<compile_context>
chip_gen: v6e
topology: v6e:2x2x1
jax: 0.10.0
libtpu: 0.0.40
codegen_flags: <defaults>
</compile_context>

<pallas_src>
import functools

import jax
import jax.numpy as jnp
from jax.experimental import pallas as pl
from jax.experimental.pallas import tpu as pltpu

N_FILTERS = 32
N_CONV = 3
KERNEL_SIZE = 32
BOTTLENECK = 32
NF_OUT = N_FILTERS * (N_CONV + 1)          # 128 = one full lane width
DEPTH = 6
KTAPS = KERNEL_SIZE - 1 if KERNEL_SIZE % 2 == 0 else KERNEL_SIZE   # 31 real taps
PAD = (KTAPS - 1) // 2                     # 15
TAPS_PER_GROUP = 8                         # -> 256-deep MXU contractions
GROUPS = (KTAPS + TAPS_PER_GROUP - 1) // TAPS_PER_GROUP            # 4 (slot 31 is zero)
GROUP_DEPTH = TAPS_PER_GROUP * BOTTLENECK  # 256


def _round_up(n, m):
    return ((n + m - 1) // m) * m


def _pick_batch_tile(B, L):
    """Batch elements per grid step.  TB is a multiple of 8 (keeps every
    (TB, ...) / (TB*L, ...) BlockSpec sublane-legal) or TB == B; aim for
    <= 4096 activation rows per step and >= 2 grid steps for v7x megacore."""
    # TODO(synk): add a sequence-tiled path for very long L (a batch tile's full
    # sequences are kept in VMEM here).
    best = B
    for d in range(8, B, 8):
        if B % d == 0 and d * L <= 4096:
            best = d                         # ascending -> largest fitting divisor
    if best == B:
        for d in range(8, B, 8):             # fallback: smallest mult-of-8 divisor
            if B % d == 0:
                best = d
                break
    return best


# ---------------------------------------------------------------------------
# Fully fused InceptionTime kernel (6 modules + ShortCut + GAP + FC)
# ---------------------------------------------------------------------------
def _inception_time_kernel(*refs, L, TB):
    """Whole forward pass for one batch tile of TB sequences of length L.

    refs = [x, pos, lane,
            (wb, wc, wm, scale, bias) * DEPTH,
            ws, s_sc, t_sc, gapmat, fc_w, fc_b,
            out,
            hA, hB, xpad]
    """
    NW = 5
    x_ref, pos_ref, lane_ref = refs[0], refs[1], refs[2]
    mod_refs = refs[3:3 + DEPTH * NW]
    (ws_ref, ssc_ref, tsc_ref,
     gap_ref, fcw_ref, fcb_ref) = refs[3 + DEPTH * NW:9 + DEPTH * NW]
    out_ref = refs[9 + DEPTH * NW]
    ha_ref, hb_ref, xp_ref = refs[10 + DEPTH * NW:]

    TBL = TB * L
    t_pos = pos_ref[...]                     # (TBL, 1) int32: position within sequence
    first_row = t_pos == 0
    last_row = t_pos == (L - 1)
    lane_tap = lane_ref[...]                 # (1, 256) int32: lane -> tap-in-group (0..7)

    def run_module(d, hin_ref, hout_ref, fuse_shortcut, fuse_head):
        wb_ref, wc_ref, wm_ref, sc_ref, bi_ref = mod_refs[d * NW:(d + 1) * NW]
        xin = hin_ref[...]                   # (TBL, Cin) bf16

        # ---- bottleneck 1x1 conv (plain Conv1d: no BN, no activation) ----
        xb = jnp.dot(xin, wb_ref[...],
                     preferred_element_type=jnp.float32).astype(jnp.bfloat16)

        # Stage 8 row-shifted copies of xb side by side: a group of 8 conv taps
        # then reads as one dense (TBL, 256) MXU operand (no per-tap matmuls,
        # no per-tap accumulator read-modify-write).
        for j in range(TAPS_PER_GROUP):
            xp_ref[PAD - j:PAD - j + TBL,
                   j * BOTTLENECK:(j + 1) * BOTTLENECK] = xb

        # ---- 3 'same' conv branches: 4 grouped 256-deep matmuls ----
        conv = None
        for g in range(GROUPS):
            src = t_pos + (lane_tap + (TAPS_PER_GROUP * g - PAD))
            valid = (src >= 0) & (src < L)   # 'same' zero-pad + batch-element edges
            slab = xp_ref[TAPS_PER_GROUP * g:TAPS_PER_GROUP * g + TBL, :]
            operand = jnp.where(valid, slab, jnp.zeros_like(slab))
            part = jnp.dot(operand, wc_ref[g], preferred_element_type=jnp.float32)
            conv = part if conv is None else conv + part      # (TBL, 128) f32

        # ---- MaxPool1d(3, stride=1, padding=1) + 1x1 conv branch ----
        prev = jnp.concatenate([xin[:1], xin[:-1]], axis=0)
        nxt = jnp.concatenate([xin[1:], xin[-1:]], axis=0)
        prev = jnp.where(first_row, xin, prev)                # clamp at sequence edges
        nxt = jnp.where(last_row, xin, nxt)
        pooled = jnp.maximum(jnp.maximum(prev, xin), nxt)
        mp = jnp.dot(pooled, wm_ref[...], preferred_element_type=jnp.float32)

        # concat([conv branches | maxpool branch]) + fused BN affine + ReLU
        out = jnp.concatenate([conv[:, :N_CONV * N_FILTERS],
                               conv[:, N_CONV * N_FILTERS:] + mp], axis=1)
        out = jnp.maximum(out * sc_ref[...] + bi_ref[...], 0.0)

        if fuse_shortcut:   # ShortCut: relu(bn(conv1x1(original x)) + inception_out)
            scv = jnp.dot(x_ref[...], ws_ref[...],
                          preferred_element_type=jnp.float32)
            out = jnp.maximum(out + scv * ssc_ref[...] + tsc_ref[...], 0.0)

        if fuse_head:       # GAP (mean over time) + Linear -> logits
            sums = jnp.dot(gap_ref[...], out.astype(jnp.bfloat16),
                           preferred_element_type=jnp.float32)        # (TB, 128)
            pooled_gap = (sums * (1.0 / L)).astype(jnp.bfloat16)
            out_ref[...] = (jnp.dot(pooled_gap, fcw_ref[...],
                                    preferred_element_type=jnp.float32)
                            + fcb_ref[...])
        else:
            hout_ref[...] = out.astype(hout_ref.dtype)

    bufs = (ha_ref, hb_ref)
    for d in range(DEPTH):
        hin = x_ref if d == 0 else bufs[(d - 1) % 2]
        hout = None if d == DEPTH - 1 else bufs[d % 2]
        run_module(d, hin, hout,
                   fuse_shortcut=(d == 2), fuse_head=(d == DEPTH - 1))


def _full_spec(a):
    """Untiled BlockSpec (same full block for every grid step)."""
    if a.ndim == 2:
        return pl.BlockSpec(a.shape, lambda i: (0, 0))
    return pl.BlockSpec(a.shape, lambda i: (0, 0, 0))


def inception_time_forward(x_ncl, params):
    """x_ncl: PyTorch-layout (B, C, L) input -> (B, n_classes) logits (f32)."""
    B, Cin, L = x_ncl.shape
    x = jnp.transpose(x_ncl, (0, 2, 1)).astype(jnp.bfloat16).reshape(B * L, Cin)

    TB = _pick_batch_tile(B, L)
    TBL = TB * L
    n_classes = params["fc_w"].shape[1]

    # Constant index helpers (identical for every grid step).
    pos = jnp.tile(jnp.arange(L, dtype=jnp.int32), TB).reshape(TBL, 1)
    lane = (jnp.arange(GROUP_DEPTH, dtype=jnp.int32) // BOTTLENECK).reshape(1, -1)
    gapmat = jnp.kron(jnp.eye(TB, dtype=jnp.float32),
                      jnp.ones((1, L), jnp.float32)).astype(jnp.bfloat16)

    args = [x, pos, lane]
    in_specs = [pl.BlockSpec((TBL, Cin), lambda i: (i, 0)),
                _full_spec(pos), _full_spec(lane)]
    for p in params["inception"]:
        mod_args = [p["wb"], p["wc"], p["wm"], p["scale"], p["bias"]]
        args += mod_args
        in_specs += [_full_spec(a) for a in mod_args]
    sc = params["shortcut"][0]
    tail = [sc["w"], sc["scale"], sc["bias"], gapmat,
            params["fc_w"], params["fc_b"]]
    args += tail
    in_specs += [_full_spec(a) for a in tail]

    rp = _round_up(TBL + 3 * TAPS_PER_GROUP, 8)     # staged-copy scratch rows
    kern = functools.partial(_inception_time_kernel, L=L, TB=TB)
    return pl.pallas_call(
        kern,
        out_shape=jax.ShapeDtypeStruct((B, n_classes), jnp.float32),
        grid=(B // TB,),
        in_specs=in_specs,
        out_specs=pl.BlockSpec((TB, n_classes), lambda i: (i, 0)),
        scratch_shapes=[pltpu.VMEM((TBL, NF_OUT), jnp.bfloat16),      # ping
                        pltpu.VMEM((TBL, NF_OUT), jnp.bfloat16),      # pong
                        pltpu.VMEM((rp, GROUP_DEPTH), jnp.bfloat16)], # shifted xb copies
        compiler_params=pltpu.CompilerParams(
            dimension_semantics=("parallel",),
            vmem_limit_bytes=48 * 1024 * 1024),
    )(*args)


# ---------------------------------------------------------------------------
# Deterministic parameter initialization (shapes follow the module __init__),
# with BN folded and conv-branch weights stacked into kernel-ready form.
# ---------------------------------------------------------------------------
def _randn(key, shape, scale=0.1):
    return scale * jax.random.normal(key, shape, dtype=jnp.float32)


def _bn_params(key, c):
    k1, k2, k3, k4 = jax.random.split(key, 4)
    gamma = 1.0 + 0.1 * jax.random.normal(k1, (c,), dtype=jnp.float32)
    beta = 0.1 * jax.random.normal(k2, (c,), dtype=jnp.float32)
    mean = 0.1 * jax.random.normal(k3, (c,), dtype=jnp.float32)
    var = jax.random.uniform(k4, (c,), jnp.float32, 0.5, 1.5)
    return gamma, beta, mean, var


def _bn_affine(bn, eps):
    gamma, beta, mean, var = bn
    s = gamma / jnp.sqrt(var + eps)
    return s, beta - mean * s


def init_inception(key, in_ch):
    keys = jax.random.split(key, 3 + 2 * N_CONV)
    wb = _randn(keys[0], (in_ch, BOTTLENECK))
    wm = _randn(keys[1], (in_ch, N_FILTERS))
    s2, t2 = _bn_affine(_bn_params(keys[2], NF_OUT), 1e-5)    # post-concat BN

    # 31 real taps (PyTorch shrinks even kernels 32/16/8 -> 31/15/7), padded to
    # 32 tap slots so they form 4 groups of 8; slot 31 keeps a zero weight.
    wc = jnp.zeros((GROUPS * TAPS_PER_GROUP, BOTTLENECK, NF_OUT), jnp.float32)
    scale = jnp.zeros((NF_OUT,), jnp.float32)
    bias = jnp.zeros((NF_OUT,), jnp.float32)
    for i in range(N_CONV):
        ks = KERNEL_SIZE // (2 ** i)
        if ks % 2 == 0:
            ks -= 1                                           # 31, 15, 7
        w = _randn(keys[3 + 2 * i], (ks, BOTTLENECK, N_FILTERS))
        s1, t1 = _bn_affine(_bn_params(keys[4 + 2 * i], N_FILTERS), 1e-3)
        off = (KTAPS - ks) // 2               # center smaller kernels ('same' conv)
        col = slice(i * N_FILTERS, (i + 1) * N_FILTERS)
        wc = wc.at[off:off + ks, :, col].set(w)
        scale = scale.at[col].set(s1 * s2[col])               # branch BN o post BN
        bias = bias.at[col].set(t1 * s2[col] + t2[col])
    col = slice(N_CONV * N_FILTERS, NF_OUT)                   # maxpool-conv slot
    scale = scale.at[col].set(s2[col])
    bias = bias.at[col].set(t2[col])
    wc_g = wc.reshape(GROUPS, TAPS_PER_GROUP, BOTTLENECK, NF_OUT)
    wc_g = wc_g.reshape(GROUPS, GROUP_DEPTH, NF_OUT)
    return {"wb": wb.astype(jnp.bfloat16),
            "wc": wc_g.astype(jnp.bfloat16),
            "wm": wm.astype(jnp.bfloat16),
            "scale": scale.reshape(1, NF_OUT),
            "bias": bias.reshape(1, NF_OUT)}


def init_inception_time(key, n_inputs, n_classes, depth=DEPTH):
    keys = jax.random.split(key, depth + 4)
    params = {"inception": [], "shortcut": []}
    for d in range(depth):
        in_ch = n_inputs if d == 0 else NF_OUT
        params["inception"].append(init_inception(keys[d], in_ch))
    # ShortCuts after d=2 (in_ch = n_inputs) and d=5 (in_ch = 128).  The second
    # one exists in the reference model but its output never reaches gap/fc.
    for j, in_ch in enumerate([n_inputs, NF_OUT]):
        kw, kb = jax.random.split(keys[depth + j])
        s, t = _bn_affine(_bn_params(kb, NF_OUT), 1e-5)
        params["shortcut"].append(
            {"w": _randn(kw, (in_ch, NF_OUT)).astype(jnp.bfloat16),
             "scale": s.reshape(1, NF_OUT), "bias": t.reshape(1, NF_OUT)})
    params["fc_w"] = _randn(keys[depth + 2], (NF_OUT, n_classes)).astype(jnp.bfloat16)
    params["fc_b"] = _randn(keys[depth + 3], (1, n_classes))
    return params


if __name__ == "__main__":
    B, C_in, L, n_classes = 2, 4, 16, 3
    key = jax.random.PRNGKey(0)
    kx, kp = jax.random.split(key)
    x = jax.random.normal(kx, (B, C_in, L), dtype=jnp.float32)   # PyTorch NCL input
    params = init_inception_time(kp, n_inputs=C_in, n_classes=n_classes)

    out = jax.jit(inception_time_forward)(x, params)
    jax.block_until_ready(out)
    assert out.shape == (B, n_classes)
    assert bool(jnp.all(jnp.isfinite(out)))
    print("KERNEL_OK")
</pallas_src>

<mosaic_0001>
module attributes {stable_mosaic.version = 11 : i64} {
  func.func @_inception_time_kernel(%arg0: i32, %arg1: memref<32x4xbf16, #tpu.memory_space<vmem>>, %arg2: memref<32x1xi32, #tpu.memory_space<vmem>>, %arg3: memref<1x256xi32, #tpu.memory_space<vmem>>, %arg4: memref<4x32xbf16, #tpu.memory_space<vmem>>, %arg5: memref<4x256x128xbf16, #tpu.memory_space<vmem>>, %arg6: memref<4x32xbf16, #tpu.memory_space<vmem>>, %arg7: memref<1x128xf32, #tpu.memory_space<vmem>>, %arg8: memref<1x128xf32, #tpu.memory_space<vmem>>, %arg9: memref<128x32xbf16, #tpu.memory_space<vmem>>, %arg10: memref<4x256x128xbf16, #tpu.memory_space<vmem>>, %arg11: memref<128x32xbf16, #tpu.memory_space<vmem>>, %arg12: memref<1x128xf32, #tpu.memory_space<vmem>>, %arg13: memref<1x128xf32, #tpu.memory_space<vmem>>, %arg14: memref<128x32xbf16, #tpu.memory_space<vmem>>, %arg15: memref<4x256x128xbf16, #tpu.memory_space<vmem>>, %arg16: memref<128x32xbf16, #tpu.memory_space<vmem>>, %arg17: memref<1x128xf32, #tpu.memory_space<vmem>>, %arg18: memref<1x128xf32, #tpu.memory_space<vmem>>, %arg19: memref<128x32xbf16, #tpu.memory_space<vmem>>, %arg20: memref<4x256x128xbf16, #tpu.memory_space<vmem>>, %arg21: memref<128x32xbf16, #tpu.memory_space<vmem>>, %arg22: memref<1x128xf32, #tpu.memory_space<vmem>>, %arg23: memref<1x128xf32, #tpu.memory_space<vmem>>, %arg24: memref<128x32xbf16, #tpu.memory_space<vmem>>, %arg25: memref<4x256x128xbf16, #tpu.memory_space<vmem>>, %arg26: memref<128x32xbf16, #tpu.memory_space<vmem>>, %arg27: memref<1x128xf32, #tpu.memory_space<vmem>>, %arg28: memref<1x128xf32, #tpu.memory_space<vmem>>, %arg29: memref<128x32xbf16, #tpu.memory_space<vmem>>, %arg30: memref<4x256x128xbf16, #tpu.memory_space<vmem>>, %arg31: memref<128x32xbf16, #tpu.memory_space<vmem>>, %arg32: memref<1x128xf32, #tpu.memory_space<vmem>>, %arg33: memref<1x128xf32, #tpu.memory_space<vmem>>, %arg34: memref<4x128xbf16, #tpu.memory_space<vmem>>, %arg35: memref<1x128xf32, #tpu.memory_space<vmem>>, %arg36: memref<1x128xf32, #tpu.memory_space<vmem>>, %arg37: memref<2x32xbf16, #tpu.memory_space<vmem>>, %arg38: memref<128x3xbf16, #tpu.memory_space<vmem>>, %arg39: memref<1x3xf32, #tpu.memory_space<vmem>>, %arg40: memref<2x3xf32, #tpu.memory_space<vmem>>, %arg41: memref<32x128xbf16, #tpu.memory_space<vmem>>, %arg42: memref<32x128xbf16, #tpu.memory_space<vmem>>, %arg43: memref<56x256xbf16, #tpu.memory_space<vmem>>) attributes {dimension_semantics = [#tpu.dimension_semantics<parallel>], iteration_bounds = array<i64: 1>, scalar_prefetch = 0 : i64, scratch_operands = 3 : i64, tpu.core_type = #tpu.core_type<tc>, window_params = [{transform_indices = @transform_0, window_bounds = array<i64: 32, 4>}, {pipeline_mode = #tpu.pipeline_mode<synchronous>, transform_indices = @transform_1, window_bounds = array<i64: 32, 1>}, {pipeline_mode = #tpu.pipeline_mode<synchronous>, transform_indices = @transform_2, window_bounds = array<i64: 1, 256>}, {pipeline_mode = #tpu.pipeline_mode<synchronous>, transform_indices = @transform_3, window_bounds = array<i64: 4, 32>}, {pipeline_mode = #tpu.pipeline_mode<synchronous>, transform_indices = @transform_4, window_bounds = array<i64: 4, 256, 128>}, {pipeline_mode = #tpu.pipeline_mode<synchronous>, transform_indices = @transform_5, window_bounds = array<i64: 4, 32>}, {pipeline_mode = #tpu.pipeline_mode<synchronous>, transform_indices = @transform_6, window_bounds = array<i64: 1, 128>}, {pipeline_mode = #tpu.pipeline_mode<synchronous>, transform_indices = @transform_7, window_bounds = array<i64: 1, 128>}, {pipeline_mode = #tpu.pipeline_mode<synchronous>, transform_indices = @transform_8, window_bounds = array<i64: 128, 32>}, {pipeline_mode = #tpu.pipeline_mode<synchronous>, transform_indices = @transform_9, window_bounds = array<i64: 4, 256, 128>}, {pipeline_mode = #tpu.pipeline_mode<synchronous>, transform_indices = @transform_10, window_bounds = array<i64: 128, 32>}, {pipeline_mode = #tpu.pipeline_mode<synchronous>, transform_indices = @transform_11, window_bounds = array<i64: 1, 128>}, {pipeline_mode = #tpu.pipeline_mode<synchronous>, transform_indices = @transform_12, window_bounds = array<i64: 1, 128>}, {pipeline_mode = #tpu.pipeline_mode<synchronous>, transform_indices = @transform_13, window_bounds = array<i64: 128, 32>}, {pipeline_mode = #tpu.pipeline_mode<synchronous>, transform_indices = @transform_14, window_bounds = array<i64: 4, 256, 128>}, {pipeline_mode = #tpu.pipeline_mode<synchronous>, transform_indices = @transform_15, window_bounds = array<i64: 128, 32>}, {pipeline_mode = #tpu.pipeline_mode<synchronous>, transform_indices = @transform_16, window_bounds = array<i64: 1, 128>}, {pipeline_mode = #tpu.pipeline_mode<synchronous>, transform_indices = @transform_17, window_bounds = array<i64: 1, 128>}, {pipeline_mode = #tpu.pipeline_mode<synchronous>, transform_indices = @transform_18, window_bounds = array<i64: 128, 32>}, {pipeline_mode = #tpu.pipeline_mode<synchronous>, transform_indices = @transform_19, window_bounds = array<i64: 4, 256, 128>}, {pipeline_mode = #tpu.pipeline_mode<synchronous>, transform_indices = @transform_20, window_bounds = array<i64: 128, 32>}, {pipeline_mode = #tpu.pipeline_mode<synchronous>, transform_indices = @transform_21, window_bounds = array<i64: 1, 128>}, {pipeline_mode = #tpu.pipeline_mode<synchronous>, transform_indices = @transform_22, window_bounds = array<i64: 1, 128>}, {pipeline_mode = #tpu.pipeline_mode<synchronous>, transform_indices = @transform_23, window_bounds = array<i64: 128, 32>}, {pipeline_mode = #tpu.pipeline_mode<synchronous>, transform_indices = @transform_24, window_bounds = array<i64: 4, 256, 128>}, {pipeline_mode = #tpu.pipeline_mode<synchronous>, transform_indices = @transform_25, window_bounds = array<i64: 128, 32>}, {pipeline_mode = #tpu.pipeline_mode<synchronous>, transform_indices = @transform_26, window_bounds = array<i64: 1, 128>}, {pipeline_mode = #tpu.pipeline_mode<synchronous>, transform_indices = @transform_27, window_bounds = array<i64: 1, 128>}, {pipeline_mode = #tpu.pipeline_mode<synchronous>, transform_indices = @transform_28, window_bounds = array<i64: 128, 32>}, {pipeline_mode = #tpu.pipeline_mode<synchronous>, transform_indices = @transform_29, window_bounds = array<i64: 4, 256, 128>}, {pipeline_mode = #tpu.pipeline_mode<synchronous>, transform_indices = @transform_30, window_bounds = array<i64: 128, 32>}, {pipeline_mode = #tpu.pipeline_mode<synchronous>, transform_indices = @transform_31, window_bounds = array<i64: 1, 128>}, {pipeline_mode = #tpu.pipeline_mode<synchronous>, transform_indices = @transform_32, window_bounds = array<i64: 1, 128>}, {pipeline_mode = #tpu.pipeline_mode<synchronous>, transform_indices = @transform_33, window_bounds = array<i64: 4, 128>}, {pipeline_mode = #tpu.pipeline_mode<synchronous>, transform_indices = @transform_34, window_bounds = array<i64: 1, 128>}, {pipeline_mode = #tpu.pipeline_mode<synchronous>, transform_indices = @transform_35, window_bounds = array<i64: 1, 128>}, {pipeline_mode = #tpu.pipeline_mode<synchronous>, transform_indices = @transform_36, window_bounds = array<i64: 2, 32>}, {pipeline_mode = #tpu.pipeline_mode<synchronous>, transform_indices = @transform_37, window_bounds = array<i64: 128, 3>}, {pipeline_mode = #tpu.pipeline_mode<synchronous>, transform_indices = @transform_38, window_bounds = array<i64: 1, 3>}, {transform_indices = @transform_39, window_bounds = array<i64: 2, 3>}]} {
    %c0 = arith.constant 0 : index
    %c0_0 = arith.constant 0 : index
    %0 = vector.load %arg2[%c0, %c0_0] : memref<32x1xi32, #tpu.memory_space<vmem>>, vector<32x1xi32>
    %c0_i32 = arith.constant 0 : i32
    %1 = vector.broadcast %c0_i32 : i32 to vector<32x1xi32>
    %2 = arith.cmpi eq, %0, %1 : vector<32x1xi32>
    %c15_i32 = arith.constant 15 : i32
    %3 = vector.broadcast %c15_i32 : i32 to vector<32x1xi32>
    %4 = arith.cmpi eq, %0, %3 : vector<32x1xi32>
    %c0_1 = arith.constant 0 : index
    %c0_2 = arith.constant 0 : index
    %5 = vector.load %arg3[%c0_1, %c0_2] : memref<1x256xi32, #tpu.memory_space<vmem>>, vector<1x256xi32>
    %c0_3 = arith.constant 0 : index
    %c0_4 = arith.constant 0 : index
    %6 = vector.load %arg1[%c0_3, %c0_4] : memref<32x4xbf16, #tpu.memory_space<vmem>>, vector<32x4xbf16>
    %c0_5 = arith.constant 0 : index
    %c0_6 = arith.constant 0 : index
    %7 = vector.load %arg4[%c0_5, %c0_6] : memref<4x32xbf16, #tpu.memory_space<vmem>>, vector<4x32xbf16>
    %cst = arith.constant dense<0.000000e+00> : vector<32x32xf32>
    %8 = tpu.matmul %6, %7, %cst {dimension_numbers = #tpu.dot_dimension_numbers<[1], [0], [0], [1], [0, 0, 1, 1], [], []>} : vector<32x4xbf16>, vector<4x32xbf16>, vector<32x32xf32> -> vector<32x32xf32>
    %9 = arith.truncf %8 : vector<32x32xf32> to vector<32x32xbf16>
    %c15 = arith.constant 15 : index
    %c0_7 = arith.constant 0 : index
    %10 = vector.load %arg43[%c15, %c0_7] : memref<56x256xbf16, #tpu.memory_space<vmem>>, vector<32x32xbf16>
    tpu.vector_store %arg43[%c15, %c0_7], %9 {strides = array<i32>} : memref<56x256xbf16, #tpu.memory_space<vmem>>, vector<32x32xbf16>,
    %c14 = arith.constant 14 : index
    %c32 = arith.constant 32 : index
    %11 = vector.load %arg43[%c14, %c32] : memref<56x256xbf16, #tpu.memory_space<vmem>>, vector<32x32xbf16>
    tpu.vector_store %arg43[%c14, %c32], %9 {strides = array<i32>} : memref<56x256xbf16, #tpu.memory_space<vmem>>, vector<32x32xbf16>,
    %c13 = arith.constant 13 : index
    %c64 = arith.constant 64 : index
    %12 = vector.load %arg43[%c13, %c64] : memref<56x256xbf16, #tpu.memory_space<vmem>>, vector<32x32xbf16>
    tpu.vector_store %arg43[%c13, %c64], %9 {strides = array<i32>} : memref<56x256xbf16, #tpu.memory_space<vmem>>, vector<32x32xbf16>,
    %c12 = arith.constant 12 : index
    %c96 = arith.constant 96 : index
    %13 = vector.load %arg43[%c12, %c96] : memref<56x256xbf16, #tpu.memory_space<vmem>>, vector<32x32xbf16>
    tpu.vector_store %arg43[%c12, %c96], %9 {strides = array<i32>} : memref<56x256xbf16, #tpu.memory_space<vmem>>, vector<32x32xbf16>,
    %c11 = arith.constant 11 : index
    %c128 = arith.constant 128 : index
    %14 = vector.load %arg43[%c11, %c128] : memref<56x256xbf16, #tpu.memory_space<vmem>>, vector<32x32xbf16>
    tpu.vector_store %arg43[%c11, %c128], %9 {strides = array<i32>} : memref<56x256xbf16, #tpu.memory_space<vmem>>, vector<32x32xbf16>,
    %c10 = arith.constant 10 : index
    %c160 = arith.constant 160 : index
    %15 = vector.load %arg43[%c10, %c160] : memref<56x256xbf16, #tpu.memory_space<vmem>>, vector<32x32xbf16>
    tpu.vector_store %arg43[%c10, %c160], %9 {strides = array<i32>} : memref<56x256xbf16, #tpu.memory_space<vmem>>, vector<32x32xbf16>,
    %c9 = arith.constant 9 : index
    %c192 = arith.constant 192 : index
    %16 = vector.load %arg43[%c9, %c192] : memref<56x256xbf16, #tpu.memory_space<vmem>>, vector<32x32xbf16>
    tpu.vector_store %arg43[%c9, %c192], %9 {strides = array<i32>} : memref<56x256xbf16, #tpu.memory_space<vmem>>, vector<32x32xbf16>,
    %c8 = arith.constant 8 : index
    %c224 = arith.constant 224 : index
    %17 = vector.load %arg43[%c8, %c224] : memref<56x256xbf16, #tpu.memory_space<vmem>>, vector<32x32xbf16>
    tpu.vector_store %arg43[%c8, %c224], %9 {strides = array<i32>} : memref<56x256xbf16, #tpu.memory_space<vmem>>, vector<32x32xbf16>,
    %c-15_i32 = arith.constant -15 : i32
    %18 = vector.broadcast %c-15_i32 : i32 to vector<1x256xi32>
    %19 = arith.addi %5, %18 : vector<1x256xi32>
    %20 = vector.broadcast %0 : vector<32x1xi32> to vector<32x256xi32>
    %21 = vector.broadcast %19 : vector<1x256xi32> to vector<32x256xi32>
    %22 = arith.addi %20, %21 : vector<32x256xi32>
    %c0_i32_8 = arith.constant 0 : i32
    %23 = vector.broadcast %c0_i32_8 : i32 to vector<32x256xi32>
    %24 = arith.cmpi sge, %22, %23 : vector<32x256xi32>
    %c16_i32 = arith.constant 16 : i32
    %25 = vector.broadcast %c16_i32 : i32 to vector<32x256xi32>
    %26 = arith.cmpi slt, %22, %25 : vector<32x256xi32>
    %27 = arith.andi %24, %26 : vector<32x256xi1>
    %c0_9 = arith.constant 0 : index
    %c0_10 = arith.constant 0 : index
    %28 = vector.load %arg43[%c0_9, %c0_10] : memref<56x256xbf16, #tpu.memory_space<vmem>>, vector<32x256xbf16>
    %cst_11 = arith.constant 0.000000e+00 : bf16
    %29 = vector.broadcast %cst_11 : bf16 to vector<32x256xbf16>
    %30 = arith.select %27, %28, %29 : vector<32x256xi1>, vector<32x256xbf16>
    %c0_12 = arith.constant 0 : index
    %c0_13 = arith.constant 0 : index
    %c0_14 = arith.constant 0 : index
    %31 = vector.load %arg5[%c0_12, %c0_13, %c0_14] : memref<4x256x128xbf16, #tpu.memory_space<vmem>>, vector<1x256x128xbf16>
    %32 = vector.shape_cast %31 : vector<1x256x128xbf16> to vector<256x128xbf16>
    %cst_15 = arith.constant dense<0.000000e+00> : vector<32x128xf32>
    %33 = tpu.matmul %30, %32, %cst_15 {dimension_numbers = #tpu.dot_dimension_numbers<[1], [0], [0], [1], [0, 0, 1, 1], [], []>} : vector<32x256xbf16>, vector<256x128xbf16>, vector<32x128xf32> -> vector<32x128xf32>
    %c-7_i32 = arith.constant -7 : i32
    %34 = vector.broadcast %c-7_i32 : i32 to vector<1x256xi32>
    %35 = arith.addi %5, %34 : vector<1x256xi32>
    %36 = vector.broadcast %0 : vector<32x1xi32> to vector<32x256xi32>
    %37 = vector.broadcast %35 : vector<1x256xi32> to vector<32x256xi32>
    %38 = arith.addi %36, %37 : vector<32x256xi32>
    %c0_i32_16 = arith.constant 0 : i32
    %39 = vector.broadcast %c0_i32_16 : i32 to vector<32x256xi32>
    %40 = arith.cmpi sge, %38, %39 : vector<32x256xi32>
    %c16_i32_17 = arith.constant 16 : i32
    %41 = vector.broadcast %c16_i32_17 : i32 to vector<32x256xi32>
    %42 = arith.cmpi slt, %38, %41 : vector<32x256xi32>
    %43 = arith.andi %40, %42 : vector<32x256xi1>
    %c8_18 = arith.constant 8 : index
    %c0_19 = arith.constant 0 : index
    %44 = vector.load %arg43[%c8_18, %c0_19] : memref<56x256xbf16, #tpu.memory_space<vmem>>, vector<32x256xbf16>
    %cst_20 = arith.constant 0.000000e+00 : bf16
    %45 = vector.broadcast %cst_20 : bf16 to vector<32x256xbf16>
    %46 = arith.select %43, %44, %45 : vector<32x256xi1>, vector<32x256xbf16>
    %c1 = arith.constant 1 : index
    %c0_21 = arith.constant 0 : index
    %c0_22 = arith.constant 0 : index
    %47 = vector.load %arg5[%c1, %c0_21, %c0_22] : memref<4x256x128xbf16, #tpu.memory_space<vmem>>, vector<1x256x128xbf16>
    %48 = vector.shape_cast %47 : vector<1x256x128xbf16> to vector<256x128xbf16>
    %cst_23 = arith.constant dense<0.000000e+00> : vector<32x128xf32>
    %49 = tpu.matmul %46, %48, %cst_23 {dimension_numbers = #tpu.dot_dimension_numbers<[1], [0], [0], [1], [0, 0, 1, 1], [], []>} : vector<32x256xbf16>, vector<256x128xbf16>, vector<32x128xf32> -> vector<32x128xf32>
    %50 = arith.addf %33, %49 : vector<32x128xf32>
    %c1_i32 = arith.constant 1 : i32
    %51 = vector.broadcast %c1_i32 : i32 to vector<1x256xi32>
    %52 = arith.addi %5, %51 : vector<1x256xi32>
    %53 = vector.broadcast %0 : vector<32x1xi32> to vector<32x256xi32>
    %54 = vector.broadcast %52 : vector<1x256xi32> to vector<32x256xi32>
    %55 = arith.addi %53, %54 : vector<32x256xi32>
    %c0_i32_24 = arith.constant 0 : i32
    %56 = vector.broadcast %c0_i32_24 : i32 to vector<32x256xi32>
    %57 = arith.cmpi sge, %55, %56 : vector<32x256xi32>
    %c16_i32_25 = arith.constant 16 : i32
    %58 = vector.broadcast %c16_i32_25 : i32 to vector<32x256xi32>
    %59 = arith.cmpi slt, %55, %58 : vector<32x256xi32>
    %60 = arith.andi %57, %59 : vector<32x256xi1>
    %c16 = arith.constant 16 : index
    %c0_26 = arith.constant 0 : index
    %61 = vector.load %arg43[%c16, %c0_26] : memref<56x256xbf16, #tpu.memory_space<vmem>>, vector<32x256xbf16>
    %cst_27 = arith.constant 0.000000e+00 : bf16
    %62 = vector.broadcast %cst_27 : bf16 to vector<32x256xbf16>
    %63 = arith.select %60, %61, %62 : vector<32x256xi1>, vector<32x256xbf16>
    %c2 = arith.constant 2 : index
    %c0_28 = arith.constant 0 : index
    %c0_29 = arith.constant 0 : index
    %64 = vector.load %arg5[%c2, %c0_28, %c0_29] : memref<4x256x128xbf16, #tpu.memory_space<vmem>>, vector<1x256x128xbf16>
    %65 = vector.shape_cast %64 : vector<1x256x128xbf16> to vector<256x128xbf16>
    %cst_30 = arith.constant dense<0.000000e+00> : vector<32x128xf32>
    %66 = tpu.matmul %63, %65, %cst_30 {dimension_numbers = #tpu.dot_dimension_numbers<[1], [0], [0], [1], [0, 0, 1, 1], [], []>} : vector<32x256xbf16>, vector<256x128xbf16>, vector<32x128xf32> -> vector<32x128xf32>
    %67 = arith.addf %50, %66 : vector<32x128xf32>
    %c9_i32 = arith.constant 9 : i32
    %68 = vector.broadcast %c9_i32 : i32 to vector<1x256xi32>
    %69 = arith.addi %5, %68 : vector<1x256xi32>
    %70 = vector.broadcast %0 : vector<32x1xi32> to vector<32x256xi32>
    %71 = vector.broadcast %69 : vector<1x256xi32> to vector<32x256xi32>
    %72 = arith.addi %70, %71 : vector<32x256xi32>
    %c0_i32_31 = arith.constant 0 : i32
    %73 = vector.broadcast %c0_i32_31 : i32 to vector<32x256xi32>
    %74 = arith.cmpi sge, %72, %73 : vector<32x256xi32>
    %c16_i32_32 = arith.constant 16 : i32
    %75 = vector.broadcast %c16_i32_32 : i32 to vector<32x256xi32>
    %76 = arith.cmpi slt, %72, %75 : vector<32x256xi32>
    %77 = arith.andi %74, %76 : vector<32x256xi1>
    %c24 = arith.constant 24 : index
    %c0_33 = arith.constant 0 : index
    %78 = vector.load %arg43[%c24, %c0_33] : memref<56x256xbf16, #tpu.memory_space<vmem>>, vector<32x256xbf16>
    %cst_34 = arith.constant 0.000000e+00 : bf16
    %79 = vector.broadcast %cst_34 : bf16 to vector<32x256xbf16>
    %80 = arith.select %77, %78, %79 : vector<32x256xi1>, vector<32x256xbf16>
    %c3 = arith.constant 3 : index
    %c0_35 = arith.constant 0 : index
    %c0_36 = arith.constant 0 : index
    %81 = vector.load %arg5[%c3, %c0_35, %c0_36] : memref<4x256x128xbf16, #tpu.memory_space<vmem>>, vector<1x256x128xbf16>
    %82 = vector.shape_cast %81 : vector<1x256x128xbf16> to vector<256x128xbf16>
    %cst_37 = arith.constant dense<0.000000e+00> : vector<32x128xf32>
    %83 = tpu.matmul %80, %82, %cst_37 {dimension_numbers = #tpu.dot_dimension_numbers<[1], [0], [0], [1], [0, 0, 1, 1], [], []>} : vector<32x256xbf16>, vector<256x128xbf16>, vector<32x128xf32> -> vector<32x128xf32>
    %84 = arith.addf %67, %83 : vector<32x128xf32>
    %85 = vector.extract_strided_slice %6 {offsets = [0, 0], sizes = [1, 4], strides = [1, 1]} : vector<32x4xbf16> to vector<1x4xbf16>
    %86 = vector.extract_strided_slice %6 {offsets = [0, 0], sizes = [31, 4], strides = [1, 1]} : vector<32x4xbf16> to vector<31x4xbf16>
    %87 = tpu.concatenate %85, %86 in 0 : vector<1x4xbf16>, vector<31x4xbf16> -> vector<32x4xbf16>
    %88 = vector.extract_strided_slice %6 {offsets = [1, 0], sizes = [31, 4], strides = [1, 1]} : vector<32x4xbf16> to vector<31x4xbf16>
    %89 = vector.extract_strided_slice %6 {offsets = [31, 0], sizes = [1, 4], strides = [1, 1]} : vector<32x4xbf16> to vector<1x4xbf16>
    %90 = tpu.concatenate %88, %89 in 0 : vector<31x4xbf16>, vector<1x4xbf16> -> vector<32x4xbf16>
    %91 = vector.shape_cast %2 : vector<32x1xi1> to vector<32x1xi1>
    %92 = vector.broadcast %91 : vector<32x1xi1> to vector<32x4xi1>
    %93 = arith.select %92, %6, %87 : vector<32x4xi1>, vector<32x4xbf16>
    %94 = vector.shape_cast %4 : vector<32x1xi1> to vector<32x1xi1>
    %95 = vector.broadcast %94 : vector<32x1xi1> to vector<32x4xi1>
    %96 = arith.select %95, %6, %90 : vector<32x4xi1>, vector<32x4xbf16>
    %97 = arith.maximumf %93, %6 : vector<32x4xbf16>
    %98 = arith.maximumf %97, %96 : vector<32x4xbf16>
    %c0_38 = arith.constant 0 : index
    %c0_39 = arith.constant 0 : index
    %99 = vector.load %arg6[%c0_38, %c0_39] : memref<4x32xbf16, #tpu.memory_space<vmem>>, vector<4x32xbf16>
    %cst_40 = arith.constant dense<0.000000e+00> : vector<32x32xf32>
    %100 = tpu.matmul %98, %99, %cst_40 {dimension_numbers = #tpu.dot_dimension_numbers<[1], [0], [0], [1], [0, 0, 1, 1], [], []>} : vector<32x4xbf16>, vector<4x32xbf16>, vector<32x32xf32> -> vector<32x32xf32>
    %101 = vector.extract_strided_slice %84 {offsets = [0, 0], sizes = [32, 96], strides = [1, 1]} : vector<32x128xf32> to vector<32x96xf32>
    %102 = vector.extract_strided_slice %84 {offsets = [0, 96], sizes = [32, 32], strides = [1, 1]} : vector<32x128xf32> to vector<32x32xf32>
    %103 = arith.addf %102, %100 : vector<32x32xf32>
    %104 = tpu.concatenate %101, %103 in 1 : vector<32x96xf32>, vector<32x32xf32> -> vector<32x128xf32>
    %c0_41 = arith.constant 0 : index
    %c0_42 = arith.constant 0 : index
    %105 = vector.load %arg7[%c0_41, %c0_42] : memref<1x128xf32, #tpu.memory_space<vmem>>, vector<1x128xf32>
    %106 = vector.broadcast %105 : vector<1x128xf32> to vector<32x128xf32>
    %107 = arith.mulf %104, %106 : vector<32x128xf32>
    %c0_43 = arith.constant 0 : index
    %c0_44 = arith.constant 0 : index
    %108 = vector.load %arg8[%c0_43, %c0_44] : memref<1x128xf32, #tpu.memory_space<vmem>>, vector<1x128xf32>
    %109 = vector.broadcast %108 : vector<1x128xf32> to vector<32x128xf32>
    %110 = arith.addf %107, %109 : vector<32x128xf32>
    %cst_45 = arith.constant 0.000000e+00 : f32
    %111 = vector.broadcast %cst_45 : f32 to vector<32x128xf32>
    %112 = arith.maximumf %110, %111 : vector<32x128xf32>
    %113 = arith.truncf %112 : vector<32x128xf32> to vector<32x128xbf16>
    %c0_46 = arith.constant 0 : index
    %c0_47 = arith.constant 0 : index
    %114 = vector.load %arg41[%c0_46, %c0_47] : memref<32x128xbf16, #tpu.memory_space<vmem>>, vector<32x128xbf16>
    tpu.vector_store %arg41[%c0_46, %c0_47], %113 {strides = array<i32>} : memref<32x128xbf16, #tpu.memory_space<vmem>>, vector<32x128xbf16>,
    %c0_48 = arith.constant 0 : index
    %c0_49 = arith.constant 0 : index
    %115 = vector.load %arg41[%c0_48, %c0_49] : memref<32x128xbf16, #tpu.memory_space<vmem>>, vector<32x128xbf16>
    %c0_50 = arith.constant 0 : index
    %c0_51 = arith.constant 0 : index
    %116 = vector.load %arg9[%c0_50, %c0_51] : memref<128x32xbf16, #tpu.memory_space<vmem>>, vector<128x32xbf16>
    %cst_52 = arith.constant dense<0.000000e+00> : vector<32x32xf32>
    %117 = tpu.matmul %115, %116, %cst_52 {dimension_numbers = #tpu.dot_dimension_numbers<[1], [0], [0], [1], [0, 0, 1, 1], [], []>} : vector<32x128xbf16>, vector<128x32xbf16>, vector<32x32xf32> -> vector<32x32xf32>
    %118 = arith.truncf %117 : vector<32x32xf32> to vector<32x32xbf16>
    %c15_53 = arith.constant 15 : index
    %c0_54 = arith.constant 0 : index
    %119 = vector.load %arg43[%c15_53, %c0_54] : memref<56x256xbf16, #tpu.memory_space<vmem>>, vector<32x32xbf16>
    tpu.vector_store %arg43[%c15_53, %c0_54], %118 {strides = array<i32>} : memref<56x256xbf16, #tpu.memory_space<vmem>>, vector<32x32xbf16>,
    %c14_55 = arith.constant 14 : index
    %c32_56 = arith.constant 32 : index
    %120 = vector.load %arg43[%c14_55, %c32_56] : memref<56x256xbf16, #tpu.memory_space<vmem>>, vector<32x32xbf16>
    tpu.vector_store %arg43[%c14_55, %c32_56], %118 {strides = array<i32>} : memref<56x256xbf16, #tpu.memory_space<vmem>>, vector<32x32xbf16>,
    %c13_57 = arith.constant 13 : index
    %c64_58 = arith.constant 64 : index
    %121 = vector.load %arg43[%c13_57, %c64_58] : memref<56x256xbf16, #tpu.memory_space<vmem>>, vector<32x32xbf16>
    tpu.vector_store %arg43[%c13_57, %c64_58], %118 {strides = array<i32>} : memref<56x256xbf16, #tpu.memory_space<vmem>>, vector<32x32xbf16>,
    %c12_59 = arith.constant 12 : index
    %c96_60 = arith.constant 96 : index
    %122 = vector.load %arg43[%c12_59, %c96_60] : memref<56x256xbf16, #tpu.memory_space<vmem>>, vector<32x32xbf16>
    tpu.vector_store %arg43[%c12_59, %c96_60], %118 {strides = array<i32>} : memref<56x256xbf16, #tpu.memory_space<vmem>>, vector<32x32xbf16>,
    %c11_61 = arith.constant 11 : index
    %c128_62 = arith.constant 128 : index
    %123 = vector.load %arg43[%c11_61, %c128_62] : memref<56x256xbf16, #tpu.memory_space<vmem>>, vector<32x32xbf16>
    tpu.vector_store %arg43[%c11_61, %c128_62], %118 {strides = array<i32>} : memref<56x256xbf16, #tpu.memory_space<vmem>>, vector<32x32xbf16>,
    %c10_63 = arith.constant 10 : index
    %c160_64 = arith.constant 160 : index
    %124 = vector.load %arg43[%c10_63, %c160_64] : memref<56x256xbf16, #tpu.memory_space<vmem>>, vector<32x32xbf16>
    tpu.vector_store %arg43[%c10_63, %c160_64], %118 {strides = array<i32>} : memref<56x256xbf16, #tpu.memory_space<vmem>>, vector<32x32xbf16>,
    %c9_65 = arith.constant 9 : index
    %c192_66 = arith.constant 192 : index
    %125 = vector.load %arg43[%c9_65, %c192_66] : memref<56x256xbf16, #tpu.memory_space<vmem>>, vector<32x32xbf16>
    tpu.vector_store %arg43[%c9_65, %c192_66], %118 {strides = array<i32>} : memref<56x256xbf16, #tpu.memory_space<vmem>>, vector<32x32xbf16>,
    %c8_67 = arith.constant 8 : index
    %c224_68 = arith.constant 224 : index
    %126 = vector.load %arg43[%c8_67, %c224_68] : memref<56x256xbf16, #tpu.memory_space<vmem>>, vector<32x32xbf16>
    tpu.vector_store %arg43[%c8_67, %c224_68], %118 {strides = array<i32>} : memref<56x256xbf16, #tpu.memory_space<vmem>>, vector<32x32xbf16>,
    %c-15_i32_69 = arith.constant -15 : i32
    %127 = vector.broadcast %c-15_i32_69 : i32 to vector<1x256xi32>
    %128 = arith.addi %5, %127 : vector<1x256xi32>
    %129 = vector.broadcast %0 : vector<32x1xi32> to vector<32x256xi32>
    %130 = vector.broadcast %128 : vector<1x256xi32> to vector<32x256xi32>
    %131 = arith.addi %129, %130 : vector<32x256xi32>
    %c0_i32_70 = arith.constant 0 : i32
    %132 = vector.broadcast %c0_i32_70 : i32 to vector<32x256xi32>
    %133 = arith.cmpi sge, %131, %132 : vector<32x256xi32>
    %c16_i32_71 = arith.constant 16 : i32
    %134 = vector.broadcast %c16_i32_71 : i32 to vector<32x256xi32>
    %135 = arith.cmpi slt, %131, %134 : vector<32x256xi32>
    %136 = arith.andi %133, %135 : vector<32x256xi1>
    %c0_72 = arith.constant 0 : index
    %c0_73 = arith.constant 0 : index
    %137 = vector.load %arg43[%c0_72, %c0_73] : memref<56x256xbf16, #tpu.memory_space<vmem>>, vector<32x256xbf16>
    %cst_74 = arith.constant 0.000000e+00 : bf16
    %138 = vector.broadcast %cst_74 : bf16 to vector<32x256xbf16>
    %139 = arith.select %136, %137, %138 : vector<32x256xi1>, vector<32x256xbf16>
    %c0_75 = arith.constant 0 : index
    %c0_76 = arith.constant 0 : index
    %c0_77 = arith.constant 0 : index
    %140 = vector.load %arg10[%c0_75, %c0_76, %c0_77] : memref<4x256x128xbf16, #tpu.memory_space<vmem>>, vector<1x256x128xbf16>
    %141 = vector.shape_cast %140 : vector<1x256x128xbf16> to vector<256x128xbf16>
    %cst_78 = arith.constant dense<0.000000e+00> : vector<32x128xf32>
    %142 = tpu.matmul %139, %141, %cst_78 {dimension_numbers = #tpu.dot_dimension_numbers<[1], [0], [0], [1], [0, 0, 1, 1], [], []>} : vector<32x256xbf16>, vector<256x128xbf16>, vector<32x128xf32> -> vector<32x128xf32>
    %c-7_i32_79 = arith.constant -7 : i32
    %143 = vector.broadcast %c-7_i32_79 : i32 to vector<1x256xi32>
    %144 = arith.addi %5, %143 : vector<1x256xi32>
    %145 = vector.broadcast %0 : vector<32x1xi32> to vector<32x256xi32>
    %146 = vector.broadcast %144 : vector<1x256xi32> to vector<32x256xi32>
    %147 = arith.addi %145, %146 : vector<32x256xi32>
    %c0_i32_80 = arith.constant 0 : i32
    %148 = vector.broadcast %c0_i32_80 : i32 to vector<32x256xi32>
    %149 = arith.cmpi sge, %147, %148 : vector<32x256xi32>
    %c16_i32_81 = arith.constant 16 : i32
    %150 = vector.broadcast %c16_i32_81 : i32 to vector<32x256xi32>
    %151 = arith.cmpi slt, %147, %150 : vector<32x256xi32>
    %152 = arith.andi %149, %151 : vector<32x256xi1>
    %c8_82 = arith.constant 8 : index
    %c0_83 = arith.constant 0 : index
    %153 = vector.load %arg43[%c8_82, %c0_83] : memref<56x256xbf16, #tpu.memory_space<vmem>>, vector<32x256xbf16>
    %cst_84 = arith.constant 0.000000e+00 : bf16
    %154 = vector.broadcast %cst_84 : bf16 to vector<32x256xbf16>
    %155 = arith.select %152, %153, %154 : vector<32x256xi1>, vector<32x256xbf16>
    %c1_85 = arith.constant 1 : index
    %c0_86 = arith.constant 0 : index
    %c0_87 = arith.constant 0 : index
    %156 = vector.load %arg10[%c1_85, %c0_86, %c0_87] : memref<4x256x128xbf16, #tpu.memory_space<vmem>>, vector<1x256x128xbf16>
    %157 = vector.shape_cast %156 : vector<1x256x128xbf16> to vector<256x128xbf16>
    %cst_88 = arith.constant dense<0.000000e+00> : vector<32x128xf32>
    %158 = tpu.matmul %155, %157, %cst_88 {dimension_numbers = #tpu.dot_dimension_numbers<[1], [0], [0], [1], [0, 0, 1, 1], [], []>} : vector<32x256xbf16>, vector<256x128xbf16>, vector<32x128xf32> -> vector<32x128xf32>
    %159 = arith.addf %142, %158 : vector<32x128xf32>
    %c1_i32_89 = arith.constant 1 : i32
    %160 = vector.broadcast %c1_i32_89 : i32 to vector<1x256xi32>
    %161 = arith.addi %5, %160 : vector<1x256xi32>
    %162 = vector.broadcast %0 : vector<32x1xi32> to vector<32x256xi32>
    %163 = vector.broadcast %161 : vector<1x256xi32> to vector<32x256xi32>
    %164 = arith.addi %162, %163 : vector<32x256xi32>
    %c0_i32_90 = arith.constant 0 : i32
    %165 = vector.broadcast %c0_i32_90 : i32 to vector<32x256xi32>
    %166 = arith.cmpi sge, %164, %165 : vector<32x256xi32>
    %c16_i32_91 = arith.constant 16 : i32
    %167 = vector.broadcast %c16_i32_91 : i32 to vector<32x256xi32>
    %168 = arith.cmpi slt, %164, %167 : vector<32x256xi32>
    %169 = arith.andi %166, %168 : vector<32x256xi1>
    %c16_92 = arith.constant 16 : index
    %c0_93 = arith.constant 0 : index
    %170 = vector.load %arg43[%c16_92, %c0_93] : memref<56x256xbf16, #tpu.memory_space<vmem>>, vector<32x256xbf16>
    %cst_94 = arith.constant 0.000000e+00 : bf16
    %171 = vector.broadcast %cst_94 : bf16 to vector<32x256xbf16>
    %172 = arith.select %169, %170, %171 : vector<32x256xi1>, vector<32x256xbf16>
    %c2_95 = arith.constant 2 : index
    %c0_96 = arith.constant 0 : index
    %c0_97 = arith.constant 0 : index
    %173 = vector.load %arg10[%c2_95, %c0_96, %c0_97] : memref<4x256x128xbf16, #tpu.memory_space<vmem>>, vector<1x256x128xbf16>
    %174 = vector.shape_cast %173 : vector<1x256x128xbf16> to vector<256x128xbf16>
    %cst_98 = arith.constant dense<0.000000e+00> : vector<32x128xf32>
    %175 = tpu.matmul %172, %174, %cst_98 {dimension_numbers = #tpu.dot_dimension_numbers<[1], [0], [0], [1], [0, 0, 1, 1], [], []>} : vector<32x256xbf16>, vector<256x128xbf16>, vector<32x128xf32> -> vector<32x128xf32>
    %176 = arith.addf %159, %175 : vector<32x128xf32>
    %c9_i32_99 = arith.constant 9 : i32
    %177 = vector.broadcast %c9_i32_99 : i32 to vector<1x256xi32>
    %178 = arith.addi %5, %177 : vector<1x256xi32>
    %179 = vector.broadcast %0 : vector<32x1xi32> to vector<32x256xi32>
    %180 = vector.broadcast %178 : vector<1x256xi32> to vector<32x256xi32>
    %181 = arith.addi %179, %180 : vector<32x256xi32>
    %c0_i32_100 = arith.constant 0 : i32
    %182 = vector.broadcast %c0_i32_100 : i32 to vector<32x256xi32>
    %183 = arith.cmpi sge, %181, %182 : vector<32x256xi32>
    %c16_i32_101 = arith.constant 16 : i32
    %184 = vector.broadcast %c16_i32_101 : i32 to vector<32x256xi32>
    %185 = arith.cmpi slt, %181, %184 : vector<32x256xi32>
    %186 = arith.andi %183, %185 : vector<32x256xi1>
    %c24_102 = arith.constant 24 : index
    %c0_103 = arith.constant 0 : index
    %187 = vector.load %arg43[%c24_102, %c0_103] : memref<56x256xbf16, #tpu.memory_space<vmem>>, vector<32x256xbf16>
    %cst_104 = arith.constant 0.000000e+00 : bf16
    %188 = vector.broadcast %cst_104 : bf16 to vector<32x256xbf16>
    %189 = arith.select %186, %187, %188 : vector<32x256xi1>, vector<32x256xbf16>
    %c3_105 = arith.constant 3 : index
    %c0_106 = arith.constant 0 : index
    %c0_107 = arith.constant 0 : index
    %190 = vector.load %arg10[%c3_105, %c0_106, %c0_107] : memref<4x256x128xbf16, #tpu.memory_space<vmem>>, vector<1x256x128xbf16>
    %191 = vector.shape_cast %190 : vector<1x256x128xbf16> to vector<256x128xbf16>
    %cst_108 = arith.constant dense<0.000000e+00> : vector<32x128xf32>
    %192 = tpu.matmul %189, %191, %cst_108 {dimension_numbers = #tpu.dot_dimension_numbers<[1], [0], [0], [1], [0, 0, 1, 1], [], []>} : vector<32x256xbf16>, vector<256x128xbf16>, vector<32x128xf32> -> vector<32x128xf32>
    %193 = arith.addf %176, %192 : vector<32x128xf32>
    %194 = vector.extract_strided_slice %115 {offsets = [0, 0], sizes = [1, 128], strides = [1, 1]} : vector<32x128xbf16> to vector<1x128xbf16>
    %195 = vector.extract_strided_slice %115 {offsets = [0, 0], sizes = [31, 128], strides = [1, 1]} : vector<32x128xbf16> to vector<31x128xbf16>
    %196 = tpu.concatenate %194, %195 in 0 : vector<1x128xbf16>, vector<31x128xbf16> -> vector<32x128xbf16>
    %197 = vector.extract_strided_slice %115 {offsets = [1, 0], sizes = [31, 128], strides = [1, 1]} : vector<32x128xbf16> to vector<31x128xbf16>
    %198 = vector.extract_strided_slice %115 {offsets = [31, 0], sizes = [1, 128], strides = [1, 1]} : vector<32x128xbf16> to vector<1x128xbf16>
    %199 = tpu.concatenate %197, %198 in 0 : vector<31x128xbf16>, vector<1x128xbf16> -> vector<32x128xbf16>
    %200 = vector.shape_cast %2 : vector<32x1xi1> to vector<32x1xi1>
    %201 = vector.broadcast %200 : vector<32x1xi1> to vector<32x128xi1>
    %202 = arith.select %201, %115, %196 : vector<32x128xi1>, vector<32x128xbf16>
    %203 = vector.shape_cast %4 : vector<32x1xi1> to vector<32x1xi1>
    %204 = vector.broadcast %203 : vector<32x1xi1> to vector<32x128xi1>
    %205 = arith.select %204, %115, %199 : vector<32x128xi1>, vector<32x128xbf16>
    %206 = arith.maximumf %202, %115 : vector<32x128xbf16>
    %207 = arith.maximumf %206, %205 : vector<32x128xbf16>
    %c0_109 = arith.constant 0 : index
    %c0_110 = arith.constant 0 : index
    %208 = vector.load %arg11[%c0_109, %c0_110] : memref<128x32xbf16, #tpu.memory_space<vmem>>, vector<128x32xbf16>
    %cst_111 = arith.constant dense<0.000000e+00> : vector<32x32xf32>
    %209 = tpu.matmul %207, %208, %cst_111 {dimension_numbers = #tpu.dot_dimension_numbers<[1], [0], [0], [1], [0, 0, 1, 1], [], []>} : vector<32x128xbf16>, vector<128x32xbf16>, vector<32x32xf32> -> vector<32x32xf32>
    %210 = vector.extract_strided_slice %193 {offsets = [0, 0], sizes = [32, 96], strides = [1, 1]} : vector<32x128xf32> to vector<32x96xf32>
    %211 = vector.extract_strided_slice %193 {offsets = [0, 96], sizes = [32, 32], strides = [1, 1]} : vector<32x128xf32> to vector<32x32xf32>
    %212 = arith.addf %211, %209 : vector<32x32xf32>
    %213 = tpu.concatenate %210, %212 in 1 : vector<32x96xf32>, vector<32x32xf32> -> vector<32x128xf32>
    %c0_112 = arith.constant 0 : index
    %c0_113 = arith.constant 0 : index
    %214 = vector.load %arg12[%c0_112, %c0_113] : memref<1x128xf32, #tpu.memory_space<vmem>>, vector<1x128xf32>
    %215 = vector.broadcast %214 : vector<1x128xf32> to vector<32x128xf32>
    %216 = arith.mulf %213, %215 : vector<32x128xf32>
    %c0_114 = arith.constant 0 : index
    %c0_115 = arith.constant 0 : index
    %217 = vector.load %arg13[%c0_114, %c0_115] : memref<1x128xf32, #tpu.memory_space<vmem>>, vector<1x128xf32>
    %218 = vector.broadcast %217 : vector<1x128xf32> to vector<32x128xf32>
    %219 = arith.addf %216, %218 : vector<32x128xf32>
    %cst_116 = arith.constant 0.000000e+00 : f32
    %220 = vector.broadcast %cst_116 : f32 to vector<32x128xf32>
    %221 = arith.maximumf %219, %220 : vector<32x128xf32>
    %222 = arith.truncf %221 : vector<32x128xf32> to vector<32x128xbf16>
    %c0_117 = arith.constant 0 : index
    %c0_118 = arith.constant 0 : index
    %223 = vector.load %arg42[%c0_117, %c0_118] : memref<32x128xbf16, #tpu.memory_space<vmem>>, vector<32x128xbf16>
    tpu.vector_store %arg42[%c0_117, %c0_118], %222 {strides = array<i32>} : memref<32x128xbf16, #tpu.memory_space<vmem>>, vector<32x128xbf16>,
    %c0_119 = arith.constant 0 : index
    %c0_120 = arith.constant 0 : index
    %224 = vector.load %arg42[%c0_119, %c0_120] : memref<32x128xbf16, #tpu.memory_space<vmem>>, vector<32x128xbf16>
    %c0_121 = arith.constant 0 : index
    %c0_122 = arith.constant 0 : index
    %225 = vector.load %arg14[%c0_121, %c0_122] : memref<128x32xbf16, #tpu.memory_space<vmem>>, vector<128x32xbf16>
    %cst_123 = arith.constant dense<0.000000e+00> : vector<32x32xf32>
    %226 = tpu.matmul %224, %225, %cst_123 {dimension_numbers = #tpu.dot_dimension_numbers<[1], [0], [0], [1], [0, 0, 1, 1], [], []>} : vector<32x128xbf16>, vector<128x32xbf16>, vector<32x32xf32> -> vector<32x32xf32>
    %227 = arith.truncf %226 : vector<32x32xf32> to vector<32x32xbf16>
    %c15_124 = arith.constant 15 : index
    %c0_125 = arith.constant 0 : index
    %228 = vector.load %arg43[%c15_124, %c0_125] : memref<56x256xbf16, #tpu.memory_space<vmem>>, vector<32x32xbf16>
    tpu.vector_store %arg43[%c15_124, %c0_125], %227 {strides = array<i32>} : memref<56x256xbf16, #tpu.memory_space<vmem>>, vector<32x32xbf16>,
    %c14_126 = arith.constant 14 : index
    %c32_127 = arith.constant 32 : index
    %229 = vector.load %arg43[%c14_126, %c32_127] : memref<56x256xbf16, #tpu.memory_space<vmem>>, vector<32x32xbf16>
    tpu.vector_store %arg43[%c14_126, %c32_127], %227 {strides = array<i32>} : memref<56x256xbf16, #tpu.memory_space<vmem>>, vector<32x32xbf16>,
    %c13_128 = arith.constant 13 : index
    %c64_129 = arith.constant 64 : index
    %230 = vector.load %arg43[%c13_128, %c64_129] : memref<56x256xbf16, #tpu.memory_space<vmem>>, vector<32x32xbf16>
    tpu.vector_store %arg43[%c13_128, %c64_129], %227 {strides = array<i32>} : memref<56x256xbf16, #tpu.memory_space<vmem>>, vector<32x32xbf16>,
    %c12_130 = arith.constant 12 : index
    %c96_131 = arith.constant 96 : index
    %231 = vector.load %arg43[%c12_130, %c96_131] : memref<56x256xbf16, #tpu.memory_space<vmem>>, vector<32x32xbf16>
    tpu.vector_store %arg43[%c12_130, %c96_131], %227 {strides = array<i32>} : memref<56x256xbf16, #tpu.memory_space<vmem>>, vector<32x32xbf16>,
    %c11_132 = arith.constant 11 : index
    %c128_133 = arith.constant 128 : index
    %232 = vector.load %arg43[%c11_132, %c128_133] : memref<56x256xbf16, #tpu.memory_space<vmem>>, vector<32x32xbf16>
    tpu.vector_store %arg43[%c11_132, %c128_133], %227 {strides = array<i32>} : memref<56x256xbf16, #tpu.memory_space<vmem>>, vector<32x32xbf16>,
    %c10_134 = arith.constant 10 : index
    %c160_135 = arith.constant 160 : index
    %233 = vector.load %arg43[%c10_134, %c160_135] : memref<56x256xbf16, #tpu.memory_space<vmem>>, vector<32x32xbf16>
    tpu.vector_store %arg43[%c10_134, %c160_135], %227 {strides = array<i32>} : memref<56x256xbf16, #tpu.memory_space<vmem>>, vector<32x32xbf16>,
    %c9_136 = arith.constant 9 : index
    %c192_137 = arith.constant 192 : index
    %234 = vector.load %arg43[%c9_136, %c192_137] : memref<56x256xbf16, #tpu.memory_space<vmem>>, vector<32x32xbf16>
    tpu.vector_store %arg43[%c9_136, %c192_137], %227 {strides = array<i32>} : memref<56x256xbf16, #tpu.memory_space<vmem>>, vector<32x32xbf16>,
    %c8_138 = arith.constant 8 : index
    %c224_139 = arith.constant 224 : index
    %235 = vector.load %arg43[%c8_138, %c224_139] : memref<56x256xbf16, #tpu.memory_space<vmem>>, vector<32x32xbf16>
    tpu.vector_store %arg43[%c8_138, %c224_139], %227 {strides = array<i32>} : memref<56x256xbf16, #tpu.memory_space<vmem>>, vector<32x32xbf16>,
    %c-15_i32_140 = arith.constant -15 : i32
    %236 = vector.broadcast %c-15_i32_140 : i32 to vector<1x256xi32>
    %237 = arith.addi %5, %236 : vector<1x256xi32>
    %238 = vector.broadcast %0 : vector<32x1xi32> to vector<32x256xi32>
    %239 = vector.broadcast %237 : vector<1x256xi32> to vector<32x256xi32>
    %240 = arith.addi %238, %239 : vector<32x256xi32>
    %c0_i32_141 = arith.constant 0 : i32
    %241 = vector.broadcast %c0_i32_141 : i32 to vector<32x256xi32>
    %242 = arith.cmpi sge, %240, %241 : vector<32x256xi32>
    %c16_i32_142 = arith.constant 16 : i32
    %243 = vector.broadcast %c16_i32_142 : i32 to vector<32x256xi32>
    %244 = arith.cmpi slt, %240, %243 : vector<32x256xi32>
    %245 = arith.andi %242, %244 : vector<32x256xi1>
    %c0_143 = arith.constant 0 : index
    %c0_144 = arith.constant 0 : index
    %246 = vector.load %arg43[%c0_143, %c0_144] : memref<56x256xbf16, #tpu.memory_space<vmem>>, vector<32x256xbf16>
    %cst_145 = arith.constant 0.000000e+00 : bf16
    %247 = vector.broadcast %cst_145 : bf16 to vector<32x256xbf16>
    %248 = arith.select %245, %246, %247 : vector<32x256xi1>, vector<32x256xbf16>
    %c0_146 = arith.constant 0 : index
    %c0_147 = arith.constant 0 : index
    %c0_148 = arith.constant 0 : index
    %249 = vector.load %arg15[%c0_146, %c0_147, %c0_148] : memref<4x256x128xbf16, #tpu.memory_space<vmem>>, vector<1x256x128xbf16>
    %250 = vector.shape_cast %249 : vector<1x256x128xbf16> to vector<256x128xbf16>
    %cst_149 = arith.constant dense<0.000000e+00> : vector<32x128xf32>
    %251 = tpu.matmul %248, %250, %cst_149 {dimension_numbers = #tpu.dot_dimension_numbers<[1], [0], [0], [1], [0, 0, 1, 1], [], []>} : vector<32x256xbf16>, vector<256x128xbf16>, vector<32x128xf32> -> vector<32x128xf32>
    %c-7_i32_150 = arith.constant -7 : i32
    %252 = vector.broadcast %c-7_i32_150 : i32 to vector<1x256xi32>
    %253 = arith.addi %5, %252 : vector<1x256xi32>
    %254 = vector.broadcast %0 : vector<32x1xi32> to vector<32x256xi32>
    %255 = vector.broadcast %253 : vector<1x256xi32> to vector<32x256xi32>
    %256 = arith.addi %254, %255 : vector<32x256xi32>
    %c0_i32_151 = arith.constant 0 : i32
    %257 = vector.broadcast %c0_i32_151 : i32 to vector<32x256xi32>
    %258 = arith.cmpi sge, %256, %257 : vector<32x256xi32>
    %c16_i32_152 = arith.constant 16 : i32
    %259 = vector.broadcast %c16_i32_152 : i32 to vector<32x256xi32>
    %260 = arith.cmpi slt, %256, %259 : vector<32x256xi32>
    %261 = arith.andi %258, %260 : vector<32x256xi1>
    %c8_153 = arith.constant 8 : index
    %c0_154 = arith.constant 0 : index
    %262 = vector.load %arg43[%c8_153, %c0_154] : memref<56x256xbf16, #tpu.memory_space<vmem>>, vector<32x256xbf16>
    %cst_155 = arith.constant 0.000000e+00 : bf16
    %263 = vector.broadcast %cst_155 : bf16 to vector<32x256xbf16>
    %264 = arith.select %261, %262, %263 : vector<32x256xi1>, vector<32x256xbf16>
    %c1_156 = arith.constant 1 : index
    %c0_157 = arith.constant 0 : index
    %c0_158 = arith.constant 0 : index
    %265 = vector.load %arg15[%c1_156, %c0_157, %c0_158] : memref<4x256x128xbf16, #tpu.memory_space<vmem>>, vector<1x256x128xbf16>
    %266 = vector.shape_cast %265 : vector<1x256x128xbf16> to vector<256x128xbf16>
    %cst_159 = arith.constant dense<0.000000e+00> : vector<32x128xf32>
    %267 = tpu.matmul %264, %266, %cst_159 {dimension_numbers = #tpu.dot_dimension_numbers<[1], [0], [0], [1], [0, 0, 1, 1], [], []>} : vector<32x256xbf16>, vector<256x128xbf16>, vector<32x128xf32> -> vector<32x128xf32>
    %268 = arith.addf %251, %267 : vector<32x128xf32>
    %c1_i32_160 = arith.constant 1 : i32
    %269 = vector.broadcast %c1_i32_160 : i32 to vector<1x256xi32>
    %270 = arith.addi %5, %269 : vector<1x256xi32>
    %271 = vector.broadcast %0 : vector<32x1xi32> to vector<32x256xi32>
    %272 = vector.broadcast %270 : vector<1x256xi32> to vector<32x256xi32>
    %273 = arith.addi %271, %272 : vector<32x256xi32>
    %c0_i32_161 = arith.constant 0 : i32
    %274 = vector.broadcast %c0_i32_161 : i32 to vector<32x256xi32>
    %275 = arith.cmpi sge, %273, %274 : vector<32x256xi32>
    %c16_i32_162 = arith.constant 16 : i32
    %276 = vector.broadcast %c16_i32_162 : i32 to vector<32x256xi32>
    %277 = arith.cmpi slt, %273, %276 : vector<32x256xi32>
    %278 = arith.andi %275, %277 : vector<32x256xi1>
    %c16_163 = arith.constant 16 : index
    %c0_164 = arith.constant 0 : index
    %279 = vector.load %arg43[%c16_163, %c0_164] : memref<56x256xbf16, #tpu.memory_space<vmem>>, vector<32x256xbf16>
    %cst_165 = arith.constant 0.000000e+00 : bf16
    %280 = vector.broadcast %cst_165 : bf16 to vector<32x256xbf16>
    %281 = arith.select %278, %279, %280 : vector<32x256xi1>, vector<32x256xbf16>
    %c2_166 = arith.constant 2 : index
    %c0_167 = arith.constant 0 : index
    %c0_168 = arith.constant 0 : index
    %282 = vector.load %arg15[%c2_166, %c0_167, %c0_168] : memref<4x256x128xbf16, #tpu.memory_space<vmem>>, vector<1x256x128xbf16>
    %283 = vector.shape_cast %282 : vector<1x256x128xbf16> to vector<256x128xbf16>
    %cst_169 = arith.constant dense<0.000000e+00> : vector<32x128xf32>
    %284 = tpu.matmul %281, %283, %cst_169 {dimension_numbers = #tpu.dot_dimension_numbers<[1], [0], [0], [1], [0, 0, 1, 1], [], []>} : vector<32x256xbf16>, vector<256x128xbf16>, vector<32x128xf32> -> vector<32x128xf32>
    %285 = arith.addf %268, %284 : vector<32x128xf32>
    %c9_i32_170 = arith.constant 9 : i32
    %286 = vector.broadcast %c9_i32_170 : i32 to vector<1x256xi32>
    %287 = arith.addi %5, %286 : vector<1x256xi32>
    %288 = vector.broadcast %0 : vector<32x1xi32> to vector<32x256xi32>
    %289 = vector.broadcast %287 : vector<1x256xi32> to vector<32x256xi32>
    %290 = arith.addi %288, %289 : vector<32x256xi32>
    %c0_i32_171 = arith.constant 0 : i32
    %291 = vector.broadcast %c0_i32_171 : i32 to vector<32x256xi32>
    %292 = arith.cmpi sge, %290, %291 : vector<32x256xi32>
    %c16_i32_172 = arith.constant 16 : i32
    %293 = vector.broadcast %c16_i32_172 : i32 to vector<32x256xi32>
    %294 = arith.cmpi slt, %290, %293 : vector<32x256xi32>
    %295 = arith.andi %292, %294 : vector<32x256xi1>
    %c24_173 = arith.constant 24 : index
    %c0_174 = arith.constant 0 : index
    %296 = vector.load %arg43[%c24_173, %c0_174] : memref<56x256xbf16, #tpu.memory_space<vmem>>, vector<32x256xbf16>
    %cst_175 = arith.constant 0.000000e+00 : bf16
    %297 = vector.broadcast %cst_175 : bf16 to vector<32x256xbf16>
    %298 = arith.select %295, %296, %297 : vector<32x256xi1>, vector<32x256xbf16>
    %c3_176 = arith.constant 3 : index
    %c0_177 = arith.constant 0 : index
    %c0_178 = arith.constant 0 : index
    %299 = vector.load %arg15[%c3_176, %c0_177, %c0_178] : memref<4x256x128xbf16, #tpu.memory_space<vmem>>, vector<1x256x128xbf16>
    %300 = vector.shape_cast %299 : vector<1x256x128xbf16> to vector<256x128xbf16>
    %cst_179 = arith.constant dense<0.000000e+00> : vector<32x128xf32>
    %301 = tpu.matmul %298, %300, %cst_179 {dimension_numbers = #tpu.dot_dimension_numbers<[1], [0], [0], [1], [0, 0, 1, 1], [], []>} : vector<32x256xbf16>, vector<256x128xbf16>, vector<32x128xf32> -> vector<32x128xf32>
    %302 = arith.addf %285, %301 : vector<32x128xf32>
    %303 = vector.extract_strided_slice %224 {offsets = [0, 0], sizes = [1, 128], strides = [1, 1]} : vector<32x128xbf16> to vector<1x128xbf16>
    %304 = vector.extract_strided_slice %224 {offsets = [0, 0], sizes = [31, 128], strides = [1, 1]} : vector<32x128xbf16> to vector<31x128xbf16>
    %305 = tpu.concatenate %303, %304 in 0 : vector<1x128xbf16>, vector<31x128xbf16> -> vector<32x128xbf16>
    %306 = vector.extract_strided_slice %224 {offsets = [1, 0], sizes = [31, 128], strides = [1, 1]} : vector<32x128xbf16> to vector<31x128xbf16>
    %307 = vector.extract_strided_slice %224 {offsets = [31, 0], sizes = [1, 128], strides = [1, 1]} : vector<32x128xbf16> to vector<1x128xbf16>
    %308 = tpu.concatenate %306, %307 in 0 : vector<31x128xbf16>, vector<1x128xbf16> -> vector<32x128xbf16>
    %309 = vector.shape_cast %2 : vector<32x1xi1> to vector<32x1xi1>
    %310 = vector.broadcast %309 : vector<32x1xi1> to vector<32x128xi1>
    %311 = arith.select %310, %224, %305 : vector<32x128xi1>, vector<32x128xbf16>
    %312 = vector.shape_cast %4 : vector<32x1xi1> to vector<32x1xi1>
    %313 = vector.broadcast %312 : vector<32x1xi1> to vector<32x128xi1>
    %314 = arith.select %313, %224, %308 : vector<32x128xi1>, vector<32x128xbf16>
    %315 = arith.maximumf %311, %224 : vector<32x128xbf16>
    %316 = arith.maximumf %315, %314 : vector<32x128xbf16>
    %c0_180 = arith.constant 0 : index
    %c0_181 = arith.constant 0 : index
    %317 = vector.load %arg16[%c0_180, %c0_181] : memref<128x32xbf16, #tpu.memory_space<vmem>>, vector<128x32xbf16>
    %cst_182 = arith.constant dense<0.000000e+00> : vector<32x32xf32>
    %318 = tpu.matmul %316, %317, %cst_182 {dimension_numbers = #tpu.dot_dimension_numbers<[1], [0], [0], [1], [0, 0, 1, 1], [], []>} : vector<32x128xbf16>, vector<128x32xbf16>, vector<32x32xf32> -> vector<32x32xf32>
    %319 = vector.extract_strided_slice %302 {offsets = [0, 0], sizes = [32, 96], strides = [1, 1]} : vector<32x128xf32> to vector<32x96xf32>
    %320 = vector.extract_strided_slice %302 {offsets = [0, 96], sizes = [32, 32], strides = [1, 1]} : vector<32x128xf32> to vector<32x32xf32>
    %321 = arith.addf %320, %318 : vector<32x32xf32>
    %322 = tpu.concatenate %319, %321 in 1 : vector<32x96xf32>, vector<32x32xf32> -> vector<32x128xf32>
    %c0_183 = arith.constant 0 : index
    %c0_184 = arith.constant 0 : index
    %323 = vector.load %arg17[%c0_183, %c0_184] : memref<1x128xf32, #tpu.memory_space<vmem>>, vector<1x128xf32>
    %324 = vector.broadcast %323 : vector<1x128xf32> to vector<32x128xf32>
    %325 = arith.mulf %322, %324 : vector<32x128xf32>
    %c0_185 = arith.constant 0 : index
    %c0_186 = arith.constant 0 : index
    %326 = vector.load %arg18[%c0_185, %c0_186] : memref<1x128xf32, #tpu.memory_space<vmem>>, vector<1x128xf32>
    %327 = vector.broadcast %326 : vector<1x128xf32> to vector<32x128xf32>
    %328 = arith.addf %325, %327 : vector<32x128xf32>
    %cst_187 = arith.constant 0.000000e+00 : f32
    %329 = vector.broadcast %cst_187 : f32 to vector<32x128xf32>
    %330 = arith.maximumf %328, %329 : vector<32x128xf32>
    %c0_188 = arith.constant 0 : index
    %c0_189 = arith.constant 0 : index
    %331 = vector.load %arg1[%c0_188, %c0_189] : memref<32x4xbf16, #tpu.memory_space<vmem>>, vector<32x4xbf16>
    %c0_190 = arith.constant 0 : index
    %c0_191 = arith.constant 0 : index
    %332 = vector.load %arg34[%c0_190, %c0_191] : memref<4x128xbf16, #tpu.memory_space<vmem>>, vector<4x128xbf16>
    %cst_192 = arith.constant dense<0.000000e+00> : vector<32x128xf32>
    %333 = tpu.matmul %331, %332, %cst_192 {dimension_numbers = #tpu.dot_dimension_numbers<[1], [0], [0], [1], [0, 0, 1, 1], [], []>} : vector<32x4xbf16>, vector<4x128xbf16>, vector<32x128xf32> -> vector<32x128xf32>
    %c0_193 = arith.constant 0 : index
    %c0_194 = arith.constant 0 : index
    %334 = vector.load %arg35[%c0_193, %c0_194] : memref<1x128xf32, #tpu.memory_space<vmem>>, vector<1x128xf32>
    %335 = vector.broadcast %334 : vector<1x128xf32> to vector<32x128xf32>
    %336 = arith.mulf %333, %335 : vector<32x128xf32>
    %337 = arith.addf %330, %336 : vector<32x128xf32>
    %c0_195 = arith.constant 0 : index
    %c0_196 = arith.constant 0 : index
    %338 = vector.load %arg36[%c0_195, %c0_196] : memref<1x128xf32, #tpu.memory_space<vmem>>, vector<1x128xf32>
    %339 = vector.broadcast %338 : vector<1x128xf32> to vector<32x128xf32>
    %340 = arith.addf %337, %339 : vector<32x128xf32>
    %cst_197 = arith.constant 0.000000e+00 : f32
    %341 = vector.broadcast %cst_197 : f32 to vector<32x128xf32>
    %342 = arith.maximumf %340, %341 : vector<32x128xf32>
    %343 = arith.truncf %342 : vector<32x128xf32> to vector<32x128xbf16>
    %c0_198 = arith.constant 0 : index
    %c0_199 = arith.constant 0 : index
    %344 = vector.load %arg41[%c0_198, %c0_199] : memref<32x128xbf16, #tpu.memory_space<vmem>>, vector<32x128xbf16>
    tpu.vector_store %arg41[%c0_198, %c0_199], %343 {strides = array<i32>} : memref<32x128xbf16, #tpu.memory_space<vmem>>, vector<32x128xbf16>,
    %c0_200 = arith.constant 0 : index
    %c0_201 = arith.constant 0 : index
    %345 = vector.load %arg41[%c0_200, %c0_201] : memref<32x128xbf16, #tpu.memory_space<vmem>>, vector<32x128xbf16>
    %c0_202 = arith.constant 0 : index
    %c0_203 = arith.constant 0 : index
    %346 = vector.load %arg19[%c0_202, %c0_203] : memref<128x32xbf16, #tpu.memory_space<vmem>>, vector<128x32xbf16>
    %cst_204 = arith.constant dense<0.000000e+00> : vector<32x32xf32>
    %347 = tpu.matmul %345, %346, %cst_204 {dimension_numbers = #tpu.dot_dimension_numbers<[1], [0], [0], [1], [0, 0, 1, 1], [], []>} : vector<32x128xbf16>, vector<128x32xbf16>, vector<32x32xf32> -> vector<32x32xf32>
    %348 = arith.truncf %347 : vector<32x32xf32> to vector<32x32xbf16>
    %c15_205 = arith.constant 15 : index
    %c0_206 = arith.constant 0 : index
    %349 = vector.load %arg43[%c15_205, %c0_206] : memref<56x256xbf16, #tpu.memory_space<vmem>>, vector<32x32xbf16>
    tpu.vector_store %arg43[%c15_205, %c0_206], %348 {strides = array<i32>} : memref<56x256xbf16, #tpu.memory_space<vmem>>, vector<32x32xbf16>,
    %c14_207 = arith.constant 14 : index
    %c32_208 = arith.constant 32 : index
    %350 = vector.load %arg43[%c14_207, %c32_208] : memref<56x256xbf16, #tpu.memory_space<vmem>>, vector<32x32xbf16>
    tpu.vector_store %arg43[%c14_207, %c32_208], %348 {strides = array<i32>} : memref<56x256xbf16, #tpu.memory_space<vmem>>, vector<32x32xbf16>,
    %c13_209 = arith.constant 13 : index
    %c64_210 = arith.constant 64 : index
    %351 = vector.load %arg43[%c13_209, %c64_210] : memref<56x256xbf16, #tpu.memory_space<vmem>>, vector<32x32xbf16>
    tpu.vector_store %arg43[%c13_209, %c64_210], %348 {strides = array<i32>} : memref<56x256xbf16, #tpu.memory_space<vmem>>, vector<32x32xbf16>,
    %c12_211 = arith.constant 12 : index
    %c96_212 = arith.constant 96 : index
    %352 = vector.load %arg43[%c12_211, %c96_212] : memref<56x256xbf16, #tpu.memory_space<vmem>>, vector<32x32xbf16>
    tpu.vector_store %arg43[%c12_211, %c96_212], %348 {strides = array<i32>} : memref<56x256xbf16, #tpu.memory_space<vmem>>, vector<32x32xbf16>,
    %c11_213 = arith.constant 11 : index
    %c128_214 = arith.constant 128 : index
    %353 = vector.load %arg43[%c11_213, %c128_214] : memref<56x256xbf16, #tpu.memory_space<vmem>>, vector<32x32xbf16>
    tpu.vector_store %arg43[%c11_213, %c128_214], %348 {strides = array<i32>} : memref<56x256xbf16, #tpu.memory_space<vmem>>, vector<32x32xbf16>,
    %c10_215 = arith.constant 10 : index
    %c160_216 = arith.constant 160 : index
    %354 = vector.load %arg43[%c10_215, %c160_216] : memref<56x256xbf16, #tpu.memory_space<vmem>>, vector<32x32xbf16>
    tpu.vector_store %arg43[%c10_215, %c160_216], %348 {strides = array<i32>} : memref<56x256xbf16, #tpu.memory_space<vmem>>, vector<32x32xbf16>,
    %c9_217 = arith.constant 9 : index
    %c192_218 = arith.constant 192 : index
    %355 = vector.load %arg43[%c9_217, %c192_218] : memref<56x256xbf16, #tpu.memory_space<vmem>>, vector<32x32xbf16>
    tpu.vector_store %arg43[%c9_217, %c192_218], %348 {strides = array<i32>} : memref<56x256xbf16, #tpu.memory_space<vmem>>, vector<32x32xbf16>,
    %c8_219 = arith.constant 8 : index
    %c224_220 = arith.constant 224 : index
    %356 = vector.load %arg43[%c8_219, %c224_220] : memref<56x256xbf16, #tpu.memory_space<vmem>>, vector<32x32xbf16>
    tpu.vector_store %arg43[%c8_219, %c224_220], %348 {strides = array<i32>} : memref<56x256xbf16, #tpu.memory_space<vmem>>, vector<32x32xbf16>,
    %c-15_i32_221 = arith.constant -15 : i32
    %357 = vector.broadcast %c-15_i32_221 : i32 to vector<1x256xi32>
    %358 = arith.addi %5, %357 : vector<1x256xi32>
    %359 = vector.broadcast %0 : vector<32x1xi32> to vector<32x256xi32>
    %360 = vector.broadcast %358 : vector<1x256xi32> to vector<32x256xi32>
    %361 = arith.addi %359, %360 : vector<32x256xi32>
    %c0_i32_222 = arith.constant 0 : i32
    %362 = vector.broadcast %c0_i32_222 : i32 to vector<32x256xi32>
    %363 = arith.cmpi sge, %361, %362 : vector<32x256xi32>
    %c16_i32_223 = arith.constant 16 : i32
    %364 = vector.broadcast %c16_i32_223 : i32 to vector<32x256xi32>
    %365 = arith.cmpi slt, %361, %364 : vector<32x256xi32>
    %366 = arith.andi %363, %365 : vector<32x256xi1>
    %c0_224 = arith.constant 0 : index
    %c0_225 = arith.constant 0 : index
    %367 = vector.load %arg43[%c0_224, %c0_225] : memref<56x256xbf16, #tpu.memory_space<vmem>>, vector<32x256xbf16>
    %cst_226 = arith.constant 0.000000e+00 : bf16
    %368 = vector.broadcast %cst_226 : bf16 to vector<32x256xbf16>
    %369 = arith.select %366, %367, %368 : vector<32x256xi1>, vector<32x256xbf16>
    %c0_227 = arith.constant 0 : index
    %c0_228 = arith.constant 0 : index
    %c0_229 = arith.constant 0 : index
    %370 = vector.load %arg20[%c0_227, %c0_228, %c0_229] : memref<4x256x128xbf16, #tpu.memory_space<vmem>>, vector<1x256x128xbf16>
    %371 = vector.shape_cast %370 : vector<1x256x128xbf16> to vector<256x128xbf16>
    %cst_230 = arith.constant dense<0.000000e+00> : vector<32x128xf32>
    %372 = tpu.matmul %369, %371, %cst_230 {dimension_numbers = #tpu.dot_dimension_numbers<[1], [0], [0], [1], [0, 0, 1, 1], [], []>} : vector<32x256xbf16>, vector<256x128xbf16>, vector<32x128xf32> -> vector<32x128xf32>
    %c-7_i32_231 = arith.constant -7 : i32
    %373 = vector.broadcast %c-7_i32_231 : i32 to vector<1x256xi32>
    %374 = arith.addi %5, %373 : vector<1x256xi32>
    %375 = vector.broadcast %0 : vector<32x1xi32> to vector<32x256xi32>
    %376 = vector.broadcast %374 : vector<1x256xi32> to vector<32x256xi32>
    %377 = arith.addi %375, %376 : vector<32x256xi32>
    %c0_i32_232 = arith.constant 0 : i32
    %378 = vector.broadcast %c0_i32_232 : i32 to vector<32x256xi32>
    %379 = arith.cmpi sge, %377, %378 : vector<32x256xi32>
    %c16_i32_233 = arith.constant 16 : i32
    %380 = vector.broadcast %c16_i32_233 : i32 to vector<32x256xi32>
    %381 = arith.cmpi slt, %377, %380 : vector<32x256xi32>
    %382 = arith.andi %379, %381 : vector<32x256xi1>
    %c8_234 = arith.constant 8 : index
    %c0_235 = arith.constant 0 : index
    %383 = vector.load %arg43[%c8_234, %c0_235] : memref<56x256xbf16, #tpu.memory_space<vmem>>, vector<32x256xbf16>
    %cst_236 = arith.constant 0.000000e+00 : bf16
    %384 = vector.broadcast %cst_236 : bf16 to vector<32x256xbf16>
    %385 = arith.select %382, %383, %384 : vector<32x256xi1>, vector<32x256xbf16>
    %c1_237 = arith.constant 1 : index
    %c0_238 = arith.constant 0 : index
    %c0_239 = arith.constant 0 : index
    %386 = vector.load %arg20[%c1_237, %c0_238, %c0_239] : memref<4x256x128xbf16, #tpu.memory_space<vmem>>, vector<1x256x128xbf16>
    %387 = vector.shape_cast %386 : vector<1x256x128xbf16> to vector<256x128xbf16>
    %cst_240 = arith.constant dense<0.000000e+00> : vector<32x128xf32>
    %388 = tpu.matmul %385, %387, %cst_240 {dimension_numbers = #tpu.dot_dimension_numbers<[1], [0], [0], [1], [0, 0, 1, 1], [], []>} : vector<32x256xbf16>, vector<256x128xbf16>, vector<32x128xf32> -> vector<32x128xf32>
    %389 = arith.addf %372, %388 : vector<32x128xf32>
    %c1_i32_241 = arith.constant 1 : i32
    %390 = vector.broadcast %c1_i32_241 : i32 to vector<1x256xi32>
    %391 = arith.addi %5, %390 : vector<1x256xi32>
    %392 = vector.broadcast %0 : vector<32x1xi32> to vector<32x256xi32>
    %393 = vector.broadcast %391 : vector<1x256xi32> to vector<32x256xi32>
    %394 = arith.addi %392, %393 : vector<32x256xi32>
    %c0_i32_242 = arith.constant 0 : i32
    %395 = vector.broadcast %c0_i32_242 : i32 to vector<32x256xi32>
    %396 = arith.cmpi sge, %394, %395 : vector<32x256xi32>
    %c16_i32_243 = arith.constant 16 : i32
    %397 = vector.broadcast %c16_i32_243 : i32 to vector<32x256xi32>
    %398 = arith.cmpi slt, %394, %397 : vector<32x256xi32>
    %399 = arith.andi %396, %398 : vector<32x256xi1>
    %c16_244 = arith.constant 16 : index
    %c0_245 = arith.constant 0 : index
    %400 = vector.load %arg43[%c16_244, %c0_245] : memref<56x256xbf16, #tpu.memory_space<vmem>>, vector<32x256xbf16>
    %cst_246 = arith.constant 0.000000e+00 : bf16
    %401 = vector.broadcast %cst_246 : bf16 to vector<32x256xbf16>
    %402 = arith.select %399, %400, %401 : vector<32x256xi1>, vector<32x256xbf16>
    %c2_247 = arith.constant 2 : index
    %c0_248 = arith.constant 0 : index
    %c0_249 = arith.constant 0 : index
    %403 = vector.load %arg20[%c2_247, %c0_248, %c0_249] : memref<4x256x128xbf16, #tpu.memory_space<vmem>>, vector<1x256x128xbf16>
    %404 = vector.shape_cast %403 : vector<1x256x128xbf16> to vector<256x128xbf16>
    %cst_250 = arith.constant dense<0.000000e+00> : vector<32x128xf32>
    %405 = tpu.matmul %402, %404, %cst_250 {dimension_numbers = #tpu.dot_dimension_numbers<[1], [0], [0], [1], [0, 0, 1, 1], [], []>} : vector<32x256xbf16>, vector<256x128xbf16>, vector<32x128xf32> -> vector<32x128xf32>
    %406 = arith.addf %389, %405 : vector<32x128xf32>
    %c9_i32_251 = arith.constant 9 : i32
    %407 = vector.broadcast %c9_i32_251 : i32 to vector<1x256xi32>
    %408 = arith.addi %5, %407 : vector<1x256xi32>
    %409 = vector.broadcast %0 : vector<32x1xi32> to vector<32x256xi32>
    %410 = vector.broadcast %408 : vector<1x256xi32> to vector<32x256xi32>
    %411 = arith.addi %409, %410 : vector<32x256xi32>
    %c0_i32_252 = arith.constant 0 : i32
    %412 = vector.broadcast %c0_i32_252 : i32 to vector<32x256xi32>
    %413 = arith.cmpi sge, %411, %412 : vector<32x256xi32>
    %c16_i32_253 = arith.constant 16 : i32
    %414 = vector.broadcast %c16_i32_253 : i32 to vector<32x256xi32>
    %415 = arith.cmpi slt, %411, %414 : vector<32x256xi32>
    %416 = arith.andi %413, %415 : vector<32x256xi1>
    %c24_254 = arith.constant 24 : index
    %c0_255 = arith.constant 0 : index
    %417 = vector.load %arg43[%c24_254, %c0_255] : memref<56x256xbf16, #tpu.memory_space<vmem>>, vector<32x256xbf16>
    %cst_256 = arith.constant 0.000000e+00 : bf16
    %418 = vector.broadcast %cst_256 : bf16 to vector<32x256xbf16>
    %419 = arith.select %416, %417, %418 : vector<32x256xi1>, vector<32x256xbf16>
    %c3_257 = arith.constant 3 : index
    %c0_258 = arith.constant 0 : index
    %c0_259 = arith.constant 0 : index
    %420 = vector.load %arg20[%c3_257, %c0_258, %c0_259] : memref<4x256x128xbf16, #tpu.memory_space<vmem>>, vector<1x256x128xbf16>
    %421 = vector.shape_cast %420 : vector<1x256x128xbf16> to vector<256x128xbf16>
    %cst_260 = arith.constant dense<0.000000e+00> : vector<32x128xf32>
    %422 = tpu.matmul %419, %421, %cst_260 {dimension_numbers = #tpu.dot_dimension_numbers<[1], [0], [0], [1], [0, 0, 1, 1], [], []>} : vector<32x256xbf16>, vector<256x128xbf16>, vector<32x128xf32> -> vector<32x128xf32>
    %423 = arith.addf %406, %422 : vector<32x128xf32>
    %424 = vector.extract_strided_slice %345 {offsets = [0, 0], sizes = [1, 128], strides = [1, 1]} : vector<32x128xbf16> to vector<1x128xbf16>
    %425 = vector.extract_strided_slice %345 {offsets = [0, 0], sizes = [31, 128], strides = [1, 1]} : vector<32x128xbf16> to vector<31x128xbf16>
    %426 = tpu.concatenate %424, %425 in 0 : vector<1x128xbf16>, vector<31x128xbf16> -> vector<32x128xbf16>
    %427 = vector.extract_strided_slice %345 {offsets = [1, 0], sizes = [31, 128], strides = [1, 1]} : vector<32x128xbf16> to vector<31x128xbf16>
    %428 = vector.extract_strided_slice %345 {offsets = [31, 0], sizes = [1, 128], strides = [1, 1]} : vector<32x128xbf16> to vector<1x128xbf16>
    %429 = tpu.concatenate %427, %428 in 0 : vector<31x128xbf16>, vector<1x128xbf16> -> vector<32x128xbf16>
    %430 = vector.shape_cast %2 : vector<32x1xi1> to vector<32x1xi1>
    %431 = vector.broadcast %430 : vector<32x1xi1> to vector<32x128xi1>
    %432 = arith.select %431, %345, %426 : vector<32x128xi1>, vector<32x128xbf16>
    %433 = vector.shape_cast %4 : vector<32x1xi1> to vector<32x1xi1>
    %434 = vector.broadcast %433 : vector<32x1xi1> to vector<32x128xi1>
    %435 = arith.select %434, %345, %429 : vector<32x128xi1>, vector<32x128xbf16>
    %436 = arith.maximumf %432, %345 : vector<32x128xbf16>
    %437 = arith.maximumf %436, %435 : vector<32x128xbf16>
    %c0_261 = arith.constant 0 : index
    %c0_262 = arith.constant 0 : index
    %438 = vector.load %arg21[%c0_261, %c0_262] : memref<128x32xbf16, #tpu.memory_space<vmem>>, vector<128x32xbf16>
    %cst_263 = arith.constant dense<0.000000e+00> : vector<32x32xf32>
    %439 = tpu.matmul %437, %438, %cst_263 {dimension_numbers = #tpu.dot_dimension_numbers<[1], [0], [0], [1], [0, 0, 1, 1], [], []>} : vector<32x128xbf16>, vector<128x32xbf16>, vector<32x32xf32> -> vector<32x32xf32>
    %440 = vector.extract_strided_slice %423 {offsets = [0, 0], sizes = [32, 96], strides = [1, 1]} : vector<32x128xf32> to vector<32x96xf32>
    %441 = vector.extract_strided_slice %423 {offsets = [0, 96], sizes = [32, 32], strides = [1, 1]} : vector<32x128xf32> to vector<32x32xf32>
    %442 = arith.addf %441, %439 : vector<32x32xf32>
    %443 = tpu.concatenate %440, %442 in 1 : vector<32x96xf32>, vector<32x32xf32> -> vector<32x128xf32>
    %c0_264 = arith.constant 0 : index
    %c0_265 = arith.constant 0 : index
    %444 = vector.load %arg22[%c0_264, %c0_265] : memref<1x128xf32, #tpu.memory_space<vmem>>, vector<1x128xf32>
    %445 = vector.broadcast %444 : vector<1x128xf32> to vector<32x128xf32>
    %446 = arith.mulf %443, %445 : vector<32x128xf32>
    %c0_266 = arith.constant 0 : index
    %c0_267 = arith.constant 0 : index
    %447 = vector.load %arg23[%c0_266, %c0_267] : memref<1x128xf32, #tpu.memory_space<vmem>>, vector<1x128xf32>
    %448 = vector.broadcast %447 : vector<1x128xf32> to vector<32x128xf32>
    %449 = arith.addf %446, %448 : vector<32x128xf32>
    %cst_268 = arith.constant 0.000000e+00 : f32
    %450 = vector.broadcast %cst_268 : f32 to vector<32x128xf32>
    %451 = arith.maximumf %449, %450 : vector<32x128xf32>
    %452 = arith.truncf %451 : vector<32x128xf32> to vector<32x128xbf16>
    %c0_269 = arith.constant 0 : index
    %c0_270 = arith.constant 0 : index
    %453 = vector.load %arg42[%c0_269, %c0_270] : memref<32x128xbf16, #tpu.memory_space<vmem>>, vector<32x128xbf16>
    tpu.vector_store %arg42[%c0_269, %c0_270], %452 {strides = array<i32>} : memref<32x128xbf16, #tpu.memory_space<vmem>>, vector<32x128xbf16>,
    %c0_271 = arith.constant 0 : index
    %c0_272 = arith.constant 0 : index
    %454 = vector.load %arg42[%c0_271, %c0_272] : memref<32x128xbf16, #tpu.memory_space<vmem>>, vector<32x128xbf16>
    %c0_273 = arith.constant 0 : index
    %c0_274 = arith.constant 0 : index
    %455 = vector.load %arg24[%c0_273, %c0_274] : memref<128x32xbf16, #tpu.memory_space<vmem>>, vector<128x32xbf16>
    %cst_275 = arith.constant dense<0.000000e+00> : vector<32x32xf32>
    %456 = tpu.matmul %454, %455, %cst_275 {dimension_numbers = #tpu.dot_dimension_numbers<[1], [0], [0], [1], [0, 0, 1, 1], [], []>} : vector<32x128xbf16>, vector<128x32xbf16>, vector<32x32xf32> -> vector<32x32xf32>
    %457 = arith.truncf %456 : vector<32x32xf32> to vector<32x32xbf16>
    %c15_276 = arith.constant 15 : index
    %c0_277 = arith.constant 0 : index
    %458 = vector.load %arg43[%c15_276, %c0_277] : memref<56x256xbf16, #tpu.memory_space<vmem>>, vector<32x32xbf16>
    tpu.vector_store %arg43[%c15_276, %c0_277], %457 {strides = array<i32>} : memref<56x256xbf16, #tpu.memory_space<vmem>>, vector<32x32xbf16>,
    %c14_278 = arith.constant 14 : index
    %c32_279 = arith.constant 32 : index
    %459 = vector.load %arg43[%c14_278, %c32_279] : memref<56x256xbf16, #tpu.memory_space<vmem>>, vector<32x32xbf16>
    tpu.vector_store %arg43[%c14_278, %c32_279], %457 {strides = array<i32>} : memref<56x256xbf16, #tpu.memory_space<vmem>>, vector<32x32xbf16>,
    %c13_280 = arith.constant 13 : index
    %c64_281 = arith.constant 64 : index
    %460 = vector.load %arg43[%c13_280, %c64_281] : memref<56x256xbf16, #tpu.memory_space<vmem>>, vector<32x32xbf16>
    tpu.vector_store %arg43[%c13_280, %c64_281], %457 {strides = array<i32>} : memref<56x256xbf16, #tpu.memory_space<vmem>>, vector<32x32xbf16>,
    %c12_282 = arith.constant 12 : index
    %c96_283 = arith.constant 96 : index
    %461 = vector.load %arg43[%c12_282, %c96_283] : memref<56x256xbf16, #tpu.memory_space<vmem>>, vector<32x32xbf16>
    tpu.vector_store %arg43[%c12_282, %c96_283], %457 {strides = array<i32>} : memref<56x256xbf16, #tpu.memory_space<vmem>>, vector<32x32xbf16>,
    %c11_284 = arith.constant 11 : index
    %c128_285 = arith.constant 128 : index
    %462 = vector.load %arg43[%c11_284, %c128_285] : memref<56x256xbf16, #tpu.memory_space<vmem>>, vector<32x32xbf16>
    tpu.vector_store %arg43[%c11_284, %c128_285], %457 {strides = array<i32>} : memref<56x256xbf16, #tpu.memory_space<vmem>>, vector<32x32xbf16>,
    %c10_286 = arith.constant 10 : index
    %c160_287 = arith.constant 160 : index
    %463 = vector.load %arg43[%c10_286, %c160_287] : memref<56x256xbf16, #tpu.memory_space<vmem>>, vector<32x32xbf16>
    tpu.vector_store %arg43[%c10_286, %c160_287], %457 {strides = array<i32>} : memref<56x256xbf16, #tpu.memory_space<vmem>>, vector<32x32xbf16>,
    %c9_288 = arith.constant 9 : index
    %c192_289 = arith.constant 192 : index
    %464 = vector.load %arg43[%c9_288, %c192_289] : memref<56x256xbf16, #tpu.memory_space<vmem>>, vector<32x32xbf16>
    tpu.vector_store %arg43[%c9_288, %c192_289], %457 {strides = array<i32>} : memref<56x256xbf16, #tpu.memory_space<vmem>>, vector<32x32xbf16>,
    %c8_290 = arith.constant 8 : index
    %c224_291 = arith.constant 224 : index
    %465 = vector.load %arg43[%c8_290, %c224_291] : memref<56x256xbf16, #tpu.memory_space<vmem>>, vector<32x32xbf16>
    tpu.vector_store %arg43[%c8_290, %c224_291], %457 {strides = array<i32>} : memref<56x256xbf16, #tpu.memory_space<vmem>>, vector<32x32xbf16>,
    %c-15_i32_292 = arith.constant -15 : i32
    %466 = vector.broadcast %c-15_i32_292 : i32 to vector<1x256xi32>
    %467 = arith.addi %5, %466 : vector<1x256xi32>
    %468 = vector.broadcast %0 : vector<32x1xi32> to vector<32x256xi32>
    %469 = vector.broadcast %467 : vector<1x256xi32> to vector<32x256xi32>
    %470 = arith.addi %468, %469 : vector<32x256xi32>
    %c0_i32_293 = arith.constant 0 : i32
    %471 = vector.broadcast %c0_i32_293 : i32 to vector<32x256xi32>
    %472 = arith.cmpi sge, %470, %471 : vector<32x256xi32>
    %c16_i32_294 = arith.constant 16 : i32
    %473 = vector.broadcast %c16_i32_294 : i32 to vector<32x256xi32>
    %474 = arith.cmpi slt, %470, %473 : vector<32x256xi32>
    %475 = arith.andi %472, %474 : vector<32x256xi1>
    %c0_295 = arith.constant 0 : index
    %c0_296 = arith.constant 0 : index
    %476 = vector.load %arg43[%c0_295, %c0_296] : memref<56x256xbf16, #tpu.memory_space<vmem>>, vector<32x256xbf16>
    %cst_297 = arith.constant 0.000000e+00 : bf16
    %477 = vector.broadcast %cst_297 : bf16 to vector<32x256xbf16>
    %478 = arith.select %475, %476, %477 : vector<32x256xi1>, vector<32x256xbf16>
    %c0_298 = arith.constant 0 : index
    %c0_299 = arith.constant 0 : index
    %c0_300 = arith.constant 0 : index
    %479 = vector.load %arg25[%c0_298, %c0_299, %c0_300] : memref<4x256x128xbf16, #tpu.memory_space<vmem>>, vector<1x256x128xbf16>
    %480 = vector.shape_cast %479 : vector<1x256x128xbf16> to vector<256x128xbf16>
    %cst_301 = arith.constant dense<0.000000e+00> : vector<32x128xf32>
    %481 = tpu.matmul %478, %480, %cst_301 {dimension_numbers = #tpu.dot_dimension_numbers<[1], [0], [0], [1], [0, 0, 1, 1], [], []>} : vector<32x256xbf16>, vector<256x128xbf16>, vector<32x128xf32> -> vector<32x128xf32>
    %c-7_i32_302 = arith.constant -7 : i32
    %482 = vector.broadcast %c-7_i32_302 : i32 to vector<1x256xi32>
    %483 = arith.addi %5, %482 : vector<1x256xi32>
    %484 = vector.broadcast %0 : vector<32x1xi32> to vector<32x256xi32>
    %485 = vector.broadcast %483 : vector<1x256xi32> to vector<32x256xi32>
    %486 = arith.addi %484, %485 : vector<32x256xi32>
    %c0_i32_303 = arith.constant 0 : i32
    %487 = vector.broadcast %c0_i32_303 : i32 to vector<32x256xi32>
    %488 = arith.cmpi sge, %486, %487 : vector<32x256xi32>
    %c16_i32_304 = arith.constant 16 : i32
    %489 = vector.broadcast %c16_i32_304 : i32 to vector<32x256xi32>
    %490 = arith.cmpi slt, %486, %489 : vector<32x256xi32>
    %491 = arith.andi %488, %490 : vector<32x256xi1>
    %c8_305 = arith.constant 8 : index
    %c0_306 = arith.constant 0 : index
    %492 = vector.load %arg43[%c8_305, %c0_306] : memref<56x256xbf16, #tpu.memory_space<vmem>>, vector<32x256xbf16>
    %cst_307 = arith.constant 0.000000e+00 : bf16
    %493 = vector.broadcast %cst_307 : bf16 to vector<32x256xbf16>
    %494 = arith.select %491, %492, %493 : vector<32x256xi1>, vector<32x256xbf16>
    %c1_308 = arith.constant 1 : index
    %c0_309 = arith.constant 0 : index
    %c0_310 = arith.constant 0 : index
    %495 = vector.load %arg25[%c1_308, %c0_309, %c0_310] : memref<4x256x128xbf16, #tpu.memory_space<vmem>>, vector<1x256x128xbf16>
    %496 = vector.shape_cast %495 : vector<1x256x128xbf16> to vector<256x128xbf16>
    %cst_311 = arith.constant dense<0.000000e+00> : vector<32x128xf32>
    %497 = tpu.matmul %494, %496, %cst_311 {dimension_numbers = #tpu.dot_dimension_numbers<[1], [0], [0], [1], [0, 0, 1, 1], [], []>} : vector<32x256xbf16>, vector<256x128xbf16>, vector<32x128xf32> -> vector<32x128xf32>
    %498 = arith.addf %481, %497 : vector<32x128xf32>
    %c1_i32_312 = arith.constant 1 : i32
    %499 = vector.broadcast %c1_i32_312 : i32 to vector<1x256xi32>
    %500 = arith.addi %5, %499 : vector<1x256xi32>
    %501 = vector.broadcast %0 : vector<32x1xi32> to vector<32x256xi32>
    %502 = vector.broadcast %500 : vector<1x256xi32> to vector<32x256xi32>
    %503 = arith.addi %501, %502 : vector<32x256xi32>
    %c0_i32_313 = arith.constant 0 : i32
    %504 = vector.broadcast %c0_i32_313 : i32 to vector<32x256xi32>
    %505 = arith.cmpi sge, %503, %504 : vector<32x256xi32>
    %c16_i32_314 = arith.constant 16 : i32
    %506 = vector.broadcast %c16_i32_314 : i32 to vector<32x256xi32>
    %507 = arith.cmpi slt, %503, %506 : vector<32x256xi32>
    %508 = arith.andi %505, %507 : vector<32x256xi1>
    %c16_315 = arith.constant 16 : index
    %c0_316 = arith.constant 0 : index
    %509 = vector.load %arg43[%c16_315, %c0_316] : memref<56x256xbf16, #tpu.memory_space<vmem>>, vector<32x256xbf16>
    %cst_317 = arith.constant 0.000000e+00 : bf16
    %510 = vector.broadcast %cst_317 : bf16 to vector<32x256xbf16>
    %511 = arith.select %508, %509, %510 : vector<32x256xi1>, vector<32x256xbf16>
    %c2_318 = arith.constant 2 : index
    %c0_319 = arith.constant 0 : index
    %c0_320 = arith.constant 0 : index
    %512 = vector.load %arg25[%c2_318, %c0_319, %c0_320] : memref<4x256x128xbf16, #tpu.memory_space<vmem>>, vector<1x256x128xbf16>
    %513 = vector.shape_cast %512 : vector<1x256x128xbf16> to vector<256x128xbf16>
    %cst_321 = arith.constant dense<0.000000e+00> : vector<32x128xf32>
    %514 = tpu.matmul %511, %513, %cst_321 {dimension_numbers = #tpu.dot_dimension_numbers<[1], [0], [0], [1], [0, 0, 1, 1], [], []>} : vector<32x256xbf16>, vector<256x128xbf16>, vector<32x128xf32> -> vector<32x128xf32>
    %515 = arith.addf %498, %514 : vector<32x128xf32>
    %c9_i32_322 = arith.constant 9 : i32
    %516 = vector.broadcast %c9_i32_322 : i32 to vector<1x256xi32>
    %517 = arith.addi %5, %516 : vector<1x256xi32>
    %518 = vector.broadcast %0 : vector<32x1xi32> to vector<32x256xi32>
    %519 = vector.broadcast %517 : vector<1x256xi32> to vector<32x256xi32>
    %520 = arith.addi %518, %519 : vector<32x256xi32>
    %c0_i32_323 = arith.constant 0 : i32
    %521 = vector.broadcast %c0_i32_323 : i32 to vector<32x256xi32>
    %522 = arith.cmpi sge, %520, %521 : vector<32x256xi32>
    %c16_i32_324 = arith.constant 16 : i32
    %523 = vector.broadcast %c16_i32_324 : i32 to vector<32x256xi32>
    %524 = arith.cmpi slt, %520, %523 : vector<32x256xi32>
    %525 = arith.andi %522, %524 : vector<32x256xi1>
    %c24_325 = arith.constant 24 : index
    %c0_326 = arith.constant 0 : index
    %526 = vector.load %arg43[%c24_325, %c0_326] : memref<56x256xbf16, #tpu.memory_space<vmem>>, vector<32x256xbf16>
    %cst_327 = arith.constant 0.000000e+00 : bf16
    %527 = vector.broadcast %cst_327 : bf16 to vector<32x256xbf16>
    %528 = arith.select %525, %526, %527 : vector<32x256xi1>, vector<32x256xbf16>
    %c3_328 = arith.constant 3 : index
    %c0_329 = arith.constant 0 : index
    %c0_330 = arith.constant 0 : index
    %529 = vector.load %arg25[%c3_328, %c0_329, %c0_330] : memref<4x256x128xbf16, #tpu.memory_space<vmem>>, vector<1x256x128xbf16>
    %530 = vector.shape_cast %529 : vector<1x256x128xbf16> to vector<256x128xbf16>
    %cst_331 = arith.constant dense<0.000000e+00> : vector<32x128xf32>
    %531 = tpu.matmul %528, %530, %cst_331 {dimension_numbers = #tpu.dot_dimension_numbers<[1], [0], [0], [1], [0, 0, 1, 1], [], []>} : vector<32x256xbf16>, vector<256x128xbf16>, vector<32x128xf32> -> vector<32x128xf32>
    %532 = arith.addf %515, %531 : vector<32x128xf32>
    %533 = vector.extract_strided_slice %454 {offsets = [0, 0], sizes = [1, 128], strides = [1, 1]} : vector<32x128xbf16> to vector<1x128xbf16>
    %534 = vector.extract_strided_slice %454 {offsets = [0, 0], sizes = [31, 128], strides = [1, 1]} : vector<32x128xbf16> to vector<31x128xbf16>
    %535 = tpu.concatenate %533, %534 in 0 : vector<1x128xbf16>, vector<31x128xbf16> -> vector<32x128xbf16>
    %536 = vector.extract_strided_slice %454 {offsets = [1, 0], sizes = [31, 128], strides = [1, 1]} : vector<32x128xbf16> to vector<31x128xbf16>
    %537 = vector.extract_strided_slice %454 {offsets = [31, 0], sizes = [1, 128], strides = [1, 1]} : vector<32x128xbf16> to vector<1x128xbf16>
    %538 = tpu.concatenate %536, %537 in 0 : vector<31x128xbf16>, vector<1x128xbf16> -> vector<32x128xbf16>
    %539 = vector.shape_cast %2 : vector<32x1xi1> to vector<32x1xi1>
    %540 = vector.broadcast %539 : vector<32x1xi1> to vector<32x128xi1>
    %541 = arith.select %540, %454, %535 : vector<32x128xi1>, vector<32x128xbf16>
    %542 = vector.shape_cast %4 : vector<32x1xi1> to vector<32x1xi1>
    %543 = vector.broadcast %542 : vector<32x1xi1> to vector<32x128xi1>
    %544 = arith.select %543, %454, %538 : vector<32x128xi1>, vector<32x128xbf16>
    %545 = arith.maximumf %541, %454 : vector<32x128xbf16>
    %546 = arith.maximumf %545, %544 : vector<32x128xbf16>
    %c0_332 = arith.constant 0 : index
    %c0_333 = arith.constant 0 : index
    %547 = vector.load %arg26[%c0_332, %c0_333] : memref<128x32xbf16, #tpu.memory_space<vmem>>, vector<128x32xbf16>
    %cst_334 = arith.constant dense<0.000000e+00> : vector<32x32xf32>
    %548 = tpu.matmul %546, %547, %cst_334 {dimension_numbers = #tpu.dot_dimension_numbers<[1], [0], [0], [1], [0, 0, 1, 1], [], []>} : vector<32x128xbf16>, vector<128x32xbf16>, vector<32x32xf32> -> vector<32x32xf32>
    %549 = vector.extract_strided_slice %532 {offsets = [0, 0], sizes = [32, 96], strides = [1, 1]} : vector<32x128xf32> to vector<32x96xf32>
    %550 = vector.extract_strided_slice %532 {offsets = [0, 96], sizes = [32, 32], strides = [1, 1]} : vector<32x128xf32> to vector<32x32xf32>
    %551 = arith.addf %550, %548 : vector<32x32xf32>
    %552 = tpu.concatenate %549, %551 in 1 : vector<32x96xf32>, vector<32x32xf32> -> vector<32x128xf32>
    %c0_335 = arith.constant 0 : index
    %c0_336 = arith.constant 0 : index
    %553 = vector.load %arg27[%c0_335, %c0_336] : memref<1x128xf32, #tpu.memory_space<vmem>>, vector<1x128xf32>
    %554 = vector.broadcast %553 : vector<1x128xf32> to vector<32x128xf32>
    %555 = arith.mulf %552, %554 : vector<32x128xf32>
    %c0_337 = arith.constant 0 : index
    %c0_338 = arith.constant 0 : index
    %556 = vector.load %arg28[%c0_337, %c0_338] : memref<1x128xf32, #tpu.memory_space<vmem>>, vector<1x128xf32>
    %557 = vector.broadcast %556 : vector<1x128xf32> to vector<32x128xf32>
    %558 = arith.addf %555, %557 : vector<32x128xf32>
    %cst_339 = arith.constant 0.000000e+00 : f32
    %559 = vector.broadcast %cst_339 : f32 to vector<32x128xf32>
    %560 = arith.maximumf %558, %559 : vector<32x128xf32>
    %561 = arith.truncf %560 : vector<32x128xf32> to vector<32x128xbf16>
    %c0_340 = arith.constant 0 : index
    %c0_341 = arith.constant 0 : index
    %562 = vector.load %arg41[%c0_340, %c0_341] : memref<32x128xbf16, #tpu.memory_space<vmem>>, vector<32x128xbf16>
    tpu.vector_store %arg41[%c0_340, %c0_341], %561 {strides = array<i32>} : memref<32x128xbf16, #tpu.memory_space<vmem>>, vector<32x128xbf16>,
    %c0_342 = arith.constant 0 : index
    %c0_343 = arith.constant 0 : index
    %563 = vector.load %arg41[%c0_342, %c0_343] : memref<32x128xbf16, #tpu.memory_space<vmem>>, vector<32x128xbf16>
    %c0_344 = arith.constant 0 : index
    %c0_345 = arith.constant 0 : index
    %564 = vector.load %arg29[%c0_344, %c0_345] : memref<128x32xbf16, #tpu.memory_space<vmem>>, vector<128x32xbf16>
    %cst_346 = arith.constant dense<0.000000e+00> : vector<32x32xf32>
    %565 = tpu.matmul %563, %564, %cst_346 {dimension_numbers = #tpu.dot_dimension_numbers<[1], [0], [0], [1], [0, 0, 1, 1], [], []>} : vector<32x128xbf16>, vector<128x32xbf16>, vector<32x32xf32> -> vector<32x32xf32>
    %566 = arith.truncf %565 : vector<32x32xf32> to vector<32x32xbf16>
    %c15_347 = arith.constant 15 : index
    %c0_348 = arith.constant 0 : index
    %567 = vector.load %arg43[%c15_347, %c0_348] : memref<56x256xbf16, #tpu.memory_space<vmem>>, vector<32x32xbf16>
    tpu.vector_store %arg43[%c15_347, %c0_348], %566 {strides = array<i32>} : memref<56x256xbf16, #tpu.memory_space<vmem>>, vector<32x32xbf16>,
    %c14_349 = arith.constant 14 : index
    %c32_350 = arith.constant 32 : index
    %568 = vector.load %arg43[%c14_349, %c32_350] : memref<56x256xbf16, #tpu.memory_space<vmem>>, vector<32x32xbf16>
    tpu.vector_store %arg43[%c14_349, %c32_350], %566 {strides = array<i32>} : memref<56x256xbf16, #tpu.memory_space<vmem>>, vector<32x32xbf16>,
    %c13_351 = arith.constant 13 : index
    %c64_352 = arith.constant 64 : index
    %569 = vector.load %arg43[%c13_351, %c64_352] : memref<56x256xbf16, #tpu.memory_space<vmem>>, vector<32x32xbf16>
    tpu.vector_store %arg43[%c13_351, %c64_352], %566 {strides = array<i32>} : memref<56x256xbf16, #tpu.memory_space<vmem>>, vector<32x32xbf16>,
    %c12_353 = arith.constant 12 : index
    %c96_354 = arith.constant 96 : index
    %570 = vector.load %arg43[%c12_353, %c96_354] : memref<56x256xbf16, #tpu.memory_space<vmem>>, vector<32x32xbf16>
    tpu.vector_store %arg43[%c12_353, %c96_354], %566 {strides = array<i32>} : memref<56x256xbf16, #tpu.memory_space<vmem>>, vector<32x32xbf16>,
    %c11_355 = arith.constant 11 : index
    %c128_356 = arith.constant 128 : index
    %571 = vector.load %arg43[%c11_355, %c128_356] : memref<56x256xbf16, #tpu.memory_space<vmem>>, vector<32x32xbf16>
    tpu.vector_store %arg43[%c11_355, %c128_356], %566 {strides = array<i32>} : memref<56x256xbf16, #tpu.memory_space<vmem>>, vector<32x32xbf16>,
    %c10_357 = arith.constant 10 : index
    %c160_358 = arith.constant 160 : index
    %572 = vector.load %arg43[%c10_357, %c160_358] : memref<56x256xbf16, #tpu.memory_space<vmem>>, vector<32x32xbf16>
    tpu.vector_store %arg43[%c10_357, %c160_358], %566 {strides = array<i32>} : memref<56x256xbf16, #tpu.memory_space<vmem>>, vector<32x32xbf16>,
    %c9_359 = arith.constant 9 : index
    %c192_360 = arith.constant 192 : index
    %573 = vector.load %arg43[%c9_359, %c192_360] : memref<56x256xbf16, #tpu.memory_space<vmem>>, vector<32x32xbf16>
    tpu.vector_store %arg43[%c9_359, %c192_360], %566 {strides = array<i32>} : memref<56x256xbf16, #tpu.memory_space<vmem>>, vector<32x32xbf16>,
    %c8_361 = arith.constant 8 : index
    %c224_362 = arith.constant 224 : index
    %574 = vector.load %arg43[%c8_361, %c224_362] : memref<56x256xbf16, #tpu.memory_space<vmem>>, vector<32x32xbf16>
    tpu.vector_store %arg43[%c8_361, %c224_362], %566 {strides = array<i32>} : memref<56x256xbf16, #tpu.memory_space<vmem>>, vector<32x32xbf16>,
    %c-15_i32_363 = arith.constant -15 : i32
    %575 = vector.broadcast %c-15_i32_363 : i32 to vector<1x256xi32>
    %576 = arith.addi %5, %575 : vector<1x256xi32>
    %577 = vector.broadcast %0 : vector<32x1xi32> to vector<32x256xi32>
    %578 = vector.broadcast %576 : vector<1x256xi32> to vector<32x256xi32>
    %579 = arith.addi %577, %578 : vector<32x256xi32>
    %c0_i32_364 = arith.constant 0 : i32
    %580 = vector.broadcast %c0_i32_364 : i32 to vector<32x256xi32>
    %581 = arith.cmpi sge, %579, %580 : vector<32x256xi32>
    %c16_i32_365 = arith.constant 16 : i32
    %582 = vector.broadcast %c16_i32_365 : i32 to vector<32x256xi32>
    %583 = arith.cmpi slt, %579, %582 : vector<32x256xi32>
    %584 = arith.andi %581, %583 : vector<32x256xi1>
    %c0_366 = arith.constant 0 : index
    %c0_367 = arith.constant 0 : index
    %585 = vector.load %arg43[%c0_366, %c0_367] : memref<56x256xbf16, #tpu.memory_space<vmem>>, vector<32x256xbf16>
    %cst_368 = arith.constant 0.000000e+00 : bf16
    %586 = vector.broadcast %cst_368 : bf16 to vector<32x256xbf16>
    %587 = arith.select %584, %585, %586 : vector<32x256xi1>, vector<32x256xbf16>
    %c0_369 = arith.constant 0 : index
    %c0_370 = arith.constant 0 : index
    %c0_371 = arith.constant 0 : index
    %588 = vector.load %arg30[%c0_369, %c0_370, %c0_371] : memref<4x256x128xbf16, #tpu.memory_space<vmem>>, vector<1x256x128xbf16>
    %589 = vector.shape_cast %588 : vector<1x256x128xbf16> to vector<256x128xbf16>
    %cst_372 = arith.constant dense<0.000000e+00> : vector<32x128xf32>
    %590 = tpu.matmul %587, %589, %cst_372 {dimension_numbers = #tpu.dot_dimension_numbers<[1], [0], [0], [1], [0, 0, 1, 1], [], []>} : vector<32x256xbf16>, vector<256x128xbf16>, vector<32x128xf32> -> vector<32x128xf32>
    %c-7_i32_373 = arith.constant -7 : i32
    %591 = vector.broadcast %c-7_i32_373 : i32 to vector<1x256xi32>
    %592 = arith.addi %5, %591 : vector<1x256xi32>
    %593 = vector.broadcast %0 : vector<32x1xi32> to vector<32x256xi32>
    %594 = vector.broadcast %592 : vector<1x256xi32> to vector<32x256xi32>
    %595 = arith.addi %593, %594 : vector<32x256xi32>
    %c0_i32_374 = arith.constant 0 : i32
    %596 = vector.broadcast %c0_i32_374 : i32 to vector<32x256xi32>
    %597 = arith.cmpi sge, %595, %596 : vector<32x256xi32>
    %c16_i32_375 = arith.constant 16 : i32
    %598 = vector.broadcast %c16_i32_375 : i32 to vector<32x256xi32>
    %599 = arith.cmpi slt, %595, %598 : vector<32x256xi32>
    %600 = arith.andi %597, %599 : vector<32x256xi1>
    %c8_376 = arith.constant 8 : index
    %c0_377 = arith.constant 0 : index
    %601 = vector.load %arg43[%c8_376, %c0_377] : memref<56x256xbf16, #tpu.memory_space<vmem>>, vector<32x256xbf16>
    %cst_378 = arith.constant 0.000000e+00 : bf16
    %602 = vector.broadcast %cst_378 : bf16 to vector<32x256xbf16>
    %603 = arith.select %600, %601, %602 : vector<32x256xi1>, vector<32x256xbf16>
    %c1_379 = arith.constant 1 : index
    %c0_380 = arith.constant 0 : index
    %c0_381 = arith.constant 0 : index
    %604 = vector.load %arg30[%c1_379, %c0_380, %c0_381] : memref<4x256x128xbf16, #tpu.memory_space<vmem>>, vector<1x256x128xbf16>
    %605 = vector.shape_cast %604 : vector<1x256x128xbf16> to vector<256x128xbf16>
    %cst_382 = arith.constant dense<0.000000e+00> : vector<32x128xf32>
    %606 = tpu.matmul %603, %605, %cst_382 {dimension_numbers = #tpu.dot_dimension_numbers<[1], [0], [0], [1], [0, 0, 1, 1], [], []>} : vector<32x256xbf16>, vector<256x128xbf16>, vector<32x128xf32> -> vector<32x128xf32>
    %607 = arith.addf %590, %606 : vector<32x128xf32>
    %c1_i32_383 = arith.constant 1 : i32
    %608 = vector.broadcast %c1_i32_383 : i32 to vector<1x256xi32>
    %609 = arith.addi %5, %608 : vector<1x256xi32>
    %610 = vector.broadcast %0 : vector<32x1xi32> to vector<32x256xi32>
    %611 = vector.broadcast %609 : vector<1x256xi32> to vector<32x256xi32>
    %612 = arith.addi %610, %611 : vector<32x256xi32>
    %c0_i32_384 = arith.constant 0 : i32
    %613 = vector.broadcast %c0_i32_384 : i32 to vector<32x256xi32>
    %614 = arith.cmpi sge, %612, %613 : vector<32x256xi32>
    %c16_i32_385 = arith.constant 16 : i32
    %615 = vector.broadcast %c16_i32_385 : i32 to vector<32x256xi32>
    %616 = arith.cmpi slt, %612, %615 : vector<32x256xi32>
    %617 = arith.andi %614, %616 : vector<32x256xi1>
    %c16_386 = arith.constant 16 : index
    %c0_387 = arith.constant 0 : index
    %618 = vector.load %arg43[%c16_386, %c0_387] : memref<56x256xbf16, #tpu.memory_space<vmem>>, vector<32x256xbf16>
    %cst_388 = arith.constant 0.000000e+00 : bf16
    %619 = vector.broadcast %cst_388 : bf16 to vector<32x256xbf16>
    %620 = arith.select %617, %618, %619 : vector<32x256xi1>, vector<32x256xbf16>
    %c2_389 = arith.constant 2 : index
    %c0_390 = arith.constant 0 : index
    %c0_391 = arith.constant 0 : index
    %621 = vector.load %arg30[%c2_389, %c0_390, %c0_391] : memref<4x256x128xbf16, #tpu.memory_space<vmem>>, vector<1x256x128xbf16>
    %622 = vector.shape_cast %621 : vector<1x256x128xbf16> to vector<256x128xbf16>
    %cst_392 = arith.constant dense<0.000000e+00> : vector<32x128xf32>
    %623 = tpu.matmul %620, %622, %cst_392 {dimension_numbers = #tpu.dot_dimension_numbers<[1], [0], [0], [1], [0, 0, 1, 1], [], []>} : vector<32x256xbf16>, vector<256x128xbf16>, vector<32x128xf32> -> vector<32x128xf32>
    %624 = arith.addf %607, %623 : vector<32x128xf32>
    %c9_i32_393 = arith.constant 9 : i32
    %625 = vector.broadcast %c9_i32_393 : i32 to vector<1x256xi32>
    %626 = arith.addi %5, %625 : vector<1x256xi32>
    %627 = vector.broadcast %0 : vector<32x1xi32> to vector<32x256xi32>
    %628 = vector.broadcast %626 : vector<1x256xi32> to vector<32x256xi32>
    %629 = arith.addi %627, %628 : vector<32x256xi32>
    %c0_i32_394 = arith.constant 0 : i32
    %630 = vector.broadcast %c0_i32_394 : i32 to vector<32x256xi32>
    %631 = arith.cmpi sge, %629, %630 : vector<32x256xi32>
    %c16_i32_395 = arith.constant 16 : i32
    %632 = vector.broadcast %c16_i32_395 : i32 to vector<32x256xi32>
    %633 = arith.cmpi slt, %629, %632 : vector<32x256xi32>
    %634 = arith.andi %631, %633 : vector<32x256xi1>
    %c24_396 = arith.constant 24 : index
    %c0_397 = arith.constant 0 : index
    %635 = vector.load %arg43[%c24_396, %c0_397] : memref<56x256xbf16, #tpu.memory_space<vmem>>, vector<32x256xbf16>
    %cst_398 = arith.constant 0.000000e+00 : bf16
    %636 = vector.broadcast %cst_398 : bf16 to vector<32x256xbf16>
    %637 = arith.select %634, %635, %636 : vector<32x256xi1>, vector<32x256xbf16>
    %c3_399 = arith.constant 3 : index
    %c0_400 = arith.constant 0 : index
    %c0_401 = arith.constant 0 : index
    %638 = vector.load %arg30[%c3_399, %c0_400, %c0_401] : memref<4x256x128xbf16, #tpu.memory_space<vmem>>, vector<1x256x128xbf16>
    %639 = vector.shape_cast %638 : vector<1x256x128xbf16> to vector<256x128xbf16>
    %cst_402 = arith.constant dense<0.000000e+00> : vector<32x128xf32>
    %640 = tpu.matmul %637, %639, %cst_402 {dimension_numbers = #tpu.dot_dimension_numbers<[1], [0], [0], [1], [0, 0, 1, 1], [], []>} : vector<32x256xbf16>, vector<256x128xbf16>, vector<32x128xf32> -> vector<32x128xf32>
    %641 = arith.addf %624, %640 : vector<32x128xf32>
    %642 = vector.extract_strided_slice %563 {offsets = [0, 0], sizes = [1, 128], strides = [1, 1]} : vector<32x128xbf16> to vector<1x128xbf16>
    %643 = vector.extract_strided_slice %563 {offsets = [0, 0], sizes = [31, 128], strides = [1, 1]} : vector<32x128xbf16> to vector<31x128xbf16>
    %644 = tpu.concatenate %642, %643 in 0 : vector<1x128xbf16>, vector<31x128xbf16> -> vector<32x128xbf16>
    %645 = vector.extract_strided_slice %563 {offsets = [1, 0], sizes = [31, 128], strides = [1, 1]} : vector<32x128xbf16> to vector<31x128xbf16>
    %646 = vector.extract_strided_slice %563 {offsets = [31, 0], sizes = [1, 128], strides = [1, 1]} : vector<32x128xbf16> to vector<1x128xbf16>
    %647 = tpu.concatenate %645, %646 in 0 : vector<31x128xbf16>, vector<1x128xbf16> -> vector<32x128xbf16>
    %648 = vector.shape_cast %2 : vector<32x1xi1> to vector<32x1xi1>
    %649 = vector.broadcast %648 : vector<32x1xi1> to vector<32x128xi1>
    %650 = arith.select %649, %563, %644 : vector<32x128xi1>, vector<32x128xbf16>
    %651 = vector.shape_cast %4 : vector<32x1xi1> to vector<32x1xi1>
    %652 = vector.broadcast %651 : vector<32x1xi1> to vector<32x128xi1>
    %653 = arith.select %652, %563, %647 : vector<32x128xi1>, vector<32x128xbf16>
    %654 = arith.maximumf %650, %563 : vector<32x128xbf16>
    %655 = arith.maximumf %654, %653 : vector<32x128xbf16>
    %c0_403 = arith.constant 0 : index
    %c0_404 = arith.constant 0 : index
    %656 = vector.load %arg31[%c0_403, %c0_404] : memref<128x32xbf16, #tpu.memory_space<vmem>>, vector<128x32xbf16>
    %cst_405 = arith.constant dense<0.000000e+00> : vector<32x32xf32>
    %657 = tpu.matmul %655, %656, %cst_405 {dimension_numbers = #tpu.dot_dimension_numbers<[1], [0], [0], [1], [0, 0, 1, 1], [], []>} : vector<32x128xbf16>, vector<128x32xbf16>, vector<32x32xf32> -> vector<32x32xf32>
    %658 = vector.extract_strided_slice %641 {offsets = [0, 0], sizes = [32, 96], strides = [1, 1]} : vector<32x128xf32> to vector<32x96xf32>
    %659 = vector.extract_strided_slice %641 {offsets = [0, 96], sizes = [32, 32], strides = [1, 1]} : vector<32x128xf32> to vector<32x32xf32>
    %660 = arith.addf %659, %657 : vector<32x32xf32>
    %661 = tpu.concatenate %658, %660 in 1 : vector<32x96xf32>, vector<32x32xf32> -> vector<32x128xf32>
    %c0_406 = arith.constant 0 : index
    %c0_407 = arith.constant 0 : index
    %662 = vector.load %arg32[%c0_406, %c0_407] : memref<1x128xf32, #tpu.memory_space<vmem>>, vector<1x128xf32>
    %663 = vector.broadcast %662 : vector<1x128xf32> to vector<32x128xf32>
    %664 = arith.mulf %661, %663 : vector<32x128xf32>
    %c0_408 = arith.constant 0 : index
    %c0_409 = arith.constant 0 : index
    %665 = vector.load %arg33[%c0_408, %c0_409] : memref<1x128xf32, #tpu.memory_space<vmem>>, vector<1x128xf32>
    %666 = vector.broadcast %665 : vector<1x128xf32> to vector<32x128xf32>
    %667 = arith.addf %664, %666 : vector<32x128xf32>
    %cst_410 = arith.constant 0.000000e+00 : f32
    %668 = vector.broadcast %cst_410 : f32 to vector<32x128xf32>
    %669 = arith.maximumf %667, %668 : vector<32x128xf32>
    %c0_411 = arith.constant 0 : index
    %c0_412 = arith.constant 0 : index
    %670 = vector.load %arg37[%c0_411, %c0_412] : memref<2x32xbf16, #tpu.memory_space<vmem>>, vector<2x32xbf16>
    %671 = arith.truncf %669 : vector<32x128xf32> to vector<32x128xbf16>
    %cst_413 = arith.constant dense<0.000000e+00> : vector<2x128xf32>
    %672 = tpu.matmul %670, %671, %cst_413 {dimension_numbers = #tpu.dot_dimension_numbers<[1], [0], [0], [1], [0, 0, 1, 1], [], []>} : vector<2x32xbf16>, vector<32x128xbf16>, vector<2x128xf32> -> vector<2x128xf32>
    %cst_414 = arith.constant 6.250000e-02 : f32
    %673 = vector.broadcast %cst_414 : f32 to vector<2x128xf32>
    %674 = arith.mulf %672, %673 : vector<2x128xf32>
    %675 = arith.truncf %674 : vector<2x128xf32> to vector<2x128xbf16>
    %c0_415 = arith.constant 0 : index
    %c0_416 = arith.constant 0 : index
    %676 = vector.load %arg38[%c0_415, %c0_416] : memref<128x3xbf16, #tpu.memory_space<vmem>>, vector<128x3xbf16>
    %cst_417 = arith.constant dense<0.000000e+00> : vector<2x3xf32>
    %677 = tpu.matmul %675, %676, %cst_417 {dimension_numbers = #tpu.dot_dimension_numbers<[1], [0], [0], [1], [0, 0, 1, 1], [], []>} : vector<2x128xbf16>, vector<128x3xbf16>, vector<2x3xf32> -> vector<2x3xf32>
    %c0_418 = arith.constant 0 : index
    %c0_419 = arith.constant 0 : index
    %678 = vector.load %arg39[%c0_418, %c0_419] : memref<1x3xf32, #tpu.memory_space<vmem>>, vector<1x3xf32>
    %679 = vector.broadcast %678 : vector<1x3xf32> to vector<2x3xf32>
    %680 = arith.addf %677, %679 : vector<2x3xf32>
    %c0_420 = arith.constant 0 : index
    %c0_421 = arith.constant 0 : index
    %681 = vector.load %arg40[%c0_420, %c0_421] : memref<2x3xf32, #tpu.memory_space<vmem>>, vector<2x3xf32>
    tpu.vector_store %arg40[%c0_420, %c0_421], %680 {strides = array<i32>} : memref<2x3xf32, #tpu.memory_space<vmem>>, vector<2x3xf32>,
    return
  }
  func.func @transform_0(%arg0: i32) -> (i32, i32) {
    %c0_i32 = arith.constant 0 : i32
    %c0_i32_0 = arith.constant 0 : i32
    return %arg0, %c0_i32 : i32, i32
  }
  func.func @transform_1(%arg0: i32) -> (i32, i32) {
    %c0_i32 = arith.constant 0 : i32
    %c0_i32_0 = arith.constant 0 : i32
    %c0_i32_1 = arith.constant 0 : i32
    return %c0_i32, %c0_i32_0 : i32, i32
  }
  func.func @transform_2(%arg0: i32) -> (i32, i32) {
    %c0_i32 = arith.constant 0 : i32
    %c0_i32_0 = arith.constant 0 : i32
    %c0_i32_1 = arith.constant 0 : i32
    return %c0_i32, %c0_i32_0 : i32, i32
  }
  func.func @transform_3(%arg0: i32) -> (i32, i32) {
    %c0_i32 = arith.constant 0 : i32
    %c0_i32_0 = arith.constant 0 : i32
    %c0_i32_1 = arith.constant 0 : i32
    return %c0_i32, %c0_i32_0 : i32, i32
  }
  func.func @transform_4(%arg0: i32) -> (i32, i32, i32) {
    %c0_i32 = arith.constant 0 : i32
    %c0_i32_0 = arith.constant 0 : i32
    %c0_i32_1 = arith.constant 0 : i32
    %c0_i32_2 = arith.constant 0 : i32
    return %c0_i32, %c0_i32_0, %c0_i32_1 : i32, i32, i32
  }
  func.func @transform_5(%arg0: i32) -> (i32, i32) {
    %c0_i32 = arith.constant 0 : i32
    %c0_i32_0 = arith.constant 0 : i32
    %c0_i32_1 = arith.constant 0 : i32
    return %c0_i32, %c0_i32_0 : i32, i32
  }
  func.func @transform_6(%arg0: i32) -> (i32, i32) {
    %c0_i32 = arith.constant 0 : i32
    %c0_i32_0 = arith.constant 0 : i32
    %c0_i32_1 = arith.constant 0 : i32
    return %c0_i32, %c0_i32_0 : i32, i32
  }
  func.func @transform_7(%arg0: i32) -> (i32, i32) {
    %c0_i32 = arith.constant 0 : i32
    %c0_i32_0 = arith.constant 0 : i32
    %c0_i32_1 = arith.constant 0 : i32
    return %c0_i32, %c0_i32_0 : i32, i32
  }
  func.func @transform_8(%arg0: i32) -> (i32, i32) {
    %c0_i32 = arith.constant 0 : i32
    %c0_i32_0 = arith.constant 0 : i32
    %c0_i32_1 = arith.constant 0 : i32
    return %c0_i32, %c0_i32_0 : i32, i32
  }
  func.func @transform_9(%arg0: i32) -> (i32, i32, i32) {
    %c0_i32 = arith.constant 0 : i32
    %c0_i32_0 = arith.constant 0 : i32
    %c0_i32_1 = arith.constant 0 : i32
    %c0_i32_2 = arith.constant 0 : i32
    return %c0_i32, %c0_i32_0, %c0_i32_1 : i32, i32, i32
  }
  func.func @transform_10(%arg0: i32) -> (i32, i32) {
    %c0_i32 = arith.constant 0 : i32
    %c0_i32_0 = arith.constant 0 : i32
    %c0_i32_1 = arith.constant 0 : i32
    return %c0_i32, %c0_i32_0 : i32, i32
  }
  func.func @transform_11(%arg0: i32) -> (i32, i32) {
    %c0_i32 = arith.constant 0 : i32
    %c0_i32_0 = arith.constant 0 : i32
    %c0_i32_1 = arith.constant 0 : i32
    return %c0_i32, %c0_i32_0 : i32, i32
  }
  func.func @transform_12(%arg0: i32) -> (i32, i32) {
    %c0_i32 = arith.constant 0 : i32
    %c0_i32_0 = arith.constant 0 : i32
    %c0_i32_1 = arith.constant 0 : i32
    return %c0_i32, %c0_i32_0 : i32, i32
  }
  func.func @transform_13(%arg0: i32) -> (i32, i32) {
    %c0_i32 = arith.constant 0 : i32
    %c0_i32_0 = arith.constant 0 : i32
    %c0_i32_1 = arith.constant 0 : i32
    return %c0_i32, %c0_i32_0 : i32, i32
  }
  func.func @transform_14(%arg0: i32) -> (i32, i32, i32) {
    %c0_i32 = arith.constant 0 : i32
    %c0_i32_0 = arith.constant 0 : i32
    %c0_i32_1 = arith.constant 0 : i32
    %c0_i32_2 = arith.constant 0 : i32
    return %c0_i32, %c0_i32_0, %c0_i32_1 : i32, i32, i32
  }
  func.func @transform_15(%arg0: i32) -> (i32, i32) {
    %c0_i32 = arith.constant 0 : i32
    %c0_i32_0 = arith.constant 0 : i32
    %c0_i32_1 = arith.constant 0 : i32
    return %c0_i32, %c0_i32_0 : i32, i32
  }
  func.func @transform_16(%arg0: i32) -> (i32, i32) {
    %c0_i32 = arith.constant 0 : i32
    %c0_i32_0 = arith.constant 0 : i32
    %c0_i32_1 = arith.constant 0 : i32
    return %c0_i32, %c0_i32_0 : i32, i32
  }
  func.func @transform_17(%arg0: i32) -> (i32, i32) {
    %c0_i32 = arith.constant 0 : i32
    %c0_i32_0 = arith.constant 0 : i32
    %c0_i32_1 = arith.constant 0 : i32
    return %c0_i32, %c0_i32_0 : i32, i32
  }
  func.func @transform_18(%arg0: i32) -> (i32, i32) {
    %c0_i32 = arith.constant 0 : i32
    %c0_i32_0 = arith.constant 0 : i32
    %c0_i32_1 = arith.constant 0 : i32
    return %c0_i32, %c0_i32_0 : i32, i32
  }
  func.func @transform_19(%arg0: i32) -> (i32, i32, i32) {
    %c0_i32 = arith.constant 0 : i32
    %c0_i32_0 = arith.constant 0 : i32
    %c0_i32_1 = arith.constant 0 : i32
    %c0_i32_2 = arith.constant 0 : i32
    return %c0_i32, %c0_i32_0, %c0_i32_1 : i32, i32, i32
  }
  func.func @transform_20(%arg0: i32) -> (i32, i32) {
    %c0_i32 = arith.constant 0 : i32
    %c0_i32_0 = arith.constant 0 : i32
    %c0_i32_1 = arith.constant 0 : i32
    return %c0_i32, %c0_i32_0 : i32, i32
  }
  func.func @transform_21(%arg0: i32) -> (i32, i32) {
    %c0_i32 = arith.constant 0 : i32
    %c0_i32_0 = arith.constant 0 : i32
    %c0_i32_1 = arith.constant 0 : i32
    return %c0_i32, %c0_i32_0 : i32, i32
  }
  func.func @transform_22(%arg0: i32) -> (i32, i32) {
    %c0_i32 = arith.constant 0 : i32
    %c0_i32_0 = arith.constant 0 : i32
    %c0_i32_1 = arith.constant 0 : i32
    return %c0_i32, %c0_i32_0 : i32, i32
  }
  func.func @transform_23(%arg0: i32) -> (i32, i32) {
    %c0_i32 = arith.constant 0 : i32
    %c0_i32_0 = arith.constant 0 : i32
    %c0_i32_1 = arith.constant 0 : i32
    return %c0_i32, %c0_i32_0 : i32, i32
  }
  func.func @transform_24(%arg0: i32) -> (i32, i32, i32) {
    %c0_i32 = arith.constant 0 : i32
    %c0_i32_0 = arith.constant 0 : i32
    %c0_i32_1 = arith.constant 0 : i32
    %c0_i32_2 = arith.constant 0 : i32
    return %c0_i32, %c0_i32_0, %c0_i32_1 : i32, i32, i32
  }
  func.func @transform_25(%arg0: i32) -> (i32, i32) {
    %c0_i32 = arith.constant 0 : i32
    %c0_i32_0 = arith.constant 0 : i32
    %c0_i32_1 = arith.constant 0 : i32
    return %c0_i32, %c0_i32_0 : i32, i32
  }
  func.func @transform_26(%arg0: i32) -> (i32, i32) {
    %c0_i32 = arith.constant 0 : i32
    %c0_i32_0 = arith.constant 0 : i32
    %c0_i32_1 = arith.constant 0 : i32
    return %c0_i32, %c0_i32_0 : i32, i32
  }
  func.func @transform_27(%arg0: i32) -> (i32, i32) {
    %c0_i32 = arith.constant 0 : i32
    %c0_i32_0 = arith.constant 0 : i32
    %c0_i32_1 = arith.constant 0 : i32
    return %c0_i32, %c0_i32_0 : i32, i32
  }
  func.func @transform_28(%arg0: i32) -> (i32, i32) {
    %c0_i32 = arith.constant 0 : i32
    %c0_i32_0 = arith.constant 0 : i32
    %c0_i32_1 = arith.constant 0 : i32
    return %c0_i32, %c0_i32_0 : i32, i32
  }
  func.func @transform_29(%arg0: i32) -> (i32, i32, i32) {
    %c0_i32 = arith.constant 0 : i32
    %c0_i32_0 = arith.constant 0 : i32
    %c0_i32_1 = arith.constant 0 : i32
    %c0_i32_2 = arith.constant 0 : i32
    return %c0_i32, %c0_i32_0, %c0_i32_1 : i32, i32, i32
  }
  func.func @transform_30(%arg0: i32) -> (i32, i32) {
    %c0_i32 = arith.constant 0 : i32
    %c0_i32_0 = arith.constant 0 : i32
    %c0_i32_1 = arith.constant 0 : i32
    return %c0_i32, %c0_i32_0 : i32, i32
  }
  func.func @transform_31(%arg0: i32) -> (i32, i32) {
    %c0_i32 = arith.constant 0 : i32
    %c0_i32_0 = arith.constant 0 : i32
    %c0_i32_1 = arith.constant 0 : i32
    return %c0_i32, %c0_i32_0 : i32, i32
  }
  func.func @transform_32(%arg0: i32) -> (i32, i32) {
    %c0_i32 = arith.constant 0 : i32
    %c0_i32_0 = arith.constant 0 : i32
    %c0_i32_1 = arith.constant 0 : i32
    return %c0_i32, %c0_i32_0 : i32, i32
  }
  func.func @transform_33(%arg0: i32) -> (i32, i32) {
    %c0_i32 = arith.constant 0 : i32
    %c0_i32_0 = arith.constant 0 : i32
    %c0_i32_1 = arith.constant 0 : i32
    return %c0_i32, %c0_i32_0 : i32, i32
  }
  func.func @transform_34(%arg0: i32) -> (i32, i32) {
    %c0_i32 = arith.constant 0 : i32
    %c0_i32_0 = arith.constant 0 : i32
    %c0_i32_1 = arith.constant 0 : i32
    return %c0_i32, %c0_i32_0 : i32, i32
  }
  func.func @transform_35(%arg0: i32) -> (i32, i32) {
    %c0_i32 = arith.constant 0 : i32
    %c0_i32_0 = arith.constant 0 : i32
    %c0_i32_1 = arith.constant 0 : i32
    return %c0_i32, %c0_i32_0 : i32, i32
  }
  func.func @transform_36(%arg0: i32) -> (i32, i32) {
    %c0_i32 = arith.constant 0 : i32
    %c0_i32_0 = arith.constant 0 : i32
    %c0_i32_1 = arith.constant 0 : i32
    return %c0_i32, %c0_i32_0 : i32, i32
  }
  func.func @transform_37(%arg0: i32) -> (i32, i32) {
    %c0_i32 = arith.constant 0 : i32
    %c0_i32_0 = arith.constant 0 : i32
    %c0_i32_1 = arith.constant 0 : i32
    return %c0_i32, %c0_i32_0 : i32, i32
  }
  func.func @transform_38(%arg0: i32) -> (i32, i32) {
    %c0_i32 = arith.constant 0 : i32
    %c0_i32_0 = arith.constant 0 : i32
    %c0_i32_1 = arith.constant 0 : i32
    return %c0_i32, %c0_i32_0 : i32, i32
  }
  func.func @transform_39(%arg0: i32) -> (i32, i32) {
    %c0_i32 = arith.constant 0 : i32
    %c0_i32_0 = arith.constant 0 : i32
    return %arg0, %c0_i32 : i32, i32
  }
}

</mosaic_0001>

<llo_original>
// kernel: tile.0
$region0: #{tile.0}
  %s0 = inlined_call_operand.vmem [shape: s32[2,16], index: 0, kind: input, shape index: {}]
  %s1 = inlined_call_operand.vmem [shape: s32[32,1], index: 1, kind: output, shape index: {}]
  $region1: #{tile.0} parent=0
    #allocation0 [shape = 'u8[4096]{0}', space=vmem, size = 0x1000, scoped, tag = 'scoped mem for input reshape']
    %s3 = sshll.u32 1, 2
    %s4 = ssub.s32 %s3, 1
    %v5 = vld [vmem:[%s0] sm:%s4]
    %6 = vst [vmem:[#allocation0] sm:%s4] %v5
    %v7 = vld [vmem:[#allocation0] sm:$0x3]
    %vm8 = vcmask 7168
    %9 = vst.msk [vmem:[%s1] ss:$16 sm:$0x3] %vm8, %v7
    %v10 = vld [vmem:[#allocation0] sm:$0x3]
    %11 = vrot.lane.b32.xlu0 %v10, 127
    %v12 = vpop.permute.xlu0 %11
    %vm13 = vcmask 7168
    %s14 = scalar_lea.vmem %s1, 1
    %15 = vst.msk [vmem:[%s14] ss:$16 sm:$0x3] %vm13, %v12
    %v16 = vld [vmem:[#allocation0] sm:$0x3]
    %17 = vrot.lane.b32.xlu0 %v16, 126
    %v18 = vpop.permute.xlu0 %17
    %vm19 = vcmask 7168
    %s20 = scalar_lea.vmem %s1, 2
    %21 = vst.msk [vmem:[%s20] ss:$16 sm:$0x3] %vm19, %v18
    %v22 = vld [vmem:[#allocation0] sm:$0x3]
    %23 = vrot.lane.b32.xlu0 %v22, 125
    %v24 = vpop.permute.xlu0 %23
    %vm25 = vcmask 7168
    %s26 = scalar_lea.vmem %s1, 3
    %27 = vst.msk [vmem:[%s26] ss:$16 sm:$0x3] %vm25, %v24
    %v28 = vld [vmem:[#allocation0] sm:$0x3]
    %29 = vrot.lane.b32.xlu0 %v28, 124
    %v30 = vpop.permute.xlu0 %29
    %vm31 = vcmask 7168
    %s32 = scalar_lea.vmem %s1, 4
    %33 = vst.msk [vmem:[%s32] ss:$16 sm:$0x3] %vm31, %v30
    %v34 = vld [vmem:[#allocation0] sm:$0x3]
    %35 = vrot.lane.b32.xlu0 %v34, 123
    %v36 = vpop.permute.xlu0 %35
    %vm37 = vcmask 7168
    %s38 = scalar_lea.vmem %s1, 5
    %39 = vst.msk [vmem:[%s38] ss:$16 sm:$0x3] %vm37, %v36
    %v40 = vld [vmem:[#allocation0] sm:$0x3]
    %41 = vrot.lane.b32.xlu0 %v40, 122
    %v42 = vpop.permute.xlu0 %41
    %vm43 = vcmask 7168
    %s44 = scalar_lea.vmem %s1, 6
    %45 = vst.msk [vmem:[%s44] ss:$16 sm:$0x3] %vm43, %v42
    %v46 = vld [vmem:[#allocation0] sm:$0x3]
    %47 = vrot.lane.b32.xlu0 %v46, 121
    %v48 = vpop.permute.xlu0 %47
    %vm49 = vcmask 7168
    %s50 = scalar_lea.vmem %s1, 7
    %51 = vst.msk [vmem:[%s50] ss:$16 sm:$0x3] %vm49, %v48
    %v52 = vld [vmem:[#allocation0] sm:$0x3]
    %53 = vrot.lane.b32.xlu0 %v52, 120
    %v54 = vpop.permute.xlu0 %53
    %vm55 = vcmask 7168
    %s56 = scalar_lea.vmem %s1, 8
    %57 = vst.msk [vmem:[%s56] ss:$16 sm:$0x3] %vm55, %v54
    %v58 = vld [vmem:[#allocation0] sm:$0x3]
    %59 = vrot.lane.b32.xlu0 %v58, 119
    %v60 = vpop.permute.xlu0 %59
    %vm61 = vcmask 7168
    %s62 = scalar_lea.vmem %s1, 9
    %63 = vst.msk [vmem:[%s62] ss:$16 sm:$0x3] %vm61, %v60
    %v64 = vld [vmem:[#allocation0] sm:$0x3]
    %65 = vrot.lane.b32.xlu0 %v64, 118
    %v66 = vpop.permute.xlu0 %65
    %vm67 = vcmask 7168
    %s68 = scalar_lea.vmem %s1, 10
    %69 = vst.msk [vmem:[%s68] ss:$16 sm:$0x3] %vm67, %v66
    %v70 = vld [vmem:[#allocation0] sm:$0x3]
    %71 = vrot.lane.b32.xlu0 %v70, 117
    %v72 = vpop.permute.xlu0 %71
    %vm73 = vcmask 7168
    %s74 = scalar_lea.vmem %s1, 11
    %75 = vst.msk [vmem:[%s74] ss:$16 sm:$0x3] %vm73, %v72
    %v76 = vld [vmem:[#allocation0] sm:$0x3]
    %77 = vrot.lane.b32.xlu0 %v76, 116
    %v78 = vpop.permute.xlu0 %77
    %vm79 = vcmask 7168
    %s80 = scalar_lea.vmem %s1, 12
    %81 = vst.msk [vmem:[%s80] ss:$16 sm:$0x3] %vm79, %v78
    %v82 = vld [vmem:[#allocation0] sm:$0x3]
    %83 = vrot.lane.b32.xlu0 %v82, 115
    %v84 = vpop.permute.xlu0 %83
    %vm85 = vcmask 7168
    %s86 = scalar_lea.vmem %s1, 13
    %87 = vst.msk [vmem:[%s86] ss:$16 sm:$0x3] %vm85, %v84
    %v88 = vld [vmem:[#allocation0] sm:$0x3]
    %89 = vrot.lane.b32.xlu0 %v88, 114
    %v90 = vpop.permute.xlu0 %89
    %vm91 = vcmask 7168
    %s92 = scalar_lea.vmem %s1, 14
    %93 = vst.msk [vmem:[%s92] ss:$16 sm:$0x3] %vm91, %v90
    %v94 = vld [vmem:[#allocation0] sm:$0x3]
    %95 = vrot.lane.b32.xlu0 %v94, 113
    %v96 = vpop.permute.xlu0 %95
    %vm97 = vcmask 7168
    %s98 = scalar_lea.vmem %s1, 15
    %99 = vst.msk [vmem:[%s98] ss:$16 sm:$0x3] %vm97, %v96

// kernel: inception_time_forward.1
$region0: #{inception_time_forward.1}
  #allocation0 [shape = 'u32[]', space=smem, size = 0x4, offset = 0x4, fixed_abs, tag = 'smem constant byte address 0x4 - core index']
  #allocation1 [shape = 'u32[144,128]{1,0:T(1,128)}', space=vmem, size = 0x12000, scoped, tag = 'internal scratch']
  #allocation2 [shape = 'bf16[32,128]{1,0:T(8,128)(2,1)}', space=vmem, size = 0x2000, scoped, tag = 'scratch operand']
  #allocation3 [shape = 'bf16[32,128]{1,0:T(8,128)(2,1)}', space=vmem, size = 0x2000, scoped, tag = 'scratch operand']
  #allocation4 [shape = 'bf16[56,256]{1,0:T(8,128)(2,1)}', space=vmem, size = 0x7000, scoped, tag = 'scratch operand']
  %s0 = inlined_call_operand.smem [shape: u32[40], index: -1, kind: input, shape index: {}]
  %s1 = sld [smem:[%s0]]
  %s2 = scalar_lea.smem %s0, 1
  %s3 = sld [smem:[%s2]]
  %s4 = scalar_lea.smem %s0, 2
  %s5 = sld [smem:[%s4]]
  %s6 = scalar_lea.smem %s0, 3
  %s7 = sld [smem:[%s6]]
  %s8 = scalar_lea.smem %s0, 4
  %s9 = sld [smem:[%s8]]
  %s10 = scalar_lea.smem %s0, 5
  %s11 = sld [smem:[%s10]]
  %s12 = scalar_lea.smem %s0, 6
  %s13 = sld [smem:[%s12]]
  %s14 = scalar_lea.smem %s0, 7
  %s15 = sld [smem:[%s14]]
  %s16 = scalar_lea.smem %s0, 8
  %s17 = sld [smem:[%s16]]
  %s18 = scalar_lea.smem %s0, 9
  %s19 = sld [smem:[%s18]]
  %s20 = scalar_lea.smem %s0, 10
  %s21 = sld [smem:[%s20]]
  %s22 = scalar_lea.smem %s0, 11
  %s23 = sld [smem:[%s22]]
  %s24 = scalar_lea.smem %s0, 12
  %s25 = sld [smem:[%s24]]
  %s26 = scalar_lea.smem %s0, 13
  %s27 = sld [smem:[%s26]]
  %s28 = scalar_lea.smem %s0, 14
  %s29 = sld [smem:[%s28]]
  %s30 = scalar_lea.smem %s0, 15
  %s31 = sld [smem:[%s30]]
  %s32 = scalar_lea.smem %s0, 16
  %s33 = sld [smem:[%s32]]
  %s34 = scalar_lea.smem %s0, 17
  %s35 = sld [smem:[%s34]]
  %s36 = scalar_lea.smem %s0, 18
  %s37 = sld [smem:[%s36]]
  %s38 = scalar_lea.smem %s0, 19
  %s39 = sld [smem:[%s38]]
  %s40 = scalar_lea.smem %s0, 20
  %s41 = sld [smem:[%s40]]
  %s42 = scalar_lea.smem %s0, 21
  %s43 = sld [smem:[%s42]]
  %s44 = scalar_lea.smem %s0, 22
  %s45 = sld [smem:[%s44]]
  %s46 = scalar_lea.smem %s0, 23
  %s47 = sld [smem:[%s46]]
  %s48 = scalar_lea.smem %s0, 24
  %s49 = sld [smem:[%s48]]
  %s50 = scalar_lea.smem %s0, 25
  %s51 = sld [smem:[%s50]]
  %s52 = scalar_lea.smem %s0, 26
  %s53 = sld [smem:[%s52]]
  %s54 = scalar_lea.smem %s0, 27
  %s55 = sld [smem:[%s54]]
  %s56 = scalar_lea.smem %s0, 28
  %s57 = sld [smem:[%s56]]
  %s58 = scalar_lea.smem %s0, 29
  %s59 = sld [smem:[%s58]]
  %s60 = scalar_lea.smem %s0, 30
  %s61 = sld [smem:[%s60]]
  %s62 = scalar_lea.smem %s0, 31
  %s63 = sld [smem:[%s62]]
  %s64 = scalar_lea.smem %s0, 32
  %s65 = sld [smem:[%s64]]
  %s66 = scalar_lea.smem %s0, 33
  %s67 = sld [smem:[%s66]]
  %s68 = scalar_lea.smem %s0, 34
  %s69 = sld [smem:[%s68]]
  %s70 = scalar_lea.smem %s0, 35
  %s71 = sld [smem:[%s70]]
  %s72 = scalar_lea.smem %s0, 36
  %s73 = sld [smem:[%s72]]
  %s74 = scalar_lea.smem %s0, 37
  %s75 = sld [smem:[%s74]]
  %s76 = scalar_lea.smem %s0, 38
  %s77 = sld [smem:[%s76]]
  %s78 = scalar_lea.smem %s0, 39
  %s79 = sld [smem:[%s78]]
  %s80 = sld [smem:[#allocation0]]
  $region186: #{inception_time_forward.1} parent=0
    _
  %s82 = ssub.s32 1, %s80
  %s83 = scalar_select 0, %s82, %s80
  $region1: #{inception_time_forward.1} parent=0
    #allocation5 [shape = 'u8[262144]{0}', space=vmem, size = 0x40000, scoped, tag = 'input window, operand 9, single buffered']
    #allocation6 [shape = 's32[1]{0}', space=sflag, size = 0x4, scoped, tag = 'scoped memory for inception_time_forward.1']
    #allocation7 [shape = 's32[1]{0}', space=sflag, size = 0x4, scoped, tag = 'scoped memory for inception_time_forward.1']
    #allocation8 [shape = 'u8[262144]{0}', space=vmem, size = 0x40000, scoped, tag = 'input window, operand 14, single buffered']
    #allocation9 [shape = 's32[1]{0}', space=sflag, size = 0x4, scoped, tag = 'scoped memory for inception_time_forward.1']
    #allocation10 [shape = 'u8[262144]{0}', space=vmem, size = 0x40000, scoped, tag = 'input window, operand 19, single buffered']
    #allocation11 [shape = 'u8[262144]{0}', space=vmem, size = 0x40000, scoped, tag = 'input window, operand 24, single buffered']
    #allocation12 [shape = 's32[1]{0}', space=sflag, size = 0x4, scoped, tag = 'scoped memory for inception_time_forward.1']
    #allocation13 [shape = 'u8[262144]{0}', space=vmem, size = 0x40000, scoped, tag = 'input window, operand 29, single buffered']
    #allocation14 [shape = 'u8[1024]{0}', space=vmem, size = 0x400, scoped, tag = 'output window, operand 0, single buffered']
    %84 = vsyncpa [#allocation6], 0
    %85 = vsyncpa [#allocation9], 0
    %86 = vsyncpa [#allocation12], 0
    %87 = vsyncpa [#allocation7], 0
    // Predicated region
    $region2: #{inception_time_forward.1} parent=1 // pred_check
      _
    $region3: #{inception_time_forward.1} parent=1 // pred_check_branch
      %89 = sbr.rel (0) target = $region5
    $region4: #{inception_time_forward.1} parent=1 // pred_region
      _
    $region5: #{inception_time_forward.1} parent=1 // pred_fallthru
      _
    // Predicated region
    $region6: #{inception_time_forward.1} parent=1 // pred_check
      _
    $region7: #{inception_time_forward.1} parent=1 // pred_check_branch
      %91 = sbr.rel (0) target = $region9
    $region8: #{inception_time_forward.1} parent=1 // pred_region
      _
    $region9: #{inception_time_forward.1} parent=1 // pred_fallthru
      _
    // Predicated region
    $region10: #{inception_time_forward.1} parent=1 // pred_check
      _
    $region11: #{inception_time_forward.1} parent=1 // pred_check_branch
      %93 = sbr.rel (0) target = $region13
    $region12: #{inception_time_forward.1} parent=1 // pred_region
      _
    $region13: #{inception_time_forward.1} parent=1 // pred_fallthru
      _
    // Predicated region
    $region14: #{inception_time_forward.1} parent=1 // pred_check
      _
    $region15: #{inception_time_forward.1} parent=1 // pred_check_branch
      %95 = sbr.rel (0) target = $region17
    $region16: #{inception_time_forward.1} parent=1 // pred_region
      _
    $region17: #{inception_time_forward.1} parent=1 // pred_fallthru
      _
    // Predicated region
    $region18: #{inception_time_forward.1} parent=1 // pred_check
      _
    $region19: #{inception_time_forward.1} parent=1 // pred_check_branch
      %97 = sbr.rel (0) target = $region21
    $region20: #{inception_time_forward.1} parent=1 // pred_region
      _
    $region21: #{inception_time_forward.1} parent=1 // pred_fallthru
      _
    // Predicated region
    $region22: #{inception_time_forward.1} parent=1 // pred_check
      _
    $region23: #{inception_time_forward.1} parent=1 // pred_check_branch
      %99 = sbr.rel (0) target = $region25
    $region24: #{inception_time_forward.1} parent=1 // pred_region
      _
    $region25: #{inception_time_forward.1} parent=1 // pred_fallthru
      _
    // Predicated region
    $region26: #{inception_time_forward.1} parent=1 // pred_check
      _
    $region27: #{inception_time_forward.1} parent=1 // pred_check_branch
      %101 = sbr.rel (0) target = $region29
    $region28: #{inception_time_forward.1} parent=1 // pred_region
      _
    $region29: #{inception_time_forward.1} parent=1 // pred_fallthru
      _
    // Predicated region
    $region30: #{inception_time_forward.1} parent=1 // pred_check
      _
    $region31: #{inception_time_forward.1} parent=1 // pred_check_branch
      %103 = sbr.rel (0) target = $region33
    $region32: #{inception_time_forward.1} parent=1 // pred_region
      _
    $region33: #{inception_time_forward.1} parent=1 // pred_fallthru
      _
    // Predicated region
    $region34: #{inception_time_forward.1} parent=1 // pred_check
      _
    $region35: #{inception_time_forward.1} parent=1 // pred_check_branch
      %105 = sbr.rel (0) target = $region37
    $region36: #{inception_time_forward.1} parent=1 // pred_region
      _
    $region37: #{inception_time_forward.1} parent=1 // pred_fallthru
      _
    // Predicated region
    $region38: #{inception_time_forward.1} parent=1 // pred_check
      _
    $region39: #{inception_time_forward.1} parent=1 // pred_check_branch
      %107 = sbr.rel (0) target = $region41
    $region40: #{inception_time_forward.1} parent=1 // pred_region
      %s109 = ssub.s32 8192, 8192
      %110 = vsyncadd [#allocation6], %s109
      %s111 = sshll.u32 [#allocation5], 4
      %s112 = int_to_ptr.vmem [resolvable:$true] %s111
      %117 = dma.hbm_to_vmem [thread:$0]  %s19, 8192, %s112, [#allocation6], 64, 64, 4
    $region41: #{inception_time_forward.1} parent=1 // pred_fallthru
      _
    // Predicated region
    $region42: #{inception_time_forward.1} parent=1 // pred_check
      _
    $region43: #{inception_time_forward.1} parent=1 // pred_check_branch
      %119 = sbr.rel (0) target = $region45
    $region44: #{inception_time_forward.1} parent=1 // pred_region
      _
    $region45: #{inception_time_forward.1} parent=1 // pred_fallthru
      _
    // Predicated region
    $region46: #{inception_time_forward.1} parent=1 // pred_check
      _
    $region47: #{inception_time_forward.1} parent=1 // pred_check_branch
      %121 = sbr.rel (0) target = $region49
    $region48: #{inception_time_forward.1} parent=1 // pred_region
      _
    $region49: #{inception_time_forward.1} parent=1 // pred_fallthru
      _
    // Predicated region
    $region50: #{inception_time_forward.1} parent=1 // pred_check
      _
    $region51: #{inception_time_forward.1} parent=1 // pred_check_branch
      %123 = sbr.rel (0) target = $region53
    $region52: #{inception_time_forward.1} parent=1 // pred_region
      _
    $region53: #{inception_time_forward.1} parent=1 // pred_fallthru
      _
    // Predicated region
    $region54: #{inception_time_forward.1} parent=1 // pred_check
      _
    $region55: #{inception_time_forward.1} parent=1 // pred_check_branch
      %125 = sbr.rel (0) target = $region57
    $region56: #{inception_time_forward.1} parent=1 // pred_region
      _
    $region57: #{inception_time_forward.1} parent=1 // pred_fallthru
      _
    // Predicated region
    $region58: #{inception_time_forward.1} parent=1 // pred_check
      _
    $region59: #{inception_time_forward.1} parent=1 // pred_check_branch
      %127 = sbr.rel (0) target = $region61
    $region60: #{inception_time_forward.1} parent=1 // pred_region
      %s129 = ssub.s32 8192, 8192
      %130 = vsyncadd [#allocation9], %s129
      %s131 = sshll.u32 [#allocation8], 4
      %s132 = int_to_ptr.vmem [resolvable:$true] %s131
      %137 = dma.hbm_to_vmem [thread:$0]  %s29, 8192, %s132, [#allocation9], 64, 64, 4
    $region61: #{inception_time_forward.1} parent=1 // pred_fallthru
      _
    // Predicated region
    $region62: #{inception_time_forward.1} parent=1 // pred_check
      _
    $region63: #{inception_time_forward.1} parent=1 // pred_check_branch
      %139 = sbr.rel (0) target = $region65
    $region64: #{inception_time_forward.1} parent=1 // pred_region
      _
    $region65: #{inception_time_forward.1} parent=1 // pred_fallthru
      _
    // Predicated region
    $region66: #{inception_time_forward.1} parent=1 // pred_check
      _
    $region67: #{inception_time_forward.1} parent=1 // pred_check_branch
      %141 = sbr.rel (0) target = $region69
    $region68: #{inception_time_forward.1} parent=1 // pred_region
      _
    $region69: #{inception_time_forward.1} parent=1 // pred_fallthru
      _
    // Predicated region
    $region70: #{inception_time_forward.1} parent=1 // pred_check
      _
    $region71: #{inception_time_forward.1} parent=1 // pred_check_branch
      %143 = sbr.rel (0) target = $region73
    $region72: #{inception_time_forward.1} parent=1 // pred_region
      _
    $region73: #{inception_time_forward.1} parent=1 // pred_fallthru
      _
    // Predicated region
    $region74: #{inception_time_forward.1} parent=1 // pred_check
      _
    $region75: #{inception_time_forward.1} parent=1 // pred_check_branch
      %145 = sbr.rel (0) target = $region77
    $region76: #{inception_time_forward.1} parent=1 // pred_region
      _
    $region77: #{inception_time_forward.1} parent=1 // pred_fallthru
      _
    // Predicated region
    $region78: #{inception_time_forward.1} parent=1 // pred_check
      _
    $region79: #{inception_time_forward.1} parent=1 // pred_check_branch
      %147 = sbr.rel (0) target = $region81
    $region80: #{inception_time_forward.1} parent=1 // pred_region
      %s149 = ssub.s32 8192, 8192
      %150 = vsyncadd [#allocation9], %s149
      %s151 = sshll.u32 [#allocation10], 4
      %s152 = int_to_ptr.vmem [resolvable:$true] %s151
      %157 = dma.hbm_to_vmem [thread:$0]  %s39, 8192, %s152, [#allocation9], 64, 64, 4
    $region81: #{inception_time_forward.1} parent=1 // pred_fallthru
      _
    // Predicated region
    $region82: #{inception_time_forward.1} parent=1 // pred_check
      _
    $region83: #{inception_time_forward.1} parent=1 // pred_check_branch
      %159 = sbr.rel (0) target = $region85
    $region84: #{inception_time_forward.1} parent=1 // pred_region
      _
    $region85: #{inception_time_forward.1} parent=1 // pred_fallthru
      _
    // Predicated region
    $region86: #{inception_time_forward.1} parent=1 // pred_check
      _
    $region87: #{inception_time_forward.1} parent=1 // pred_check_branch
      %161 = sbr.rel (0) target = $region89
    $region88: #{inception_time_forward.1} parent=1 // pred_region
      _
    $region89: #{inception_time_forward.1} parent=1 // pred_fallthru
      _
    // Predicated region
    $region90: #{inception_time_forward.1} parent=1 // pred_check
      _
    $region91: #{inception_time_forward.1} parent=1 // pred_check_branch
      %163 = sbr.rel (0) target = $region93
    $region92: #{inception_time_forward.1} parent=1 // pred_region
      _
    $region93: #{inception_time_forward.1} parent=1 // pred_fallthru
      _
    // Predicated region
    $region94: #{inception_time_forward.1} parent=1 // pred_check
      _
    $region95: #{inception_time_forward.1} parent=1 // pred_check_branch
      %165 = sbr.rel (0) target = $region97
    $region96: #{inception_time_forward.1} parent=1 // pred_region
      _
    $region97: #{inception_time_forward.1} parent=1 // pred_fallthru
      _
    // Predicated region
    $region98: #{inception_time_forward.1} parent=1 // pred_check
      _
    $region99: #{inception_time_forward.1} parent=1 // pred_check_branch
      %167 = sbr.rel (0) target = $region101
    $region100: #{inception_time_forward.1} parent=1 // pred_region
      %s169 = ssub.s32 8192, 8192
      %170 = vsyncadd [#allocation12], %s169
      %s171 = sshll.u32 [#allocation11], 4
      %s172 = int_to_ptr.vmem [resolvable:$true] %s171
      %177 = dma.hbm_to_vmem [thread:$0]  %s49, 8192, %s172, [#allocation12], 64, 64, 4
    $region101: #{inception_time_forward.1} parent=1 // pred_fallthru
      _
    // Predicated region
    $region102: #{inception_time_forward.1} parent=1 // pred_check
      _
    $region103: #{inception_time_forward.1} parent=1 // pred_check_branch
      %179 = sbr.rel (0) target = $region105
    $region104: #{inception_time_forward.1} parent=1 // pred_region
      _
    $region105: #{inception_time_forward.1} parent=1 // pred_fallthru
      _
    // Predicated region
    $region106: #{inception_time_forward.1} parent=1 // pred_check
      _
    $region107: #{inception_time_forward.1} parent=1 // pred_check_branch
      %181 = sbr.rel (0) target = $region109
    $region108: #{inception_time_forward.1} parent=1 // pred_region
      _
    $region109: #{inception_time_forward.1} parent=1 // pred_fallthru
      _
    // Predicated region
    $region110: #{inception_time_forward.1} parent=1 // pred_check
      _
    $region111: #{inception_time_forward.1} parent=1 // pred_check_branch
      %183 = sbr.rel (0) target = $region113
    $region112: #{inception_time_forward.1} parent=1 // pred_region
      _
    $region113: #{inception_time_forward.1} parent=1 // pred_fallthru
      _
    // Predicated region
    $region114: #{inception_time_forward.1} parent=1 // pred_check
      _
    $region115: #{inception_time_forward.1} parent=1 // pred_check_branch
      %185 = sbr.rel (0) target = $region117
    $region116: #{inception_time_forward.1} parent=1 // pred_region
      _
    $region117: #{inception_time_forward.1} parent=1 // pred_fallthru
      _
    // Predicated region
    $region118: #{inception_time_forward.1} parent=1 // pred_check
      _
    $region119: #{inception_time_forward.1} parent=1 // pred_check_branch
      %187 = sbr.rel (0) target = $region121
    $region120: #{inception_time_forward.1} parent=1 // pred_region
      %s189 = ssub.s32 8192, 8192
      %190 = vsyncadd [#allocation12], %s189
      %s191 = sshll.u32 [#allocation13], 4
      %s192 = int_to_ptr.vmem [resolvable:$true] %s191
      %197 = dma.hbm_to_vmem [thread:$0]  %s59, 8192, %s192, [#allocation12], 64, 64, 4
    $region121: #{inception_time_forward.1} parent=1 // pred_fallthru
      _
    // Predicated region
    $region122: #{inception_time_forward.1} parent=1 // pred_check
      _
    $region123: #{inception_time_forward.1} parent=1 // pred_check_branch
      %199 = sbr.rel (0) target = $region125
    $region124: #{inception_time_forward.1} parent=1 // pred_region
      _
    $region125: #{inception_time_forward.1} parent=1 // pred_fallthru
      _
    // Predicated region
    $region126: #{inception_time_forward.1} parent=1 // pred_check
      _
    $region127: #{inception_time_forward.1} parent=1 // pred_check_branch
      %201 = sbr.rel (0) target = $region129
    $region128: #{inception_time_forward.1} parent=1 // pred_region
      _
    $region129: #{inception_time_forward.1} parent=1 // pred_fallthru
      _
    // Predicated region
    $region130: #{inception_time_forward.1} parent=1 // pred_check
      _
    $region131: #{inception_time_forward.1} parent=1 // pred_check_branch
      %203 = sbr.rel (0) target = $region133
    $region132: #{inception_time_forward.1} parent=1 // pred_region
      _
    $region133: #{inception_time_forward.1} parent=1 // pred_fallthru
      _
    // Predicated region
    $region134: #{inception_time_forward.1} parent=1 // pred_check
      _
    $region135: #{inception_time_forward.1} parent=1 // pred_check_branch
      %205 = sbr.rel (0) target = $region137
    $region136: #{inception_time_forward.1} parent=1 // pred_region
      _
    $region137: #{inception_time_forward.1} parent=1 // pred_fallthru
      _
    // Predicated region
    $region138: #{inception_time_forward.1} parent=1 // pred_check
      _
    $region139: #{inception_time_forward.1} parent=1 // pred_check_branch
      %207 = sbr.rel (0) target = $region141
    $region140: #{inception_time_forward.1} parent=1 // pred_region
      _
    $region141: #{inception_time_forward.1} parent=1 // pred_fallthru
      _
    // Predicated region
    $region142: #{inception_time_forward.1} parent=1 // pred_check
      _
    $region143: #{inception_time_forward.1} parent=1 // pred_check_branch
      %209 = sbr.rel (0) target = $region145
    $region144: #{inception_time_forward.1} parent=1 // pred_region
      _
    $region145: #{inception_time_forward.1} parent=1 // pred_fallthru
      _
    // Predicated region
    $region146: #{inception_time_forward.1} parent=1 // pred_check
      _
    $region147: #{inception_time_forward.1} parent=1 // pred_check_branch
      %211 = sbr.rel (0) target = $region149
    $region148: #{inception_time_forward.1} parent=1 // pred_region
      _
    $region149: #{inception_time_forward.1} parent=1 // pred_fallthru
      _
    // Predicated region
    $region150: #{inception_time_forward.1} parent=1 // pred_check
      _
    $region151: #{inception_time_forward.1} parent=1 // pred_check_branch
      %213 = sbr.rel (0) target = $region153
    $region152: #{inception_time_forward.1} parent=1 // pred_region
      _
    $region153: #{inception_time_forward.1} parent=1 // pred_fallthru
      _
    // Predicated region
    $region154: #{inception_time_forward.1} parent=1 // pred_check
      _
    $region155: #{inception_time_forward.1} parent=1 // pred_check_branch
      %215 = sbr.rel (0) target = $region157
    $region156: #{inception_time_forward.1} parent=1 // pred_region
      _
    $region157: #{inception_time_forward.1} parent=1 // pred_fallthru
      _
    // Predicated region
    $region158: #{inception_time_forward.1} parent=1 // pred_check
      _
    $region159: #{inception_time_forward.1} parent=1 // pred_check_branch
      %217 = sbr.rel (0) target = $region161
    $region160: #{inception_time_forward.1} parent=1 // pred_region
      %218 = dma.done [#allocation6], 8192
    $region161: #{inception_time_forward.1} parent=1 // pred_fallthru
      _
    // Predicated region
    $region162: #{inception_time_forward.1} parent=1 // pred_check
      _
    $region163: #{inception_time_forward.1} parent=1 // pred_check_branch
      %220 = sbr.rel (0) target = $region165
    $region164: #{inception_time_forward.1} parent=1 // pred_region
      %221 = dma.done [#allocation9], 8192
    $region165: #{inception_time_forward.1} parent=1 // pred_fallthru
      _
    // Predicated region
    $region166: #{inception_time_forward.1} parent=1 // pred_check
      _
    $region167: #{inception_time_forward.1} parent=1 // pred_check_branch
      %223 = sbr.rel (0) target = $region169
    $region168: #{inception_time_forward.1} parent=1 // pred_region
      %224 = dma.done [#allocation9], 8192
    $region169: #{inception_time_forward.1} parent=1 // pred_fallthru
      _
    // Predicated region
    $region170: #{inception_time_forward.1} parent=1 // pred_check
      _
    $region171: #{inception_time_forward.1} parent=1 // pred_check_branch
      %226 = sbr.rel (0) target = $region173
    $region172: #{inception_time_forward.1} parent=1 // pred_region
      %227 = dma.done [#allocation12], 8192
    $region173: #{inception_time_forward.1} parent=1 // pred_fallthru
      _
    // Predicated region
    $region174: #{inception_time_forward.1} parent=1 // pred_check
      _
    $region175: #{inception_time_forward.1} parent=1 // pred_check_branch
      %229 = sbr.rel (0) target = $region177
    $region176: #{inception_time_forward.1} parent=1 // pred_region
      %230 = dma.done [#allocation12], 8192
    $region177: #{inception_time_forward.1} parent=1 // pred_fallthru
      _
    %v232 = vld [vmem:[%s3] sm:$0xff]
    %v233 = vld [vmem:[%s3 + $0x8] sm:$0xff]
    %v234 = vld [vmem:[%s3 + $0x10] sm:$0xff]
    %v235 = vld [vmem:[%s3 + $0x18] sm:$0xff]
    %vm236 = vcmp.eq.s32.totalorder %v232, 0
    %vm237 = vcmp.eq.s32.totalorder %v233, 0
    %vm238 = vcmp.eq.s32.totalorder %v234, 0
    %vm239 = vcmp.eq.s32.totalorder %v235, 0
    %vm240 = vcmp.eq.s32.totalorder %v232, 15
    %vm241 = vcmp.eq.s32.totalorder %v233, 15
    %vm242 = vcmp.eq.s32.totalorder %v234, 15
    %vm243 = vcmp.eq.s32.totalorder %v235, 15
    %v244 = vld [vmem:[%s5] sm:$0x3]
    %v245 = vld [vmem:[%s1] sm:$0xf]
    %v246 = vld [vmem:[%s1 + $0x4] sm:$0xf]
    %v247 = vld [vmem:[%s1 + $0x8] sm:$0xf]
    %v248 = vld [vmem:[%s1 + $0xc] sm:$0xf]
    %v249 = vld [vmem:[%s7] sm:$0x3]
    %v254 = vunpack.c.l.b16 %v245
    %v255 = vunpack.c.l.b16 %v246
    %v256 = vunpack.c.l.b16 %v247
    %v257 = vunpack.c.l.b16 %v248
    %v258 = vpack.c.b16 %v255, %v254
    %v259 = vpack.c.b16 %v257, %v256
    %vm260 = vcmask 31744
    %v262 = vsel %vm260, %v258, 0
    %v265 = vsel %vm260, %v259, 0
    %vm267 = vcmask 1041408
    %v269 = vsel %vm267, %v249, 0
    %271 = vmatprep.subr.bf16.mxu0 0
    %272 = vmatpush1.bf16.msra.mxu0 0
    %273 = vmatprep.subr.bf16.mxu0 0
    %274 = vmatpush1.bf16.msra.mxu0 0
    %275 = vmatprep.subr.bf16.mxu0 0
    %276 = vmatpush1.bf16.msra.mxu0 0
    %277 = vmatprep.subr.bf16.mxu0 0
    %278 = vmatpush1.bf16.msra.mxu0 0
    %279 = vmatprep.subr.bf16.mxu0 0
    %280 = vmatpush1.bf16.msra.mxu0 0
    %281 = vmatprep.subr.bf16.mxu0 0
    %282 = vmatpush1.bf16.msra.mxu0 0
    %283 = vmatprep.subr.bf16.mxu0 0
    %284 = vmatpush1.bf16.msra.mxu0 0
    %285 = vmatprep.subr.bf16.mxu0 0
    %286 = vmatpush1.bf16.msra.mxu0 %v269
    %287 = vmatprep.subr.bf16.mxu0 0
    %288 = vmatpush2.bf16.msra.mxu0 0
    %289 = vmatprep.subr.bf16.mxu0 0
    %290 = vmatpush2.bf16.msra.mxu0 0
    %291 = vmatprep.subr.bf16.mxu0 0
    %292 = vmatpush2.bf16.msra.mxu0 0
    %293 = vmatprep.subr.bf16.mxu0 0
    %294 = vmatpush2.bf16.msra.mxu0 0
    %295 = vmatprep.subr.bf16.mxu0 0
    %296 = vmatpush2.bf16.msra.mxu0 0
    %297 = vmatprep.subr.bf16.mxu0 0
    %298 = vmatpush2.bf16.msra.mxu0 0
    %299 = vmatprep.subr.bf16.mxu0 0
    %300 = vmatpush2.bf16.msra.mxu0 0
    %301 = vmatprep.subr.bf16.mxu0 0
    %302 = vmatpush2.bf16.msra.mxu0 0
    %303 = vmatprep.mubr.bf16.mxu0 0
    %304 = vmatmul.mubr.bf16.gmra.mxu0 %v262
    %v305 = vpop.f32.mrf.mxu0
    %v306 = vadd.f32 0.0, %v305
    %v307 = vpop.f32.mrf.mxu0
    %v308 = vpop.f32.mrf.mxu0
    %v309 = vadd.f32 0.0, %v308
    %v310 = vpop.f32.mrf.mxu0
    %311 = vmatprep.mubr.bf16.mxu0 0
    %312 = vmatmul.mubr.bf16.gmra.mxu0 %v265
    %v313 = vpop.f32.mrf.mxu0
    %v314 = vadd.f32 0.0, %v313
    %v315 = vpop.f32.mrf.mxu0
    %v316 = vpop.f32.mrf.mxu0
    %v317 = vadd.f32 0.0, %v316
    %v318 = vpop.f32.mrf.mxu0
    %319 = vdwg.mxu0
    %v320 = vpack.c.bf16 %v309, %v306
    %v321 = vpack.c.bf16 %v317, %v314
    %v324 = vunpack.c.l.b16 %v320
    %v325 = vunpack.c.h.b16 %v320
    %v326 = vunpack.c.l.b16 %v321
    %v327 = vunpack.c.h.b16 %v321
    %v328 = vpack.c.b16 %v324, %v324
    %v329 = vpack.c.b16 %v325, %v325
    %v330 = vpack.c.b16 %v326, %v326
    %v331 = vpack.c.b16 %v327, %v327
    %vm332 = vsmask.f32 3328
    %vm333 = vsmask.f32 7440
    %vm334 = vmor %vm332, %vm333
    %v336 = vshll.u32 %v328, 16
    %v338 = vrot.slane %v336, 5
    %v339 = vshrl.u32 %v328, 16
    %v341 = vrot.slane %v339, 4
    %v342 = vor.u32 %v341, %v338
    %v343 = vrot.slane %v342, 4
    %v345 = vshll.u32 %v329, 16
    %v347 = vrot.slane %v345, 5
    %v348 = vsel %vm334, %v343, %v347
    %v349 = vshrl.u32 %v329, 16
    %v351 = vrot.slane %v349, 4
    %v352 = vor.u32 %v351, %v347
    %v353 = vrot.slane %v352, 4
    %v355 = vshll.u32 %v330, 16
    %v357 = vrot.slane %v355, 5
    %v358 = vsel %vm334, %v353, %v357
    %v359 = vshrl.u32 %v330, 16
    %v361 = vrot.slane %v359, 4
    %v362 = vor.u32 %v361, %v357
    %v363 = vrot.slane %v362, 4
    %v365 = vshll.u32 %v331, 16
    %v367 = vrot.slane %v365, 5
    %v368 = vsel %vm334, %v363, %v367
    %v369 = vshrl.u32 %v331, 16
    %v371 = vrot.slane %v369, 4
    %v372 = vor.u32 %v371, %v367
    %v373 = vrot.slane %v372, 4
    %vm379 = vcmask 257027
    %vm380 = vsmask.f32 7950
    %vm381 = vmand %vm379, %vm380
    %v382 = vld [vmem:[#allocation4 + $0x8] sm:$0x8]
    %v383 = vsel %vm381, %v338, %v382
    %384 = vst [vmem:[#allocation4 + $0x8] sm:$0x8] %v383
    %vm385 = vcmask 257024
    %386 = vst.msk [vmem:[#allocation4 + $0x10] sm:$0xf] %vm385, %v348
    %387 = vst.msk [vmem:[#allocation4 + $0x18] sm:$0xf] %vm385, %v358
    %388 = vst.msk [vmem:[#allocation4 + $0x20] sm:$0xf] %vm385, %v368
    %vm389 = vcmask 257024
    %vm390 = vmand %vm389, %vm332
    %v391 = vld [vmem:[#allocation4 + $0x28] sm:$0xf]
    %v392 = vsel %vm390, %v373, %v391
    %393 = vst [vmem:[#allocation4 + $0x28] sm:$0xf] %v392
    %vm394 = vcmask 1042432
    %vm395 = vcmask 1046532
    %vm396 = vmor %vm394, %vm395
    %v397 = vrot.slane %v328, 5
    %v398 = vrot.slane %v397, 4
    %v399 = vrot.slane %v329, 5
    %v400 = vsel %vm396, %v398, %v399
    %v401 = vrot.slane %v399, 4
    %v402 = vrot.slane %v330, 5
    %v403 = vsel %vm396, %v401, %v402
    %v404 = vrot.slane %v402, 4
    %v405 = vrot.slane %v331, 5
    %v406 = vsel %vm396, %v404, %v405
    %v407 = vrot.slane %v405, 4
    %408 = vrot.lane.b32.xlu0 %v397, 32
    %v409 = vpop.permute.xlu0 %408
    %410 = vrot.lane.b32.xlu0 %v400, 32
    %v411 = vpop.permute.xlu0 %410
    %412 = vrot.lane.b32.xlu0 %v403, 32
    %v413 = vpop.permute.xlu0 %412
    %414 = vrot.lane.b32.xlu0 %v406, 32
    %v415 = vpop.permute.xlu0 %414
    %416 = vrot.lane.b32.xlu0 %v407, 32
    %v417 = vpop.permute.xlu0 %416
    %vm423 = vcmask 519427
    %424 = vst.msk [vmem:[#allocation4 + $0x8] sm:$0x8] %vm423, %v409
    %vm425 = vcmask 519424
    %426 = vst.msk [vmem:[#allocation4 + $0x10] sm:$0xf] %vm425, %v411
    %427 = vst.msk [vmem:[#allocation4 + $0x18] sm:$0xf] %vm425, %v413
    %428 = vst.msk [vmem:[#allocation4 + $0x20] sm:$0xf] %vm425, %v415
    %vm429 = vcmask 518400
    %430 = vst.msk [vmem:[#allocation4 + $0x28] sm:$0x7] %vm429, %v417
    %vm431 = vsmask.f32 2304
    %vm432 = vsmask.f32 6416
    %vm433 = vmor %vm431, %vm432
    %v434 = vrot.slane %v339, 5
    %v435 = vrot.slane %v336, 6
    %v436 = vor.u32 %v434, %v435
    %v437 = vrot.slane %v436, 4
    %v438 = vrot.slane %v349, 5
    %v439 = vrot.slane %v345, 6
    %v440 = vor.u32 %v438, %v439
    %v441 = vsel %vm433, %v437, %v440
    %v442 = vrot.slane %v440, 4
    %v443 = vrot.slane %v359, 5
    %v444 = vrot.slane %v355, 6
    %v445 = vor.u32 %v443, %v444
    %v446 = vsel %vm433, %v442, %v445
    %v447 = vrot.slane %v445, 4
    %v448 = vrot.slane %v369, 5
    %v449 = vrot.slane %v365, 6
    %v450 = vor.u32 %v448, %v449
    %v451 = vsel %vm433, %v447, %v450
    %v452 = vrot.slane %v450, 4
    %453 = vrot.lane.b32.xlu0 %v436, 64
    %v454 = vpop.permute.xlu0 %453
    %455 = vrot.lane.b32.xlu0 %v441, 64
    %v456 = vpop.permute.xlu0 %455
    %457 = vrot.lane.b32.xlu0 %v446, 64
    %v458 = vpop.permute.xlu0 %457
    %459 = vrot.lane.b32.xlu0 %v451, 64
    %v460 = vpop.permute.xlu0 %459
    %461 = vrot.lane.b32.xlu0 %v452, 64
    %v462 = vpop.permute.xlu0 %461
    %vm468 = vcmask 781826
    %vm469 = vsmask.f32 7946
    %vm470 = vmand %vm468, %vm469
    %v471 = vld [vmem:[#allocation4 + $0x8] sm:$0xc]
    %v472 = vsel %vm470, %v454, %v471
    %473 = vst [vmem:[#allocation4 + $0x8] sm:$0xc] %v472
    %vm474 = vcmask 781824
    %475 = vst.msk [vmem:[#allocation4 + $0x10] sm:$0xf] %vm474, %v456
    %476 = vst.msk [vmem:[#allocation4 + $0x18] sm:$0xf] %vm474, %v458
    %477 = vst.msk [vmem:[#allocation4 + $0x20] sm:$0xf] %vm474, %v460
    %vm478 = vcmask 780800
    %vm479 = vmand %vm478, %vm431
    %v480 = vld [vmem:[#allocation4 + $0x28] sm:$0x7]
    %v481 = vsel %vm479, %v462, %v480
    %482 = vst [vmem:[#allocation4 + $0x28] sm:$0x7] %v481
    %vm483 = vcmask 1041408
    %vm484 = vcmask 1045508
    %vm485 = vmor %vm483, %vm484
    %v486 = vrot.slane %v328, 6
    %v487 = vrot.slane %v486, 4
    %v488 = vrot.slane %v329, 6
    %v489 = vsel %vm485, %v487, %v488
    %v490 = vrot.slane %v488, 4
    %v491 = vrot.slane %v330, 6
    %v492 = vsel %vm485, %v490, %v491
    %v493 = vrot.slane %v491, 4
    %v494 = vrot.slane %v331, 6
    %v495 = vsel %vm485, %v493, %v494
    %v496 = vrot.slane %v494, 4
    %497 = vrot.lane.b32.xlu0 %v486, 96
    %v498 = vpop.permute.xlu0 %497
    %499 = vrot.lane.b32.xlu0 %v489, 96
    %v500 = vpop.permute.xlu0 %499
    %501 = vrot.lane.b32.xlu0 %v492, 96
    %v502 = vpop.permute.xlu0 %501
    %503 = vrot.lane.b32.xlu0 %v495, 96
    %v504 = vpop.permute.xlu0 %503
    %505 = vrot.lane.b32.xlu0 %v496, 96
    %v506 = vpop.permute.xlu0 %505
    %vm512 = vcmask 1044226
    %513 = vst.msk [vmem:[#allocation4 + $0x8] sm:$0xc] %vm512, %v498
    %vm514 = vcmask 1044224
    %515 = vst.msk [vmem:[#allocation4 + $0x10] sm:$0xf] %vm514, %v500
    %516 = vst.msk [vmem:[#allocation4 + $0x18] sm:$0xf] %vm514, %v502
    %517 = vst.msk [vmem:[#allocation4 + $0x20] sm:$0xf] %vm514, %v504
    %vm518 = vcmask 1042176
    %519 = vst.msk [vmem:[#allocation4 + $0x28] sm:$0x3] %vm518, %v506
    %vm520 = vsmask.f32 1280
    %vm521 = vsmask.f32 5392
    %vm522 = vmor %vm520, %vm521
    %v523 = vrot.slane %v339, 6
    %v524 = vrot.slane %v336, 7
    %v525 = vor.u32 %v523, %v524
    %v526 = vrot.slane %v525, 4
    %v527 = vrot.slane %v349, 6
    %v528 = vrot.slane %v345, 7
    %v529 = vor.u32 %v527, %v528
    %v530 = vsel %vm522, %v526, %v529
    %v531 = vrot.slane %v529, 4
    %v532 = vrot.slane %v359, 6
    %v533 = vrot.slane %v355, 7
    %v534 = vor.u32 %v532, %v533
    %v535 = vsel %vm522, %v531, %v534
    %v536 = vrot.slane %v534, 4
    %v537 = vrot.slane %v369, 6
    %v538 = vrot.slane %v365, 7
    %v539 = vor.u32 %v537, %v538
    %v540 = vsel %vm522, %v536, %v539
    %v541 = vrot.slane %v539, 4
    %vm547 = vcmask 257025
    %vm548 = vsmask.f32 7942
    %vm549 = vmand %vm547, %vm548
    %v550 = vld [vmem:[#allocation4 + $0xc] sm:$0xe]
    %v551 = vsel %vm549, %v525, %v550
    %552 = vst [vmem:[#allocation4 + $0xc] sm:$0xe] %v551
    %553 = vst.msk [vmem:[#allocation4 + $0x14] sm:$0xf] %vm385, %v530
    %554 = vst.msk [vmem:[#allocation4 + $0x1c] sm:$0xf] %vm385, %v535
    %555 = vst.msk [vmem:[#allocation4 + $0x24] sm:$0xf] %vm385, %v540
    %vm556 = vcmask 254976
    %vm557 = vmand %vm556, %vm520
    %v558 = vld [vmem:[#allocation4 + $0x2c] sm:$0x3]
    %v559 = vsel %vm557, %v541, %v558
    %560 = vst [vmem:[#allocation4 + $0x2c] sm:$0x3] %v559
    %vm561 = vcmask 1040384
    %vm562 = vcmask 1044484
    %vm563 = vmor %vm561, %vm562
    %v564 = vrot.slane %v328, 7
    %v565 = vrot.slane %v564, 4
    %v566 = vrot.slane %v329, 7
    %v567 = vsel %vm563, %v565, %v566
    %v568 = vrot.slane %v566, 4
    %v569 = vrot.slane %v330, 7
    %v570 = vsel %vm563, %v568, %v569
    %v571 = vrot.slane %v569, 4
    %v572 = vrot.slane %v331, 7
    %v573 = vsel %vm563, %v571, %v572
    %v574 = vrot.slane %v572, 4
    %575 = vrot.lane.b32.xlu0 %v564, 32
    %v576 = vpop.permute.xlu0 %575
    %577 = vrot.lane.b32.xlu0 %v567, 32
    %v578 = vpop.permute.xlu0 %577
    %579 = vrot.lane.b32.xlu0 %v570, 32
    %v580 = vpop.permute.xlu0 %579
    %581 = vrot.lane.b32.xlu0 %v573, 32
    %v582 = vpop.permute.xlu0 %581
    %583 = vrot.lane.b32.xlu0 %v574, 32
    %v584 = vpop.permute.xlu0 %583
    %vm590 = vcmask 519425
    %591 = vst.msk [vmem:[#allocation4 + $0xc] sm:$0xe] %vm590, %v576
    %592 = vst.msk [vmem:[#allocation4 + $0x14] sm:$0xf] %vm425, %v578
    %593 = vst.msk [vmem:[#allocation4 + $0x1c] sm:$0xf] %vm425, %v580
    %594 = vst.msk [vmem:[#allocation4 + $0x24] sm:$0xf] %vm425, %v582
    %vm595 = vcmask 516352
    %596 = vst.msk [vmem:[#allocation4 + $0x2c] sm:$0x1] %vm595, %v584
    %vm597 = vsmask.f32 256
    %vm598 = vsmask.f32 4368
    %vm599 = vmor %vm597, %vm598
    %v600 = vrot.slane %v339, 7
    %v601 = vor.u32 %v600, %v336
    %v602 = vrot.slane %v600, 4
    %v603 = vrot.slane %v349, 7
    %v604 = vor.u32 %v603, %v345
    %v605 = vsel %vm599, %v602, %v604
    %v606 = vrot.slane %v603, 4
    %v607 = vrot.slane %v359, 7
    %v608 = vor.u32 %v607, %v355
    %v609 = vsel %vm599, %v606, %v608
    %v610 = vrot.slane %v607, 4
    %v611 = vrot.slane %v369, 7
    %v612 = vor.u32 %v611, %v365
    %v613 = vsel %vm599, %v610, %v612
    %v614 = vrot.slane %v611, 4
    %615 = vrot.lane.b32.xlu0 %v601, 64
    %v616 = vpop.permute.xlu0 %615
    %617 = vrot.lane.b32.xlu0 %v605, 64
    %v618 = vpop.permute.xlu0 %617
    %619 = vrot.lane.b32.xlu0 %v609, 64
    %v620 = vpop.permute.xlu0 %619
    %621 = vrot.lane.b32.xlu0 %v613, 64
    %v622 = vpop.permute.xlu0 %621
    %623 = vrot.lane.b32.xlu0 %v614, 64
    %v624 = vpop.permute.xlu0 %623
    %vm630 = vcmask 781824
    %vm631 = vsmask.f32 7938
    %vm632 = vmand %vm630, %vm631
    %v633 = vld [vmem:[#allocation4 + $0xc] sm:$0xf]
    %v634 = vsel %vm632, %v616, %v633
    %635 = vst [vmem:[#allocation4 + $0xc] sm:$0xf] %v634
    %636 = vst.msk [vmem:[#allocation4 + $0x14] sm:$0xf] %vm474, %v618
    %637 = vst.msk [vmem:[#allocation4 + $0x1c] sm:$0xf] %vm474, %v620
    %638 = vst.msk [vmem:[#allocation4 + $0x24] sm:$0xf] %vm474, %v622
    %vm639 = vcmask 778752
    %vm640 = vmand %vm639, %vm597
    %v641 = vld [vmem:[#allocation4 + $0x2c] sm:$0x1]
    %v642 = vsel %vm640, %v624, %v641
    %643 = vst [vmem:[#allocation4 + $0x2c] sm:$0x1] %v642
    %644 = vrot.lane.b32.xlu0 %v328, 96
    %v645 = vpop.permute.xlu0 %644
    %646 = vrot.lane.b32.xlu0 %v329, 96
    %v647 = vpop.permute.xlu0 %646
    %648 = vrot.lane.b32.xlu0 %v330, 96
    %v649 = vpop.permute.xlu0 %648
    %650 = vrot.lane.b32.xlu0 %v331, 96
    %v651 = vpop.permute.xlu0 %650
    %656 = vst.msk [vmem:[#allocation4 + $0xc] sm:$0xf] %vm514, %v645
    %657 = vst.msk [vmem:[#allocation4 + $0x14] sm:$0xf] %vm514, %v647
    %658 = vst.msk [vmem:[#allocation4 + $0x1c] sm:$0xf] %vm514, %v649
    %659 = vst.msk [vmem:[#allocation4 + $0x24] sm:$0xf] %vm514, %v651
    %v660 = vadd.s32 %v244, 4294967281
    %661 = vset.pattern.permute.xlu0 0
    %662 = vperm.xlu0 %661, %v232
    %v663 = vpop.permute.xlu0 %662
    %664 = vset.pattern.permute.xlu0 0
    %665 = vperm.xlu0 %664, %v233
    %v666 = vpop.permute.xlu0 %665
    %667 = vset.pattern.permute.xlu0 0
    %668 = vperm.xlu0 %667, %v234
    %v669 = vpop.permute.xlu0 %668
    %670 = vset.pattern.permute.xlu0 0
    %671 = vperm.xlu0 %670, %v235
    %v672 = vpop.permute.xlu0 %671
    %v673 = vlaneseq
    %v674 = vshrl.u32 %v673, 7
    %v675 = vsub.s32 0, %v674
    %v676 = vrot.slane %v660, %v675
    %v677 = vlaneseq
    %v678 = vshrl.u32 %v677, 7
    %v679 = vsub.s32 1, %v678
    %v680 = vrot.slane %v660, %v679
    %v681 = vadd.s32 %v663, %v676
    %v682 = vadd.s32 %v663, %v680
    %v683 = vadd.s32 %v666, %v676
    %v684 = vadd.s32 %v666, %v680
    %v685 = vadd.s32 %v669, %v676
    %v686 = vadd.s32 %v669, %v680
    %v687 = vadd.s32 %v672, %v676
    %v688 = vadd.s32 %v672, %v680
    %vm689 = vcmp.ge.s32.totalorder %v681, 0
    %vm690 = vcmp.ge.s32.totalorder %v682, 0
    %vm691 = vcmp.ge.s32.totalorder %v683, 0
    %vm692 = vcmp.ge.s32.totalorder %v684, 0
    %vm693 = vcmp.ge.s32.totalorder %v685, 0
    %vm694 = vcmp.ge.s32.totalorder %v686, 0
    %vm695 = vcmp.ge.s32.totalorder %v687, 0
    %vm696 = vcmp.ge.s32.totalorder %v688, 0
    %vm697 = vcmp.lt.s32.totalorder %v681, 16
    %vm698 = vcmp.lt.s32.totalorder %v682, 16
    %vm699 = vcmp.lt.s32.totalorder %v683, 16
    %vm700 = vcmp.lt.s32.totalorder %v684, 16
    %vm701 = vcmp.lt.s32.totalorder %v685, 16
    %vm702 = vcmp.lt.s32.totalorder %v686, 16
    %vm703 = vcmp.lt.s32.totalorder %v687, 16
    %vm704 = vcmp.lt.s32.totalorder %v688, 16
    %vm705 = vmand %vm689, %vm697
    %vm706 = vmand %vm690, %vm698
    %vm707 = vmand %vm691, %vm699
    %vm708 = vmand %vm692, %vm700
    %vm709 = vmand %vm693, %vm701
    %vm710 = vmand %vm694, %vm702
    %vm711 = vmand %vm695, %vm703
    %vm712 = vmand %vm696, %vm704
    %v713 = vld [vmem:[#allocation4] sm:$0xff]
    %v714 = vld [vmem:[#allocation4 + $0x8] sm:$0xff]
    %v715 = vld [vmem:[#allocation4 + $0x10] sm:$0xff]
    %v716 = vld [vmem:[#allocation4 + $0x18] sm:$0xff]
    %vm717 = vmpackc.low %vm706, %vm705
    %vm718 = vmpackc.low %vm708, %vm707
    %vm719 = vmpackc.low %vm710, %vm709
    %vm720 = vmpackc.low %vm712, %vm711
    %v721 = vsel %vm717, %v713, 0
    %v722 = vsel %vm718, %v714, 0
    %v723 = vsel %vm719, %v715, 0
    %v724 = vsel %vm720, %v716, 0
    %v725 = vld [vmem:[%s9] sm:$0xf]
    %v726 = vld [vmem:[%s9 + $0x4] sm:$0xf]
    %v727 = vld [vmem:[%s9 + $0x8] sm:$0xf]
    %v728 = vld [vmem:[%s9 + $0xc] sm:$0xf]
    %v729 = vld [vmem:[%s9 + $0x10] sm:$0xf]
    %v730 = vld [vmem:[%s9 + $0x14] sm:$0xf]
    %v731 = vld [vmem:[%s9 + $0x18] sm:$0xf]
    %v732 = vld [vmem:[%s9 + $0x1c] sm:$0xf]
    %v733 = vld [vmem:[%s9 + $0x20] sm:$0xf]
    %v734 = vld [vmem:[%s9 + $0x24] sm:$0xf]
    %v735 = vld [vmem:[%s9 + $0x28] sm:$0xf]
    %v736 = vld [vmem:[%s9 + $0x2c] sm:$0xf]
    %v737 = vld [vmem:[%s9 + $0x30] sm:$0xf]
    %v738 = vld [vmem:[%s9 + $0x34] sm:$0xf]
    %v739 = vld [vmem:[%s9 + $0x38] sm:$0xf]
    %v740 = vld [vmem:[%s9 + $0x3c] sm:$0xf]
    %v741 = vld [vmem:[%s9 + $0x40] sm:$0xf]
    %v742 = vld [vmem:[%s9 + $0x44] sm:$0xf]
    %v743 = vld [vmem:[%s9 + $0x48] sm:$0xf]
    %v744 = vld [vmem:[%s9 + $0x4c] sm:$0xf]
    %v745 = vld [vmem:[%s9 + $0x50] sm:$0xf]
    %v746 = vld [vmem:[%s9 + $0x54] sm:$0xf]
    %v747 = vld [vmem:[%s9 + $0x58] sm:$0xf]
    %v748 = vld [vmem:[%s9 + $0x5c] sm:$0xf]
    %v749 = vld [vmem:[%s9 + $0x60] sm:$0xf]
    %v750 = vld [vmem:[%s9 + $0x64] sm:$0xf]
    %v751 = vld [vmem:[%s9 + $0x68] sm:$0xf]
    %v752 = vld [vmem:[%s9 + $0x6c] sm:$0xf]
    %v753 = vld [vmem:[%s9 + $0x70] sm:$0xf]
    %v754 = vld [vmem:[%s9 + $0x74] sm:$0xf]
    %v755 = vld [vmem:[%s9 + $0x78] sm:$0xf]
    %v756 = vld [vmem:[%s9 + $0x7c] sm:$0xf]
    %v757 = vadd.s32 %v244, 4294967289
    %v758 = vlaneseq
    %v759 = vshrl.u32 %v758, 7
    %v760 = vsub.s32 0, %v759
    %v761 = vrot.slane %v757, %v760
    %v762 = vlaneseq
    %v763 = vshrl.u32 %v762, 7
    %v764 = vsub.s32 1, %v763
    %v765 = vrot.slane %v757, %v764
    %v766 = vadd.s32 %v663, %v761
    %v767 = vadd.s32 %v663, %v765
    %v768 = vadd.s32 %v666, %v761
    %v769 = vadd.s32 %v666, %v765
    %v770 = vadd.s32 %v669, %v761
    %v771 = vadd.s32 %v669, %v765
    %v772 = vadd.s32 %v672, %v761
    %v773 = vadd.s32 %v672, %v765
    %vm774 = vcmp.ge.s32.totalorder %v766, 0
    %vm775 = vcmp.ge.s32.totalorder %v767, 0
    %vm776 = vcmp.ge.s32.totalorder %v768, 0
    %vm777 = vcmp.ge.s32.totalorder %v769, 0
    %vm778 = vcmp.ge.s32.totalorder %v770, 0
    %vm779 = vcmp.ge.s32.totalorder %v771, 0
    %vm780 = vcmp.ge.s32.totalorder %v772, 0
    %vm781 = vcmp.ge.s32.totalorder %v773, 0
    %vm782 = vcmp.lt.s32.totalorder %v766, 16
    %vm783 = vcmp.lt.s32.totalorder %v767, 16
    %vm784 = vcmp.lt.s32.totalorder %v768, 16
    %vm785 = vcmp.lt.s32.totalorder %v769, 16
    %vm786 = vcmp.lt.s32.totalorder %v770, 16
    %vm787 = vcmp.lt.s32.totalorder %v771, 16
    %vm788 = vcmp.lt.s32.totalorder %v772, 16
    %vm789 = vcmp.lt.s32.totalorder %v773, 16
    %vm790 = vmand %vm774, %vm782
    %vm791 = vmand %vm775, %vm783
    %vm792 = vmand %vm776, %vm784
    %vm793 = vmand %vm777, %vm785
    %vm794 = vmand %vm778, %vm786
    %vm795 = vmand %vm779, %vm787
    %vm796 = vmand %vm780, %vm788
    %vm797 = vmand %vm781, %vm789
    %v798 = vld [vmem:[#allocation4 + $0x20] sm:$0xff]
    %vm799 = vmpackc.low %vm791, %vm790
    %vm800 = vmpackc.low %vm793, %vm792
    %vm801 = vmpackc.low %vm795, %vm794
    %vm802 = vmpackc.low %vm797, %vm796
    %v803 = vsel %vm799, %v714, 0
    %v804 = vsel %vm800, %v715, 0
    %v805 = vsel %vm801, %v716, 0
    %v806 = vsel %vm802, %v798, 0
    %s807 = scalar_lea.vmem %s9, 128
    %v808 = vld [vmem:[%s807] sm:$0xf]
    %v809 = vld [vmem:[%s807 + $0x4] sm:$0xf]
    %v810 = vld [vmem:[%s807 + $0x8] sm:$0xf]
    %v811 = vld [vmem:[%s807 + $0xc] sm:$0xf]
    %v812 = vld [vmem:[%s807 + $0x10] sm:$0xf]
    %v813 = vld [vmem:[%s807 + $0x14] sm:$0xf]
    %v814 = vld [vmem:[%s807 + $0x18] sm:$0xf]
    %v815 = vld [vmem:[%s807 + $0x1c] sm:$0xf]
    %v816 = vld [vmem:[%s807 + $0x20] sm:$0xf]
    %v817 = vld [vmem:[%s807 + $0x24] sm:$0xf]
    %v818 = vld [vmem:[%s807 + $0x28] sm:$0xf]
    %v819 = vld [vmem:[%s807 + $0x2c] sm:$0xf]
    %v820 = vld [vmem:[%s807 + $0x30] sm:$0xf]
    %v821 = vld [vmem:[%s807 + $0x34] sm:$0xf]
    %v822 = vld [vmem:[%s807 + $0x38] sm:$0xf]
    %v823 = vld [vmem:[%s807 + $0x3c] sm:$0xf]
    %v824 = vld [vmem:[%s807 + $0x40] sm:$0xf]
    %v825 = vld [vmem:[%s807 + $0x44] sm:$0xf]
    %v826 = vld [vmem:[%s807 + $0x48] sm:$0xf]
    %v827 = vld [vmem:[%s807 + $0x4c] sm:$0xf]
    %v828 = vld [vmem:[%s807 + $0x50] sm:$0xf]
    %v829 = vld [vmem:[%s807 + $0x54] sm:$0xf]
    %v830 = vld [vmem:[%s807 + $0x58] sm:$0xf]
    %v831 = vld [vmem:[%s807 + $0x5c] sm:$0xf]
    %v832 = vld [vmem:[%s807 + $0x60] sm:$0xf]
    %v833 = vld [vmem:[%s807 + $0x64] sm:$0xf]
    %v834 = vld [vmem:[%s807 + $0x68] sm:$0xf]
    %v835 = vld [vmem:[%s807 + $0x6c] sm:$0xf]
    %v836 = vld [vmem:[%s807 + $0x70] sm:$0xf]
    %v837 = vld [vmem:[%s807 + $0x74] sm:$0xf]
    %v838 = vld [vmem:[%s807 + $0x78] sm:$0xf]
    %v839 = vld [vmem:[%s807 + $0x7c] sm:$0xf]
    %v844 = vunpack.c.l.b16 %v803
    %v845 = vunpack.c.h.b16 %v803
    %v846 = vunpack.c.l.b16 %v804
    %v847 = vunpack.c.h.b16 %v804
    %v848 = vunpack.c.l.b16 %v805
    %v849 = vunpack.c.h.b16 %v805
    %v850 = vunpack.c.l.b16 %v806
    %v851 = vunpack.c.h.b16 %v806
    %v852 = vpack.c.b16 %v846, %v844
    %v853 = vpack.c.b16 %v847, %v845
    %v854 = vpack.c.b16 %v850, %v848
    %v855 = vpack.c.b16 %v851, %v849
    %v892 = vunpack.c.l.b16 %v808
    %v893 = vunpack.c.l.b16 %v809
    %v894 = vunpack.c.l.b16 %v810
    %v895 = vunpack.c.l.b16 %v811
    %v896 = vunpack.c.l.b16 %v812
    %v897 = vunpack.c.l.b16 %v813
    %v898 = vunpack.c.l.b16 %v814
    %v899 = vunpack.c.l.b16 %v815
    %v900 = vunpack.c.l.b16 %v816
    %v901 = vunpack.c.l.b16 %v817
    %v902 = vunpack.c.l.b16 %v818
    %v903 = vunpack.c.l.b16 %v819
    %v904 = vunpack.c.l.b16 %v820
    %v905 = vunpack.c.l.b16 %v821
    %v906 = vunpack.c.l.b16 %v822
    %v907 = vunpack.c.l.b16 %v823
    %v908 = vunpack.c.l.b16 %v824
    %v909 = vunpack.c.l.b16 %v825
    %v910 = vunpack.c.l.b16 %v826
    %v911 = vunpack.c.l.b16 %v827
    %v912 = vunpack.c.l.b16 %v828
    %v913 = vunpack.c.l.b16 %v829
    %v914 = vunpack.c.l.b16 %v830
    %v915 = vunpack.c.l.b16 %v831
    %v916 = vunpack.c.l.b16 %v832
    %v917 = vunpack.c.l.b16 %v833
    %v918 = vunpack.c.l.b16 %v834
    %v919 = vunpack.c.l.b16 %v835
    %v920 = vunpack.c.l.b16 %v836
    %v921 = vunpack.c.l.b16 %v837
    %v922 = vunpack.c.l.b16 %v838
    %v923 = vunpack.c.l.b16 %v839
    %v924 = vpack.c.b16 %v893, %v892
    %v925 = vpack.c.b16 %v895, %v894
    %v926 = vpack.c.b16 %v897, %v896
    %v927 = vpack.c.b16 %v899, %v898
    %v928 = vpack.c.b16 %v901, %v900
    %v929 = vpack.c.b16 %v903, %v902
    %v930 = vpack.c.b16 %v905, %v904
    %v931 = vpack.c.b16 %v907, %v906
    %v932 = vpack.c.b16 %v909, %v908
    %v933 = vpack.c.b16 %v911, %v910
    %v934 = vpack.c.b16 %v913, %v912
    %v935 = vpack.c.b16 %v915, %v914
    %v936 = vpack.c.b16 %v917, %v916
    %v937 = vpack.c.b16 %v919, %v918
    %v938 = vpack.c.b16 %v921, %v920
    %v939 = vpack.c.b16 %v923, %v922
    %956 = vmatprep.subr.bf16.mxu0 0
    %957 = vmatpush1.bf16.msra.mxu0 %v931
    %958 = vmatprep.subr.bf16.mxu0 0
    %959 = vmatpush1.bf16.msra.mxu0 %v930
    %960 = vmatprep.subr.bf16.mxu0 0
    %961 = vmatpush1.bf16.msra.mxu0 %v929
    %962 = vmatprep.subr.bf16.mxu0 0
    %963 = vmatpush1.bf16.msra.mxu0 %v928
    %964 = vmatprep.subr.bf16.mxu0 0
    %965 = vmatpush1.bf16.msra.mxu0 %v927
    %966 = vmatprep.subr.bf16.mxu0 0
    %967 = vmatpush1.bf16.msra.mxu0 %v926
    %968 = vmatprep.subr.bf16.mxu0 0
    %969 = vmatpush1.bf16.msra.mxu0 %v925
    %970 = vmatprep.subr.bf16.mxu0 0
    %971 = vmatpush1.bf16.msra.mxu0 %v924
    %972 = vmatprep.subr.bf16.mxu0 0
    %973 = vmatpush2.bf16.msra.mxu0 %v939
    %974 = vmatprep.subr.bf16.mxu0 0
    %975 = vmatpush2.bf16.msra.mxu0 %v938
    %976 = vmatprep.subr.bf16.mxu0 0
    %977 = vmatpush2.bf16.msra.mxu0 %v937
    %978 = vmatprep.subr.bf16.mxu0 0
    %979 = vmatpush2.bf16.msra.mxu0 %v936
    %980 = vmatprep.subr.bf16.mxu0 0
    %981 = vmatpush2.bf16.msra.mxu0 %v935
    %982 = vmatprep.subr.bf16.mxu0 0
    %983 = vmatpush2.bf16.msra.mxu0 %v934
    %984 = vmatprep.subr.bf16.mxu0 0
    %985 = vmatpush2.bf16.msra.mxu0 %v933
    %986 = vmatprep.subr.bf16.mxu0 0
    %987 = vmatpush2.bf16.msra.mxu0 %v932
    %988 = vmatprep.mubr.bf16.mxu0 %v853
    %989 = vmatmul.mubr.bf16.gmra.mxu0 %v852
    %v990 = vpop.f32.mrf.mxu0
    %v991 = vadd.f32 0.0, %v990
    %v992 = vpop.f32.mrf.mxu0
    %v993 = vpop.f32.mrf.mxu0
    %v994 = vadd.f32 0.0, %v993
    %v995 = vpop.f32.mrf.mxu0
    %996 = vmatprep.mubr.bf16.mxu0 %v855
    %997 = vmatmul.mubr.bf16.gmra.mxu0 %v854
    %v998 = vpop.f32.mrf.mxu0
    %v999 = vadd.f32 0.0, %v998
    %v1000 = vpop.f32.mrf.mxu0
    %v1001 = vpop.f32.mrf.mxu0
    %v1002 = vadd.f32 0.0, %v1001
    %v1003 = vpop.f32.mrf.mxu0
    %1004 = vdwg.mxu0
    %v1009 = vunpack.c.l.b16 %v721
    %v1010 = vunpack.c.h.b16 %v721
    %v1011 = vunpack.c.l.b16 %v722
    %v1012 = vunpack.c.h.b16 %v722
    %v1013 = vunpack.c.l.b16 %v723
    %v1014 = vunpack.c.h.b16 %v723
    %v1015 = vunpack.c.l.b16 %v724
    %v1016 = vunpack.c.h.b16 %v724
    %v1017 = vpack.c.b16 %v1011, %v1009
    %v1018 = vpack.c.b16 %v1012, %v1010
    %v1019 = vpack.c.b16 %v1015, %v1013
    %v1020 = vpack.c.b16 %v1016, %v1014
    %v1057 = vunpack.c.l.b16 %v725
    %v1058 = vunpack.c.l.b16 %v726
    %v1059 = vunpack.c.l.b16 %v727
    %v1060 = vunpack.c.l.b16 %v728
    %v1061 = vunpack.c.l.b16 %v729
    %v1062 = vunpack.c.l.b16 %v730
    %v1063 = vunpack.c.l.b16 %v731
    %v1064 = vunpack.c.l.b16 %v732
    %v1065 = vunpack.c.l.b16 %v733
    %v1066 = vunpack.c.l.b16 %v734
    %v1067 = vunpack.c.l.b16 %v735
    %v1068 = vunpack.c.l.b16 %v736
    %v1069 = vunpack.c.l.b16 %v737
    %v1070 = vunpack.c.l.b16 %v738
    %v1071 = vunpack.c.l.b16 %v739
    %v1072 = vunpack.c.l.b16 %v740
    %v1073 = vunpack.c.l.b16 %v741
    %v1074 = vunpack.c.l.b16 %v742
    %v1075 = vunpack.c.l.b16 %v743
    %v1076 = vunpack.c.l.b16 %v744
    %v1077 = vunpack.c.l.b16 %v745
    %v1078 = vunpack.c.l.b16 %v746
    %v1079 = vunpack.c.l.b16 %v747
    %v1080 = vunpack.c.l.b16 %v748
    %v1081 = vunpack.c.l.b16 %v749
    %v1082 = vunpack.c.l.b16 %v750
    %v1083 = vunpack.c.l.b16 %v751
    %v1084 = vunpack.c.l.b16 %v752
    %v1085 = vunpack.c.l.b16 %v753
    %v1086 = vunpack.c.l.b16 %v754
    %v1087 = vunpack.c.l.b16 %v755
    %v1088 = vunpack.c.l.b16 %v756
    %v1089 = vpack.c.b16 %v1058, %v1057
    %v1090 = vpack.c.b16 %v1060, %v1059
    %v1091 = vpack.c.b16 %v1062, %v1061
    %v1092 = vpack.c.b16 %v1064, %v1063
    %v1093 = vpack.c.b16 %v1066, %v1065
    %v1094 = vpack.c.b16 %v1068, %v1067
    %v1095 = vpack.c.b16 %v1070, %v1069
    %v1096 = vpack.c.b16 %v1072, %v1071
    %v1097 = vpack.c.b16 %v1074, %v1073
    %v1098 = vpack.c.b16 %v1076, %v1075
    %v1099 = vpack.c.b16 %v1078, %v1077
    %v1100 = vpack.c.b16 %v1080, %v1079
    %v1101 = vpack.c.b16 %v1082, %v1081
    %v1102 = vpack.c.b16 %v1084, %v1083
    %v1103 = vpack.c.b16 %v1086, %v1085
    %v1104 = vpack.c.b16 %v1088, %v1087
    %1121 = vmatprep.subr.bf16.mxu0 0
    %1122 = vmatpush1.bf16.msra.mxu0 %v1096
    %1123 = vmatprep.subr.bf16.mxu0 0
    %1124 = vmatpush1.bf16.msra.mxu0 %v1095
    %1125 = vmatprep.subr.bf16.mxu0 0
    %1126 = vmatpush1.bf16.msra.mxu0 %v1094
    %1127 = vmatprep.subr.bf16.mxu0 0
    %1128 = vmatpush1.bf16.msra.mxu0 %v1093
    %1129 = vmatprep.subr.bf16.mxu0 0
    %1130 = vmatpush1.bf16.msra.mxu0 %v1092
    %1131 = vmatprep.subr.bf16.mxu0 0
    %1132 = vmatpush1.bf16.msra.mxu0 %v1091
    %1133 = vmatprep.subr.bf16.mxu0 0
    %1134 = vmatpush1.bf16.msra.mxu0 %v1090
    %1135 = vmatprep.subr.bf16.mxu0 0
    %1136 = vmatpush1.bf16.msra.mxu0 %v1089
    %1137 = vmatprep.subr.bf16.mxu0 0
    %1138 = vmatpush2.bf16.msra.mxu0 %v1104
    %1139 = vmatprep.subr.bf16.mxu0 0
    %1140 = vmatpush2.bf16.msra.mxu0 %v1103
    %1141 = vmatprep.subr.bf16.mxu0 0
    %1142 = vmatpush2.bf16.msra.mxu0 %v1102
    %1143 = vmatprep.subr.bf16.mxu0 0
    %1144 = vmatpush2.bf16.msra.mxu0 %v1101
    %1145 = vmatprep.subr.bf16.mxu0 0
    %1146 = vmatpush2.bf16.msra.mxu0 %v1100
    %1147 = vmatprep.subr.bf16.mxu0 0
    %1148 = vmatpush2.bf16.msra.mxu0 %v1099
    %1149 = vmatprep.subr.bf16.mxu0 0
    %1150 = vmatpush2.bf16.msra.mxu0 %v1098
    %1151 = vmatprep.subr.bf16.mxu0 0
    %1152 = vmatpush2.bf16.msra.mxu0 %v1097
    %1153 = vmatprep.mubr.bf16.mxu0 %v1018
    %1154 = vmatmul.mubr.bf16.gmra.mxu0 %v1017
    %v1155 = vpop.f32.mrf.mxu0
    %v1156 = vadd.f32 %v991, %v1155
    %v1157 = vpop.f32.mrf.mxu0
    %v1158 = vpop.f32.mrf.mxu0
    %v1159 = vadd.f32 %v994, %v1158
    %v1160 = vpop.f32.mrf.mxu0
    %1161 = vmatprep.mubr.bf16.mxu0 %v1020
    %1162 = vmatmul.mubr.bf16.gmra.mxu0 %v1019
    %v1163 = vpop.f32.mrf.mxu0
    %v1164 = vadd.f32 %v999, %v1163
    %v1165 = vpop.f32.mrf.mxu0
    %v1166 = vpop.f32.mrf.mxu0
    %v1167 = vadd.f32 %v1002, %v1166
    %v1168 = vpop.f32.mrf.mxu0
    %1169 = vdwg.mxu0
    %v1170 = vadd.s32 %v244, 1
    %v1171 = vlaneseq
    %v1172 = vshrl.u32 %v1171, 7
    %v1173 = vsub.s32 0, %v1172
    %v1174 = vrot.slane %v1170, %v1173
    %v1175 = vlaneseq
    %v1176 = vshrl.u32 %v1175, 7
    %v1177 = vsub.s32 1, %v1176
    %v1178 = vrot.slane %v1170, %v1177
    %v1179 = vadd.s32 %v663, %v1174
    %v1180 = vadd.s32 %v663, %v1178
    %v1181 = vadd.s32 %v666, %v1174
    %v1182 = vadd.s32 %v666, %v1178
    %v1183 = vadd.s32 %v669, %v1174
    %v1184 = vadd.s32 %v669, %v1178
    %v1185 = vadd.s32 %v672, %v1174
    %v1186 = vadd.s32 %v672, %v1178
    %vm1187 = vcmp.ge.s32.totalorder %v1179, 0
    %vm1188 = vcmp.ge.s32.totalorder %v1180, 0
    %vm1189 = vcmp.ge.s32.totalorder %v1181, 0
    %vm1190 = vcmp.ge.s32.totalorder %v1182, 0
    %vm1191 = vcmp.ge.s32.totalorder %v1183, 0
    %vm1192 = vcmp.ge.s32.totalorder %v1184, 0
    %vm1193 = vcmp.ge.s32.totalorder %v1185, 0
    %vm1194 = vcmp.ge.s32.totalorder %v1186, 0
    %vm1195 = vcmp.lt.s32.totalorder %v1179, 16
    %vm1196 = vcmp.lt.s32.totalorder %v1180, 16
    %vm1197 = vcmp.lt.s32.totalorder %v1181, 16
    %vm1198 = vcmp.lt.s32.totalorder %v1182, 16
    %vm1199 = vcmp.lt.s32.totalorder %v1183, 16
    %vm1200 = vcmp.lt.s32.totalorder %v1184, 16
    %vm1201 = vcmp.lt.s32.totalorder %v1185, 16
    %vm1202 = vcmp.lt.s32.totalorder %v1186, 16
    %vm1203 = vmand %vm1187, %vm1195
    %vm1204 = vmand %vm1188, %vm1196
    %vm1205 = vmand %vm1189, %vm1197
    %vm1206 = vmand %vm1190, %vm1198
    %vm1207 = vmand %vm1191, %vm1199
    %vm1208 = vmand %vm1192, %vm1200
    %vm1209 = vmand %vm1193, %vm1201
    %vm1210 = vmand %vm1194, %vm1202
    %v1211 = vld [vmem:[#allocation4 + $0x10] sm:$0xff]
    %v1212 = vld [vmem:[#allocation4 + $0x18] sm:$0xff]
    %v1213 = vld [vmem:[#allocation4 + $0x20] sm:$0xff]
    %v1214 = vld [vmem:[#allocation4 + $0x28] sm:$0xff]
    %vm1215 = vmpackc.low %vm1204, %vm1203
    %vm1216 = vmpackc.low %vm1206, %vm1205
    %vm1217 = vmpackc.low %vm1208, %vm1207
    %vm1218 = vmpackc.low %vm1210, %vm1209
    %v1219 = vsel %vm1215, %v1211, 0
    %v1220 = vsel %vm1216, %v1212, 0
    %v1221 = vsel %vm1217, %v1213, 0
    %v1222 = vsel %vm1218, %v1214, 0
    %s1223 = scalar_lea.vmem %s9, 256
    %v1224 = vld [vmem:[%s1223] sm:$0xf]
    %v1225 = vld [vmem:[%s1223 + $0x4] sm:$0xf]
    %v1226 = vld [vmem:[%s1223 + $0x8] sm:$0xf]
    %v1227 = vld [vmem:[%s1223 + $0xc] sm:$0xf]
    %v1228 = vld [vmem:[%s1223 + $0x10] sm:$0xf]
    %v1229 = vld [vmem:[%s1223 + $0x14] sm:$0xf]
    %v1230 = vld [vmem:[%s1223 + $0x18] sm:$0xf]
    %v1231 = vld [vmem:[%s1223 + $0x1c] sm:$0xf]
    %v1232 = vld [vmem:[%s1223 + $0x20] sm:$0xf]
    %v1233 = vld [vmem:[%s1223 + $0x24] sm:$0xf]
    %v1234 = vld [vmem:[%s1223 + $0x28] sm:$0xf]
    %v1235 = vld [vmem:[%s1223 + $0x2c] sm:$0xf]
    %v1236 = vld [vmem:[%s1223 + $0x30] sm:$0xf]
    %v1237 = vld [vmem:[%s1223 + $0x34] sm:$0xf]
    %v1238 = vld [vmem:[%s1223 + $0x38] sm:$0xf]
    %v1239 = vld [vmem:[%s1223 + $0x3c] sm:$0xf]
    %v1240 = vld [vmem:[%s1223 + $0x40] sm:$0xf]
    %v1241 = vld [vmem:[%s1223 + $0x44] sm:$0xf]
    %v1242 = vld [vmem:[%s1223 + $0x48] sm:$0xf]
    %v1243 = vld [vmem:[%s1223 + $0x4c] sm:$0xf]
    %v1244 = vld [vmem:[%s1223 + $0x50] sm:$0xf]
    %v1245 = vld [vmem:[%s1223 + $0x54] sm:$0xf]
    %v1246 = vld [vmem:[%s1223 + $0x58] sm:$0xf]
    %v1247 = vld [vmem:[%s1223 + $0x5c] sm:$0xf]
    %v1248 = vld [vmem:[%s1223 + $0x60] sm:$0xf]
    %v1249 = vld [vmem:[%s1223 + $0x64] sm:$0xf]
    %v1250 = vld [vmem:[%s1223 + $0x68] sm:$0xf]
    %v1251 = vld [vmem:[%s1223 + $0x6c] sm:$0xf]
    %v1252 = vld [vmem:[%s1223 + $0x70] sm:$0xf]
    %v1253 = vld [vmem:[%s1223 + $0x74] sm:$0xf]
    %v1254 = vld [vmem:[%s1223 + $0x78] sm:$0xf]
    %v1255 = vld [vmem:[%s1223 + $0x7c] sm:$0xf]
    %v1260 = vunpack.c.l.b16 %v1219
    %v1261 = vunpack.c.h.b16 %v1219
    %v1262 = vunpack.c.l.b16 %v1220
    %v1263 = vunpack.c.h.b16 %v1220
    %v1264 = vunpack.c.l.b16 %v1221
    %v1265 = vunpack.c.h.b16 %v1221
    %v1266 = vunpack.c.l.b16 %v1222
    %v1267 = vunpack.c.h.b16 %v1222
    %v1268 = vpack.c.b16 %v1262, %v1260
    %v1269 = vpack.c.b16 %v1263, %v1261
    %v1270 = vpack.c.b16 %v1266, %v1264
    %v1271 = vpack.c.b16 %v1267, %v1265
    %v1308 = vunpack.c.l.b16 %v1224
    %v1309 = vunpack.c.l.b16 %v1225
    %v1310 = vunpack.c.l.b16 %v1226
    %v1311 = vunpack.c.l.b16 %v1227
    %v1312 = vunpack.c.l.b16 %v1228
    %v1313 = vunpack.c.l.b16 %v1229
    %v1314 = vunpack.c.l.b16 %v1230
    %v1315 = vunpack.c.l.b16 %v1231
    %v1316 = vunpack.c.l.b16 %v1232
    %v1317 = vunpack.c.l.b16 %v1233
    %v1318 = vunpack.c.l.b16 %v1234
    %v1319 = vunpack.c.l.b16 %v1235
    %v1320 = vunpack.c.l.b16 %v1236
    %v1321 = vunpack.c.l.b16 %v1237
    %v1322 = vunpack.c.l.b16 %v1238
    %v1323 = vunpack.c.l.b16 %v1239
    %v1324 = vunpack.c.l.b16 %v1240
    %v1325 = vunpack.c.l.b16 %v1241
    %v1326 = vunpack.c.l.b16 %v1242
    %v1327 = vunpack.c.l.b16 %v1243
    %v1328 = vunpack.c.l.b16 %v1244
    %v1329 = vunpack.c.l.b16 %v1245
    %v1330 = vunpack.c.l.b16 %v1246
    %v1331 = vunpack.c.l.b16 %v1247
    %v1332 = vunpack.c.l.b16 %v1248
    %v1333 = vunpack.c.l.b16 %v1249
    %v1334 = vunpack.c.l.b16 %v1250
    %v1335 = vunpack.c.l.b16 %v1251
    %v1336 = vunpack.c.l.b16 %v1252
    %v1337 = vunpack.c.l.b16 %v1253
    %v1338 = vunpack.c.l.b16 %v1254
    %v1339 = vunpack.c.l.b16 %v1255
    %v1340 = vpack.c.b16 %v1309, %v1308
    %v1341 = vpack.c.b16 %v1311, %v1310
    %v1342 = vpack.c.b16 %v1313, %v1312
    %v1343 = vpack.c.b16 %v1315, %v1314
    %v1344 = vpack.c.b16 %v1317, %v1316
    %v1345 = vpack.c.b16 %v1319, %v1318
    %v1346 = vpack.c.b16 %v1321, %v1320
    %v1347 = vpack.c.b16 %v1323, %v1322
    %v1348 = vpack.c.b16 %v1325, %v1324
    %v1349 = vpack.c.b16 %v1327, %v1326
    %v1350 = vpack.c.b16 %v1329, %v1328
    %v1351 = vpack.c.b16 %v1331, %v1330
    %v1352 = vpack.c.b16 %v1333, %v1332
    %v1353 = vpack.c.b16 %v1335, %v1334
    %v1354 = vpack.c.b16 %v1337, %v1336
    %v1355 = vpack.c.b16 %v1339, %v1338
    %1372 = vmatprep.subr.bf16.mxu0 0
    %1373 = vmatpush1.bf16.msra.mxu0 %v1347
    %1374 = vmatprep.subr.bf16.mxu0 0
    %1375 = vmatpush1.bf16.msra.mxu0 %v1346
    %1376 = vmatprep.subr.bf16.mxu0 0
    %1377 = vmatpush1.bf16.msra.mxu0 %v1345
    %1378 = vmatprep.subr.bf16.mxu0 0
    %1379 = vmatpush1.bf16.msra.mxu0 %v1344
    %1380 = vmatprep.subr.bf16.mxu0 0
    %1381 = vmatpush1.bf16.msra.mxu0 %v1343
    %1382 = vmatprep.subr.bf16.mxu0 0
    %1383 = vmatpush1.bf16.msra.mxu0 %v1342
    %1384 = vmatprep.subr.bf16.mxu0 0
    %1385 = vmatpush1.bf16.msra.mxu0 %v1341
    %1386 = vmatprep.subr.bf16.mxu0 0
    %1387 = vmatpush1.bf16.msra.mxu0 %v1340
    %1388 = vmatprep.subr.bf16.mxu0 0
    %1389 = vmatpush2.bf16.msra.mxu0 %v1355
    %1390 = vmatprep.subr.bf16.mxu0 0
    %1391 = vmatpush2.bf16.msra.mxu0 %v1354
    %1392 = vmatprep.subr.bf16.mxu0 0
    %1393 = vmatpush2.bf16.msra.mxu0 %v1353
    %1394 = vmatprep.subr.bf16.mxu0 0
    %1395 = vmatpush2.bf16.msra.mxu0 %v1352
    %1396 = vmatprep.subr.bf16.mxu0 0
    %1397 = vmatpush2.bf16.msra.mxu0 %v1351
    %1398 = vmatprep.subr.bf16.mxu0 0
    %1399 = vmatpush2.bf16.msra.mxu0 %v1350
    %1400 = vmatprep.subr.bf16.mxu0 0
    %1401 = vmatpush2.bf16.msra.mxu0 %v1349
    %1402 = vmatprep.subr.bf16.mxu0 0
    %1403 = vmatpush2.bf16.msra.mxu0 %v1348
    %1404 = vmatprep.mubr.bf16.mxu0 %v1269
    %1405 = vmatmul.mubr.bf16.gmra.mxu0 %v1268
    %v1406 = vpop.f32.mrf.mxu0
    %v1407 = vadd.f32 0.0, %v1406
    %v1408 = vpop.f32.mrf.mxu0
    %v1409 = vpop.f32.mrf.mxu0
    %v1410 = vadd.f32 0.0, %v1409
    %v1411 = vpop.f32.mrf.mxu0
    %1412 = vmatprep.mubr.bf16.mxu0 %v1271
    %1413 = vmatmul.mubr.bf16.gmra.mxu0 %v1270
    %v1414 = vpop.f32.mrf.mxu0
    %v1415 = vadd.f32 0.0, %v1414
    %v1416 = vpop.f32.mrf.mxu0
    %v1417 = vpop.f32.mrf.mxu0
    %v1418 = vadd.f32 0.0, %v1417
    %v1419 = vpop.f32.mrf.mxu0
    %1420 = vdwg.mxu0
    %v1421 = vadd.f32 %v1156, %v1407
    %v1422 = vadd.f32 %v1159, %v1410
    %v1423 = vadd.f32 %v1164, %v1415
    %v1424 = vadd.f32 %v1167, %v1418
    %v1425 = vadd.s32 %v244, 9
    %v1426 = vlaneseq
    %v1427 = vshrl.u32 %v1426, 7
    %v1428 = vsub.s32 0, %v1427
    %v1429 = vrot.slane %v1425, %v1428
    %v1430 = vlaneseq
    %v1431 = vshrl.u32 %v1430, 7
    %v1432 = vsub.s32 1, %v1431
    %v1433 = vrot.slane %v1425, %v1432
    %v1434 = vadd.s32 %v663, %v1429
    %v1435 = vadd.s32 %v663, %v1433
    %v1436 = vadd.s32 %v666, %v1429
    %v1437 = vadd.s32 %v666, %v1433
    %v1438 = vadd.s32 %v669, %v1429
    %v1439 = vadd.s32 %v669, %v1433
    %v1440 = vadd.s32 %v672, %v1429
    %v1441 = vadd.s32 %v672, %v1433
    %vm1442 = vcmp.ge.s32.totalorder %v1434, 0
    %vm1443 = vcmp.ge.s32.totalorder %v1435, 0
    %vm1444 = vcmp.ge.s32.totalorder %v1436, 0
    %vm1445 = vcmp.ge.s32.totalorder %v1437, 0
    %vm1446 = vcmp.ge.s32.totalorder %v1438, 0
    %vm1447 = vcmp.ge.s32.totalorder %v1439, 0
    %vm1448 = vcmp.ge.s32.totalorder %v1440, 0
    %vm1449 = vcmp.ge.s32.totalorder %v1441, 0
    %vm1450 = vcmp.lt.s32.totalorder %v1434, 16
    %vm1451 = vcmp.lt.s32.totalorder %v1435, 16
    %vm1452 = vcmp.lt.s32.totalorder %v1436, 16
    %vm1453 = vcmp.lt.s32.totalorder %v1437, 16
    %vm1454 = vcmp.lt.s32.totalorder %v1438, 16
    %vm1455 = vcmp.lt.s32.totalorder %v1439, 16
    %vm1456 = vcmp.lt.s32.totalorder %v1440, 16
    %vm1457 = vcmp.lt.s32.totalorder %v1441, 16
    %vm1458 = vmand %vm1442, %vm1450
    %vm1459 = vmand %vm1443, %vm1451
    %vm1460 = vmand %vm1444, %vm1452
    %vm1461 = vmand %vm1445, %vm1453
    %vm1462 = vmand %vm1446, %vm1454
    %vm1463 = vmand %vm1447, %vm1455
    %vm1464 = vmand %vm1448, %vm1456
    %vm1465 = vmand %vm1449, %vm1457
    %v1466 = vld [vmem:[#allocation4 + $0x18] sm:$0xff]
    %v1467 = vld [vmem:[#allocation4 + $0x20] sm:$0xff]
    %v1468 = vld [vmem:[#allocation4 + $0x28] sm:$0xff]
    %v1469 = vld [vmem:[#allocation4 + $0x30] sm:$0xff]
    %vm1470 = vmpackc.low %vm1459, %vm1458
    %vm1471 = vmpackc.low %vm1461, %vm1460
    %vm1472 = vmpackc.low %vm1463, %vm1462
    %vm1473 = vmpackc.low %vm1465, %vm1464
    %v1474 = vsel %vm1470, %v1466, 0
    %v1475 = vsel %vm1471, %v1467, 0
    %v1476 = vsel %vm1472, %v1468, 0
    %v1477 = vsel %vm1473, %v1469, 0
    %s1478 = scalar_lea.vmem %s9, 384
    %v1479 = vld [vmem:[%s1478] sm:$0xf]
    %v1480 = vld [vmem:[%s1478 + $0x4] sm:$0xf]
    %v1481 = vld [vmem:[%s1478 + $0x8] sm:$0xf]
    %v1482 = vld [vmem:[%s1478 + $0xc] sm:$0xf]
    %v1483 = vld [vmem:[%s1478 + $0x10] sm:$0xf]
    %v1484 = vld [vmem:[%s1478 + $0x14] sm:$0xf]
    %v1485 = vld [vmem:[%s1478 + $0x18] sm:$0xf]
    %v1486 = vld [vmem:[%s1478 + $0x1c] sm:$0xf]
    %v1487 = vld [vmem:[%s1478 + $0x20] sm:$0xf]
    %v1488 = vld [vmem:[%s1478 + $0x24] sm:$0xf]
    %v1489 = vld [vmem:[%s1478 + $0x28] sm:$0xf]
    %v1490 = vld [vmem:[%s1478 + $0x2c] sm:$0xf]
    %v1491 = vld [vmem:[%s1478 + $0x30] sm:$0xf]
    %v1492 = vld [vmem:[%s1478 + $0x34] sm:$0xf]
    %v1493 = vld [vmem:[%s1478 + $0x38] sm:$0xf]
    %v1494 = vld [vmem:[%s1478 + $0x3c] sm:$0xf]
    %v1495 = vld [vmem:[%s1478 + $0x40] sm:$0xf]
    %v1496 = vld [vmem:[%s1478 + $0x44] sm:$0xf]
    %v1497 = vld [vmem:[%s1478 + $0x48] sm:$0xf]
    %v1498 = vld [vmem:[%s1478 + $0x4c] sm:$0xf]
    %v1499 = vld [vmem:[%s1478 + $0x50] sm:$0xf]
    %v1500 = vld [vmem:[%s1478 + $0x54] sm:$0xf]
    %v1501 = vld [vmem:[%s1478 + $0x58] sm:$0xf]
    %v1502 = vld [vmem:[%s1478 + $0x5c] sm:$0xf]
    %v1503 = vld [vmem:[%s1478 + $0x60] sm:$0xf]
    %v1504 = vld [vmem:[%s1478 + $0x64] sm:$0xf]
    %v1505 = vld [vmem:[%s1478 + $0x68] sm:$0xf]
    %v1506 = vld [vmem:[%s1478 + $0x6c] sm:$0xf]
    %v1507 = vld [vmem:[%s1478 + $0x70] sm:$0xf]
    %v1508 = vld [vmem:[%s1478 + $0x74] sm:$0xf]
    %v1509 = vld [vmem:[%s1478 + $0x78] sm:$0xf]
    %v1510 = vld [vmem:[%s1478 + $0x7c] sm:$0xf]
    %v1515 = vunpack.c.l.b16 %v1474
    %v1516 = vunpack.c.h.b16 %v1474
    %v1517 = vunpack.c.l.b16 %v1475
    %v1518 = vunpack.c.h.b16 %v1475
    %v1519 = vunpack.c.l.b16 %v1476
    %v1520 = vunpack.c.h.b16 %v1476
    %v1521 = vunpack.c.l.b16 %v1477
    %v1522 = vunpack.c.h.b16 %v1477
    %v1523 = vpack.c.b16 %v1517, %v1515
    %v1524 = vpack.c.b16 %v1518, %v1516
    %v1525 = vpack.c.b16 %v1521, %v1519
    %v1526 = vpack.c.b16 %v1522, %v1520
    %v1563 = vunpack.c.l.b16 %v1479
    %v1564 = vunpack.c.l.b16 %v1480
    %v1565 = vunpack.c.l.b16 %v1481
    %v1566 = vunpack.c.l.b16 %v1482
    %v1567 = vunpack.c.l.b16 %v1483
    %v1568 = vunpack.c.l.b16 %v1484
    %v1569 = vunpack.c.l.b16 %v1485
    %v1570 = vunpack.c.l.b16 %v1486
    %v1571 = vunpack.c.l.b16 %v1487
    %v1572 = vunpack.c.l.b16 %v1488
    %v1573 = vunpack.c.l.b16 %v1489
    %v1574 = vunpack.c.l.b16 %v1490
    %v1575 = vunpack.c.l.b16 %v1491
    %v1576 = vunpack.c.l.b16 %v1492
    %v1577 = vunpack.c.l.b16 %v1493
    %v1578 = vunpack.c.l.b16 %v1494
    %v1579 = vunpack.c.l.b16 %v1495
    %v1580 = vunpack.c.l.b16 %v1496
    %v1581 = vunpack.c.l.b16 %v1497
    %v1582 = vunpack.c.l.b16 %v1498
    %v1583 = vunpack.c.l.b16 %v1499
    %v1584 = vunpack.c.l.b16 %v1500
    %v1585 = vunpack.c.l.b16 %v1501
    %v1586 = vunpack.c.l.b16 %v1502
    %v1587 = vunpack.c.l.b16 %v1503
    %v1588 = vunpack.c.l.b16 %v1504
    %v1589 = vunpack.c.l.b16 %v1505
    %v1590 = vunpack.c.l.b16 %v1506
    %v1591 = vunpack.c.l.b16 %v1507
    %v1592 = vunpack.c.l.b16 %v1508
    %v1593 = vunpack.c.l.b16 %v1509
    %v1594 = vunpack.c.l.b16 %v1510
    %v1595 = vpack.c.b16 %v1564, %v1563
    %v1596 = vpack.c.b16 %v1566, %v1565
    %v1597 = vpack.c.b16 %v1568, %v1567
    %v1598 = vpack.c.b16 %v1570, %v1569
    %v1599 = vpack.c.b16 %v1572, %v1571
    %v1600 = vpack.c.b16 %v1574, %v1573
    %v1601 = vpack.c.b16 %v1576, %v1575
    %v1602 = vpack.c.b16 %v1578, %v1577
    %v1603 = vpack.c.b16 %v1580, %v1579
    %v1604 = vpack.c.b16 %v1582, %v1581
    %v1605 = vpack.c.b16 %v1584, %v1583
    %v1606 = vpack.c.b16 %v1586, %v1585
    %v1607 = vpack.c.b16 %v1588, %v1587
    %v1608 = vpack.c.b16 %v1590, %v1589
    %v1609 = vpack.c.b16 %v1592, %v1591
    %v1610 = vpack.c.b16 %v1594, %v1593
    %1627 = vmatprep.subr.bf16.mxu0 0
    %1628 = vmatpush1.bf16.msra.mxu0 %v1602
    %1629 = vmatprep.subr.bf16.mxu0 0
    %1630 = vmatpush1.bf16.msra.mxu0 %v1601
    %1631 = vmatprep.subr.bf16.mxu0 0
    %1632 = vmatpush1.bf16.msra.mxu0 %v1600
    %1633 = vmatprep.subr.bf16.mxu0 0
    %1634 = vmatpush1.bf16.msra.mxu0 %v1599
    %1635 = vmatprep.subr.bf16.mxu0 0
    %1636 = vmatpush1.bf16.msra.mxu0 %v1598
    %1637 = vmatprep.subr.bf16.mxu0 0
    %1638 = vmatpush1.bf16.msra.mxu0 %v1597
    %1639 = vmatprep.subr.bf16.mxu0 0
    %1640 = vmatpush1.bf16.msra.mxu0 %v1596
    %1641 = vmatprep.subr.bf16.mxu0 0
    %1642 = vmatpush1.bf16.msra.mxu0 %v1595
    %1643 = vmatprep.subr.bf16.mxu0 0
    %1644 = vmatpush2.bf16.msra.mxu0 %v1610
    %1645 = vmatprep.subr.bf16.mxu0 0
    %1646 = vmatpush2.bf16.msra.mxu0 %v1609
    %1647 = vmatprep.subr.bf16.mxu0 0
    %1648 = vmatpush2.bf16.msra.mxu0 %v1608
    %1649 = vmatprep.subr.bf16.mxu0 0
    %1650 = vmatpush2.bf16.msra.mxu0 %v1607
    %1651 = vmatprep.subr.bf16.mxu0 0
    %1652 = vmatpush2.bf16.msra.mxu0 %v1606
    %1653 = vmatprep.subr.bf16.mxu0 0
    %1654 = vmatpush2.bf16.msra.mxu0 %v1605
    %1655 = vmatprep.subr.bf16.mxu0 0
    %1656 = vmatpush2.bf16.msra.mxu0 %v1604
    %1657 = vmatprep.subr.bf16.mxu0 0
    %1658 = vmatpush2.bf16.msra.mxu0 %v1603
    %1659 = vmatprep.mubr.bf16.mxu0 %v1524
    %1660 = vmatmul.mubr.bf16.gmra.mxu0 %v1523
    %v1661 = vpop.f32.mrf.mxu0
    %v1662 = vadd.f32 0.0, %v1661
    %v1663 = vpop.f32.mrf.mxu0
    %v1664 = vpop.f32.mrf.mxu0
    %v1665 = vadd.f32 0.0, %v1664
    %v1666 = vpop.f32.mrf.mxu0
    %1667 = vmatprep.mubr.bf16.mxu0 %v1526
    %1668 = vmatmul.mubr.bf16.gmra.mxu0 %v1525
    %v1669 = vpop.f32.mrf.mxu0
    %v1670 = vadd.f32 0.0, %v1669
    %v1671 = vpop.f32.mrf.mxu0
    %v1672 = vpop.f32.mrf.mxu0
    %v1673 = vadd.f32 0.0, %v1672
    %v1674 = vpop.f32.mrf.mxu0
    %1675 = vdwg.mxu0
    %v1676 = vadd.f32 %v1421, %v1662
    %v1677 = vadd.f32 %v1422, %v1665
    %v1678 = vadd.f32 %v1423, %v1670
    %v1679 = vadd.f32 %v1424, %v1673
    %v1680 = vshrl.u32 %v258, 16
    %v1682 = vrot.slane %v1680, 7
    %v1683 = vshll.u32 %v258, 16
    %v1685 = vor.u32 %v1682, %v1683
    %v1686 = vshrl.u32 %v259, 16
    %v1688 = vrot.slane %v1686, 7
    %v1689 = vshll.u32 %v259, 16
    %v1691 = vor.u32 %v1688, %v1689
    %v1692 = vsel %vm597, %v1682, %v1691
    %vm1694 = vmand %vm561, %vm597
    %v1695 = vsel %vm1694, %v245, %v1685
    %vm1696 = vsmask.f32 7424
    %v1697 = vrot.slane %v1683, 1
    %v1698 = vor.u32 %v1680, %v1697
    %v1699 = vrot.slane %v1689, 1
    %v1700 = vsel %vm1696, %v1698, %v1699
    %v1701 = vor.u32 %v1686, %v1699
    %v1703 = vpack.c.b16 %v257, %v257
    %vm1705 = vcmask 1047552
    %vm1706 = vmand %vm1705, %vm1696
    %v1707 = vsel %vm1706, %v1701, %v1703
    %v1708 = vsel %vm236, 1, 0
    %v1709 = vsel %vm237, 1, 0
    %v1710 = vsel %vm238, 1, 0
    %v1711 = vsel %vm239, 1, 0
    %1712 = vset.pattern.permute.xlu0 0
    %1713 = vperm.xlu0 %1712, %v1708
    %v1714 = vpop.permute.xlu0 %1713
    %1715 = vset.pattern.permute.xlu0 0
    %1716 = vperm.xlu0 %1715, %v1709
    %v1717 = vpop.permute.xlu0 %1716
    %1718 = vset.pattern.permute.xlu0 0
    %1719 = vperm.xlu0 %1718, %v1710
    %v1720 = vpop.permute.xlu0 %1719
    %1721 = vset.pattern.permute.xlu0 0
    %1722 = vperm.xlu0 %1721, %v1711
    %v1723 = vpop.permute.xlu0 %1722
    %vm1724 = vcmp.eq.s32.totalorder %v1714, 1
    %vm1725 = vcmp.eq.s32.totalorder %v1717, 1
    %vm1726 = vcmp.eq.s32.totalorder %v1720, 1
    %vm1727 = vcmp.eq.s32.totalorder %v1723, 1
    %vm1728 = vmpackc.low %vm1724, %vm1724
    %vm1729 = vmpackc.low %vm1725, %vm1725
    %vm1730 = vmpackc.low %vm1726, %vm1726
    %vm1731 = vmpackc.low %vm1727, %vm1727
    %v1733 = vunpack.c.l.b16 %v1695
    %v1734 = vunpack.c.h.b16 %v1695
    %v1735 = vunpack.c.l.b16 %v1692
    %v1736 = vunpack.c.h.b16 %v1692
    %v1737 = vpack.c.b16 %v1733, %v1733
    %v1738 = vpack.c.b16 %v1734, %v1734
    %v1739 = vpack.c.b16 %v1735, %v1735
    %v1740 = vpack.c.b16 %v1736, %v1736
    %v1745 = vsel %vm1728, %v245, %v1737
    %v1746 = vsel %vm1729, %v246, %v1738
    %v1747 = vsel %vm1730, %v247, %v1739
    %v1748 = vsel %vm1731, %v248, %v1740
    %v1749 = vsel %vm240, 1, 0
    %v1750 = vsel %vm241, 1, 0
    %v1751 = vsel %vm242, 1, 0
    %v1752 = vsel %vm243, 1, 0
    %1753 = vset.pattern.permute.xlu0 0
    %1754 = vperm.xlu0 %1753, %v1749
    %v1755 = vpop.permute.xlu0 %1754
    %1756 = vset.pattern.permute.xlu0 0
    %1757 = vperm.xlu0 %1756, %v1750
    %v1758 = vpop.permute.xlu0 %1757
    %1759 = vset.pattern.permute.xlu0 0
    %1760 = vperm.xlu0 %1759, %v1751
    %v1761 = vpop.permute.xlu0 %1760
    %1762 = vset.pattern.permute.xlu0 0
    %1763 = vperm.xlu0 %1762, %v1752
    %v1764 = vpop.permute.xlu0 %1763
    %vm1765 = vcmp.eq.s32.totalorder %v1755, 1
    %vm1766 = vcmp.eq.s32.totalorder %v1758, 1
    %vm1767 = vcmp.eq.s32.totalorder %v1761, 1
    %vm1768 = vcmp.eq.s32.totalorder %v1764, 1
    %vm1769 = vmpackc.low %vm1765, %vm1765
    %vm1770 = vmpackc.low %vm1766, %vm1766
    %vm1771 = vmpackc.low %vm1767, %vm1767
    %vm1772 = vmpackc.low %vm1768, %vm1768
    %v1774 = vunpack.c.l.b16 %v1700
    %v1775 = vunpack.c.h.b16 %v1700
    %v1776 = vunpack.c.l.b16 %v1707
    %v1777 = vunpack.c.h.b16 %v1707
    %v1778 = vpack.c.b16 %v1774, %v1774
    %v1779 = vpack.c.b16 %v1775, %v1775
    %v1780 = vpack.c.b16 %v1776, %v1776
    %v1781 = vpack.c.b16 %v1777, %v1777
    %v1786 = vsel %vm1769, %v245, %v1778
    %v1787 = vsel %vm1770, %v246, %v1779
    %v1788 = vsel %vm1771, %v247, %v1780
    %v1789 = vsel %vm1772, %v248, %v1781
    %v1790 = vmax.bf16 %v1745, %v245
    %v1791 = vmax.bf16 %v1746, %v246
    %v1792 = vmax.bf16 %v1747, %v247
    %v1793 = vmax.bf16 %v1748, %v248
    %v1794 = vmax.bf16 %v1790, %v1786
    %v1795 = vmax.bf16 %v1791, %v1787
    %v1796 = vmax.bf16 %v1792, %v1788
    %v1797 = vmax.bf16 %v1793, %v1789
    %v1798 = vld [vmem:[%s11] sm:$0x3]
    %v1803 = vunpack.c.l.b16 %v1794
    %v1804 = vunpack.c.l.b16 %v1795
    %v1805 = vunpack.c.l.b16 %v1796
    %v1806 = vunpack.c.l.b16 %v1797
    %v1807 = vpack.c.b16 %v1804, %v1803
    %v1808 = vpack.c.b16 %v1806, %v1805
    %v1810 = vsel %vm260, %v1807, 0
    %v1813 = vsel %vm260, %v1808, 0
    %v1816 = vsel %vm267, %v1798, 0
    %1818 = vmatprep.subr.bf16.mxu0 0
    %1819 = vmatpush1.bf16.msra.mxu0 0
    %1820 = vmatprep.subr.bf16.mxu0 0
    %1821 = vmatpush1.bf16.msra.mxu0 0
    %1822 = vmatprep.subr.bf16.mxu0 0
    %1823 = vmatpush1.bf16.msra.mxu0 0
    %1824 = vmatprep.subr.bf16.mxu0 0
    %1825 = vmatpush1.bf16.msra.mxu0 0
    %1826 = vmatprep.subr.bf16.mxu0 0
    %1827 = vmatpush1.bf16.msra.mxu0 0
    %1828 = vmatprep.subr.bf16.mxu0 0
    %1829 = vmatpush1.bf16.msra.mxu0 0
    %1830 = vmatprep.subr.bf16.mxu0 0
    %1831 = vmatpush1.bf16.msra.mxu0 0
    %1832 = vmatprep.subr.bf16.mxu0 0
    %1833 = vmatpush1.bf16.msra.mxu0 %v1816
    %1834 = vmatprep.subr.bf16.mxu0 0
    %1835 = vmatpush2.bf16.msra.mxu0 0
    %1836 = vmatprep.subr.bf16.mxu0 0
    %1837 = vmatpush2.bf16.msra.mxu0 0
    %1838 = vmatprep.subr.bf16.mxu0 0
    %1839 = vmatpush2.bf16.msra.mxu0 0
    %1840 = vmatprep.subr.bf16.mxu0 0
    %1841 = vmatpush2.bf16.msra.mxu0 0
    %1842 = vmatprep.subr.bf16.mxu0 0
    %1843 = vmatpush2.bf16.msra.mxu0 0
    %1844 = vmatprep.subr.bf16.mxu0 0
    %1845 = vmatpush2.bf16.msra.mxu0 0
    %1846 = vmatprep.subr.bf16.mxu0 0
    %1847 = vmatpush2.bf16.msra.mxu0 0
    %1848 = vmatprep.subr.bf16.mxu0 0
    %1849 = vmatpush2.bf16.msra.mxu0 0
    %1850 = vmatprep.mubr.bf16.mxu0 0
    %1851 = vmatmul.mubr.bf16.gmra.mxu0 %v1810
    %v1852 = vpop.f32.mrf.mxu0
    %v1853 = vadd.f32 0.0, %v1852
    %v1854 = vpop.f32.mrf.mxu0
    %v1855 = vpop.f32.mrf.mxu0
    %v1856 = vadd.f32 0.0, %v1855
    %v1857 = vpop.f32.mrf.mxu0
    %1858 = vmatprep.mubr.bf16.mxu0 0
    %1859 = vmatmul.mubr.bf16.gmra.mxu0 %v1813
    %v1860 = vpop.f32.mrf.mxu0
    %v1861 = vadd.f32 0.0, %v1860
    %v1862 = vpop.f32.mrf.mxu0
    %v1863 = vpop.f32.mrf.mxu0
    %v1864 = vadd.f32 0.0, %v1863
    %v1865 = vpop.f32.mrf.mxu0
    %1866 = vdwg.mxu0
    %1871 = vrot.lane.b32.xlu0 %v1853, 96
    %v1872 = vpop.permute.xlu0 %1871
    %1873 = vrot.lane.b32.xlu0 %v1856, 96
    %v1874 = vpop.permute.xlu0 %1873
    %1875 = vrot.lane.b32.xlu0 %v1861, 96
    %v1876 = vpop.permute.xlu0 %1875
    %1877 = vrot.lane.b32.xlu0 %v1864, 96
    %v1878 = vpop.permute.xlu0 %1877
    %v1883 = vadd.f32 %v1676, %v1872
    %v1884 = vadd.f32 %v1677, %v1874
    %v1885 = vadd.f32 %v1678, %v1876
    %v1886 = vadd.f32 %v1679, %v1878
    %vm1887 = vcmask 785408
    %v1888 = vsel %vm1887, %v1676, %v1883
    %v1889 = vsel %vm1887, %v1677, %v1884
    %v1890 = vsel %vm1887, %v1678, %v1885
    %v1891 = vsel %vm1887, %v1679, %v1886
    %v1892 = vld [vmem:[%s13] sm:$0x1]
    %v1894 = vlaneseq
    %v1895 = vshrl.u32 %v1894, 7
    %v1896 = vsub.s32 0, %v1895
    %v1897 = vrot.slane %v1892, %v1896
    %v1899 = vmul.f32 %v1888, %v1897
    %v1900 = vmul.f32 %v1889, %v1897
    %v1901 = vmul.f32 %v1890, %v1897
    %v1902 = vmul.f32 %v1891, %v1897
    %v1903 = vld [vmem:[%s15] sm:$0x1]
    %v1905 = vlaneseq
    %v1906 = vshrl.u32 %v1905, 7
    %v1907 = vsub.s32 0, %v1906
    %v1908 = vrot.slane %v1903, %v1907
    %v1910 = vadd.f32 %v1899, %v1908
    %v1911 = vadd.f32 %v1900, %v1908
    %v1912 = vadd.f32 %v1901, %v1908
    %v1913 = vadd.f32 %v1902, %v1908
    %v1914 = vmax.f32 %v1910, 0.0
    %v1915 = vmax.f32 %v1911, 0.0
    %v1916 = vmax.f32 %v1912, 0.0
    %v1917 = vmax.f32 %v1913, 0.0
    %v1918 = vpack.c.bf16 %v1915, %v1914
    %v1919 = vpack.c.bf16 %v1917, %v1916
    %v1922 = vunpack.c.l.b16 %v1918
    %v1923 = vunpack.c.h.b16 %v1918
    %v1924 = vunpack.c.l.b16 %v1919
    %v1925 = vunpack.c.h.b16 %v1919
    %v1926 = vpack.c.b16 %v1922, %v1922
    %v1927 = vpack.c.b16 %v1923, %v1923
    %v1928 = vpack.c.b16 %v1924, %v1924
    %v1929 = vpack.c.b16 %v1925, %v1925
    %1934 = vst [vmem:[#allocation2] sm:$0xf] %v1926
    %1935 = vst [vmem:[#allocation2 + $0x4] sm:$0xf] %v1927
    %1936 = vst [vmem:[#allocation2 + $0x8] sm:$0xf] %v1928
    %1937 = vst [vmem:[#allocation2 + $0xc] sm:$0xf] %v1929
    %v1938 = vld [vmem:[#allocation2] sm:$0xf]
    %v1939 = vld [vmem:[#allocation2 + $0x4] sm:$0xf]
    %v1940 = vld [vmem:[#allocation2 + $0x8] sm:$0xf]
    %v1941 = vld [vmem:[#allocation2 + $0xc] sm:$0xf]
    %v1942 = vld [vmem:[%s17] sm:$0xf]
    %v1943 = vld [vmem:[%s17 + $0x4] sm:$0xf]
    %v1944 = vld [vmem:[%s17 + $0x8] sm:$0xf]
    %v1945 = vld [vmem:[%s17 + $0xc] sm:$0xf]
    %v1946 = vld [vmem:[%s17 + $0x10] sm:$0xf]
    %v1947 = vld [vmem:[%s17 + $0x14] sm:$0xf]
    %v1948 = vld [vmem:[%s17 + $0x18] sm:$0xf]
    %v1949 = vld [vmem:[%s17 + $0x1c] sm:$0xf]
    %v1950 = vld [vmem:[%s17 + $0x20] sm:$0xf]
    %v1951 = vld [vmem:[%s17 + $0x24] sm:$0xf]
    %v1952 = vld [vmem:[%s17 + $0x28] sm:$0xf]
    %v1953 = vld [vmem:[%s17 + $0x2c] sm:$0xf]
    %v1954 = vld [vmem:[%s17 + $0x30] sm:$0xf]
    %v1955 = vld [vmem:[%s17 + $0x34] sm:$0xf]
    %v1956 = vld [vmem:[%s17 + $0x38] sm:$0xf]
    %v1957 = vld [vmem:[%s17 + $0x3c] sm:$0xf]
    %v1962 = vunpack.c.l.b16 %v1938
    %v1963 = vunpack.c.l.b16 %v1939
    %v1964 = vunpack.c.l.b16 %v1940
    %v1965 = vunpack.c.l.b16 %v1941
    %v1966 = vpack.c.b16 %v1963, %v1962
    %v1967 = vpack.c.b16 %v1965, %v1964
    %v1986 = vunpack.c.l.b16 %v1942
    %v1987 = vunpack.c.l.b16 %v1943
    %v1988 = vunpack.c.l.b16 %v1944
    %v1989 = vunpack.c.l.b16 %v1945
    %v1990 = vunpack.c.l.b16 %v1946
    %v1991 = vunpack.c.l.b16 %v1947
    %v1992 = vunpack.c.l.b16 %v1948
    %v1993 = vunpack.c.l.b16 %v1949
    %v1994 = vunpack.c.l.b16 %v1950
    %v1995 = vunpack.c.l.b16 %v1951
    %v1996 = vunpack.c.l.b16 %v1952
    %v1997 = vunpack.c.l.b16 %v1953
    %v1998 = vunpack.c.l.b16 %v1954
    %v1999 = vunpack.c.l.b16 %v1955
    %v2000 = vunpack.c.l.b16 %v1956
    %v2001 = vunpack.c.l.b16 %v1957
    %v2002 = vpack.c.b16 %v1987, %v1986
    %v2003 = vpack.c.b16 %v1989, %v1988
    %v2004 = vpack.c.b16 %v1991, %v1990
    %v2005 = vpack.c.b16 %v1993, %v1992
    %v2006 = vpack.c.b16 %v1995, %v1994
    %v2007 = vpack.c.b16 %v1997, %v1996
    %v2008 = vpack.c.b16 %v1999, %v1998
    %v2009 = vpack.c.b16 %v2001, %v2000
    %2018 = vmatprep.subr.bf16.mxu0 0
    %2019 = vmatpush1.bf16.msra.mxu0 %v2009
    %2020 = vmatprep.subr.bf16.mxu0 0
    %2021 = vmatpush1.bf16.msra.mxu0 %v2008
    %2022 = vmatprep.subr.bf16.mxu0 0
    %2023 = vmatpush1.bf16.msra.mxu0 %v2007
    %2024 = vmatprep.subr.bf16.mxu0 0
    %2025 = vmatpush1.bf16.msra.mxu0 %v2006
    %2026 = vmatprep.subr.bf16.mxu0 0
    %2027 = vmatpush1.bf16.msra.mxu0 %v2005
    %2028 = vmatprep.subr.bf16.mxu0 0
    %2029 = vmatpush1.bf16.msra.mxu0 %v2004
    %2030 = vmatprep.subr.bf16.mxu0 0
    %2031 = vmatpush1.bf16.msra.mxu0 %v2003
    %2032 = vmatprep.subr.bf16.mxu0 0
    %2033 = vmatpush1.bf16.msra.mxu0 %v2002
    %2034 = vmatprep.subr.bf16.mxu0 0
    %2035 = vmatpush2.bf16.msra.mxu0 0
    %2036 = vmatprep.subr.bf16.mxu0 0
    %2037 = vmatpush2.bf16.msra.mxu0 0
    %2038 = vmatprep.subr.bf16.mxu0 0
    %2039 = vmatpush2.bf16.msra.mxu0 0
    %2040 = vmatprep.subr.bf16.mxu0 0
    %2041 = vmatpush2.bf16.msra.mxu0 0
    %2042 = vmatprep.subr.bf16.mxu0 0
    %2043 = vmatpush2.bf16.msra.mxu0 0
    %2044 = vmatprep.subr.bf16.mxu0 0
    %2045 = vmatpush2.bf16.msra.mxu0 0
    %2046 = vmatprep.subr.bf16.mxu0 0
    %2047 = vmatpush2.bf16.msra.mxu0 0
    %2048 = vmatprep.subr.bf16.mxu0 0
    %2049 = vmatpush2.bf16.msra.mxu0 0
    %2050 = vmatprep.mubr.bf16.mxu0 0
    %2051 = vmatmul.mubr.bf16.gmra.mxu0 %v1966
    %v2052 = vpop.f32.mrf.mxu0
    %v2053 = vadd.f32 0.0, %v2052
    %v2054 = vpop.f32.mrf.mxu0
    %v2055 = vpop.f32.mrf.mxu0
    %v2056 = vadd.f32 0.0, %v2055
    %v2057 = vpop.f32.mrf.mxu0
    %2058 = vmatprep.mubr.bf16.mxu0 0
    %2059 = vmatmul.mubr.bf16.gmra.mxu0 %v1967
    %v2060 = vpop.f32.mrf.mxu0
    %v2061 = vadd.f32 0.0, %v2060
    %v2062 = vpop.f32.mrf.mxu0
    %v2063 = vpop.f32.mrf.mxu0
    %v2064 = vadd.f32 0.0, %v2063
    %v2065 = vpop.f32.mrf.mxu0
    %2066 = vdwg.mxu0
    %v2067 = vpack.c.bf16 %v2056, %v2053
    %v2068 = vpack.c.bf16 %v2064, %v2061
    %v2071 = vunpack.c.l.b16 %v2067
    %v2072 = vunpack.c.h.b16 %v2067
    %v2073 = vunpack.c.l.b16 %v2068
    %v2074 = vunpack.c.h.b16 %v2068
    %v2075 = vpack.c.b16 %v2071, %v2071
    %v2076 = vpack.c.b16 %v2072, %v2072
    %v2077 = vpack.c.b16 %v2073, %v2073
    %v2078 = vpack.c.b16 %v2074, %v2074
    %v2080 = vshll.u32 %v2075, 16
    %v2082 = vrot.slane %v2080, 5
    %v2083 = vshrl.u32 %v2075, 16
    %v2085 = vrot.slane %v2083, 4
    %v2086 = vor.u32 %v2085, %v2082
    %v2087 = vrot.slane %v2086, 4
    %v2089 = vshll.u32 %v2076, 16
    %v2091 = vrot.slane %v2089, 5
    %v2092 = vsel %vm334, %v2087, %v2091
    %v2093 = vshrl.u32 %v2076, 16
    %v2095 = vrot.slane %v2093, 4
    %v2096 = vor.u32 %v2095, %v2091
    %v2097 = vrot.slane %v2096, 4
    %v2099 = vshll.u32 %v2077, 16
    %v2101 = vrot.slane %v2099, 5
    %v2102 = vsel %vm334, %v2097, %v2101
    %v2103 = vshrl.u32 %v2077, 16
    %v2105 = vrot.slane %v2103, 4
    %v2106 = vor.u32 %v2105, %v2101
    %v2107 = vrot.slane %v2106, 4
    %v2109 = vshll.u32 %v2078, 16
    %v2111 = vrot.slane %v2109, 5
    %v2112 = vsel %vm334, %v2107, %v2111
    %v2113 = vshrl.u32 %v2078, 16
    %v2115 = vrot.slane %v2113, 4
    %v2116 = vor.u32 %v2115, %v2111
    %v2117 = vrot.slane %v2116, 4
    %v2123 = vld [vmem:[#allocation4 + $0x8] sm:$0x8]
    %v2124 = vsel %vm381, %v2082, %v2123
    %2125 = vst [vmem:[#allocation4 + $0x8] sm:$0x8] %v2124
    %2126 = vst.msk [vmem:[#allocation4 + $0x10] sm:$0xf] %vm385, %v2092
    %2127 = vst.msk [vmem:[#allocation4 + $0x18] sm:$0xf] %vm385, %v2102
    %2128 = vst.msk [vmem:[#allocation4 + $0x20] sm:$0xf] %vm385, %v2112
    %v2129 = vld [vmem:[#allocation4 + $0x28] sm:$0xf]
    %v2130 = vsel %vm390, %v2117, %v2129
    %2131 = vst [vmem:[#allocation4 + $0x28] sm:$0xf] %v2130
    %v2132 = vrot.slane %v2075, 5
    %v2133 = vrot.slane %v2132, 4
    %v2134 = vrot.slane %v2076, 5
    %v2135 = vsel %vm396, %v2133, %v2134
    %v2136 = vrot.slane %v2134, 4
    %v2137 = vrot.slane %v2077, 5
    %v2138 = vsel %vm396, %v2136, %v2137
    %v2139 = vrot.slane %v2137, 4
    %v2140 = vrot.slane %v2078, 5
    %v2141 = vsel %vm396, %v2139, %v2140
    %v2142 = vrot.slane %v2140, 4
    %2143 = vrot.lane.b32.xlu0 %v2132, 32
    %v2144 = vpop.permute.xlu0 %2143
    %2145 = vrot.lane.b32.xlu0 %v2135, 32
    %v2146 = vpop.permute.xlu0 %2145
    %2147 = vrot.lane.b32.xlu0 %v2138, 32
    %v2148 = vpop.permute.xlu0 %2147
    %2149 = vrot.lane.b32.xlu0 %v2141, 32
    %v2150 = vpop.permute.xlu0 %2149
    %2151 = vrot.lane.b32.xlu0 %v2142, 32
    %v2152 = vpop.permute.xlu0 %2151
    %2158 = vst.msk [vmem:[#allocation4 + $0x8] sm:$0x8] %vm423, %v2144
    %2159 = vst.msk [vmem:[#allocation4 + $0x10] sm:$0xf] %vm425, %v2146
    %2160 = vst.msk [vmem:[#allocation4 + $0x18] sm:$0xf] %vm425, %v2148
    %2161 = vst.msk [vmem:[#allocation4 + $0x20] sm:$0xf] %vm425, %v2150
    %2162 = vst.msk [vmem:[#allocation4 + $0x28] sm:$0x7] %vm429, %v2152
    %v2163 = vrot.slane %v2083, 5
    %v2164 = vrot.slane %v2080, 6
    %v2165 = vor.u32 %v2163, %v2164
    %v2166 = vrot.slane %v2165, 4
    %v2167 = vrot.slane %v2093, 5
    %v2168 = vrot.slane %v2089, 6
    %v2169 = vor.u32 %v2167, %v2168
    %v2170 = vsel %vm433, %v2166, %v2169
    %v2171 = vrot.slane %v2169, 4
    %v2172 = vrot.slane %v2103, 5
    %v2173 = vrot.slane %v2099, 6
    %v2174 = vor.u32 %v2172, %v2173
    %v2175 = vsel %vm433, %v2171, %v2174
    %v2176 = vrot.slane %v2174, 4
    %v2177 = vrot.slane %v2113, 5
    %v2178 = vrot.slane %v2109, 6
    %v2179 = vor.u32 %v2177, %v2178
    %v2180 = vsel %vm433, %v2176, %v2179
    %v2181 = vrot.slane %v2179, 4
    %2182 = vrot.lane.b32.xlu0 %v2165, 64
    %v2183 = vpop.permute.xlu0 %2182
    %2184 = vrot.lane.b32.xlu0 %v2170, 64
    %v2185 = vpop.permute.xlu0 %2184
    %2186 = vrot.lane.b32.xlu0 %v2175, 64
    %v2187 = vpop.permute.xlu0 %2186
    %2188 = vrot.lane.b32.xlu0 %v2180, 64
    %v2189 = vpop.permute.xlu0 %2188
    %2190 = vrot.lane.b32.xlu0 %v2181, 64
    %v2191 = vpop.permute.xlu0 %2190
    %v2197 = vld [vmem:[#allocation4 + $0x8] sm:$0xc]
    %v2198 = vsel %vm470, %v2183, %v2197
    %2199 = vst [vmem:[#allocation4 + $0x8] sm:$0xc] %v2198
    %2200 = vst.msk [vmem:[#allocation4 + $0x10] sm:$0xf] %vm474, %v2185
    %2201 = vst.msk [vmem:[#allocation4 + $0x18] sm:$0xf] %vm474, %v2187
    %2202 = vst.msk [vmem:[#allocation4 + $0x20] sm:$0xf] %vm474, %v2189
    %v2203 = vld [vmem:[#allocation4 + $0x28] sm:$0x7]
    %v2204 = vsel %vm479, %v2191, %v2203
    %2205 = vst [vmem:[#allocation4 + $0x28] sm:$0x7] %v2204
    %v2206 = vrot.slane %v2075, 6
    %v2207 = vrot.slane %v2206, 4
    %v2208 = vrot.slane %v2076, 6
    %v2209 = vsel %vm485, %v2207, %v2208
    %v2210 = vrot.slane %v2208, 4
    %v2211 = vrot.slane %v2077, 6
    %v2212 = vsel %vm485, %v2210, %v2211
    %v2213 = vrot.slane %v2211, 4
    %v2214 = vrot.slane %v2078, 6
    %v2215 = vsel %vm485, %v2213, %v2214
    %v2216 = vrot.slane %v2214, 4
    %2217 = vrot.lane.b32.xlu0 %v2206, 96
    %v2218 = vpop.permute.xlu0 %2217
    %2219 = vrot.lane.b32.xlu0 %v2209, 96
    %v2220 = vpop.permute.xlu0 %2219
    %2221 = vrot.lane.b32.xlu0 %v2212, 96
    %v2222 = vpop.permute.xlu0 %2221
    %2223 = vrot.lane.b32.xlu0 %v2215, 96
    %v2224 = vpop.permute.xlu0 %2223
    %2225 = vrot.lane.b32.xlu0 %v2216, 96
    %v2226 = vpop.permute.xlu0 %2225
    %2232 = vst.msk [vmem:[#allocation4 + $0x8] sm:$0xc] %vm512, %v2218
    %2233 = vst.msk [vmem:[#allocation4 + $0x10] sm:$0xf] %vm514, %v2220
    %2234 = vst.msk [vmem:[#allocation4 + $0x18] sm:$0xf] %vm514, %v2222
    %2235 = vst.msk [vmem:[#allocation4 + $0x20] sm:$0xf] %vm514, %v2224
    %2236 = vst.msk [vmem:[#allocation4 + $0x28] sm:$0x3] %vm518, %v2226
    %v2237 = vrot.slane %v2083, 6
    %v2238 = vrot.slane %v2080, 7
    %v2239 = vor.u32 %v2237, %v2238
    %v2240 = vrot.slane %v2239, 4
    %v2241 = vrot.slane %v2093, 6
    %v2242 = vrot.slane %v2089, 7
    %v2243 = vor.u32 %v2241, %v2242
    %v2244 = vsel %vm522, %v2240, %v2243
    %v2245 = vrot.slane %v2243, 4
    %v2246 = vrot.slane %v2103, 6
    %v2247 = vrot.slane %v2099, 7
    %v2248 = vor.u32 %v2246, %v2247
    %v2249 = vsel %vm522, %v2245, %v2248
    %v2250 = vrot.slane %v2248, 4
    %v2251 = vrot.slane %v2113, 6
    %v2252 = vrot.slane %v2109, 7
    %v2253 = vor.u32 %v2251, %v2252
    %v2254 = vsel %vm522, %v2250, %v2253
    %v2255 = vrot.slane %v2253, 4
    %v2261 = vld [vmem:[#allocation4 + $0xc] sm:$0xe]
    %v2262 = vsel %vm549, %v2239, %v2261
    %2263 = vst [vmem:[#allocation4 + $0xc] sm:$0xe] %v2262
    %2264 = vst.msk [vmem:[#allocation4 + $0x14] sm:$0xf] %vm385, %v2244
    %2265 = vst.msk [vmem:[#allocation4 + $0x1c] sm:$0xf] %vm385, %v2249
    %2266 = vst.msk [vmem:[#allocation4 + $0x24] sm:$0xf] %vm385, %v2254
    %v2267 = vld [vmem:[#allocation4 + $0x2c] sm:$0x3]
    %v2268 = vsel %vm557, %v2255, %v2267
    %2269 = vst [vmem:[#allocation4 + $0x2c] sm:$0x3] %v2268
    %v2270 = vrot.slane %v2075, 7
    %v2271 = vrot.slane %v2270, 4
    %v2272 = vrot.slane %v2076, 7
    %v2273 = vsel %vm563, %v2271, %v2272
    %v2274 = vrot.slane %v2272, 4
    %v2275 = vrot.slane %v2077, 7
    %v2276 = vsel %vm563, %v2274, %v2275
    %v2277 = vrot.slane %v2275, 4
    %v2278 = vrot.slane %v2078, 7
    %v2279 = vsel %vm563, %v2277, %v2278
    %v2280 = vrot.slane %v2278, 4
    %2281 = vrot.lane.b32.xlu0 %v2270, 32
    %v2282 = vpop.permute.xlu0 %2281
    %2283 = vrot.lane.b32.xlu0 %v2273, 32
    %v2284 = vpop.permute.xlu0 %2283
    %2285 = vrot.lane.b32.xlu0 %v2276, 32
    %v2286 = vpop.permute.xlu0 %2285
    %2287 = vrot.lane.b32.xlu0 %v2279, 32
    %v2288 = vpop.permute.xlu0 %2287
    %2289 = vrot.lane.b32.xlu0 %v2280, 32
    %v2290 = vpop.permute.xlu0 %2289
    %2296 = vst.msk [vmem:[#allocation4 + $0xc] sm:$0xe] %vm590, %v2282
    %2297 = vst.msk [vmem:[#allocation4 + $0x14] sm:$0xf] %vm425, %v2284
    %2298 = vst.msk [vmem:[#allocation4 + $0x1c] sm:$0xf] %vm425, %v2286
    %2299 = vst.msk [vmem:[#allocation4 + $0x24] sm:$0xf] %vm425, %v2288
    %2300 = vst.msk [vmem:[#allocation4 + $0x2c] sm:$0x1] %vm595, %v2290
    %v2301 = vrot.slane %v2083, 7
    %v2302 = vor.u32 %v2301, %v2080
    %v2303 = vrot.slane %v2301, 4
    %v2304 = vrot.slane %v2093, 7
    %v2305 = vor.u32 %v2304, %v2089
    %v2306 = vsel %vm599, %v2303, %v2305
    %v2307 = vrot.slane %v2304, 4
    %v2308 = vrot.slane %v2103, 7
    %v2309 = vor.u32 %v2308, %v2099
    %v2310 = vsel %vm599, %v2307, %v2309
    %v2311 = vrot.slane %v2308, 4
    %v2312 = vrot.slane %v2113, 7
    %v2313 = vor.u32 %v2312, %v2109
    %v2314 = vsel %vm599, %v2311, %v2313
    %v2315 = vrot.slane %v2312, 4
    %2316 = vrot.lane.b32.xlu0 %v2302, 64
    %v2317 = vpop.permute.xlu0 %2316
    %2318 = vrot.lane.b32.xlu0 %v2306, 64
    %v2319 = vpop.permute.xlu0 %2318
    %2320 = vrot.lane.b32.xlu0 %v2310, 64
    %v2321 = vpop.permute.xlu0 %2320
    %2322 = vrot.lane.b32.xlu0 %v2314, 64
    %v2323 = vpop.permute.xlu0 %2322
    %2324 = vrot.lane.b32.xlu0 %v2315, 64
    %v2325 = vpop.permute.xlu0 %2324
    %v2331 = vld [vmem:[#allocation4 + $0xc] sm:$0xf]
    %v2332 = vsel %vm632, %v2317, %v2331
    %2333 = vst [vmem:[#allocation4 + $0xc] sm:$0xf] %v2332
    %2334 = vst.msk [vmem:[#allocation4 + $0x14] sm:$0xf] %vm474, %v2319
    %2335 = vst.msk [vmem:[#allocation4 + $0x1c] sm:$0xf] %vm474, %v2321
    %2336 = vst.msk [vmem:[#allocation4 + $0x24] sm:$0xf] %vm474, %v2323
    %v2337 = vld [vmem:[#allocation4 + $0x2c] sm:$0x1]
    %v2338 = vsel %vm640, %v2325, %v2337
    %2339 = vst [vmem:[#allocation4 + $0x2c] sm:$0x1] %v2338
    %2340 = vrot.lane.b32.xlu0 %v2075, 96
    %v2341 = vpop.permute.xlu0 %2340
    %2342 = vrot.lane.b32.xlu0 %v2076, 96
    %v2343 = vpop.permute.xlu0 %2342
    %2344 = vrot.lane.b32.xlu0 %v2077, 96
    %v2345 = vpop.permute.xlu0 %2344
    %2346 = vrot.lane.b32.xlu0 %v2078, 96
    %v2347 = vpop.permute.xlu0 %2346
    %2352 = vst.msk [vmem:[#allocation4 + $0xc] sm:$0xf] %vm514, %v2341
    %2353 = vst.msk [vmem:[#allocation4 + $0x14] sm:$0xf] %vm514, %v2343
    %2354 = vst.msk [vmem:[#allocation4 + $0x1c] sm:$0xf] %vm514, %v2345
    %2355 = vst.msk [vmem:[#allocation4 + $0x24] sm:$0xf] %vm514, %v2347
    %v2356 = vld [vmem:[#allocation4] sm:$0xff]
    %v2357 = vld [vmem:[#allocation4 + $0x8] sm:$0xff]
    %v2358 = vld [vmem:[#allocation4 + $0x10] sm:$0xff]
    %v2359 = vld [vmem:[#allocation4 + $0x18] sm:$0xff]
    %v2360 = vsel %vm717, %v2356, 0
    %v2361 = vsel %vm718, %v2357, 0
    %v2362 = vsel %vm719, %v2358, 0
    %v2363 = vsel %vm720, %v2359, 0
    %v2364 = vld [vmem:[#allocation5] sm:$0xf]
    %v2365 = vld [vmem:[#allocation5 + $0x4] sm:$0xf]
    %v2366 = vld [vmem:[#allocation5 + $0x8] sm:$0xf]
    %v2367 = vld [vmem:[#allocation5 + $0xc] sm:$0xf]
    %v2368 = vld [vmem:[#allocation5 + $0x10] sm:$0xf]
    %v2369 = vld [vmem:[#allocation5 + $0x14] sm:$0xf]
    %v2370 = vld [vmem:[#allocation5 + $0x18] sm:$0xf]
    %v2371 = vld [vmem:[#allocation5 + $0x1c] sm:$0xf]
    %v2372 = vld [vmem:[#allocation5 + $0x20] sm:$0xf]
    %v2373 = vld [vmem:[#allocation5 + $0x24] sm:$0xf]
    %v2374 = vld [vmem:[#allocation5 + $0x28] sm:$0xf]
    %v2375 = vld [vmem:[#allocation5 + $0x2c] sm:$0xf]
    %v2376 = vld [vmem:[#allocation5 + $0x30] sm:$0xf]
    %v2377 = vld [vmem:[#allocation5 + $0x34] sm:$0xf]
    %v2378 = vld [vmem:[#allocation5 + $0x38] sm:$0xf]
    %v2379 = vld [vmem:[#allocation5 + $0x3c] sm:$0xf]
    %v2380 = vld [vmem:[#allocation5 + $0x40] sm:$0xf]
    %v2381 = vld [vmem:[#allocation5 + $0x44] sm:$0xf]
    %v2382 = vld [vmem:[#allocation5 + $0x48] sm:$0xf]
    %v2383 = vld [vmem:[#allocation5 + $0x4c] sm:$0xf]
    %v2384 = vld [vmem:[#allocation5 + $0x50] sm:$0xf]
    %v2385 = vld [vmem:[#allocation5 + $0x54] sm:$0xf]
    %v2386 = vld [vmem:[#allocation5 + $0x58] sm:$0xf]
    %v2387 = vld [vmem:[#allocation5 + $0x5c] sm:$0xf]
    %v2388 = vld [vmem:[#allocation5 + $0x60] sm:$0xf]
    %v2389 = vld [vmem:[#allocation5 + $0x64] sm:$0xf]
    %v2390 = vld [vmem:[#allocation5 + $0x68] sm:$0xf]
    %v2391 = vld [vmem:[#allocation5 + $0x6c] sm:$0xf]
    %v2392 = vld [vmem:[#allocation5 + $0x70] sm:$0xf]
    %v2393 = vld [vmem:[#allocation5 + $0x74] sm:$0xf]
    %v2394 = vld [vmem:[#allocation5 + $0x78] sm:$0xf]
    %v2395 = vld [vmem:[#allocation5 + $0x7c] sm:$0xf]
    %v2396 = vld [vmem:[#allocation4 + $0x20] sm:$0xff]
    %v2397 = vsel %vm799, %v2357, 0
    %v2398 = vsel %vm800, %v2358, 0
    %v2399 = vsel %vm801, %v2359, 0
    %v2400 = vsel %vm802, %v2396, 0
    %s2401 = scalar_lea.vmem [#allocation5], 128
    %v2402 = vld [vmem:[%s2401] sm:$0xf]
    %v2403 = vld [vmem:[%s2401 + $0x4] sm:$0xf]
    %v2404 = vld [vmem:[%s2401 + $0x8] sm:$0xf]
    %v2405 = vld [vmem:[%s2401 + $0xc] sm:$0xf]
    %v2406 = vld [vmem:[%s2401 + $0x10] sm:$0xf]
    %v2407 = vld [vmem:[%s2401 + $0x14] sm:$0xf]
    %v2408 = vld [vmem:[%s2401 + $0x18] sm:$0xf]
    %v2409 = vld [vmem:[%s2401 + $0x1c] sm:$0xf]
    %v2410 = vld [vmem:[%s2401 + $0x20] sm:$0xf]
    %v2411 = vld [vmem:[%s2401 + $0x24] sm:$0xf]
    %v2412 = vld [vmem:[%s2401 + $0x28] sm:$0xf]
    %v2413 = vld [vmem:[%s2401 + $0x2c] sm:$0xf]
    %v2414 = vld [vmem:[%s2401 + $0x30] sm:$0xf]
    %v2415 = vld [vmem:[%s2401 + $0x34] sm:$0xf]
    %v2416 = vld [vmem:[%s2401 + $0x38] sm:$0xf]
    %v2417 = vld [vmem:[%s2401 + $0x3c] sm:$0xf]
    %v2418 = vld [vmem:[%s2401 + $0x40] sm:$0xf]
    %v2419 = vld [vmem:[%s2401 + $0x44] sm:$0xf]
    %v2420 = vld [vmem:[%s2401 + $0x48] sm:$0xf]
    %v2421 = vld [vmem:[%s2401 + $0x4c] sm:$0xf]
    %v2422 = vld [vmem:[%s2401 + $0x50] sm:$0xf]
    %v2423 = vld [vmem:[%s2401 + $0x54] sm:$0xf]
    %v2424 = vld [vmem:[%s2401 + $0x58] sm:$0xf]
    %v2425 = vld [vmem:[%s2401 + $0x5c] sm:$0xf]
    %v2426 = vld [vmem:[%s2401 + $0x60] sm:$0xf]
    %v2427 = vld [vmem:[%s2401 + $0x64] sm:$0xf]
    %v2428 = vld [vmem:[%s2401 + $0x68] sm:$0xf]
    %v2429 = vld [vmem:[%s2401 + $0x6c] sm:$0xf]
    %v2430 = vld [vmem:[%s2401 + $0x70] sm:$0xf]
    %v2431 = vld [vmem:[%s2401 + $0x74] sm:$0xf]
    %v2432 = vld [vmem:[%s2401 + $0x78] sm:$0xf]
    %v2433 = vld [vmem:[%s2401 + $0x7c] sm:$0xf]
    %v2438 = vunpack.c.l.b16 %v2397
    %v2439 = vunpack.c.h.b16 %v2397
    %v2440 = vunpack.c.l.b16 %v2398
    %v2441 = vunpack.c.h.b16 %v2398
    %v2442 = vunpack.c.l.b16 %v2399
    %v2443 = vunpack.c.h.b16 %v2399
    %v2444 = vunpack.c.l.b16 %v2400
    %v2445 = vunpack.c.h.b16 %v2400
    %v2446 = vpack.c.b16 %v2440, %v2438
    %v2447 = vpack.c.b16 %v2441, %v2439
    %v2448 = vpack.c.b16 %v2444, %v2442
    %v2449 = vpack.c.b16 %v2445, %v2443
    %v2486 = vunpack.c.l.b16 %v2402
    %v2487 = vunpack.c.l.b16 %v2403
    %v2488 = vunpack.c.l.b16 %v2404
    %v2489 = vunpack.c.l.b16 %v2405
    %v2490 = vunpack.c.l.b16 %v2406
    %v2491 = vunpack.c.l.b16 %v2407
    %v2492 = vunpack.c.l.b16 %v2408
    %v2493 = vunpack.c.l.b16 %v2409
    %v2494 = vunpack.c.l.b16 %v2410
    %v2495 = vunpack.c.l.b16 %v2411
    %v2496 = vunpack.c.l.b16 %v2412
    %v2497 = vunpack.c.l.b16 %v2413
    %v2498 = vunpack.c.l.b16 %v2414
    %v2499 = vunpack.c.l.b16 %v2415
    %v2500 = vunpack.c.l.b16 %v2416
    %v2501 = vunpack.c.l.b16 %v2417
    %v2502 = vunpack.c.l.b16 %v2418
    %v2503 = vunpack.c.l.b16 %v2419
    %v2504 = vunpack.c.l.b16 %v2420
    %v2505 = vunpack.c.l.b16 %v2421
    %v2506 = vunpack.c.l.b16 %v2422
    %v2507 = vunpack.c.l.b16 %v2423
    %v2508 = vunpack.c.l.b16 %v2424
    %v2509 = vunpack.c.l.b16 %v2425
    %v2510 = vunpack.c.l.b16 %v2426
    %v2511 = vunpack.c.l.b16 %v2427
    %v2512 = vunpack.c.l.b16 %v2428
    %v2513 = vunpack.c.l.b16 %v2429
    %v2514 = vunpack.c.l.b16 %v2430
    %v2515 = vunpack.c.l.b16 %v2431
    %v2516 = vunpack.c.l.b16 %v2432
    %v2517 = vunpack.c.l.b16 %v2433
    %v2518 = vpack.c.b16 %v2487, %v2486
    %v2519 = vpack.c.b16 %v2489, %v2488
    %v2520 = vpack.c.b16 %v2491, %v2490
    %v2521 = vpack.c.b16 %v2493, %v2492
    %v2522 = vpack.c.b16 %v2495, %v2494
    %v2523 = vpack.c.b16 %v2497, %v2496
    %v2524 = vpack.c.b16 %v2499, %v2498
    %v2525 = vpack.c.b16 %v2501, %v2500
    %v2526 = vpack.c.b16 %v2503, %v2502
    %v2527 = vpack.c.b16 %v2505, %v2504
    %v2528 = vpack.c.b16 %v2507, %v2506
    %v2529 = vpack.c.b16 %v2509, %v2508
    %v2530 = vpack.c.b16 %v2511, %v2510
    %v2531 = vpack.c.b16 %v2513, %v2512
    %v2532 = vpack.c.b16 %v2515, %v2514
    %v2533 = vpack.c.b16 %v2517, %v2516
    %2550 = vmatprep.subr.bf16.mxu0 0
    %2551 = vmatpush1.bf16.msra.mxu0 %v2525
    %2552 = vmatprep.subr.bf16.mxu0 0
    %2553 = vmatpush1.bf16.msra.mxu0 %v2524
    %2554 = vmatprep.subr.bf16.mxu0 0
    %2555 = vmatpush1.bf16.msra.mxu0 %v2523
    %2556 = vmatprep.subr.bf16.mxu0 0
    %2557 = vmatpush1.bf16.msra.mxu0 %v2522
    %2558 = vmatprep.subr.bf16.mxu0 0
    %2559 = vmatpush1.bf16.msra.mxu0 %v2521
    %2560 = vmatprep.subr.bf16.mxu0 0
    %2561 = vmatpush1.bf16.msra.mxu0 %v2520
    %2562 = vmatprep.subr.bf16.mxu0 0
    %2563 = vmatpush1.bf16.msra.mxu0 %v2519
    %2564 = vmatprep.subr.bf16.mxu0 0
    %2565 = vmatpush1.bf16.msra.mxu0 %v2518
    %2566 = vmatprep.subr.bf16.mxu0 0
    %2567 = vmatpush2.bf16.msra.mxu0 %v2533
    %2568 = vmatprep.subr.bf16.mxu0 0
    %2569 = vmatpush2.bf16.msra.mxu0 %v2532
    %2570 = vmatprep.subr.bf16.mxu0 0
    %2571 = vmatpush2.bf16.msra.mxu0 %v2531
    %2572 = vmatprep.subr.bf16.mxu0 0
    %2573 = vmatpush2.bf16.msra.mxu0 %v2530
    %2574 = vmatprep.subr.bf16.mxu0 0
    %2575 = vmatpush2.bf16.msra.mxu0 %v2529
    %2576 = vmatprep.subr.bf16.mxu0 0
    %2577 = vmatpush2.bf16.msra.mxu0 %v2528
    %2578 = vmatprep.subr.bf16.mxu0 0
    %2579 = vmatpush2.bf16.msra.mxu0 %v2527
    %2580 = vmatprep.subr.bf16.mxu0 0
    %2581 = vmatpush2.bf16.msra.mxu0 %v2526
    %2582 = vmatprep.mubr.bf16.mxu0 %v2447
    %2583 = vmatmul.mubr.bf16.gmra.mxu0 %v2446
    %v2584 = vpop.f32.mrf.mxu0
    %v2585 = vadd.f32 0.0, %v2584
    %v2586 = vpop.f32.mrf.mxu0
    %v2587 = vpop.f32.mrf.mxu0
    %v2588 = vadd.f32 0.0, %v2587
    %v2589 = vpop.f32.mrf.mxu0
    %2590 = vmatprep.mubr.bf16.mxu0 %v2449
    %2591 = vmatmul.mubr.bf16.gmra.mxu0 %v2448
    %v2592 = vpop.f32.mrf.mxu0
    %v2593 = vadd.f32 0.0, %v2592
    %v2594 = vpop.f32.mrf.mxu0
    %v2595 = vpop.f32.mrf.mxu0
    %v2596 = vadd.f32 0.0, %v2595
    %v2597 = vpop.f32.mrf.mxu0
    %2598 = vdwg.mxu0
    %v2603 = vunpack.c.l.b16 %v2360
    %v2604 = vunpack.c.h.b16 %v2360
    %v2605 = vunpack.c.l.b16 %v2361
    %v2606 = vunpack.c.h.b16 %v2361
    %v2607 = vunpack.c.l.b16 %v2362
    %v2608 = vunpack.c.h.b16 %v2362
    %v2609 = vunpack.c.l.b16 %v2363
    %v2610 = vunpack.c.h.b16 %v2363
    %v2611 = vpack.c.b16 %v2605, %v2603
    %v2612 = vpack.c.b16 %v2606, %v2604
    %v2613 = vpack.c.b16 %v2609, %v2607
    %v2614 = vpack.c.b16 %v2610, %v2608
    %v2651 = vunpack.c.l.b16 %v2364
    %v2652 = vunpack.c.l.b16 %v2365
    %v2653 = vunpack.c.l.b16 %v2366
    %v2654 = vunpack.c.l.b16 %v2367
    %v2655 = vunpack.c.l.b16 %v2368
    %v2656 = vunpack.c.l.b16 %v2369
    %v2657 = vunpack.c.l.b16 %v2370
    %v2658 = vunpack.c.l.b16 %v2371
    %v2659 = vunpack.c.l.b16 %v2372
    %v2660 = vunpack.c.l.b16 %v2373
    %v2661 = vunpack.c.l.b16 %v2374
    %v2662 = vunpack.c.l.b16 %v2375
    %v2663 = vunpack.c.l.b16 %v2376
    %v2664 = vunpack.c.l.b16 %v2377
    %v2665 = vunpack.c.l.b16 %v2378
    %v2666 = vunpack.c.l.b16 %v2379
    %v2667 = vunpack.c.l.b16 %v2380
    %v2668 = vunpack.c.l.b16 %v2381
    %v2669 = vunpack.c.l.b16 %v2382
    %v2670 = vunpack.c.l.b16 %v2383
    %v2671 = vunpack.c.l.b16 %v2384
    %v2672 = vunpack.c.l.b16 %v2385
    %v2673 = vunpack.c.l.b16 %v2386
    %v2674 = vunpack.c.l.b16 %v2387
    %v2675 = vunpack.c.l.b16 %v2388
    %v2676 = vunpack.c.l.b16 %v2389
    %v2677 = vunpack.c.l.b16 %v2390
    %v2678 = vunpack.c.l.b16 %v2391
    %v2679 = vunpack.c.l.b16 %v2392
    %v2680 = vunpack.c.l.b16 %v2393
    %v2681 = vunpack.c.l.b16 %v2394
    %v2682 = vunpack.c.l.b16 %v2395
    %v2683 = vpack.c.b16 %v2652, %v2651
    %v2684 = vpack.c.b16 %v2654, %v2653
    %v2685 = vpack.c.b16 %v2656, %v2655
    %v2686 = vpack.c.b16 %v2658, %v2657
    %v2687 = vpack.c.b16 %v2660, %v2659
    %v2688 = vpack.c.b16 %v2662, %v2661
    %v2689 = vpack.c.b16 %v2664, %v2663
    %v2690 = vpack.c.b16 %v2666, %v2665
    %v2691 = vpack.c.b16 %v2668, %v2667
    %v2692 = vpack.c.b16 %v2670, %v2669
    %v2693 = vpack.c.b16 %v2672, %v2671
    %v2694 = vpack.c.b16 %v2674, %v2673
    %v2695 = vpack.c.b16 %v2676, %v2675
    %v2696 = vpack.c.b16 %v2678, %v2677
    %v2697 = vpack.c.b16 %v2680, %v2679
    %v2698 = vpack.c.b16 %v2682, %v2681
    %2715 = vmatprep.subr.bf16.mxu0 0
    %2716 = vmatpush1.bf16.msra.mxu0 %v2690
    %2717 = vmatprep.subr.bf16.mxu0 0
    %2718 = vmatpush1.bf16.msra.mxu0 %v2689
    %2719 = vmatprep.subr.bf16.mxu0 0
    %2720 = vmatpush1.bf16.msra.mxu0 %v2688
    %2721 = vmatprep.subr.bf16.mxu0 0
    %2722 = vmatpush1.bf16.msra.mxu0 %v2687
    %2723 = vmatprep.subr.bf16.mxu0 0
    %2724 = vmatpush1.bf16.msra.mxu0 %v2686
    %2725 = vmatprep.subr.bf16.mxu0 0
    %2726 = vmatpush1.bf16.msra.mxu0 %v2685
    %2727 = vmatprep.subr.bf16.mxu0 0
    %2728 = vmatpush1.bf16.msra.mxu0 %v2684
    %2729 = vmatprep.subr.bf16.mxu0 0
    %2730 = vmatpush1.bf16.msra.mxu0 %v2683
    %2731 = vmatprep.subr.bf16.mxu0 0
    %2732 = vmatpush2.bf16.msra.mxu0 %v2698
    %2733 = vmatprep.subr.bf16.mxu0 0
    %2734 = vmatpush2.bf16.msra.mxu0 %v2697
    %2735 = vmatprep.subr.bf16.mxu0 0
    %2736 = vmatpush2.bf16.msra.mxu0 %v2696
    %2737 = vmatprep.subr.bf16.mxu0 0
    %2738 = vmatpush2.bf16.msra.mxu0 %v2695
    %2739 = vmatprep.subr.bf16.mxu0 0
    %2740 = vmatpush2.bf16.msra.mxu0 %v2694
    %2741 = vmatprep.subr.bf16.mxu0 0
    %2742 = vmatpush2.bf16.msra.mxu0 %v2693
    %2743 = vmatprep.subr.bf16.mxu0 0
    %2744 = vmatpush2.bf16.msra.mxu0 %v2692
    %2745 = vmatprep.subr.bf16.mxu0 0
    %2746 = vmatpush2.bf16.msra.mxu0 %v2691
    %2747 = vmatprep.mubr.bf16.mxu0 %v2612
    %2748 = vmatmul.mubr.bf16.gmra.mxu0 %v2611
    %v2749 = vpop.f32.mrf.mxu0
    %v2750 = vadd.f32 %v2585, %v2749
    %v2751 = vpop.f32.mrf.mxu0
    %v2752 = vpop.f32.mrf.mxu0
    %v2753 = vadd.f32 %v2588, %v2752
    %v2754 = vpop.f32.mrf.mxu0
    %2755 = vmatprep.mubr.bf16.mxu0 %v2614
    %2756 = vmatmul.mubr.bf16.gmra.mxu0 %v2613
    %v2757 = vpop.f32.mrf.mxu0
    %v2758 = vadd.f32 %v2593, %v2757
    %v2759 = vpop.f32.mrf.mxu0
    %v2760 = vpop.f32.mrf.mxu0
    %v2761 = vadd.f32 %v2596, %v2760
    %v2762 = vpop.f32.mrf.mxu0
    %2763 = vdwg.mxu0
    %v2764 = vld [vmem:[#allocation4 + $0x10] sm:$0xff]
    %v2765 = vld [vmem:[#allocation4 + $0x18] sm:$0xff]
    %v2766 = vld [vmem:[#allocation4 + $0x20] sm:$0xff]
    %v2767 = vld [vmem:[#allocation4 + $0x28] sm:$0xff]
    %v2768 = vsel %vm1215, %v2764, 0
    %v2769 = vsel %vm1216, %v2765, 0
    %v2770 = vsel %vm1217, %v2766, 0
    %v2771 = vsel %vm1218, %v2767, 0
    %s2772 = scalar_lea.vmem [#allocation5], 256
    %v2773 = vld [vmem:[%s2772] sm:$0xf]
    %v2774 = vld [vmem:[%s2772 + $0x4] sm:$0xf]
    %v2775 = vld [vmem:[%s2772 + $0x8] sm:$0xf]
    %v2776 = vld [vmem:[%s2772 + $0xc] sm:$0xf]
    %v2777 = vld [vmem:[%s2772 + $0x10] sm:$0xf]
    %v2778 = vld [vmem:[%s2772 + $0x14] sm:$0xf]
    %v2779 = vld [vmem:[%s2772 + $0x18] sm:$0xf]
    %v2780 = vld [vmem:[%s2772 + $0x1c] sm:$0xf]
    %v2781 = vld [vmem:[%s2772 + $0x20] sm:$0xf]
    %v2782 = vld [vmem:[%s2772 + $0x24] sm:$0xf]
    %v2783 = vld [vmem:[%s2772 + $0x28] sm:$0xf]
    %v2784 = vld [vmem:[%s2772 + $0x2c] sm:$0xf]
    %v2785 = vld [vmem:[%s2772 + $0x30] sm:$0xf]
    %v2786 = vld [vmem:[%s2772 + $0x34] sm:$0xf]
    %v2787 = vld [vmem:[%s2772 + $0x38] sm:$0xf]
    %v2788 = vld [vmem:[%s2772 + $0x3c] sm:$0xf]
    %v2789 = vld [vmem:[%s2772 + $0x40] sm:$0xf]
    %v2790 = vld [vmem:[%s2772 + $0x44] sm:$0xf]
    %v2791 = vld [vmem:[%s2772 + $0x48] sm:$0xf]
    %v2792 = vld [vmem:[%s2772 + $0x4c] sm:$0xf]
    %v2793 = vld [vmem:[%s2772 + $0x50] sm:$0xf]
    %v2794 = vld [vmem:[%s2772 + $0x54] sm:$0xf]
    %v2795 = vld [vmem:[%s2772 + $0x58] sm:$0xf]
    %v2796 = vld [vmem:[%s2772 + $0x5c] sm:$0xf]
    %v2797 = vld [vmem:[%s2772 + $0x60] sm:$0xf]
    %v2798 = vld [vmem:[%s2772 + $0x64] sm:$0xf]
    %v2799 = vld [vmem:[%s2772 + $0x68] sm:$0xf]
    %v2800 = vld [vmem:[%s2772 + $0x6c] sm:$0xf]
    %v2801 = vld [vmem:[%s2772 + $0x70] sm:$0xf]
    %v2802 = vld [vmem:[%s2772 + $0x74] sm:$0xf]
    %v2803 = vld [vmem:[%s2772 + $0x78] sm:$0xf]
    %v2804 = vld [vmem:[%s2772 + $0x7c] sm:$0xf]
    %v2809 = vunpack.c.l.b16 %v2768
    %v2810 = vunpack.c.h.b16 %v2768
    %v2811 = vunpack.c.l.b16 %v2769
    %v2812 = vunpack.c.h.b16 %v2769
    %v2813 = vunpack.c.l.b16 %v2770
    %v2814 = vunpack.c.h.b16 %v2770
    %v2815 = vunpack.c.l.b16 %v2771
    %v2816 = vunpack.c.h.b16 %v2771
    %v2817 = vpack.c.b16 %v2811, %v2809
    %v2818 = vpack.c.b16 %v2812, %v2810
    %v2819 = vpack.c.b16 %v2815, %v2813
    %v2820 = vpack.c.b16 %v2816, %v2814
    %v2857 = vunpack.c.l.b16 %v2773
    %v2858 = vunpack.c.l.b16 %v2774
    %v2859 = vunpack.c.l.b16 %v2775
    %v2860 = vunpack.c.l.b16 %v2776
    %v2861 = vunpack.c.l.b16 %v2777
    %v2862 = vunpack.c.l.b16 %v2778
    %v2863 = vunpack.c.l.b16 %v2779
    %v2864 = vunpack.c.l.b16 %v2780
    %v2865 = vunpack.c.l.b16 %v2781
    %v2866 = vunpack.c.l.b16 %v2782
    %v2867 = vunpack.c.l.b16 %v2783
    %v2868 = vunpack.c.l.b16 %v2784
    %v2869 = vunpack.c.l.b16 %v2785
    %v2870 = vunpack.c.l.b16 %v2786
    %v2871 = vunpack.c.l.b16 %v2787
    %v2872 = vunpack.c.l.b16 %v2788
    %v2873 = vunpack.c.l.b16 %v2789
    %v2874 = vunpack.c.l.b16 %v2790
    %v2875 = vunpack.c.l.b16 %v2791
    %v2876 = vunpack.c.l.b16 %v2792
    %v2877 = vunpack.c.l.b16 %v2793
    %v2878 = vunpack.c.l.b16 %v2794
    %v2879 = vunpack.c.l.b16 %v2795
    %v2880 = vunpack.c.l.b16 %v2796
    %v2881 = vunpack.c.l.b16 %v2797
    %v2882 = vunpack.c.l.b16 %v2798
    %v2883 = vunpack.c.l.b16 %v2799
    %v2884 = vunpack.c.l.b16 %v2800
    %v2885 = vunpack.c.l.b16 %v2801
    %v2886 = vunpack.c.l.b16 %v2802
    %v2887 = vunpack.c.l.b16 %v2803
    %v2888 = vunpack.c.l.b16 %v2804
    %v2889 = vpack.c.b16 %v2858, %v2857
    %v2890 = vpack.c.b16 %v2860, %v2859
    %v2891 = vpack.c.b16 %v2862, %v2861
    %v2892 = vpack.c.b16 %v2864, %v2863
    %v2893 = vpack.c.b16 %v2866, %v2865
    %v2894 = vpack.c.b16 %v2868, %v2867
    %v2895 = vpack.c.b16 %v2870, %v2869
    %v2896 = vpack.c.b16 %v2872, %v2871
    %v2897 = vpack.c.b16 %v2874, %v2873
    %v2898 = vpack.c.b16 %v2876, %v2875
    %v2899 = vpack.c.b16 %v2878, %v2877
    %v2900 = vpack.c.b16 %v2880, %v2879
    %v2901 = vpack.c.b16 %v2882, %v2881
    %v2902 = vpack.c.b16 %v2884, %v2883
    %v2903 = vpack.c.b16 %v2886, %v2885
    %v2904 = vpack.c.b16 %v2888, %v2887
    %2921 = vmatprep.subr.bf16.mxu0 0
    %2922 = vmatpush1.bf16.msra.mxu0 %v2896
    %2923 = vmatprep.subr.bf16.mxu0 0
    %2924 = vmatpush1.bf16.msra.mxu0 %v2895
    %2925 = vmatprep.subr.bf16.mxu0 0
    %2926 = vmatpush1.bf16.msra.mxu0 %v2894
    %2927 = vmatprep.subr.bf16.mxu0 0
    %2928 = vmatpush1.bf16.msra.mxu0 %v2893
    %2929 = vmatprep.subr.bf16.mxu0 0
    %2930 = vmatpush1.bf16.msra.mxu0 %v2892
    %2931 = vmatprep.subr.bf16.mxu0 0
    %2932 = vmatpush1.bf16.msra.mxu0 %v2891
    %2933 = vmatprep.subr.bf16.mxu0 0
    %2934 = vmatpush1.bf16.msra.mxu0 %v2890
    %2935 = vmatprep.subr.bf16.mxu0 0
    %2936 = vmatpush1.bf16.msra.mxu0 %v2889
    %2937 = vmatprep.subr.bf16.mxu0 0
    %2938 = vmatpush2.bf16.msra.mxu0 %v2904
    %2939 = vmatprep.subr.bf16.mxu0 0
    %2940 = vmatpush2.bf16.msra.mxu0 %v2903
    %2941 = vmatprep.subr.bf16.mxu0 0
    %2942 = vmatpush2.bf16.msra.mxu0 %v2902
    %2943 = vmatprep.subr.bf16.mxu0 0
    %2944 = vmatpush2.bf16.msra.mxu0 %v2901
    %2945 = vmatprep.subr.bf16.mxu0 0
    %2946 = vmatpush2.bf16.msra.mxu0 %v2900
    %2947 = vmatprep.subr.bf16.mxu0 0
    %2948 = vmatpush2.bf16.msra.mxu0 %v2899
    %2949 = vmatprep.subr.bf16.mxu0 0
    %2950 = vmatpush2.bf16.msra.mxu0 %v2898
    %2951 = vmatprep.subr.bf16.mxu0 0
    %2952 = vmatpush2.bf16.msra.mxu0 %v2897
    %2953 = vmatprep.mubr.bf16.mxu0 %v2818
    %2954 = vmatmul.mubr.bf16.gmra.mxu0 %v2817
    %v2955 = vpop.f32.mrf.mxu0
    %v2956 = vadd.f32 0.0, %v2955
    %v2957 = vpop.f32.mrf.mxu0
    %v2958 = vpop.f32.mrf.mxu0
    %v2959 = vadd.f32 0.0, %v2958
    %v2960 = vpop.f32.mrf.mxu0
    %2961 = vmatprep.mubr.bf16.mxu0 %v2820
    %2962 = vmatmul.mubr.bf16.gmra.mxu0 %v2819
    %v2963 = vpop.f32.mrf.mxu0
    %v2964 = vadd.f32 0.0, %v2963
    %v2965 = vpop.f32.mrf.mxu0
    %v2966 = vpop.f32.mrf.mxu0
    %v2967 = vadd.f32 0.0, %v2966
    %v2968 = vpop.f32.mrf.mxu0
    %2969 = vdwg.mxu0
    %v2970 = vadd.f32 %v2750, %v2956
    %v2971 = vadd.f32 %v2753, %v2959
    %v2972 = vadd.f32 %v2758, %v2964
    %v2973 = vadd.f32 %v2761, %v2967
    %v2974 = vld [vmem:[#allocation4 + $0x18] sm:$0xff]
    %v2975 = vld [vmem:[#allocation4 + $0x20] sm:$0xff]
    %v2976 = vld [vmem:[#allocation4 + $0x28] sm:$0xff]
    %v2977 = vld [vmem:[#allocation4 + $0x30] sm:$0xff]
    %v2978 = vsel %vm1470, %v2974, 0
    %v2979 = vsel %vm1471, %v2975, 0
    %v2980 = vsel %vm1472, %v2976, 0
    %v2981 = vsel %vm1473, %v2977, 0
    %s2982 = scalar_lea.vmem [#allocation5], 384
    %v2983 = vld [vmem:[%s2982] sm:$0xf]
    %v2984 = vld [vmem:[%s2982 + $0x4] sm:$0xf]
    %v2985 = vld [vmem:[%s2982 + $0x8] sm:$0xf]
    %v2986 = vld [vmem:[%s2982 + $0xc] sm:$0xf]
    %v2987 = vld [vmem:[%s2982 + $0x10] sm:$0xf]
    %v2988 = vld [vmem:[%s2982 + $0x14] sm:$0xf]
    %v2989 = vld [vmem:[%s2982 + $0x18] sm:$0xf]
    %v2990 = vld [vmem:[%s2982 + $0x1c] sm:$0xf]
    %v2991 = vld [vmem:[%s2982 + $0x20] sm:$0xf]
    %v2992 = vld [vmem:[%s2982 + $0x24] sm:$0xf]
    %v2993 = vld [vmem:[%s2982 + $0x28] sm:$0xf]
    %v2994 = vld [vmem:[%s2982 + $0x2c] sm:$0xf]
    %v2995 = vld [vmem:[%s2982 + $0x30] sm:$0xf]
    %v2996 = vld [vmem:[%s2982 + $0x34] sm:$0xf]
    %v2997 = vld [vmem:[%s2982 + $0x38] sm:$0xf]
    %v2998 = vld [vmem:[%s2982 + $0x3c] sm:$0xf]
    %v2999 = vld [vmem:[%s2982 + $0x40] sm:$0xf]
    %v3000 = vld [vmem:[%s2982 + $0x44] sm:$0xf]
    %v3001 = vld [vmem:[%s2982 + $0x48] sm:$0xf]
    %v3002 = vld [vmem:[%s2982 + $0x4c] sm:$0xf]
    %v3003 = vld [vmem:[%s2982 + $0x50] sm:$0xf]
    %v3004 = vld [vmem:[%s2982 + $0x54] sm:$0xf]
    %v3005 = vld [vmem:[%s2982 + $0x58] sm:$0xf]
    %v3006 = vld [vmem:[%s2982 + $0x5c] sm:$0xf]
    %v3007 = vld [vmem:[%s2982 + $0x60] sm:$0xf]
    %v3008 = vld [vmem:[%s2982 + $0x64] sm:$0xf]
    %v3009 = vld [vmem:[%s2982 + $0x68] sm:$0xf]
    %v3010 = vld [vmem:[%s2982 + $0x6c] sm:$0xf]
    %v3011 = vld [vmem:[%s2982 + $0x70] sm:$0xf]
    %v3012 = vld [vmem:[%s2982 + $0x74] sm:$0xf]
    %v3013 = vld [vmem:[%s2982 + $0x78] sm:$0xf]
    %v3014 = vld [vmem:[%s2982 + $0x7c] sm:$0xf]
    %v3019 = vunpack.c.l.b16 %v2978
    %v3020 = vunpack.c.h.b16 %v2978
    %v3021 = vunpack.c.l.b16 %v2979
    %v3022 = vunpack.c.h.b16 %v2979
    %v3023 = vunpack.c.l.b16 %v2980
    %v3024 = vunpack.c.h.b16 %v2980
    %v3025 = vunpack.c.l.b16 %v2981
    %v3026 = vunpack.c.h.b16 %v2981
    %v3027 = vpack.c.b16 %v3021, %v3019
    %v3028 = vpack.c.b16 %v3022, %v3020
    %v3029 = vpack.c.b16 %v3025, %v3023
    %v3030 = vpack.c.b16 %v3026, %v3024
    %v3067 = vunpack.c.l.b16 %v2983
    %v3068 = vunpack.c.l.b16 %v2984
    %v3069 = vunpack.c.l.b16 %v2985
    %v3070 = vunpack.c.l.b16 %v2986
    %v3071 = vunpack.c.l.b16 %v2987
    %v3072 = vunpack.c.l.b16 %v2988
    %v3073 = vunpack.c.l.b16 %v2989
    %v3074 = vunpack.c.l.b16 %v2990
    %v3075 = vunpack.c.l.b16 %v2991
    %v3076 = vunpack.c.l.b16 %v2992
    %v3077 = vunpack.c.l.b16 %v2993
    %v3078 = vunpack.c.l.b16 %v2994
    %v3079 = vunpack.c.l.b16 %v2995
    %v3080 = vunpack.c.l.b16 %v2996
    %v3081 = vunpack.c.l.b16 %v2997
    %v3082 = vunpack.c.l.b16 %v2998
    %v3083 = vunpack.c.l.b16 %v2999
    %v3084 = vunpack.c.l.b16 %v3000
    %v3085 = vunpack.c.l.b16 %v3001
    %v3086 = vunpack.c.l.b16 %v3002
    %v3087 = vunpack.c.l.b16 %v3003
    %v3088 = vunpack.c.l.b16 %v3004
    %v3089 = vunpack.c.l.b16 %v3005
    %v3090 = vunpack.c.l.b16 %v3006
    %v3091 = vunpack.c.l.b16 %v3007
    %v3092 = vunpack.c.l.b16 %v3008
    %v3093 = vunpack.c.l.b16 %v3009
    %v3094 = vunpack.c.l.b16 %v3010
    %v3095 = vunpack.c.l.b16 %v3011
    %v3096 = vunpack.c.l.b16 %v3012
    %v3097 = vunpack.c.l.b16 %v3013
    %v3098 = vunpack.c.l.b16 %v3014
    %v3099 = vpack.c.b16 %v3068, %v3067
    %v3100 = vpack.c.b16 %v3070, %v3069
    %v3101 = vpack.c.b16 %v3072, %v3071
    %v3102 = vpack.c.b16 %v3074, %v3073
    %v3103 = vpack.c.b16 %v3076, %v3075
    %v3104 = vpack.c.b16 %v3078, %v3077
    %v3105 = vpack.c.b16 %v3080, %v3079
    %v3106 = vpack.c.b16 %v3082, %v3081
    %v3107 = vpack.c.b16 %v3084, %v3083
    %v3108 = vpack.c.b16 %v3086, %v3085
    %v3109 = vpack.c.b16 %v3088, %v3087
    %v3110 = vpack.c.b16 %v3090, %v3089
    %v3111 = vpack.c.b16 %v3092, %v3091
    %v3112 = vpack.c.b16 %v3094, %v3093
    %v3113 = vpack.c.b16 %v3096, %v3095
    %v3114 = vpack.c.b16 %v3098, %v3097
    %3131 = vmatprep.subr.bf16.mxu0 0
    %3132 = vmatpush1.bf16.msra.mxu0 %v3106
    %3133 = vmatprep.subr.bf16.mxu0 0
    %3134 = vmatpush1.bf16.msra.mxu0 %v3105
    %3135 = vmatprep.subr.bf16.mxu0 0
    %3136 = vmatpush1.bf16.msra.mxu0 %v3104
    %3137 = vmatprep.subr.bf16.mxu0 0
    %3138 = vmatpush1.bf16.msra.mxu0 %v3103
    %3139 = vmatprep.subr.bf16.mxu0 0
    %3140 = vmatpush1.bf16.msra.mxu0 %v3102
    %3141 = vmatprep.subr.bf16.mxu0 0
    %3142 = vmatpush1.bf16.msra.mxu0 %v3101
    %3143 = vmatprep.subr.bf16.mxu0 0
    %3144 = vmatpush1.bf16.msra.mxu0 %v3100
    %3145 = vmatprep.subr.bf16.mxu0 0
    %3146 = vmatpush1.bf16.msra.mxu0 %v3099
    %3147 = vmatprep.subr.bf16.mxu0 0
    %3148 = vmatpush2.bf16.msra.mxu0 %v3114
    %3149 = vmatprep.subr.bf16.mxu0 0
    %3150 = vmatpush2.bf16.msra.mxu0 %v3113
    %3151 = vmatprep.subr.bf16.mxu0 0
    %3152 = vmatpush2.bf16.msra.mxu0 %v3112
    %3153 = vmatprep.subr.bf16.mxu0 0
    %3154 = vmatpush2.bf16.msra.mxu0 %v3111
    %3155 = vmatprep.subr.bf16.mxu0 0
    %3156 = vmatpush2.bf16.msra.mxu0 %v3110
    %3157 = vmatprep.subr.bf16.mxu0 0
    %3158 = vmatpush2.bf16.msra.mxu0 %v3109
    %3159 = vmatprep.subr.bf16.mxu0 0
    %3160 = vmatpush2.bf16.msra.mxu0 %v3108
    %3161 = vmatprep.subr.bf16.mxu0 0
    %3162 = vmatpush2.bf16.msra.mxu0 %v3107
    %3163 = vmatprep.mubr.bf16.mxu0 %v3028
    %3164 = vmatmul.mubr.bf16.gmra.mxu0 %v3027
    %v3165 = vpop.f32.mrf.mxu0
    %v3166 = vadd.f32 0.0, %v3165
    %v3167 = vpop.f32.mrf.mxu0
    %v3168 = vpop.f32.mrf.mxu0
    %v3169 = vadd.f32 0.0, %v3168
    %v3170 = vpop.f32.mrf.mxu0
    %3171 = vmatprep.mubr.bf16.mxu0 %v3030
    %3172 = vmatmul.mubr.bf16.gmra.mxu0 %v3029
    %v3173 = vpop.f32.mrf.mxu0
    %v3174 = vadd.f32 0.0, %v3173
    %v3175 = vpop.f32.mrf.mxu0
    %v3176 = vpop.f32.mrf.mxu0
    %v3177 = vadd.f32 0.0, %v3176
    %v3178 = vpop.f32.mrf.mxu0
    %3179 = vdwg.mxu0
    %v3180 = vadd.f32 %v2970, %v3166
    %v3181 = vadd.f32 %v2971, %v3169
    %v3182 = vadd.f32 %v2972, %v3174
    %v3183 = vadd.f32 %v2973, %v3177
    %v3185 = vshrl.u32 %v1966, 16
    %v3187 = vrot.slane %v3185, 7
    %v3188 = vshll.u32 %v1966, 16
    %v3190 = vor.u32 %v3187, %v3188
    %v3192 = vshrl.u32 %v1967, 16
    %v3194 = vrot.slane %v3192, 7
    %v3195 = vshll.u32 %v1967, 16
    %v3197 = vor.u32 %v3194, %v3195
    %v3198 = vsel %vm597, %v3187, %v3197
    %v3200 = vsel %vm1694, %v1938, %v3190
    %v3201 = vrot.slane %v3188, 1
    %v3202 = vor.u32 %v3185, %v3201
    %v3203 = vrot.slane %v3195, 1
    %v3204 = vsel %vm1696, %v3202, %v3203
    %v3205 = vor.u32 %v3192, %v3203
    %v3207 = vpack.c.b16 %v1965, %v1965
    %v3209 = vsel %vm1706, %v3205, %v3207
    %v3211 = vunpack.c.l.b16 %v3200
    %v3212 = vunpack.c.h.b16 %v3200
    %v3213 = vunpack.c.l.b16 %v3198
    %v3214 = vunpack.c.h.b16 %v3198
    %v3215 = vpack.c.b16 %v3211, %v3211
    %v3216 = vpack.c.b16 %v3212, %v3212
    %v3217 = vpack.c.b16 %v3213, %v3213
    %v3218 = vpack.c.b16 %v3214, %v3214
    %v3223 = vsel %vm1728, %v1938, %v3215
    %v3224 = vsel %vm1729, %v1939, %v3216
    %v3225 = vsel %vm1730, %v1940, %v3217
    %v3226 = vsel %vm1731, %v1941, %v3218
    %v3228 = vunpack.c.l.b16 %v3204
    %v3229 = vunpack.c.h.b16 %v3204
    %v3230 = vunpack.c.l.b16 %v3209
    %v3231 = vunpack.c.h.b16 %v3209
    %v3232 = vpack.c.b16 %v3228, %v3228
    %v3233 = vpack.c.b16 %v3229, %v3229
    %v3234 = vpack.c.b16 %v3230, %v3230
    %v3235 = vpack.c.b16 %v3231, %v3231
    %v3240 = vsel %vm1769, %v1938, %v3232
    %v3241 = vsel %vm1770, %v1939, %v3233
    %v3242 = vsel %vm1771, %v1940, %v3234
    %v3243 = vsel %vm1772, %v1941, %v3235
    %v3244 = vmax.bf16 %v3223, %v1938
    %v3245 = vmax.bf16 %v3224, %v1939
    %v3246 = vmax.bf16 %v3225, %v1940
    %v3247 = vmax.bf16 %v3226, %v1941
    %v3248 = vmax.bf16 %v3244, %v3240
    %v3249 = vmax.bf16 %v3245, %v3241
    %v3250 = vmax.bf16 %v3246, %v3242
    %v3251 = vmax.bf16 %v3247, %v3243
    %v3252 = vld [vmem:[%s21] sm:$0xf]
    %v3253 = vld [vmem:[%s21 + $0x4] sm:$0xf]
    %v3254 = vld [vmem:[%s21 + $0x8] sm:$0xf]
    %v3255 = vld [vmem:[%s21 + $0xc] sm:$0xf]
    %v3256 = vld [vmem:[%s21 + $0x10] sm:$0xf]
    %v3257 = vld [vmem:[%s21 + $0x14] sm:$0xf]
    %v3258 = vld [vmem:[%s21 + $0x18] sm:$0xf]
    %v3259 = vld [vmem:[%s21 + $0x1c] sm:$0xf]
    %v3260 = vld [vmem:[%s21 + $0x20] sm:$0xf]
    %v3261 = vld [vmem:[%s21 + $0x24] sm:$0xf]
    %v3262 = vld [vmem:[%s21 + $0x28] sm:$0xf]
    %v3263 = vld [vmem:[%s21 + $0x2c] sm:$0xf]
    %v3264 = vld [vmem:[%s21 + $0x30] sm:$0xf]
    %v3265 = vld [vmem:[%s21 + $0x34] sm:$0xf]
    %v3266 = vld [vmem:[%s21 + $0x38] sm:$0xf]
    %v3267 = vld [vmem:[%s21 + $0x3c] sm:$0xf]
    %v3272 = vunpack.c.l.b16 %v3248
    %v3273 = vunpack.c.l.b16 %v3249
    %v3274 = vunpack.c.l.b16 %v3250
    %v3275 = vunpack.c.l.b16 %v3251
    %v3276 = vpack.c.b16 %v3273, %v3272
    %v3277 = vpack.c.b16 %v3275, %v3274
    %v3296 = vunpack.c.l.b16 %v3252
    %v3297 = vunpack.c.l.b16 %v3253
    %v3298 = vunpack.c.l.b16 %v3254
    %v3299 = vunpack.c.l.b16 %v3255
    %v3300 = vunpack.c.l.b16 %v3256
    %v3301 = vunpack.c.l.b16 %v3257
    %v3302 = vunpack.c.l.b16 %v3258
    %v3303 = vunpack.c.l.b16 %v3259
    %v3304 = vunpack.c.l.b16 %v3260
    %v3305 = vunpack.c.l.b16 %v3261
    %v3306 = vunpack.c.l.b16 %v3262
    %v3307 = vunpack.c.l.b16 %v3263
    %v3308 = vunpack.c.l.b16 %v3264
    %v3309 = vunpack.c.l.b16 %v3265
    %v3310 = vunpack.c.l.b16 %v3266
    %v3311 = vunpack.c.l.b16 %v3267
    %v3312 = vpack.c.b16 %v3297, %v3296
    %v3313 = vpack.c.b16 %v3299, %v3298
    %v3314 = vpack.c.b16 %v3301, %v3300
    %v3315 = vpack.c.b16 %v3303, %v3302
    %v3316 = vpack.c.b16 %v3305, %v3304
    %v3317 = vpack.c.b16 %v3307, %v3306
    %v3318 = vpack.c.b16 %v3309, %v3308
    %v3319 = vpack.c.b16 %v3311, %v3310
    %3328 = vmatprep.subr.bf16.mxu0 0
    %3329 = vmatpush1.bf16.msra.mxu0 %v3319
    %3330 = vmatprep.subr.bf16.mxu0 0
    %3331 = vmatpush1.bf16.msra.mxu0 %v3318
    %3332 = vmatprep.subr.bf16.mxu0 0
    %3333 = vmatpush1.bf16.msra.mxu0 %v3317
    %3334 = vmatprep.subr.bf16.mxu0 0
    %3335 = vmatpush1.bf16.msra.mxu0 %v3316
    %3336 = vmatprep.subr.bf16.mxu0 0
    %3337 = vmatpush1.bf16.msra.mxu0 %v3315
    %3338 = vmatprep.subr.bf16.mxu0 0
    %3339 = vmatpush1.bf16.msra.mxu0 %v3314
    %3340 = vmatprep.subr.bf16.mxu0 0
    %3341 = vmatpush1.bf16.msra.mxu0 %v3313
    %3342 = vmatprep.subr.bf16.mxu0 0
    %3343 = vmatpush1.bf16.msra.mxu0 %v3312
    %3344 = vmatprep.subr.bf16.mxu0 0
    %3345 = vmatpush2.bf16.msra.mxu0 0
    %3346 = vmatprep.subr.bf16.mxu0 0
    %3347 = vmatpush2.bf16.msra.mxu0 0
    %3348 = vmatprep.subr.bf16.mxu0 0
    %3349 = vmatpush2.bf16.msra.mxu0 0
    %3350 = vmatprep.subr.bf16.mxu0 0
    %3351 = vmatpush2.bf16.msra.mxu0 0
    %3352 = vmatprep.subr.bf16.mxu0 0
    %3353 = vmatpush2.bf16.msra.mxu0 0
    %3354 = vmatprep.subr.bf16.mxu0 0
    %3355 = vmatpush2.bf16.msra.mxu0 0
    %3356 = vmatprep.subr.bf16.mxu0 0
    %3357 = vmatpush2.bf16.msra.mxu0 0
    %3358 = vmatprep.subr.bf16.mxu0 0
    %3359 = vmatpush2.bf16.msra.mxu0 0
    %3360 = vmatprep.mubr.bf16.mxu0 0
    %3361 = vmatmul.mubr.bf16.gmra.mxu0 %v3276
    %v3362 = vpop.f32.mrf.mxu0
    %v3363 = vadd.f32 0.0, %v3362
    %v3364 = vpop.f32.mrf.mxu0
    %v3365 = vpop.f32.mrf.mxu0
    %v3366 = vadd.f32 0.0, %v3365
    %v3367 = vpop.f32.mrf.mxu0
    %3368 = vmatprep.mubr.bf16.mxu0 0
    %3369 = vmatmul.mubr.bf16.gmra.mxu0 %v3277
    %v3370 = vpop.f32.mrf.mxu0
    %v3371 = vadd.f32 0.0, %v3370
    %v3372 = vpop.f32.mrf.mxu0
    %v3373 = vpop.f32.mrf.mxu0
    %v3374 = vadd.f32 0.0, %v3373
    %v3375 = vpop.f32.mrf.mxu0
    %3376 = vdwg.mxu0
    %3381 = vrot.lane.b32.xlu0 %v3363, 96
    %v3382 = vpop.permute.xlu0 %3381
    %3383 = vrot.lane.b32.xlu0 %v3366, 96
    %v3384 = vpop.permute.xlu0 %3383
    %3385 = vrot.lane.b32.xlu0 %v3371, 96
    %v3386 = vpop.permute.xlu0 %3385
    %3387 = vrot.lane.b32.xlu0 %v3374, 96
    %v3388 = vpop.permute.xlu0 %3387
    %v3393 = vadd.f32 %v3180, %v3382
    %v3394 = vadd.f32 %v3181, %v3384
    %v3395 = vadd.f32 %v3182, %v3386
    %v3396 = vadd.f32 %v3183, %v3388
    %v3397 = vsel %vm1887, %v3180, %v3393
    %v3398 = vsel %vm1887, %v3181, %v3394
    %v3399 = vsel %vm1887, %v3182, %v3395
    %v3400 = vsel %vm1887, %v3183, %v3396
    %v3401 = vld [vmem:[%s23] sm:$0x1]
    %v3403 = vlaneseq
    %v3404 = vshrl.u32 %v3403, 7
    %v3405 = vsub.s32 0, %v3404
    %v3406 = vrot.slane %v3401, %v3405
    %v3408 = vmul.f32 %v3397, %v3406
    %v3409 = vmul.f32 %v3398, %v3406
    %v3410 = vmul.f32 %v3399, %v3406
    %v3411 = vmul.f32 %v3400, %v3406
    %v3412 = vld [vmem:[%s25] sm:$0x1]
    %v3414 = vlaneseq
    %v3415 = vshrl.u32 %v3414, 7
    %v3416 = vsub.s32 0, %v3415
    %v3417 = vrot.slane %v3412, %v3416
    %v3419 = vadd.f32 %v3408, %v3417
    %v3420 = vadd.f32 %v3409, %v3417
    %v3421 = vadd.f32 %v3410, %v3417
    %v3422 = vadd.f32 %v3411, %v3417
    %v3423 = vmax.f32 %v3419, 0.0
    %v3424 = vmax.f32 %v3420, 0.0
    %v3425 = vmax.f32 %v3421, 0.0
    %v3426 = vmax.f32 %v3422, 0.0
    %v3427 = vpack.c.bf16 %v3424, %v3423
    %v3428 = vpack.c.bf16 %v3426, %v3425
    %v3431 = vunpack.c.l.b16 %v3427
    %v3432 = vunpack.c.h.b16 %v3427
    %v3433 = vunpack.c.l.b16 %v3428
    %v3434 = vunpack.c.h.b16 %v3428
    %v3435 = vpack.c.b16 %v3431, %v3431
    %v3436 = vpack.c.b16 %v3432, %v3432
    %v3437 = vpack.c.b16 %v3433, %v3433
    %v3438 = vpack.c.b16 %v3434, %v3434
    %3443 = vst [vmem:[#allocation3] sm:$0xf] %v3435
    %3444 = vst [vmem:[#allocation3 + $0x4] sm:$0xf] %v3436
    %3445 = vst [vmem:[#allocation3 + $0x8] sm:$0xf] %v3437
    %3446 = vst [vmem:[#allocation3 + $0xc] sm:$0xf] %v3438
    %v3447 = vld [vmem:[#allocation3] sm:$0xf]
    %v3448 = vld [vmem:[#allocation3 + $0x4] sm:$0xf]
    %v3449 = vld [vmem:[#allocation3 + $0x8] sm:$0xf]
    %v3450 = vld [vmem:[#allocation3 + $0xc] sm:$0xf]
    %v3451 = vld [vmem:[%s27] sm:$0xf]
    %v3452 = vld [vmem:[%s27 + $0x4] sm:$0xf]
    %v3453 = vld [vmem:[%s27 + $0x8] sm:$0xf]
    %v3454 = vld [vmem:[%s27 + $0xc] sm:$0xf]
    %v3455 = vld [vmem:[%s27 + $0x10] sm:$0xf]
    %v3456 = vld [vmem:[%s27 + $0x14] sm:$0xf]
    %v3457 = vld [vmem:[%s27 + $0x18] sm:$0xf]
    %v3458 = vld [vmem:[%s27 + $0x1c] sm:$0xf]
    %v3459 = vld [vmem:[%s27 + $0x20] sm:$0xf]
    %v3460 = vld [vmem:[%s27 + $0x24] sm:$0xf]
    %v3461 = vld [vmem:[%s27 + $0x28] sm:$0xf]
    %v3462 = vld [vmem:[%s27 + $0x2c] sm:$0xf]
    %v3463 = vld [vmem:[%s27 + $0x30] sm:$0xf]
    %v3464 = vld [vmem:[%s27 + $0x34] sm:$0xf]
    %v3465 = vld [vmem:[%s27 + $0x38] sm:$0xf]
    %v3466 = vld [vmem:[%s27 + $0x3c] sm:$0xf]
    %v3471 = vunpack.c.l.b16 %v3447
    %v3472 = vunpack.c.l.b16 %v3448
    %v3473 = vunpack.c.l.b16 %v3449
    %v3474 = vunpack.c.l.b16 %v3450
    %v3475 = vpack.c.b16 %v3472, %v3471
    %v3476 = vpack.c.b16 %v3474, %v3473
    %v3495 = vunpack.c.l.b16 %v3451
    %v3496 = vunpack.c.l.b16 %v3452
    %v3497 = vunpack.c.l.b16 %v3453
    %v3498 = vunpack.c.l.b16 %v3454
    %v3499 = vunpack.c.l.b16 %v3455
    %v3500 = vunpack.c.l.b16 %v3456
    %v3501 = vunpack.c.l.b16 %v3457
    %v3502 = vunpack.c.l.b16 %v3458
    %v3503 = vunpack.c.l.b16 %v3459
    %v3504 = vunpack.c.l.b16 %v3460
    %v3505 = vunpack.c.l.b16 %v3461
    %v3506 = vunpack.c.l.b16 %v3462
    %v3507 = vunpack.c.l.b16 %v3463
    %v3508 = vunpack.c.l.b16 %v3464
    %v3509 = vunpack.c.l.b16 %v3465
    %v3510 = vunpack.c.l.b16 %v3466
    %v3511 = vpack.c.b16 %v3496, %v3495
    %v3512 = vpack.c.b16 %v3498, %v3497
    %v3513 = vpack.c.b16 %v3500, %v3499
    %v3514 = vpack.c.b16 %v3502, %v3501
    %v3515 = vpack.c.b16 %v3504, %v3503
    %v3516 = vpack.c.b16 %v3506, %v3505
    %v3517 = vpack.c.b16 %v3508, %v3507
    %v3518 = vpack.c.b16 %v3510, %v3509
    %3527 = vmatprep.subr.bf16.mxu0 0
    %3528 = vmatpush1.bf16.msra.mxu0 %v3518
    %3529 = vmatprep.subr.bf16.mxu0 0
    %3530 = vmatpush1.bf16.msra.mxu0 %v3517
    %3531 = vmatprep.subr.bf16.mxu0 0
    %3532 = vmatpush1.bf16.msra.mxu0 %v3516
    %3533 = vmatprep.subr.bf16.mxu0 0
    %3534 = vmatpush1.bf16.msra.mxu0 %v3515
    %3535 = vmatprep.subr.bf16.mxu0 0
    %3536 = vmatpush1.bf16.msra.mxu0 %v3514
    %3537 = vmatprep.subr.bf16.mxu0 0
    %3538 = vmatpush1.bf16.msra.mxu0 %v3513
    %3539 = vmatprep.subr.bf16.mxu0 0
    %3540 = vmatpush1.bf16.msra.mxu0 %v3512
    %3541 = vmatprep.subr.bf16.mxu0 0
    %3542 = vmatpush1.bf16.msra.mxu0 %v3511
    %3543 = vmatprep.subr.bf16.mxu0 0
    %3544 = vmatpush2.bf16.msra.mxu0 0
    %3545 = vmatprep.subr.bf16.mxu0 0
    %3546 = vmatpush2.bf16.msra.mxu0 0
    %3547 = vmatprep.subr.bf16.mxu0 0
    %3548 = vmatpush2.bf16.msra.mxu0 0
    %3549 = vmatprep.subr.bf16.mxu0 0
    %3550 = vmatpush2.bf16.msra.mxu0 0
    %3551 = vmatprep.subr.bf16.mxu0 0
    %3552 = vmatpush2.bf16.msra.mxu0 0
    %3553 = vmatprep.subr.bf16.mxu0 0
    %3554 = vmatpush2.bf16.msra.mxu0 0
    %3555 = vmatprep.subr.bf16.mxu0 0
    %3556 = vmatpush2.bf16.msra.mxu0 0
    %3557 = vmatprep.subr.bf16.mxu0 0
    %3558 = vmatpush2.bf16.msra.mxu0 0
    %3559 = vmatprep.mubr.bf16.mxu0 0
    %3560 = vmatmul.mubr.bf16.gmra.mxu0 %v3475
    %v3561 = vpop.f32.mrf.mxu0
    %v3562 = vadd.f32 0.0, %v3561
    %v3563 = vpop.f32.mrf.mxu0
    %v3564 = vpop.f32.mrf.mxu0
    %v3565 = vadd.f32 0.0, %v3564
    %v3566 = vpop.f32.mrf.mxu0
    %3567 = vmatprep.mubr.bf16.mxu0 0
    %3568 = vmatmul.mubr.bf16.gmra.mxu0 %v3476
    %v3569 = vpop.f32.mrf.mxu0
    %v3570 = vadd.f32 0.0, %v3569
    %v3571 = vpop.f32.mrf.mxu0
    %v3572 = vpop.f32.mrf.mxu0
    %v3573 = vadd.f32 0.0, %v3572
    %v3574 = vpop.f32.mrf.mxu0
    %3575 = vdwg.mxu0
    %v3576 = vpack.c.bf16 %v3565, %v3562
    %v3577 = vpack.c.bf16 %v3573, %v3570
    %v3580 = vunpack.c.l.b16 %v3576
    %v3581 = vunpack.c.h.b16 %v3576
    %v3582 = vunpack.c.l.b16 %v3577
    %v3583 = vunpack.c.h.b16 %v3577
    %v3584 = vpack.c.b16 %v3580, %v3580
    %v3585 = vpack.c.b16 %v3581, %v3581
    %v3586 = vpack.c.b16 %v3582, %v3582
    %v3587 = vpack.c.b16 %v3583, %v3583
    %v3589 = vshll.u32 %v3584, 16
    %v3591 = vrot.slane %v3589, 5
    %v3592 = vshrl.u32 %v3584, 16
    %v3594 = vrot.slane %v3592, 4
    %v3595 = vor.u32 %v3594, %v3591
    %v3596 = vrot.slane %v3595, 4
    %v3598 = vshll.u32 %v3585, 16
    %v3600 = vrot.slane %v3598, 5
    %v3601 = vsel %vm334, %v3596, %v3600
    %v3602 = vshrl.u32 %v3585, 16
    %v3604 = vrot.slane %v3602, 4
    %v3605 = vor.u32 %v3604, %v3600
    %v3606 = vrot.slane %v3605, 4
    %v3608 = vshll.u32 %v3586, 16
    %v3610 = vrot.slane %v3608, 5
    %v3611 = vsel %vm334, %v3606, %v3610
    %v3612 = vshrl.u32 %v3586, 16
    %v3614 = vrot.slane %v3612, 4
    %v3615 = vor.u32 %v3614, %v3610
    %v3616 = vrot.slane %v3615, 4
    %v3618 = vshll.u32 %v3587, 16
    %v3620 = vrot.slane %v3618, 5
    %v3621 = vsel %vm334, %v3616, %v3620
    %v3622 = vshrl.u32 %v3587, 16
    %v3624 = vrot.slane %v3622, 4
    %v3625 = vor.u32 %v3624, %v3620
    %v3626 = vrot.slane %v3625, 4
    %v3632 = vld [vmem:[#allocation4 + $0x8] sm:$0x8]
    %v3633 = vsel %vm381, %v3591, %v3632
    %3634 = vst [vmem:[#allocation4 + $0x8] sm:$0x8] %v3633
    %3635 = vst.msk [vmem:[#allocation4 + $0x10] sm:$0xf] %vm385, %v3601
    %3636 = vst.msk [vmem:[#allocation4 + $0x18] sm:$0xf] %vm385, %v3611
    %3637 = vst.msk [vmem:[#allocation4 + $0x20] sm:$0xf] %vm385, %v3621
    %v3638 = vld [vmem:[#allocation4 + $0x28] sm:$0xf]
    %v3639 = vsel %vm390, %v3626, %v3638
    %3640 = vst [vmem:[#allocation4 + $0x28] sm:$0xf] %v3639
    %v3641 = vrot.slane %v3584, 5
    %v3642 = vrot.slane %v3641, 4
    %v3643 = vrot.slane %v3585, 5
    %v3644 = vsel %vm396, %v3642, %v3643
    %v3645 = vrot.slane %v3643, 4
    %v3646 = vrot.slane %v3586, 5
    %v3647 = vsel %vm396, %v3645, %v3646
    %v3648 = vrot.slane %v3646, 4
    %v3649 = vrot.slane %v3587, 5
    %v3650 = vsel %vm396, %v3648, %v3649
    %v3651 = vrot.slane %v3649, 4
    %3652 = vrot.lane.b32.xlu0 %v3641, 32
    %v3653 = vpop.permute.xlu0 %3652
    %3654 = vrot.lane.b32.xlu0 %v3644, 32
    %v3655 = vpop.permute.xlu0 %3654
    %3656 = vrot.lane.b32.xlu0 %v3647, 32
    %v3657 = vpop.permute.xlu0 %3656
    %3658 = vrot.lane.b32.xlu0 %v3650, 32
    %v3659 = vpop.permute.xlu0 %3658
    %3660 = vrot.lane.b32.xlu0 %v3651, 32
    %v3661 = vpop.permute.xlu0 %3660
    %3667 = vst.msk [vmem:[#allocation4 + $0x8] sm:$0x8] %vm423, %v3653
    %3668 = vst.msk [vmem:[#allocation4 + $0x10] sm:$0xf] %vm425, %v3655
    %3669 = vst.msk [vmem:[#allocation4 + $0x18] sm:$0xf] %vm425, %v3657
    %3670 = vst.msk [vmem:[#allocation4 + $0x20] sm:$0xf] %vm425, %v3659
    %3671 = vst.msk [vmem:[#allocation4 + $0x28] sm:$0x7] %vm429, %v3661
    %v3672 = vrot.slane %v3592, 5
    %v3673 = vrot.slane %v3589, 6
    %v3674 = vor.u32 %v3672, %v3673
    %v3675 = vrot.slane %v3674, 4
    %v3676 = vrot.slane %v3602, 5
    %v3677 = vrot.slane %v3598, 6
    %v3678 = vor.u32 %v3676, %v3677
    %v3679 = vsel %vm433, %v3675, %v3678
    %v3680 = vrot.slane %v3678, 4
    %v3681 = vrot.slane %v3612, 5
    %v3682 = vrot.slane %v3608, 6
    %v3683 = vor.u32 %v3681, %v3682
    %v3684 = vsel %vm433, %v3680, %v3683
    %v3685 = vrot.slane %v3683, 4
    %v3686 = vrot.slane %v3622, 5
    %v3687 = vrot.slane %v3618, 6
    %v3688 = vor.u32 %v3686, %v3687
    %v3689 = vsel %vm433, %v3685, %v3688
    %v3690 = vrot.slane %v3688, 4
    %3691 = vrot.lane.b32.xlu0 %v3674, 64
    %v3692 = vpop.permute.xlu0 %3691
    %3693 = vrot.lane.b32.xlu0 %v3679, 64
    %v3694 = vpop.permute.xlu0 %3693
    %3695 = vrot.lane.b32.xlu0 %v3684, 64
    %v3696 = vpop.permute.xlu0 %3695
    %3697 = vrot.lane.b32.xlu0 %v3689, 64
    %v3698 = vpop.permute.xlu0 %3697
    %3699 = vrot.lane.b32.xlu0 %v3690, 64
    %v3700 = vpop.permute.xlu0 %3699
    %v3706 = vld [vmem:[#allocation4 + $0x8] sm:$0xc]
    %v3707 = vsel %vm470, %v3692, %v3706
    %3708 = vst [vmem:[#allocation4 + $0x8] sm:$0xc] %v3707
    %3709 = vst.msk [vmem:[#allocation4 + $0x10] sm:$0xf] %vm474, %v3694
    %3710 = vst.msk [vmem:[#allocation4 + $0x18] sm:$0xf] %vm474, %v3696
    %3711 = vst.msk [vmem:[#allocation4 + $0x20] sm:$0xf] %vm474, %v3698
    %v3712 = vld [vmem:[#allocation4 + $0x28] sm:$0x7]
    %v3713 = vsel %vm479, %v3700, %v3712
    %3714 = vst [vmem:[#allocation4 + $0x28] sm:$0x7] %v3713
    %v3715 = vrot.slane %v3584, 6
    %v3716 = vrot.slane %v3715, 4
    %v3717 = vrot.slane %v3585, 6
    %v3718 = vsel %vm485, %v3716, %v3717
    %v3719 = vrot.slane %v3717, 4
    %v3720 = vrot.slane %v3586, 6
    %v3721 = vsel %vm485, %v3719, %v3720
    %v3722 = vrot.slane %v3720, 4
    %v3723 = vrot.slane %v3587, 6
    %v3724 = vsel %vm485, %v3722, %v3723
    %v3725 = vrot.slane %v3723, 4
    %3726 = vrot.lane.b32.xlu0 %v3715, 96
    %v3727 = vpop.permute.xlu0 %3726
    %3728 = vrot.lane.b32.xlu0 %v3718, 96
    %v3729 = vpop.permute.xlu0 %3728
    %3730 = vrot.lane.b32.xlu0 %v3721, 96
    %v3731 = vpop.permute.xlu0 %3730
    %3732 = vrot.lane.b32.xlu0 %v3724, 96
    %v3733 = vpop.permute.xlu0 %3732
    %3734 = vrot.lane.b32.xlu0 %v3725, 96
    %v3735 = vpop.permute.xlu0 %3734
    %3741 = vst.msk [vmem:[#allocation4 + $0x8] sm:$0xc] %vm512, %v3727
    %3742 = vst.msk [vmem:[#allocation4 + $0x10] sm:$0xf] %vm514, %v3729
    %3743 = vst.msk [vmem:[#allocation4 + $0x18] sm:$0xf] %vm514, %v3731
    %3744 = vst.msk [vmem:[#allocation4 + $0x20] sm:$0xf] %vm514, %v3733
    %3745 = vst.msk [vmem:[#allocation4 + $0x28] sm:$0x3] %vm518, %v3735
    %v3746 = vrot.slane %v3592, 6
    %v3747 = vrot.slane %v3589, 7
    %v3748 = vor.u32 %v3746, %v3747
    %v3749 = vrot.slane %v3748, 4
    %v3750 = vrot.slane %v3602, 6
    %v3751 = vrot.slane %v3598, 7
    %v3752 = vor.u32 %v3750, %v3751
    %v3753 = vsel %vm522, %v3749, %v3752
    %v3754 = vrot.slane %v3752, 4
    %v3755 = vrot.slane %v3612, 6
    %v3756 = vrot.slane %v3608, 7
    %v3757 = vor.u32 %v3755, %v3756
    %v3758 = vsel %vm522, %v3754, %v3757
    %v3759 = vrot.slane %v3757, 4
    %v3760 = vrot.slane %v3622, 6
    %v3761 = vrot.slane %v3618, 7
    %v3762 = vor.u32 %v3760, %v3761
    %v3763 = vsel %vm522, %v3759, %v3762
    %v3764 = vrot.slane %v3762, 4
    %v3770 = vld [vmem:[#allocation4 + $0xc] sm:$0xe]
    %v3771 = vsel %vm549, %v3748, %v3770
    %3772 = vst [vmem:[#allocation4 + $0xc] sm:$0xe] %v3771
    %3773 = vst.msk [vmem:[#allocation4 + $0x14] sm:$0xf] %vm385, %v3753
    %3774 = vst.msk [vmem:[#allocation4 + $0x1c] sm:$0xf] %vm385, %v3758
    %3775 = vst.msk [vmem:[#allocation4 + $0x24] sm:$0xf] %vm385, %v3763
    %v3776 = vld [vmem:[#allocation4 + $0x2c] sm:$0x3]
    %v3777 = vsel %vm557, %v3764, %v3776
    %3778 = vst [vmem:[#allocation4 + $0x2c] sm:$0x3] %v3777
    %v3779 = vrot.slane %v3584, 7
    %v3780 = vrot.slane %v3779, 4
    %v3781 = vrot.slane %v3585, 7
    %v3782 = vsel %vm563, %v3780, %v3781
    %v3783 = vrot.slane %v3781, 4
    %v3784 = vrot.slane %v3586, 7
    %v3785 = vsel %vm563, %v3783, %v3784
    %v3786 = vrot.slane %v3784, 4
    %v3787 = vrot.slane %v3587, 7
    %v3788 = vsel %vm563, %v3786, %v3787
    %v3789 = vrot.slane %v3787, 4
    %3790 = vrot.lane.b32.xlu0 %v3779, 32
    %v3791 = vpop.permute.xlu0 %3790
    %3792 = vrot.lane.b32.xlu0 %v3782, 32
    %v3793 = vpop.permute.xlu0 %3792
    %3794 = vrot.lane.b32.xlu0 %v3785, 32
    %v3795 = vpop.permute.xlu0 %3794
    %3796 = vrot.lane.b32.xlu0 %v3788, 32
    %v3797 = vpop.permute.xlu0 %3796
    %3798 = vrot.lane.b32.xlu0 %v3789, 32
    %v3799 = vpop.permute.xlu0 %3798
    %3805 = vst.msk [vmem:[#allocation4 + $0xc] sm:$0xe] %vm590, %v3791
    %3806 = vst.msk [vmem:[#allocation4 + $0x14] sm:$0xf] %vm425, %v3793
    %3807 = vst.msk [vmem:[#allocation4 + $0x1c] sm:$0xf] %vm425, %v3795
    %3808 = vst.msk [vmem:[#allocation4 + $0x24] sm:$0xf] %vm425, %v3797
    %3809 = vst.msk [vmem:[#allocation4 + $0x2c] sm:$0x1] %vm595, %v3799
    %v3810 = vrot.slane %v3592, 7
    %v3811 = vor.u32 %v3810, %v3589
    %v3812 = vrot.slane %v3810, 4
    %v3813 = vrot.slane %v3602, 7
    %v3814 = vor.u32 %v3813, %v3598
    %v3815 = vsel %vm599, %v3812, %v3814
    %v3816 = vrot.slane %v3813, 4
    %v3817 = vrot.slane %v3612, 7
    %v3818 = vor.u32 %v3817, %v3608
    %v3819 = vsel %vm599, %v3816, %v3818
    %v3820 = vrot.slane %v3817, 4
    %v3821 = vrot.slane %v3622, 7
    %v3822 = vor.u32 %v3821, %v3618
    %v3823 = vsel %vm599, %v3820, %v3822
    %v3824 = vrot.slane %v3821, 4
    %3825 = vrot.lane.b32.xlu0 %v3811, 64
    %v3826 = vpop.permute.xlu0 %3825
    %3827 = vrot.lane.b32.xlu0 %v3815, 64
    %v3828 = vpop.permute.xlu0 %3827
    %3829 = vrot.lane.b32.xlu0 %v3819, 64
    %v3830 = vpop.permute.xlu0 %3829
    %3831 = vrot.lane.b32.xlu0 %v3823, 64
    %v3832 = vpop.permute.xlu0 %3831
    %3833 = vrot.lane.b32.xlu0 %v3824, 64
    %v3834 = vpop.permute.xlu0 %3833
    %v3840 = vld [vmem:[#allocation4 + $0xc] sm:$0xf]
    %v3841 = vsel %vm632, %v3826, %v3840
    %3842 = vst [vmem:[#allocation4 + $0xc] sm:$0xf] %v3841
    %3843 = vst.msk [vmem:[#allocation4 + $0x14] sm:$0xf] %vm474, %v3828
    %3844 = vst.msk [vmem:[#allocation4 + $0x1c] sm:$0xf] %vm474, %v3830
    %3845 = vst.msk [vmem:[#allocation4 + $0x24] sm:$0xf] %vm474, %v3832
    %v3846 = vld [vmem:[#allocation4 + $0x2c] sm:$0x1]
    %v3847 = vsel %vm640, %v3834, %v3846
    %3848 = vst [vmem:[#allocation4 + $0x2c] sm:$0x1] %v3847
    %3849 = vrot.lane.b32.xlu0 %v3584, 96
    %v3850 = vpop.permute.xlu0 %3849
    %3851 = vrot.lane.b32.xlu0 %v3585, 96
    %v3852 = vpop.permute.xlu0 %3851
    %3853 = vrot.lane.b32.xlu0 %v3586, 96
    %v3854 = vpop.permute.xlu0 %3853
    %3855 = vrot.lane.b32.xlu0 %v3587, 96
    %v3856 = vpop.permute.xlu0 %3855
    %3861 = vst.msk [vmem:[#allocation4 + $0xc] sm:$0xf] %vm514, %v3850
    %3862 = vst.msk [vmem:[#allocation4 + $0x14] sm:$0xf] %vm514, %v3852
    %3863 = vst.msk [vmem:[#allocation4 + $0x1c] sm:$0xf] %vm514, %v3854
    %3864 = vst.msk [vmem:[#allocation4 + $0x24] sm:$0xf] %vm514, %v3856
    %v3865 = vld [vmem:[#allocation4] sm:$0xff]
    %v3866 = vld [vmem:[#allocation4 + $0x8] sm:$0xff]
    %v3867 = vld [vmem:[#allocation4 + $0x10] sm:$0xff]
    %v3868 = vld [vmem:[#allocation4 + $0x18] sm:$0xff]
    %v3869 = vsel %vm717, %v3865, 0
    %v3870 = vsel %vm718, %v3866, 0
    %v3871 = vsel %vm719, %v3867, 0
    %v3872 = vsel %vm720, %v3868, 0
    %v3873 = vld [vmem:[#allocation8] sm:$0xf]
    %v3874 = vld [vmem:[#allocation8 + $0x4] sm:$0xf]
    %v3875 = vld [vmem:[#allocation8 + $0x8] sm:$0xf]
    %v3876 = vld [vmem:[#allocation8 + $0xc] sm:$0xf]
    %v3877 = vld [vmem:[#allocation8 + $0x10] sm:$0xf]
    %v3878 = vld [vmem:[#allocation8 + $0x14] sm:$0xf]
    %v3879 = vld [vmem:[#allocation8 + $0x18] sm:$0xf]
    %v3880 = vld [vmem:[#allocation8 + $0x1c] sm:$0xf]
    %v3881 = vld [vmem:[#allocation8 + $0x20] sm:$0xf]
    %v3882 = vld [vmem:[#allocation8 + $0x24] sm:$0xf]
    %v3883 = vld [vmem:[#allocation8 + $0x28] sm:$0xf]
    %v3884 = vld [vmem:[#allocation8 + $0x2c] sm:$0xf]
    %v3885 = vld [vmem:[#allocation8 + $0x30] sm:$0xf]
    %v3886 = vld [vmem:[#allocation8 + $0x34] sm:$0xf]
    %v3887 = vld [vmem:[#allocation8 + $0x38] sm:$0xf]
    %v3888 = vld [vmem:[#allocation8 + $0x3c] sm:$0xf]
    %v3889 = vld [vmem:[#allocation8 + $0x40] sm:$0xf]
    %v3890 = vld [vmem:[#allocation8 + $0x44] sm:$0xf]
    %v3891 = vld [vmem:[#allocation8 + $0x48] sm:$0xf]
    %v3892 = vld [vmem:[#allocation8 + $0x4c] sm:$0xf]
    %v3893 = vld [vmem:[#allocation8 + $0x50] sm:$0xf]
    %v3894 = vld [vmem:[#allocation8 + $0x54] sm:$0xf]
    %v3895 = vld [vmem:[#allocation8 + $0x58] sm:$0xf]
    %v3896 = vld [vmem:[#allocation8 + $0x5c] sm:$0xf]
    %v3897 = vld [vmem:[#allocation8 + $0x60] sm:$0xf]
    %v3898 = vld [vmem:[#allocation8 + $0x64] sm:$0xf]
    %v3899 = vld [vmem:[#allocation8 + $0x68] sm:$0xf]
    %v3900 = vld [vmem:[#allocation8 + $0x6c] sm:$0xf]
    %v3901 = vld [vmem:[#allocation8 + $0x70] sm:$0xf]
    %v3902 = vld [vmem:[#allocation8 + $0x74] sm:$0xf]
    %v3903 = vld [vmem:[#allocation8 + $0x78] sm:$0xf]
    %v3904 = vld [vmem:[#allocation8 + $0x7c] sm:$0xf]
    %v3905 = vld [vmem:[#allocation4 + $0x20] sm:$0xff]
    %v3906 = vsel %vm799, %v3866, 0
    %v3907 = vsel %vm800, %v3867, 0
    %v3908 = vsel %vm801, %v3868, 0
    %v3909 = vsel %vm802, %v3905, 0
    %s3910 = scalar_lea.vmem [#allocation8], 128
    %v3911 = vld [vmem:[%s3910] sm:$0xf]
    %v3912 = vld [vmem:[%s3910 + $0x4] sm:$0xf]
    %v3913 = vld [vmem:[%s3910 + $0x8] sm:$0xf]
    %v3914 = vld [vmem:[%s3910 + $0xc] sm:$0xf]
    %v3915 = vld [vmem:[%s3910 + $0x10] sm:$0xf]
    %v3916 = vld [vmem:[%s3910 + $0x14] sm:$0xf]
    %v3917 = vld [vmem:[%s3910 + $0x18] sm:$0xf]
    %v3918 = vld [vmem:[%s3910 + $0x1c] sm:$0xf]
    %v3919 = vld [vmem:[%s3910 + $0x20] sm:$0xf]
    %v3920 = vld [vmem:[%s3910 + $0x24] sm:$0xf]
    %v3921 = vld [vmem:[%s3910 + $0x28] sm:$0xf]
    %v3922 = vld [vmem:[%s3910 + $0x2c] sm:$0xf]
    %v3923 = vld [vmem:[%s3910 + $0x30] sm:$0xf]
    %v3924 = vld [vmem:[%s3910 + $0x34] sm:$0xf]
    %v3925 = vld [vmem:[%s3910 + $0x38] sm:$0xf]
    %v3926 = vld [vmem:[%s3910 + $0x3c] sm:$0xf]
    %v3927 = vld [vmem:[%s3910 + $0x40] sm:$0xf]
    %v3928 = vld [vmem:[%s3910 + $0x44] sm:$0xf]
    %v3929 = vld [vmem:[%s3910 + $0x48] sm:$0xf]
    %v3930 = vld [vmem:[%s3910 + $0x4c] sm:$0xf]
    %v3931 = vld [vmem:[%s3910 + $0x50] sm:$0xf]
    %v3932 = vld [vmem:[%s3910 + $0x54] sm:$0xf]
    %v3933 = vld [vmem:[%s3910 + $0x58] sm:$0xf]
    %v3934 = vld [vmem:[%s3910 + $0x5c] sm:$0xf]
    %v3935 = vld [vmem:[%s3910 + $0x60] sm:$0xf]
    %v3936 = vld [vmem:[%s3910 + $0x64] sm:$0xf]
    %v3937 = vld [vmem:[%s3910 + $0x68] sm:$0xf]
    %v3938 = vld [vmem:[%s3910 + $0x6c] sm:$0xf]
    %v3939 = vld [vmem:[%s3910 + $0x70] sm:$0xf]
    %v3940 = vld [vmem:[%s3910 + $0x74] sm:$0xf]
    %v3941 = vld [vmem:[%s3910 + $0x78] sm:$0xf]
    %v3942 = vld [vmem:[%s3910 + $0x7c] sm:$0xf]
    %v3947 = vunpack.c.l.b16 %v3906
    %v3948 = vunpack.c.h.b16 %v3906
    %v3949 = vunpack.c.l.b16 %v3907
    %v3950 = vunpack.c.h.b16 %v3907
    %v3951 = vunpack.c.l.b16 %v3908
    %v3952 = vunpack.c.h.b16 %v3908
    %v3953 = vunpack.c.l.b16 %v3909
    %v3954 = vunpack.c.h.b16 %v3909
    %v3955 = vpack.c.b16 %v3949, %v3947
    %v3956 = vpack.c.b16 %v3950, %v3948
    %v3957 = vpack.c.b16 %v3953, %v3951
    %v3958 = vpack.c.b16 %v3954, %v3952
    %v3995 = vunpack.c.l.b16 %v3911
    %v3996 = vunpack.c.l.b16 %v3912
    %v3997 = vunpack.c.l.b16 %v3913
    %v3998 = vunpack.c.l.b16 %v3914
    %v3999 = vunpack.c.l.b16 %v3915
    %v4000 = vunpack.c.l.b16 %v3916
    %v4001 = vunpack.c.l.b16 %v3917
    %v4002 = vunpack.c.l.b16 %v3918
    %v4003 = vunpack.c.l.b16 %v3919
    %v4004 = vunpack.c.l.b16 %v3920
    %v4005 = vunpack.c.l.b16 %v3921
    %v4006 = vunpack.c.l.b16 %v3922
    %v4007 = vunpack.c.l.b16 %v3923
    %v4008 = vunpack.c.l.b16 %v3924
    %v4009 = vunpack.c.l.b16 %v3925
    %v4010 = vunpack.c.l.b16 %v3926
    %v4011 = vunpack.c.l.b16 %v3927
    %v4012 = vunpack.c.l.b16 %v3928
    %v4013 = vunpack.c.l.b16 %v3929
    %v4014 = vunpack.c.l.b16 %v3930
    %v4015 = vunpack.c.l.b16 %v3931
    %v4016 = vunpack.c.l.b16 %v3932
    %v4017 = vunpack.c.l.b16 %v3933
    %v4018 = vunpack.c.l.b16 %v3934
    %v4019 = vunpack.c.l.b16 %v3935
    %v4020 = vunpack.c.l.b16 %v3936
    %v4021 = vunpack.c.l.b16 %v3937
    %v4022 = vunpack.c.l.b16 %v3938
    %v4023 = vunpack.c.l.b16 %v3939
    %v4024 = vunpack.c.l.b16 %v3940
    %v4025 = vunpack.c.l.b16 %v3941
    %v4026 = vunpack.c.l.b16 %v3942
    %v4027 = vpack.c.b16 %v3996, %v3995
    %v4028 = vpack.c.b16 %v3998, %v3997
    %v4029 = vpack.c.b16 %v4000, %v3999
    %v4030 = vpack.c.b16 %v4002, %v4001
    %v4031 = vpack.c.b16 %v4004, %v4003
    %v4032 = vpack.c.b16 %v4006, %v4005
    %v4033 = vpack.c.b16 %v4008, %v4007
    %v4034 = vpack.c.b16 %v4010, %v4009
    %v4035 = vpack.c.b16 %v4012, %v4011
    %v4036 = vpack.c.b16 %v4014, %v4013
    %v4037 = vpack.c.b16 %v4016, %v4015
    %v4038 = vpack.c.b16 %v4018, %v4017
    %v4039 = vpack.c.b16 %v4020, %v4019
    %v4040 = vpack.c.b16 %v4022, %v4021
    %v4041 = vpack.c.b16 %v4024, %v4023
    %v4042 = vpack.c.b16 %v4026, %v4025
    %4059 = vmatprep.subr.bf16.mxu0 0
    %4060 = vmatpush1.bf16.msra.mxu0 %v4034
    %4061 = vmatprep.subr.bf16.mxu0 0
    %4062 = vmatpush1.bf16.msra.mxu0 %v4033
    %4063 = vmatprep.subr.bf16.mxu0 0
    %4064 = vmatpush1.bf16.msra.mxu0 %v4032
    %4065 = vmatprep.subr.bf16.mxu0 0
    %4066 = vmatpush1.bf16.msra.mxu0 %v4031
    %4067 = vmatprep.subr.bf16.mxu0 0
    %4068 = vmatpush1.bf16.msra.mxu0 %v4030
    %4069 = vmatprep.subr.bf16.mxu0 0
    %4070 = vmatpush1.bf16.msra.mxu0 %v4029
    %4071 = vmatprep.subr.bf16.mxu0 0
    %4072 = vmatpush1.bf16.msra.mxu0 %v4028
    %4073 = vmatprep.subr.bf16.mxu0 0
    %4074 = vmatpush1.bf16.msra.mxu0 %v4027
    %4075 = vmatprep.subr.bf16.mxu0 0
    %4076 = vmatpush2.bf16.msra.mxu0 %v4042
    %4077 = vmatprep.subr.bf16.mxu0 0
    %4078 = vmatpush2.bf16.msra.mxu0 %v4041
    %4079 = vmatprep.subr.bf16.mxu0 0
    %4080 = vmatpush2.bf16.msra.mxu0 %v4040
    %4081 = vmatprep.subr.bf16.mxu0 0
    %4082 = vmatpush2.bf16.msra.mxu0 %v4039
    %4083 = vmatprep.subr.bf16.mxu0 0
    %4084 = vmatpush2.bf16.msra.mxu0 %v4038
    %4085 = vmatprep.subr.bf16.mxu0 0
    %4086 = vmatpush2.bf16.msra.mxu0 %v4037
    %4087 = vmatprep.subr.bf16.mxu0 0
    %4088 = vmatpush2.bf16.msra.mxu0 %v4036
    %4089 = vmatprep.subr.bf16.mxu0 0
    %4090 = vmatpush2.bf16.msra.mxu0 %v4035
    %4091 = vmatprep.mubr.bf16.mxu0 %v3956
    %4092 = vmatmul.mubr.bf16.gmra.mxu0 %v3955
    %v4093 = vpop.f32.mrf.mxu0
    %v4094 = vadd.f32 0.0, %v4093
    %v4095 = vpop.f32.mrf.mxu0
    %v4096 = vpop.f32.mrf.mxu0
    %v4097 = vadd.f32 0.0, %v4096
    %v4098 = vpop.f32.mrf.mxu0
    %4099 = vmatprep.mubr.bf16.mxu0 %v3958
    %4100 = vmatmul.mubr.bf16.gmra.mxu0 %v3957
    %v4101 = vpop.f32.mrf.mxu0
    %v4102 = vadd.f32 0.0, %v4101
    %v4103 = vpop.f32.mrf.mxu0
    %v4104 = vpop.f32.mrf.mxu0
    %v4105 = vadd.f32 0.0, %v4104
    %v4106 = vpop.f32.mrf.mxu0
    %4107 = vdwg.mxu0
    %v4112 = vunpack.c.l.b16 %v3869
    %v4113 = vunpack.c.h.b16 %v3869
    %v4114 = vunpack.c.l.b16 %v3870
    %v4115 = vunpack.c.h.b16 %v3870
    %v4116 = vunpack.c.l.b16 %v3871
    %v4117 = vunpack.c.h.b16 %v3871
    %v4118 = vunpack.c.l.b16 %v3872
    %v4119 = vunpack.c.h.b16 %v3872
    %v4120 = vpack.c.b16 %v4114, %v4112
    %v4121 = vpack.c.b16 %v4115, %v4113
    %v4122 = vpack.c.b16 %v4118, %v4116
    %v4123 = vpack.c.b16 %v4119, %v4117
    %v4160 = vunpack.c.l.b16 %v3873
    %v4161 = vunpack.c.l.b16 %v3874
    %v4162 = vunpack.c.l.b16 %v3875
    %v4163 = vunpack.c.l.b16 %v3876
    %v4164 = vunpack.c.l.b16 %v3877
    %v4165 = vunpack.c.l.b16 %v3878
    %v4166 = vunpack.c.l.b16 %v3879
    %v4167 = vunpack.c.l.b16 %v3880
    %v4168 = vunpack.c.l.b16 %v3881
    %v4169 = vunpack.c.l.b16 %v3882
    %v4170 = vunpack.c.l.b16 %v3883
    %v4171 = vunpack.c.l.b16 %v3884
    %v4172 = vunpack.c.l.b16 %v3885
    %v4173 = vunpack.c.l.b16 %v3886
    %v4174 = vunpack.c.l.b16 %v3887
    %v4175 = vunpack.c.l.b16 %v3888
    %v4176 = vunpack.c.l.b16 %v3889
    %v4177 = vunpack.c.l.b16 %v3890
    %v4178 = vunpack.c.l.b16 %v3891
    %v4179 = vunpack.c.l.b16 %v3892
    %v4180 = vunpack.c.l.b16 %v3893
    %v4181 = vunpack.c.l.b16 %v3894
    %v4182 = vunpack.c.l.b16 %v3895
    %v4183 = vunpack.c.l.b16 %v3896
    %v4184 = vunpack.c.l.b16 %v3897
    %v4185 = vunpack.c.l.b16 %v3898
    %v4186 = vunpack.c.l.b16 %v3899
    %v4187 = vunpack.c.l.b16 %v3900
    %v4188 = vunpack.c.l.b16 %v3901
    %v4189 = vunpack.c.l.b16 %v3902
    %v4190 = vunpack.c.l.b16 %v3903
    %v4191 = vunpack.c.l.b16 %v3904
    %v4192 = vpack.c.b16 %v4161, %v4160
    %v4193 = vpack.c.b16 %v4163, %v4162
    %v4194 = vpack.c.b16 %v4165, %v4164
    %v4195 = vpack.c.b16 %v4167, %v4166
    %v4196 = vpack.c.b16 %v4169, %v4168
    %v4197 = vpack.c.b16 %v4171, %v4170
    %v4198 = vpack.c.b16 %v4173, %v4172
    %v4199 = vpack.c.b16 %v4175, %v4174
    %v4200 = vpack.c.b16 %v4177, %v4176
    %v4201 = vpack.c.b16 %v4179, %v4178
    %v4202 = vpack.c.b16 %v4181, %v4180
    %v4203 = vpack.c.b16 %v4183, %v4182
    %v4204 = vpack.c.b16 %v4185, %v4184
    %v4205 = vpack.c.b16 %v4187, %v4186
    %v4206 = vpack.c.b16 %v4189, %v4188
    %v4207 = vpack.c.b16 %v4191, %v4190
    %4224 = vmatprep.subr.bf16.mxu0 0
    %4225 = vmatpush1.bf16.msra.mxu0 %v4199
    %4226 = vmatprep.subr.bf16.mxu0 0
    %4227 = vmatpush1.bf16.msra.mxu0 %v4198
    %4228 = vmatprep.subr.bf16.mxu0 0
    %4229 = vmatpush1.bf16.msra.mxu0 %v4197
    %4230 = vmatprep.subr.bf16.mxu0 0
    %4231 = vmatpush1.bf16.msra.mxu0 %v4196
    %4232 = vmatprep.subr.bf16.mxu0 0
    %4233 = vmatpush1.bf16.msra.mxu0 %v4195
    %4234 = vmatprep.subr.bf16.mxu0 0
    %4235 = vmatpush1.bf16.msra.mxu0 %v4194
    %4236 = vmatprep.subr.bf16.mxu0 0
    %4237 = vmatpush1.bf16.msra.mxu0 %v4193
    %4238 = vmatprep.subr.bf16.mxu0 0
    %4239 = vmatpush1.bf16.msra.mxu0 %v4192
    %4240 = vmatprep.subr.bf16.mxu0 0
    %4241 = vmatpush2.bf16.msra.mxu0 %v4207
    %4242 = vmatprep.subr.bf16.mxu0 0
    %4243 = vmatpush2.bf16.msra.mxu0 %v4206
    %4244 = vmatprep.subr.bf16.mxu0 0
    %4245 = vmatpush2.bf16.msra.mxu0 %v4205
    %4246 = vmatprep.subr.bf16.mxu0 0
    %4247 = vmatpush2.bf16.msra.mxu0 %v4204
    %4248 = vmatprep.subr.bf16.mxu0 0
    %4249 = vmatpush2.bf16.msra.mxu0 %v4203
    %4250 = vmatprep.subr.bf16.mxu0 0
    %4251 = vmatpush2.bf16.msra.mxu0 %v4202
    %4252 = vmatprep.subr.bf16.mxu0 0
    %4253 = vmatpush2.bf16.msra.mxu0 %v4201
    %4254 = vmatprep.subr.bf16.mxu0 0
    %4255 = vmatpush2.bf16.msra.mxu0 %v4200
    %4256 = vmatprep.mubr.bf16.mxu0 %v4121
    %4257 = vmatmul.mubr.bf16.gmra.mxu0 %v4120
    %v4258 = vpop.f32.mrf.mxu0
    %v4259 = vadd.f32 %v4094, %v4258
    %v4260 = vpop.f32.mrf.mxu0
    %v4261 = vpop.f32.mrf.mxu0
    %v4262 = vadd.f32 %v4097, %v4261
    %v4263 = vpop.f32.mrf.mxu0
    %4264 = vmatprep.mubr.bf16.mxu0 %v4123
    %4265 = vmatmul.mubr.bf16.gmra.mxu0 %v4122
    %v4266 = vpop.f32.mrf.mxu0
    %v4267 = vadd.f32 %v4102, %v4266
    %v4268 = vpop.f32.mrf.mxu0
    %v4269 = vpop.f32.mrf.mxu0
    %v4270 = vadd.f32 %v4105, %v4269
    %v4271 = vpop.f32.mrf.mxu0
    %4272 = vdwg.mxu0
    %v4273 = vld [vmem:[#allocation4 + $0x10] sm:$0xff]
    %v4274 = vld [vmem:[#allocation4 + $0x18] sm:$0xff]
    %v4275 = vld [vmem:[#allocation4 + $0x20] sm:$0xff]
    %v4276 = vld [vmem:[#allocation4 + $0x28] sm:$0xff]
    %v4277 = vsel %vm1215, %v4273, 0
    %v4278 = vsel %vm1216, %v4274, 0
    %v4279 = vsel %vm1217, %v4275, 0
    %v4280 = vsel %vm1218, %v4276, 0
    %s4281 = scalar_lea.vmem [#allocation8], 256
    %v4282 = vld [vmem:[%s4281] sm:$0xf]
    %v4283 = vld [vmem:[%s4281 + $0x4] sm:$0xf]
    %v4284 = vld [vmem:[%s4281 + $0x8] sm:$0xf]
    %v4285 = vld [vmem:[%s4281 + $0xc] sm:$0xf]
    %v4286 = vld [vmem:[%s4281 + $0x10] sm:$0xf]
    %v4287 = vld [vmem:[%s4281 + $0x14] sm:$0xf]
    %v4288 = vld [vmem:[%s4281 + $0x18] sm:$0xf]
    %v4289 = vld [vmem:[%s4281 + $0x1c] sm:$0xf]
    %v4290 = vld [vmem:[%s4281 + $0x20] sm:$0xf]
    %v4291 = vld [vmem:[%s4281 + $0x24] sm:$0xf]
    %v4292 = vld [vmem:[%s4281 + $0x28] sm:$0xf]
    %v4293 = vld [vmem:[%s4281 + $0x2c] sm:$0xf]
    %v4294 = vld [vmem:[%s4281 + $0x30] sm:$0xf]
    %v4295 = vld [vmem:[%s4281 + $0x34] sm:$0xf]
    %v4296 = vld [vmem:[%s4281 + $0x38] sm:$0xf]
    %v4297 = vld [vmem:[%s4281 + $0x3c] sm:$0xf]
    %v4298 = vld [vmem:[%s4281 + $0x40] sm:$0xf]
    %v4299 = vld [vmem:[%s4281 + $0x44] sm:$0xf]
    %v4300 = vld [vmem:[%s4281 + $0x48] sm:$0xf]
    %v4301 = vld [vmem:[%s4281 + $0x4c] sm:$0xf]
    %v4302 = vld [vmem:[%s4281 + $0x50] sm:$0xf]
    %v4303 = vld [vmem:[%s4281 + $0x54] sm:$0xf]
    %v4304 = vld [vmem:[%s4281 + $0x58] sm:$0xf]
    %v4305 = vld [vmem:[%s4281 + $0x5c] sm:$0xf]
    %v4306 = vld [vmem:[%s4281 + $0x60] sm:$0xf]
    %v4307 = vld [vmem:[%s4281 + $0x64] sm:$0xf]
    %v4308 = vld [vmem:[%s4281 + $0x68] sm:$0xf]
    %v4309 = vld [vmem:[%s4281 + $0x6c] sm:$0xf]
    %v4310 = vld [vmem:[%s4281 + $0x70] sm:$0xf]
    %v4311 = vld [vmem:[%s4281 + $0x74] sm:$0xf]
    %v4312 = vld [vmem:[%s4281 + $0x78] sm:$0xf]
    %v4313 = vld [vmem:[%s4281 + $0x7c] sm:$0xf]
    %v4318 = vunpack.c.l.b16 %v4277
    %v4319 = vunpack.c.h.b16 %v4277
    %v4320 = vunpack.c.l.b16 %v4278
    %v4321 = vunpack.c.h.b16 %v4278
    %v4322 = vunpack.c.l.b16 %v4279
    %v4323 = vunpack.c.h.b16 %v4279
    %v4324 = vunpack.c.l.b16 %v4280
    %v4325 = vunpack.c.h.b16 %v4280
    %v4326 = vpack.c.b16 %v4320, %v4318
    %v4327 = vpack.c.b16 %v4321, %v4319
    %v4328 = vpack.c.b16 %v4324, %v4322
    %v4329 = vpack.c.b16 %v4325, %v4323
    %v4366 = vunpack.c.l.b16 %v4282
    %v4367 = vunpack.c.l.b16 %v4283
    %v4368 = vunpack.c.l.b16 %v4284
    %v4369 = vunpack.c.l.b16 %v4285
    %v4370 = vunpack.c.l.b16 %v4286
    %v4371 = vunpack.c.l.b16 %v4287
    %v4372 = vunpack.c.l.b16 %v4288
    %v4373 = vunpack.c.l.b16 %v4289
    %v4374 = vunpack.c.l.b16 %v4290
    %v4375 = vunpack.c.l.b16 %v4291
    %v4376 = vunpack.c.l.b16 %v4292
    %v4377 = vunpack.c.l.b16 %v4293
    %v4378 = vunpack.c.l.b16 %v4294
    %v4379 = vunpack.c.l.b16 %v4295
    %v4380 = vunpack.c.l.b16 %v4296
    %v4381 = vunpack.c.l.b16 %v4297
    %v4382 = vunpack.c.l.b16 %v4298
    %v4383 = vunpack.c.l.b16 %v4299
    %v4384 = vunpack.c.l.b16 %v4300
    %v4385 = vunpack.c.l.b16 %v4301
    %v4386 = vunpack.c.l.b16 %v4302
    %v4387 = vunpack.c.l.b16 %v4303
    %v4388 = vunpack.c.l.b16 %v4304
    %v4389 = vunpack.c.l.b16 %v4305
    %v4390 = vunpack.c.l.b16 %v4306
    %v4391 = vunpack.c.l.b16 %v4307
    %v4392 = vunpack.c.l.b16 %v4308
    %v4393 = vunpack.c.l.b16 %v4309
    %v4394 = vunpack.c.l.b16 %v4310
    %v4395 = vunpack.c.l.b16 %v4311
    %v4396 = vunpack.c.l.b16 %v4312
    %v4397 = vunpack.c.l.b16 %v4313
    %v4398 = vpack.c.b16 %v4367, %v4366
    %v4399 = vpack.c.b16 %v4369, %v4368
    %v4400 = vpack.c.b16 %v4371, %v4370
    %v4401 = vpack.c.b16 %v4373, %v4372
    %v4402 = vpack.c.b16 %v4375, %v4374
    %v4403 = vpack.c.b16 %v4377, %v4376
    %v4404 = vpack.c.b16 %v4379, %v4378
    %v4405 = vpack.c.b16 %v4381, %v4380
    %v4406 = vpack.c.b16 %v4383, %v4382
    %v4407 = vpack.c.b16 %v4385, %v4384
    %v4408 = vpack.c.b16 %v4387, %v4386
    %v4409 = vpack.c.b16 %v4389, %v4388
    %v4410 = vpack.c.b16 %v4391, %v4390
    %v4411 = vpack.c.b16 %v4393, %v4392
    %v4412 = vpack.c.b16 %v4395, %v4394
    %v4413 = vpack.c.b16 %v4397, %v4396
    %4430 = vmatprep.subr.bf16.mxu0 0
    %4431 = vmatpush1.bf16.msra.mxu0 %v4405
    %4432 = vmatprep.subr.bf16.mxu0 0
    %4433 = vmatpush1.bf16.msra.mxu0 %v4404
    %4434 = vmatprep.subr.bf16.mxu0 0
    %4435 = vmatpush1.bf16.msra.mxu0 %v4403
    %4436 = vmatprep.subr.bf16.mxu0 0
    %4437 = vmatpush1.bf16.msra.mxu0 %v4402
    %4438 = vmatprep.subr.bf16.mxu0 0
    %4439 = vmatpush1.bf16.msra.mxu0 %v4401
    %4440 = vmatprep.subr.bf16.mxu0 0
    %4441 = vmatpush1.bf16.msra.mxu0 %v4400
    %4442 = vmatprep.subr.bf16.mxu0 0
    %4443 = vmatpush1.bf16.msra.mxu0 %v4399
    %4444 = vmatprep.subr.bf16.mxu0 0
    %4445 = vmatpush1.bf16.msra.mxu0 %v4398
    %4446 = vmatprep.subr.bf16.mxu0 0
    %4447 = vmatpush2.bf16.msra.mxu0 %v4413
    %4448 = vmatprep.subr.bf16.mxu0 0
    %4449 = vmatpush2.bf16.msra.mxu0 %v4412
    %4450 = vmatprep.subr.bf16.mxu0 0
    %4451 = vmatpush2.bf16.msra.mxu0 %v4411
    %4452 = vmatprep.subr.bf16.mxu0 0
    %4453 = vmatpush2.bf16.msra.mxu0 %v4410
    %4454 = vmatprep.subr.bf16.mxu0 0
    %4455 = vmatpush2.bf16.msra.mxu0 %v4409
    %4456 = vmatprep.subr.bf16.mxu0 0
    %4457 = vmatpush2.bf16.msra.mxu0 %v4408
    %4458 = vmatprep.subr.bf16.mxu0 0
    %4459 = vmatpush2.bf16.msra.mxu0 %v4407
    %4460 = vmatprep.subr.bf16.mxu0 0
    %4461 = vmatpush2.bf16.msra.mxu0 %v4406
    %4462 = vmatprep.mubr.bf16.mxu0 %v4327
    %4463 = vmatmul.mubr.bf16.gmra.mxu0 %v4326
    %v4464 = vpop.f32.mrf.mxu0
    %v4465 = vadd.f32 0.0, %v4464
    %v4466 = vpop.f32.mrf.mxu0
    %v4467 = vpop.f32.mrf.mxu0
    %v4468 = vadd.f32 0.0, %v4467
    %v4469 = vpop.f32.mrf.mxu0
    %4470 = vmatprep.mubr.bf16.mxu0 %v4329
    %4471 = vmatmul.mubr.bf16.gmra.mxu0 %v4328
    %v4472 = vpop.f32.mrf.mxu0
    %v4473 = vadd.f32 0.0, %v4472
    %v4474 = vpop.f32.mrf.mxu0
    %v4475 = vpop.f32.mrf.mxu0
    %v4476 = vadd.f32 0.0, %v4475
    %v4477 = vpop.f32.mrf.mxu0
    %4478 = vdwg.mxu0
    %v4479 = vadd.f32 %v4259, %v4465
    %v4480 = vadd.f32 %v4262, %v4468
    %v4481 = vadd.f32 %v4267, %v4473
    %v4482 = vadd.f32 %v4270, %v4476
    %v4483 = vld [vmem:[#allocation4 + $0x18] sm:$0xff]
    %v4484 = vld [vmem:[#allocation4 + $0x20] sm:$0xff]
    %v4485 = vld [vmem:[#allocation4 + $0x28] sm:$0xff]
    %v4486 = vld [vmem:[#allocation4 + $0x30] sm:$0xff]
    %v4487 = vsel %vm1470, %v4483, 0
    %v4488 = vsel %vm1471, %v4484, 0
    %v4489 = vsel %vm1472, %v4485, 0
    %v4490 = vsel %vm1473, %v4486, 0
    %s4491 = scalar_lea.vmem [#allocation8], 384
    %v4492 = vld [vmem:[%s4491] sm:$0xf]
    %v4493 = vld [vmem:[%s4491 + $0x4] sm:$0xf]
    %v4494 = vld [vmem:[%s4491 + $0x8] sm:$0xf]
    %v4495 = vld [vmem:[%s4491 + $0xc] sm:$0xf]
    %v4496 = vld [vmem:[%s4491 + $0x10] sm:$0xf]
    %v4497 = vld [vmem:[%s4491 + $0x14] sm:$0xf]
    %v4498 = vld [vmem:[%s4491 + $0x18] sm:$0xf]
    %v4499 = vld [vmem:[%s4491 + $0x1c] sm:$0xf]
    %v4500 = vld [vmem:[%s4491 + $0x20] sm:$0xf]
    %v4501 = vld [vmem:[%s4491 + $0x24] sm:$0xf]
    %v4502 = vld [vmem:[%s4491 + $0x28] sm:$0xf]
    %v4503 = vld [vmem:[%s4491 + $0x2c] sm:$0xf]
    %v4504 = vld [vmem:[%s4491 + $0x30] sm:$0xf]
    %v4505 = vld [vmem:[%s4491 + $0x34] sm:$0xf]
    %v4506 = vld [vmem:[%s4491 + $0x38] sm:$0xf]
    %v4507 = vld [vmem:[%s4491 + $0x3c] sm:$0xf]
    %v4508 = vld [vmem:[%s4491 + $0x40] sm:$0xf]
    %v4509 = vld [vmem:[%s4491 + $0x44] sm:$0xf]
    %v4510 = vld [vmem:[%s4491 + $0x48] sm:$0xf]
    %v4511 = vld [vmem:[%s4491 + $0x4c] sm:$0xf]
    %v4512 = vld [vmem:[%s4491 + $0x50] sm:$0xf]
    %v4513 = vld [vmem:[%s4491 + $0x54] sm:$0xf]
    %v4514 = vld [vmem:[%s4491 + $0x58] sm:$0xf]
    %v4515 = vld [vmem:[%s4491 + $0x5c] sm:$0xf]
    %v4516 = vld [vmem:[%s4491 + $0x60] sm:$0xf]
    %v4517 = vld [vmem:[%s4491 + $0x64] sm:$0xf]
    %v4518 = vld [vmem:[%s4491 + $0x68] sm:$0xf]
    %v4519 = vld [vmem:[%s4491 + $0x6c] sm:$0xf]
    %v4520 = vld [vmem:[%s4491 + $0x70] sm:$0xf]
    %v4521 = vld [vmem:[%s4491 + $0x74] sm:$0xf]
    %v4522 = vld [vmem:[%s4491 + $0x78] sm:$0xf]
    %v4523 = vld [vmem:[%s4491 + $0x7c] sm:$0xf]
    %v4528 = vunpack.c.l.b16 %v4487
    %v4529 = vunpack.c.h.b16 %v4487
    %v4530 = vunpack.c.l.b16 %v4488
    %v4531 = vunpack.c.h.b16 %v4488
    %v4532 = vunpack.c.l.b16 %v4489
    %v4533 = vunpack.c.h.b16 %v4489
    %v4534 = vunpack.c.l.b16 %v4490
    %v4535 = vunpack.c.h.b16 %v4490
    %v4536 = vpack.c.b16 %v4530, %v4528
    %v4537 = vpack.c.b16 %v4531, %v4529
    %v4538 = vpack.c.b16 %v4534, %v4532
    %v4539 = vpack.c.b16 %v4535, %v4533
    %v4576 = vunpack.c.l.b16 %v4492
    %v4577 = vunpack.c.l.b16 %v4493
    %v4578 = vunpack.c.l.b16 %v4494
    %v4579 = vunpack.c.l.b16 %v4495
    %v4580 = vunpack.c.l.b16 %v4496
    %v4581 = vunpack.c.l.b16 %v4497
    %v4582 = vunpack.c.l.b16 %v4498
    %v4583 = vunpack.c.l.b16 %v4499
    %v4584 = vunpack.c.l.b16 %v4500
    %v4585 = vunpack.c.l.b16 %v4501
    %v4586 = vunpack.c.l.b16 %v4502
    %v4587 = vunpack.c.l.b16 %v4503
    %v4588 = vunpack.c.l.b16 %v4504
    %v4589 = vunpack.c.l.b16 %v4505
    %v4590 = vunpack.c.l.b16 %v4506
    %v4591 = vunpack.c.l.b16 %v4507
    %v4592 = vunpack.c.l.b16 %v4508
    %v4593 = vunpack.c.l.b16 %v4509
    %v4594 = vunpack.c.l.b16 %v4510
    %v4595 = vunpack.c.l.b16 %v4511
    %v4596 = vunpack.c.l.b16 %v4512
    %v4597 = vunpack.c.l.b16 %v4513
    %v4598 = vunpack.c.l.b16 %v4514
    %v4599 = vunpack.c.l.b16 %v4515
    %v4600 = vunpack.c.l.b16 %v4516
    %v4601 = vunpack.c.l.b16 %v4517
    %v4602 = vunpack.c.l.b16 %v4518
    %v4603 = vunpack.c.l.b16 %v4519
    %v4604 = vunpack.c.l.b16 %v4520
    %v4605 = vunpack.c.l.b16 %v4521
    %v4606 = vunpack.c.l.b16 %v4522
    %v4607 = vunpack.c.l.b16 %v4523
    %v4608 = vpack.c.b16 %v4577, %v4576
    %v4609 = vpack.c.b16 %v4579, %v4578
    %v4610 = vpack.c.b16 %v4581, %v4580
    %v4611 = vpack.c.b16 %v4583, %v4582
    %v4612 = vpack.c.b16 %v4585, %v4584
    %v4613 = vpack.c.b16 %v4587, %v4586
    %v4614 = vpack.c.b16 %v4589, %v4588
    %v4615 = vpack.c.b16 %v4591, %v4590
    %v4616 = vpack.c.b16 %v4593, %v4592
    %v4617 = vpack.c.b16 %v4595, %v4594
    %v4618 = vpack.c.b16 %v4597, %v4596
    %v4619 = vpack.c.b16 %v4599, %v4598
    %v4620 = vpack.c.b16 %v4601, %v4600
    %v4621 = vpack.c.b16 %v4603, %v4602
    %v4622 = vpack.c.b16 %v4605, %v4604
    %v4623 = vpack.c.b16 %v4607, %v4606
    %4640 = vmatprep.subr.bf16.mxu0 0
    %4641 = vmatpush1.bf16.msra.mxu0 %v4615
    %4642 = vmatprep.subr.bf16.mxu0 0
    %4643 = vmatpush1.bf16.msra.mxu0 %v4614
    %4644 = vmatprep.subr.bf16.mxu0 0
    %4645 = vmatpush1.bf16.msra.mxu0 %v4613
    %4646 = vmatprep.subr.bf16.mxu0 0
    %4647 = vmatpush1.bf16.msra.mxu0 %v4612
    %4648 = vmatprep.subr.bf16.mxu0 0
    %4649 = vmatpush1.bf16.msra.mxu0 %v4611
    %4650 = vmatprep.subr.bf16.mxu0 0
    %4651 = vmatpush1.bf16.msra.mxu0 %v4610
    %4652 = vmatprep.subr.bf16.mxu0 0
    %4653 = vmatpush1.bf16.msra.mxu0 %v4609
    %4654 = vmatprep.subr.bf16.mxu0 0
    %4655 = vmatpush1.bf16.msra.mxu0 %v4608
    %4656 = vmatprep.subr.bf16.mxu0 0
    %4657 = vmatpush2.bf16.msra.mxu0 %v4623
    %4658 = vmatprep.subr.bf16.mxu0 0
    %4659 = vmatpush2.bf16.msra.mxu0 %v4622
    %4660 = vmatprep.subr.bf16.mxu0 0
    %4661 = vmatpush2.bf16.msra.mxu0 %v4621
    %4662 = vmatprep.subr.bf16.mxu0 0
    %4663 = vmatpush2.bf16.msra.mxu0 %v4620
    %4664 = vmatprep.subr.bf16.mxu0 0
    %4665 = vmatpush2.bf16.msra.mxu0 %v4619
    %4666 = vmatprep.subr.bf16.mxu0 0
    %4667 = vmatpush2.bf16.msra.mxu0 %v4618
    %4668 = vmatprep.subr.bf16.mxu0 0
    %4669 = vmatpush2.bf16.msra.mxu0 %v4617
    %4670 = vmatprep.subr.bf16.mxu0 0
    %4671 = vmatpush2.bf16.msra.mxu0 %v4616
    %4672 = vmatprep.mubr.bf16.mxu0 %v4537
    %4673 = vmatmul.mubr.bf16.gmra.mxu0 %v4536
    %v4674 = vpop.f32.mrf.mxu0
    %v4675 = vadd.f32 0.0, %v4674
    %v4676 = vpop.f32.mrf.mxu0
    %v4677 = vpop.f32.mrf.mxu0
    %v4678 = vadd.f32 0.0, %v4677
    %v4679 = vpop.f32.mrf.mxu0
    %4680 = vmatprep.mubr.bf16.mxu0 %v4539
    %4681 = vmatmul.mubr.bf16.gmra.mxu0 %v4538
    %v4682 = vpop.f32.mrf.mxu0
    %v4683 = vadd.f32 0.0, %v4682
    %v4684 = vpop.f32.mrf.mxu0
    %v4685 = vpop.f32.mrf.mxu0
    %v4686 = vadd.f32 0.0, %v4685
    %v4687 = vpop.f32.mrf.mxu0
    %4688 = vdwg.mxu0
    %v4689 = vadd.f32 %v4479, %v4675
    %v4690 = vadd.f32 %v4480, %v4678
    %v4691 = vadd.f32 %v4481, %v4683
    %v4692 = vadd.f32 %v4482, %v4686
    %v4694 = vshrl.u32 %v3475, 16
    %v4696 = vrot.slane %v4694, 7
    %v4697 = vshll.u32 %v3475, 16
    %v4699 = vor.u32 %v4696, %v4697
    %v4701 = vshrl.u32 %v3476, 16
    %v4703 = vrot.slane %v4701, 7
    %v4704 = vshll.u32 %v3476, 16
    %v4706 = vor.u32 %v4703, %v4704
    %v4707 = vsel %vm597, %v4696, %v4706
    %v4709 = vsel %vm1694, %v3447, %v4699
    %v4710 = vrot.slane %v4697, 1
    %v4711 = vor.u32 %v4694, %v4710
    %v4712 = vrot.slane %v4704, 1
    %v4713 = vsel %vm1696, %v4711, %v4712
    %v4714 = vor.u32 %v4701, %v4712
    %v4716 = vpack.c.b16 %v3474, %v3474
    %v4718 = vsel %vm1706, %v4714, %v4716
    %v4720 = vunpack.c.l.b16 %v4709
    %v4721 = vunpack.c.h.b16 %v4709
    %v4722 = vunpack.c.l.b16 %v4707
    %v4723 = vunpack.c.h.b16 %v4707
    %v4724 = vpack.c.b16 %v4720, %v4720
    %v4725 = vpack.c.b16 %v4721, %v4721
    %v4726 = vpack.c.b16 %v4722, %v4722
    %v4727 = vpack.c.b16 %v4723, %v4723
    %v4732 = vsel %vm1728, %v3447, %v4724
    %v4733 = vsel %vm1729, %v3448, %v4725
    %v4734 = vsel %vm1730, %v3449, %v4726
    %v4735 = vsel %vm1731, %v3450, %v4727
    %v4737 = vunpack.c.l.b16 %v4713
    %v4738 = vunpack.c.h.b16 %v4713
    %v4739 = vunpack.c.l.b16 %v4718
    %v4740 = vunpack.c.h.b16 %v4718
    %v4741 = vpack.c.b16 %v4737, %v4737
    %v4742 = vpack.c.b16 %v4738, %v4738
    %v4743 = vpack.c.b16 %v4739, %v4739
    %v4744 = vpack.c.b16 %v4740, %v4740
    %v4749 = vsel %vm1769, %v3447, %v4741
    %v4750 = vsel %vm1770, %v3448, %v4742
    %v4751 = vsel %vm1771, %v3449, %v4743
    %v4752 = vsel %vm1772, %v3450, %v4744
    %v4753 = vmax.bf16 %v4732, %v3447
    %v4754 = vmax.bf16 %v4733, %v3448
    %v4755 = vmax.bf16 %v4734, %v3449
    %v4756 = vmax.bf16 %v4735, %v3450
    %v4757 = vmax.bf16 %v4753, %v4749
    %v4758 = vmax.bf16 %v4754, %v4750
    %v4759 = vmax.bf16 %v4755, %v4751
    %v4760 = vmax.bf16 %v4756, %v4752
    %v4761 = vld [vmem:[%s31] sm:$0xf]
    %v4762 = vld [vmem:[%s31 + $0x4] sm:$0xf]
    %v4763 = vld [vmem:[%s31 + $0x8] sm:$0xf]
    %v4764 = vld [vmem:[%s31 + $0xc] sm:$0xf]
    %v4765 = vld [vmem:[%s31 + $0x10] sm:$0xf]
    %v4766 = vld [vmem:[%s31 + $0x14] sm:$0xf]
    %v4767 = vld [vmem:[%s31 + $0x18] sm:$0xf]
    %v4768 = vld [vmem:[%s31 + $0x1c] sm:$0xf]
    %v4769 = vld [vmem:[%s31 + $0x20] sm:$0xf]
    %v4770 = vld [vmem:[%s31 + $0x24] sm:$0xf]
    %v4771 = vld [vmem:[%s31 + $0x28] sm:$0xf]
    %v4772 = vld [vmem:[%s31 + $0x2c] sm:$0xf]
    %v4773 = vld [vmem:[%s31 + $0x30] sm:$0xf]
    %v4774 = vld [vmem:[%s31 + $0x34] sm:$0xf]
    %v4775 = vld [vmem:[%s31 + $0x38] sm:$0xf]
    %v4776 = vld [vmem:[%s31 + $0x3c] sm:$0xf]
    %v4781 = vunpack.c.l.b16 %v4757
    %v4782 = vunpack.c.l.b16 %v4758
    %v4783 = vunpack.c.l.b16 %v4759
    %v4784 = vunpack.c.l.b16 %v4760
    %v4785 = vpack.c.b16 %v4782, %v4781
    %v4786 = vpack.c.b16 %v4784, %v4783
    %v4805 = vunpack.c.l.b16 %v4761
    %v4806 = vunpack.c.l.b16 %v4762
    %v4807 = vunpack.c.l.b16 %v4763
    %v4808 = vunpack.c.l.b16 %v4764
    %v4809 = vunpack.c.l.b16 %v4765
    %v4810 = vunpack.c.l.b16 %v4766
    %v4811 = vunpack.c.l.b16 %v4767
    %v4812 = vunpack.c.l.b16 %v4768
    %v4813 = vunpack.c.l.b16 %v4769
    %v4814 = vunpack.c.l.b16 %v4770
    %v4815 = vunpack.c.l.b16 %v4771
    %v4816 = vunpack.c.l.b16 %v4772
    %v4817 = vunpack.c.l.b16 %v4773
    %v4818 = vunpack.c.l.b16 %v4774
    %v4819 = vunpack.c.l.b16 %v4775
    %v4820 = vunpack.c.l.b16 %v4776
    %v4821 = vpack.c.b16 %v4806, %v4805
    %v4822 = vpack.c.b16 %v4808, %v4807
    %v4823 = vpack.c.b16 %v4810, %v4809
    %v4824 = vpack.c.b16 %v4812, %v4811
    %v4825 = vpack.c.b16 %v4814, %v4813
    %v4826 = vpack.c.b16 %v4816, %v4815
    %v4827 = vpack.c.b16 %v4818, %v4817
    %v4828 = vpack.c.b16 %v4820, %v4819
    %4837 = vmatprep.subr.bf16.mxu0 0
    %4838 = vmatpush1.bf16.msra.mxu0 %v4828
    %4839 = vmatprep.subr.bf16.mxu0 0
    %4840 = vmatpush1.bf16.msra.mxu0 %v4827
    %4841 = vmatprep.subr.bf16.mxu0 0
    %4842 = vmatpush1.bf16.msra.mxu0 %v4826
    %4843 = vmatprep.subr.bf16.mxu0 0
    %4844 = vmatpush1.bf16.msra.mxu0 %v4825
    %4845 = vmatprep.subr.bf16.mxu0 0
    %4846 = vmatpush1.bf16.msra.mxu0 %v4824
    %4847 = vmatprep.subr.bf16.mxu0 0
    %4848 = vmatpush1.bf16.msra.mxu0 %v4823
    %4849 = vmatprep.subr.bf16.mxu0 0
    %4850 = vmatpush1.bf16.msra.mxu0 %v4822
    %4851 = vmatprep.subr.bf16.mxu0 0
    %4852 = vmatpush1.bf16.msra.mxu0 %v4821
    %4853 = vmatprep.subr.bf16.mxu0 0
    %4854 = vmatpush2.bf16.msra.mxu0 0
    %4855 = vmatprep.subr.bf16.mxu0 0
    %4856 = vmatpush2.bf16.msra.mxu0 0
    %4857 = vmatprep.subr.bf16.mxu0 0
    %4858 = vmatpush2.bf16.msra.mxu0 0
    %4859 = vmatprep.subr.bf16.mxu0 0
    %4860 = vmatpush2.bf16.msra.mxu0 0
    %4861 = vmatprep.subr.bf16.mxu0 0
    %4862 = vmatpush2.bf16.msra.mxu0 0
    %4863 = vmatprep.subr.bf16.mxu0 0
    %4864 = vmatpush2.bf16.msra.mxu0 0
    %4865 = vmatprep.subr.bf16.mxu0 0
    %4866 = vmatpush2.bf16.msra.mxu0 0
    %4867 = vmatprep.subr.bf16.mxu0 0
    %4868 = vmatpush2.bf16.msra.mxu0 0
    %4869 = vmatprep.mubr.bf16.mxu0 0
    %4870 = vmatmul.mubr.bf16.gmra.mxu0 %v4785
    %v4871 = vpop.f32.mrf.mxu0
    %v4872 = vadd.f32 0.0, %v4871
    %v4873 = vpop.f32.mrf.mxu0
    %v4874 = vpop.f32.mrf.mxu0
    %v4875 = vadd.f32 0.0, %v4874
    %v4876 = vpop.f32.mrf.mxu0
    %4877 = vmatprep.mubr.bf16.mxu0 0
    %4878 = vmatmul.mubr.bf16.gmra.mxu0 %v4786
    %v4879 = vpop.f32.mrf.mxu0
    %v4880 = vadd.f32 0.0, %v4879
    %v4881 = vpop.f32.mrf.mxu0
    %v4882 = vpop.f32.mrf.mxu0
    %v4883 = vadd.f32 0.0, %v4882
    %v4884 = vpop.f32.mrf.mxu0
    %4885 = vdwg.mxu0
    %4890 = vrot.lane.b32.xlu0 %v4872, 96
    %v4891 = vpop.permute.xlu0 %4890
    %4892 = vrot.lane.b32.xlu0 %v4875, 96
    %v4893 = vpop.permute.xlu0 %4892
    %4894 = vrot.lane.b32.xlu0 %v4880, 96
    %v4895 = vpop.permute.xlu0 %4894
    %4896 = vrot.lane.b32.xlu0 %v4883, 96
    %v4897 = vpop.permute.xlu0 %4896
    %v4902 = vadd.f32 %v4689, %v4891
    %v4903 = vadd.f32 %v4690, %v4893
    %v4904 = vadd.f32 %v4691, %v4895
    %v4905 = vadd.f32 %v4692, %v4897
    %v4906 = vsel %vm1887, %v4689, %v4902
    %v4907 = vsel %vm1887, %v4690, %v4903
    %v4908 = vsel %vm1887, %v4691, %v4904
    %v4909 = vsel %vm1887, %v4692, %v4905
    %v4910 = vld [vmem:[%s33] sm:$0x1]
    %v4912 = vlaneseq
    %v4913 = vshrl.u32 %v4912, 7
    %v4914 = vsub.s32 0, %v4913
    %v4915 = vrot.slane %v4910, %v4914
    %v4917 = vmul.f32 %v4906, %v4915
    %v4918 = vmul.f32 %v4907, %v4915
    %v4919 = vmul.f32 %v4908, %v4915
    %v4920 = vmul.f32 %v4909, %v4915
    %v4921 = vld [vmem:[%s35] sm:$0x1]
    %v4923 = vlaneseq
    %v4924 = vshrl.u32 %v4923, 7
    %v4925 = vsub.s32 0, %v4924
    %v4926 = vrot.slane %v4921, %v4925
    %v4928 = vadd.f32 %v4917, %v4926
    %v4929 = vadd.f32 %v4918, %v4926
    %v4930 = vadd.f32 %v4919, %v4926
    %v4931 = vadd.f32 %v4920, %v4926
    %v4932 = vmax.f32 %v4928, 0.0
    %v4933 = vmax.f32 %v4929, 0.0
    %v4934 = vmax.f32 %v4930, 0.0
    %v4935 = vmax.f32 %v4931, 0.0
    %v4936 = vld [vmem:[%s1] sm:$0xf]
    %v4937 = vld [vmem:[%s1 + $0x4] sm:$0xf]
    %v4938 = vld [vmem:[%s1 + $0x8] sm:$0xf]
    %v4939 = vld [vmem:[%s1 + $0xc] sm:$0xf]
    %v4940 = vld [vmem:[%s67] sm:$0x3]
    %v4945 = vunpack.c.l.b16 %v4936
    %v4946 = vunpack.c.l.b16 %v4937
    %v4947 = vunpack.c.l.b16 %v4938
    %v4948 = vunpack.c.l.b16 %v4939
    %v4949 = vpack.c.b16 %v4946, %v4945
    %v4950 = vpack.c.b16 %v4948, %v4947
    %v4952 = vsel %vm260, %v4949, 0
    %v4955 = vsel %vm260, %v4950, 0
    %v4958 = vsel %vm267, %v4940, 0
    %4960 = vmatprep.subr.bf16.mxu0 0
    %4961 = vmatpush1.bf16.msra.mxu0 0
    %4962 = vmatprep.subr.bf16.mxu0 0
    %4963 = vmatpush1.bf16.msra.mxu0 0
    %4964 = vmatprep.subr.bf16.mxu0 0
    %4965 = vmatpush1.bf16.msra.mxu0 0
    %4966 = vmatprep.subr.bf16.mxu0 0
    %4967 = vmatpush1.bf16.msra.mxu0 0
    %4968 = vmatprep.subr.bf16.mxu0 0
    %4969 = vmatpush1.bf16.msra.mxu0 0
    %4970 = vmatprep.subr.bf16.mxu0 0
    %4971 = vmatpush1.bf16.msra.mxu0 0
    %4972 = vmatprep.subr.bf16.mxu0 0
    %4973 = vmatpush1.bf16.msra.mxu0 0
    %4974 = vmatprep.subr.bf16.mxu0 0
    %4975 = vmatpush1.bf16.msra.mxu0 %v4958
    %4976 = vmatprep.subr.bf16.mxu0 0
    %4977 = vmatpush2.bf16.msra.mxu0 0
    %4978 = vmatprep.subr.bf16.mxu0 0
    %4979 = vmatpush2.bf16.msra.mxu0 0
    %4980 = vmatprep.subr.bf16.mxu0 0
    %4981 = vmatpush2.bf16.msra.mxu0 0
    %4982 = vmatprep.subr.bf16.mxu0 0
    %4983 = vmatpush2.bf16.msra.mxu0 0
    %4984 = vmatprep.subr.bf16.mxu0 0
    %4985 = vmatpush2.bf16.msra.mxu0 0
    %4986 = vmatprep.subr.bf16.mxu0 0
    %4987 = vmatpush2.bf16.msra.mxu0 0
    %4988 = vmatprep.subr.bf16.mxu0 0
    %4989 = vmatpush2.bf16.msra.mxu0 0
    %4990 = vmatprep.subr.bf16.mxu0 0
    %4991 = vmatpush2.bf16.msra.mxu0 0
    %4992 = vmatprep.mubr.bf16.mxu0 0
    %4993 = vmatmul.mubr.bf16.gmra.mxu0 %v4952
    %v4994 = vpop.f32.mrf.mxu0
    %v4995 = vadd.f32 0.0, %v4994
    %v4996 = vpop.f32.mrf.mxu0
    %v4997 = vpop.f32.mrf.mxu0
    %v4998 = vadd.f32 0.0, %v4997
    %v4999 = vpop.f32.mrf.mxu0
    %5000 = vmatprep.mubr.bf16.mxu0 0
    %5001 = vmatmul.mubr.bf16.gmra.mxu0 %v4955
    %v5002 = vpop.f32.mrf.mxu0
    %v5003 = vadd.f32 0.0, %v5002
    %v5004 = vpop.f32.mrf.mxu0
    %v5005 = vpop.f32.mrf.mxu0
    %v5006 = vadd.f32 0.0, %v5005
    %v5007 = vpop.f32.mrf.mxu0
    %5008 = vdwg.mxu0
    %v5009 = vld [vmem:[%s69] sm:$0x1]
    %v5011 = vlaneseq
    %v5012 = vshrl.u32 %v5011, 7
    %v5013 = vsub.s32 0, %v5012
    %v5014 = vrot.slane %v5009, %v5013
    %v5016 = vmul.f32 %v4995, %v5014
    %v5017 = vmul.f32 %v4998, %v5014
    %v5018 = vmul.f32 %v5003, %v5014
    %v5019 = vmul.f32 %v5006, %v5014
    %v5020 = vadd.f32 %v4932, %v5016
    %v5021 = vadd.f32 %v4933, %v5017
    %v5022 = vadd.f32 %v4934, %v5018
    %v5023 = vadd.f32 %v4935, %v5019
    %v5024 = vld [vmem:[%s71] sm:$0x1]
    %v5026 = vlaneseq
    %v5027 = vshrl.u32 %v5026, 7
    %v5028 = vsub.s32 0, %v5027
    %v5029 = vrot.slane %v5024, %v5028
    %v5031 = vadd.f32 %v5020, %v5029
    %v5032 = vadd.f32 %v5021, %v5029
    %v5033 = vadd.f32 %v5022, %v5029
    %v5034 = vadd.f32 %v5023, %v5029
    %v5035 = vmax.f32 %v5031, 0.0
    %v5036 = vmax.f32 %v5032, 0.0
    %v5037 = vmax.f32 %v5033, 0.0
    %v5038 = vmax.f32 %v5034, 0.0
    %v5039 = vpack.c.bf16 %v5036, %v5035
    %v5040 = vpack.c.bf16 %v5038, %v5037
    %v5043 = vunpack.c.l.b16 %v5039
    %v5044 = vunpack.c.h.b16 %v5039
    %v5045 = vunpack.c.l.b16 %v5040
    %v5046 = vunpack.c.h.b16 %v5040
    %v5047 = vpack.c.b16 %v5043, %v5043
    %v5048 = vpack.c.b16 %v5044, %v5044
    %v5049 = vpack.c.b16 %v5045, %v5045
    %v5050 = vpack.c.b16 %v5046, %v5046
    %5055 = vst [vmem:[#allocation2] sm:$0xf] %v5047
    %5056 = vst [vmem:[#allocation2 + $0x4] sm:$0xf] %v5048
    %5057 = vst [vmem:[#allocation2 + $0x8] sm:$0xf] %v5049
    %5058 = vst [vmem:[#allocation2 + $0xc] sm:$0xf] %v5050
    %v5059 = vld [vmem:[#allocation2] sm:$0xf]
    %v5060 = vld [vmem:[#allocation2 + $0x4] sm:$0xf]
    %v5061 = vld [vmem:[#allocation2 + $0x8] sm:$0xf]
    %v5062 = vld [vmem:[#allocation2 + $0xc] sm:$0xf]
    %v5063 = vld [vmem:[%s37] sm:$0xf]
    %v5064 = vld [vmem:[%s37 + $0x4] sm:$0xf]
    %v5065 = vld [vmem:[%s37 + $0x8] sm:$0xf]
    %v5066 = vld [vmem:[%s37 + $0xc] sm:$0xf]
    %v5067 = vld [vmem:[%s37 + $0x10] sm:$0xf]
    %v5068 = vld [vmem:[%s37 + $0x14] sm:$0xf]
    %v5069 = vld [vmem:[%s37 + $0x18] sm:$0xf]
    %v5070 = vld [vmem:[%s37 + $0x1c] sm:$0xf]
    %v5071 = vld [vmem:[%s37 + $0x20] sm:$0xf]
    %v5072 = vld [vmem:[%s37 + $0x24] sm:$0xf]
    %v5073 = vld [vmem:[%s37 + $0x28] sm:$0xf]
    %v5074 = vld [vmem:[%s37 + $0x2c] sm:$0xf]
    %v5075 = vld [vmem:[%s37 + $0x30] sm:$0xf]
    %v5076 = vld [vmem:[%s37 + $0x34] sm:$0xf]
    %v5077 = vld [vmem:[%s37 + $0x38] sm:$0xf]
    %v5078 = vld [vmem:[%s37 + $0x3c] sm:$0xf]
    %v5083 = vunpack.c.l.b16 %v5059
    %v5084 = vunpack.c.l.b16 %v5060
    %v5085 = vunpack.c.l.b16 %v5061
    %v5086 = vunpack.c.l.b16 %v5062
    %v5087 = vpack.c.b16 %v5084, %v5083
    %v5088 = vpack.c.b16 %v5086, %v5085
    %v5107 = vunpack.c.l.b16 %v5063
    %v5108 = vunpack.c.l.b16 %v5064
    %v5109 = vunpack.c.l.b16 %v5065
    %v5110 = vunpack.c.l.b16 %v5066
    %v5111 = vunpack.c.l.b16 %v5067
    %v5112 = vunpack.c.l.b16 %v5068
    %v5113 = vunpack.c.l.b16 %v5069
    %v5114 = vunpack.c.l.b16 %v5070
    %v5115 = vunpack.c.l.b16 %v5071
    %v5116 = vunpack.c.l.b16 %v5072
    %v5117 = vunpack.c.l.b16 %v5073
    %v5118 = vunpack.c.l.b16 %v5074
    %v5119 = vunpack.c.l.b16 %v5075
    %v5120 = vunpack.c.l.b16 %v5076
    %v5121 = vunpack.c.l.b16 %v5077
    %v5122 = vunpack.c.l.b16 %v5078
    %v5123 = vpack.c.b16 %v5108, %v5107
    %v5124 = vpack.c.b16 %v5110, %v5109
    %v5125 = vpack.c.b16 %v5112, %v5111
    %v5126 = vpack.c.b16 %v5114, %v5113
    %v5127 = vpack.c.b16 %v5116, %v5115
    %v5128 = vpack.c.b16 %v5118, %v5117
    %v5129 = vpack.c.b16 %v5120, %v5119
    %v5130 = vpack.c.b16 %v5122, %v5121
    %5139 = vmatprep.subr.bf16.mxu0 0
    %5140 = vmatpush1.bf16.msra.mxu0 %v5130
    %5141 = vmatprep.subr.bf16.mxu0 0
    %5142 = vmatpush1.bf16.msra.mxu0 %v5129
    %5143 = vmatprep.subr.bf16.mxu0 0
    %5144 = vmatpush1.bf16.msra.mxu0 %v5128
    %5145 = vmatprep.subr.bf16.mxu0 0
    %5146 = vmatpush1.bf16.msra.mxu0 %v5127
    %5147 = vmatprep.subr.bf16.mxu0 0
    %5148 = vmatpush1.bf16.msra.mxu0 %v5126
    %5149 = vmatprep.subr.bf16.mxu0 0
    %5150 = vmatpush1.bf16.msra.mxu0 %v5125
    %5151 = vmatprep.subr.bf16.mxu0 0
    %5152 = vmatpush1.bf16.msra.mxu0 %v5124
    %5153 = vmatprep.subr.bf16.mxu0 0
    %5154 = vmatpush1.bf16.msra.mxu0 %v5123
    %5155 = vmatprep.subr.bf16.mxu0 0
    %5156 = vmatpush2.bf16.msra.mxu0 0
    %5157 = vmatprep.subr.bf16.mxu0 0
    %5158 = vmatpush2.bf16.msra.mxu0 0
    %5159 = vmatprep.subr.bf16.mxu0 0
    %5160 = vmatpush2.bf16.msra.mxu0 0
    %5161 = vmatprep.subr.bf16.mxu0 0
    %5162 = vmatpush2.bf16.msra.mxu0 0
    %5163 = vmatprep.subr.bf16.mxu0 0
    %5164 = vmatpush2.bf16.msra.mxu0 0
    %5165 = vmatprep.subr.bf16.mxu0 0
    %5166 = vmatpush2.bf16.msra.mxu0 0
    %5167 = vmatprep.subr.bf16.mxu0 0
    %5168 = vmatpush2.bf16.msra.mxu0 0
    %5169 = vmatprep.subr.bf16.mxu0 0
    %5170 = vmatpush2.bf16.msra.mxu0 0
    %5171 = vmatprep.mubr.bf16.mxu0 0
    %5172 = vmatmul.mubr.bf16.gmra.mxu0 %v5087
    %v5173 = vpop.f32.mrf.mxu0
    %v5174 = vadd.f32 0.0, %v5173
    %v5175 = vpop.f32.mrf.mxu0
    %v5176 = vpop.f32.mrf.mxu0
    %v5177 = vadd.f32 0.0, %v5176
    %v5178 = vpop.f32.mrf.mxu0
    %5179 = vmatprep.mubr.bf16.mxu0 0
    %5180 = vmatmul.mubr.bf16.gmra.mxu0 %v5088
    %v5181 = vpop.f32.mrf.mxu0
    %v5182 = vadd.f32 0.0, %v5181
    %v5183 = vpop.f32.mrf.mxu0
    %v5184 = vpop.f32.mrf.mxu0
    %v5185 = vadd.f32 0.0, %v5184
    %v5186 = vpop.f32.mrf.mxu0
    %5187 = vdwg.mxu0
    %v5188 = vpack.c.bf16 %v5177, %v5174
    %v5189 = vpack.c.bf16 %v5185, %v5182
    %v5192 = vunpack.c.l.b16 %v5188
    %v5193 = vunpack.c.h.b16 %v5188
    %v5194 = vunpack.c.l.b16 %v5189
    %v5195 = vunpack.c.h.b16 %v5189
    %v5196 = vpack.c.b16 %v5192, %v5192
    %v5197 = vpack.c.b16 %v5193, %v5193
    %v5198 = vpack.c.b16 %v5194, %v5194
    %v5199 = vpack.c.b16 %v5195, %v5195
    %v5201 = vshll.u32 %v5196, 16
    %v5203 = vrot.slane %v5201, 5
    %v5204 = vshrl.u32 %v5196, 16
    %v5206 = vrot.slane %v5204, 4
    %v5207 = vor.u32 %v5206, %v5203
    %v5208 = vrot.slane %v5207, 4
    %v5210 = vshll.u32 %v5197, 16
    %v5212 = vrot.slane %v5210, 5
    %v5213 = vsel %vm334, %v5208, %v5212
    %v5214 = vshrl.u32 %v5197, 16
    %v5216 = vrot.slane %v5214, 4
    %v5217 = vor.u32 %v5216, %v5212
    %v5218 = vrot.slane %v5217, 4
    %v5220 = vshll.u32 %v5198, 16
    %v5222 = vrot.slane %v5220, 5
    %v5223 = vsel %vm334, %v5218, %v5222
    %v5224 = vshrl.u32 %v5198, 16
    %v5226 = vrot.slane %v5224, 4
    %v5227 = vor.u32 %v5226, %v5222
    %v5228 = vrot.slane %v5227, 4
    %v5230 = vshll.u32 %v5199, 16
    %v5232 = vrot.slane %v5230, 5
    %v5233 = vsel %vm334, %v5228, %v5232
    %v5234 = vshrl.u32 %v5199, 16
    %v5236 = vrot.slane %v5234, 4
    %v5237 = vor.u32 %v5236, %v5232
    %v5238 = vrot.slane %v5237, 4
    %v5244 = vld [vmem:[#allocation4 + $0x8] sm:$0x8]
    %v5245 = vsel %vm381, %v5203, %v5244
    %5246 = vst [vmem:[#allocation4 + $0x8] sm:$0x8] %v5245
    %5247 = vst.msk [vmem:[#allocation4 + $0x10] sm:$0xf] %vm385, %v5213
    %5248 = vst.msk [vmem:[#allocation4 + $0x18] sm:$0xf] %vm385, %v5223
    %5249 = vst.msk [vmem:[#allocation4 + $0x20] sm:$0xf] %vm385, %v5233
    %v5250 = vld [vmem:[#allocation4 + $0x28] sm:$0xf]
    %v5251 = vsel %vm390, %v5238, %v5250
    %5252 = vst [vmem:[#allocation4 + $0x28] sm:$0xf] %v5251
    %v5253 = vrot.slane %v5196, 5
    %v5254 = vrot.slane %v5253, 4
    %v5255 = vrot.slane %v5197, 5
    %v5256 = vsel %vm396, %v5254, %v5255
    %v5257 = vrot.slane %v5255, 4
    %v5258 = vrot.slane %v5198, 5
    %v5259 = vsel %vm396, %v5257, %v5258
    %v5260 = vrot.slane %v5258, 4
    %v5261 = vrot.slane %v5199, 5
    %v5262 = vsel %vm396, %v5260, %v5261
    %v5263 = vrot.slane %v5261, 4
    %5264 = vrot.lane.b32.xlu0 %v5253, 32
    %v5265 = vpop.permute.xlu0 %5264
    %5266 = vrot.lane.b32.xlu0 %v5256, 32
    %v5267 = vpop.permute.xlu0 %5266
    %5268 = vrot.lane.b32.xlu0 %v5259, 32
    %v5269 = vpop.permute.xlu0 %5268
    %5270 = vrot.lane.b32.xlu0 %v5262, 32
    %v5271 = vpop.permute.xlu0 %5270
    %5272 = vrot.lane.b32.xlu0 %v5263, 32
    %v5273 = vpop.permute.xlu0 %5272
    %5279 = vst.msk [vmem:[#allocation4 + $0x8] sm:$0x8] %vm423, %v5265
    %5280 = vst.msk [vmem:[#allocation4 + $0x10] sm:$0xf] %vm425, %v5267
    %5281 = vst.msk [vmem:[#allocation4 + $0x18] sm:$0xf] %vm425, %v5269
    %5282 = vst.msk [vmem:[#allocation4 + $0x20] sm:$0xf] %vm425, %v5271
    %5283 = vst.msk [vmem:[#allocation4 + $0x28] sm:$0x7] %vm429, %v5273
    %v5284 = vrot.slane %v5204, 5
    %v5285 = vrot.slane %v5201, 6
    %v5286 = vor.u32 %v5284, %v5285
    %v5287 = vrot.slane %v5286, 4
    %v5288 = vrot.slane %v5214, 5
    %v5289 = vrot.slane %v5210, 6
    %v5290 = vor.u32 %v5288, %v5289
    %v5291 = vsel %vm433, %v5287, %v5290
    %v5292 = vrot.slane %v5290, 4
    %v5293 = vrot.slane %v5224, 5
    %v5294 = vrot.slane %v5220, 6
    %v5295 = vor.u32 %v5293, %v5294
    %v5296 = vsel %vm433, %v5292, %v5295
    %v5297 = vrot.slane %v5295, 4
    %v5298 = vrot.slane %v5234, 5
    %v5299 = vrot.slane %v5230, 6
    %v5300 = vor.u32 %v5298, %v5299
    %v5301 = vsel %vm433, %v5297, %v5300
    %v5302 = vrot.slane %v5300, 4
    %5303 = vrot.lane.b32.xlu0 %v5286, 64
    %v5304 = vpop.permute.xlu0 %5303
    %5305 = vrot.lane.b32.xlu0 %v5291, 64
    %v5306 = vpop.permute.xlu0 %5305
    %5307 = vrot.lane.b32.xlu0 %v5296, 64
    %v5308 = vpop.permute.xlu0 %5307
    %5309 = vrot.lane.b32.xlu0 %v5301, 64
    %v5310 = vpop.permute.xlu0 %5309
    %5311 = vrot.lane.b32.xlu0 %v5302, 64
    %v5312 = vpop.permute.xlu0 %5311
    %v5318 = vld [vmem:[#allocation4 + $0x8] sm:$0xc]
    %v5319 = vsel %vm470, %v5304, %v5318
    %5320 = vst [vmem:[#allocation4 + $0x8] sm:$0xc] %v5319
    %5321 = vst.msk [vmem:[#allocation4 + $0x10] sm:$0xf] %vm474, %v5306
    %5322 = vst.msk [vmem:[#allocation4 + $0x18] sm:$0xf] %vm474, %v5308
    %5323 = vst.msk [vmem:[#allocation4 + $0x20] sm:$0xf] %vm474, %v5310
    %v5324 = vld [vmem:[#allocation4 + $0x28] sm:$0x7]
    %v5325 = vsel %vm479, %v5312, %v5324
    %5326 = vst [vmem:[#allocation4 + $0x28] sm:$0x7] %v5325
    %v5327 = vrot.slane %v5196, 6
    %v5328 = vrot.slane %v5327, 4
    %v5329 = vrot.slane %v5197, 6
    %v5330 = vsel %vm485, %v5328, %v5329
    %v5331 = vrot.slane %v5329, 4
    %v5332 = vrot.slane %v5198, 6
    %v5333 = vsel %vm485, %v5331, %v5332
    %v5334 = vrot.slane %v5332, 4
    %v5335 = vrot.slane %v5199, 6
    %v5336 = vsel %vm485, %v5334, %v5335
    %v5337 = vrot.slane %v5335, 4
    %5338 = vrot.lane.b32.xlu0 %v5327, 96
    %v5339 = vpop.permute.xlu0 %5338
    %5340 = vrot.lane.b32.xlu0 %v5330, 96
    %v5341 = vpop.permute.xlu0 %5340
    %5342 = vrot.lane.b32.xlu0 %v5333, 96
    %v5343 = vpop.permute.xlu0 %5342
    %5344 = vrot.lane.b32.xlu0 %v5336, 96
    %v5345 = vpop.permute.xlu0 %5344
    %5346 = vrot.lane.b32.xlu0 %v5337, 96
    %v5347 = vpop.permute.xlu0 %5346
    %5353 = vst.msk [vmem:[#allocation4 + $0x8] sm:$0xc] %vm512, %v5339
    %5354 = vst.msk [vmem:[#allocation4 + $0x10] sm:$0xf] %vm514, %v5341
    %5355 = vst.msk [vmem:[#allocation4 + $0x18] sm:$0xf] %vm514, %v5343
    %5356 = vst.msk [vmem:[#allocation4 + $0x20] sm:$0xf] %vm514, %v5345
    %5357 = vst.msk [vmem:[#allocation4 + $0x28] sm:$0x3] %vm518, %v5347
    %v5358 = vrot.slane %v5204, 6
    %v5359 = vrot.slane %v5201, 7
    %v5360 = vor.u32 %v5358, %v5359
    %v5361 = vrot.slane %v5360, 4
    %v5362 = vrot.slane %v5214, 6
    %v5363 = vrot.slane %v5210, 7
    %v5364 = vor.u32 %v5362, %v5363
    %v5365 = vsel %vm522, %v5361, %v5364
    %v5366 = vrot.slane %v5364, 4
    %v5367 = vrot.slane %v5224, 6
    %v5368 = vrot.slane %v5220, 7
    %v5369 = vor.u32 %v5367, %v5368
    %v5370 = vsel %vm522, %v5366, %v5369
    %v5371 = vrot.slane %v5369, 4
    %v5372 = vrot.slane %v5234, 6
    %v5373 = vrot.slane %v5230, 7
    %v5374 = vor.u32 %v5372, %v5373
    %v5375 = vsel %vm522, %v5371, %v5374
    %v5376 = vrot.slane %v5374, 4
    %v5382 = vld [vmem:[#allocation4 + $0xc] sm:$0xe]
    %v5383 = vsel %vm549, %v5360, %v5382
    %5384 = vst [vmem:[#allocation4 + $0xc] sm:$0xe] %v5383
    %5385 = vst.msk [vmem:[#allocation4 + $0x14] sm:$0xf] %vm385, %v5365
    %5386 = vst.msk [vmem:[#allocation4 + $0x1c] sm:$0xf] %vm385, %v5370
    %5387 = vst.msk [vmem:[#allocation4 + $0x24] sm:$0xf] %vm385, %v5375
    %v5388 = vld [vmem:[#allocation4 + $0x2c] sm:$0x3]
    %v5389 = vsel %vm557, %v5376, %v5388
    %5390 = vst [vmem:[#allocation4 + $0x2c] sm:$0x3] %v5389
    %v5391 = vrot.slane %v5196, 7
    %v5392 = vrot.slane %v5391, 4
    %v5393 = vrot.slane %v5197, 7
    %v5394 = vsel %vm563, %v5392, %v5393
    %v5395 = vrot.slane %v5393, 4
    %v5396 = vrot.slane %v5198, 7
    %v5397 = vsel %vm563, %v5395, %v5396
    %v5398 = vrot.slane %v5396, 4
    %v5399 = vrot.slane %v5199, 7
    %v5400 = vsel %vm563, %v5398, %v5399
    %v5401 = vrot.slane %v5399, 4
    %5402 = vrot.lane.b32.xlu0 %v5391, 32
    %v5403 = vpop.permute.xlu0 %5402
    %5404 = vrot.lane.b32.xlu0 %v5394, 32
    %v5405 = vpop.permute.xlu0 %5404
    %5406 = vrot.lane.b32.xlu0 %v5397, 32
    %v5407 = vpop.permute.xlu0 %5406
    %5408 = vrot.lane.b32.xlu0 %v5400, 32
    %v5409 = vpop.permute.xlu0 %5408
    %5410 = vrot.lane.b32.xlu0 %v5401, 32
    %v5411 = vpop.permute.xlu0 %5410
    %5417 = vst.msk [vmem:[#allocation4 + $0xc] sm:$0xe] %vm590, %v5403
    %5418 = vst.msk [vmem:[#allocation4 + $0x14] sm:$0xf] %vm425, %v5405
    %5419 = vst.msk [vmem:[#allocation4 + $0x1c] sm:$0xf] %vm425, %v5407
    %5420 = vst.msk [vmem:[#allocation4 + $0x24] sm:$0xf] %vm425, %v5409
    %5421 = vst.msk [vmem:[#allocation4 + $0x2c] sm:$0x1] %vm595, %v5411
    %v5422 = vrot.slane %v5204, 7
    %v5423 = vor.u32 %v5422, %v5201
    %v5424 = vrot.slane %v5422, 4
    %v5425 = vrot.slane %v5214, 7
    %v5426 = vor.u32 %v5425, %v5210
    %v5427 = vsel %vm599, %v5424, %v5426
    %v5428 = vrot.slane %v5425, 4
    %v5429 = vrot.slane %v5224, 7
    %v5430 = vor.u32 %v5429, %v5220
    %v5431 = vsel %vm599, %v5428, %v5430
    %v5432 = vrot.slane %v5429, 4
    %v5433 = vrot.slane %v5234, 7
    %v5434 = vor.u32 %v5433, %v5230
    %v5435 = vsel %vm599, %v5432, %v5434
    %v5436 = vrot.slane %v5433, 4
    %5437 = vrot.lane.b32.xlu0 %v5423, 64
    %v5438 = vpop.permute.xlu0 %5437
    %5439 = vrot.lane.b32.xlu0 %v5427, 64
    %v5440 = vpop.permute.xlu0 %5439
    %5441 = vrot.lane.b32.xlu0 %v5431, 64
    %v5442 = vpop.permute.xlu0 %5441
    %5443 = vrot.lane.b32.xlu0 %v5435, 64
    %v5444 = vpop.permute.xlu0 %5443
    %5445 = vrot.lane.b32.xlu0 %v5436, 64
    %v5446 = vpop.permute.xlu0 %5445
    %v5452 = vld [vmem:[#allocation4 + $0xc] sm:$0xf]
    %v5453 = vsel %vm632, %v5438, %v5452
    %5454 = vst [vmem:[#allocation4 + $0xc] sm:$0xf] %v5453
    %5455 = vst.msk [vmem:[#allocation4 + $0x14] sm:$0xf] %vm474, %v5440
    %5456 = vst.msk [vmem:[#allocation4 + $0x1c] sm:$0xf] %vm474, %v5442
    %5457 = vst.msk [vmem:[#allocation4 + $0x24] sm:$0xf] %vm474, %v5444
    %v5458 = vld [vmem:[#allocation4 + $0x2c] sm:$0x1]
    %v5459 = vsel %vm640, %v5446, %v5458
    %5460 = vst [vmem:[#allocation4 + $0x2c] sm:$0x1] %v5459
    %5461 = vrot.lane.b32.xlu0 %v5196, 96
    %v5462 = vpop.permute.xlu0 %5461
    %5463 = vrot.lane.b32.xlu0 %v5197, 96
    %v5464 = vpop.permute.xlu0 %5463
    %5465 = vrot.lane.b32.xlu0 %v5198, 96
    %v5466 = vpop.permute.xlu0 %5465
    %5467 = vrot.lane.b32.xlu0 %v5199, 96
    %v5468 = vpop.permute.xlu0 %5467
    %5473 = vst.msk [vmem:[#allocation4 + $0xc] sm:$0xf] %vm514, %v5462
    %5474 = vst.msk [vmem:[#allocation4 + $0x14] sm:$0xf] %vm514, %v5464
    %5475 = vst.msk [vmem:[#allocation4 + $0x1c] sm:$0xf] %vm514, %v5466
    %5476 = vst.msk [vmem:[#allocation4 + $0x24] sm:$0xf] %vm514, %v5468
    %v5477 = vld [vmem:[#allocation4] sm:$0xff]
    %v5478 = vld [vmem:[#allocation4 + $0x8] sm:$0xff]
    %v5479 = vld [vmem:[#allocation4 + $0x10] sm:$0xff]
    %v5480 = vld [vmem:[#allocation4 + $0x18] sm:$0xff]
    %v5481 = vsel %vm717, %v5477, 0
    %v5482 = vsel %vm718, %v5478, 0
    %v5483 = vsel %vm719, %v5479, 0
    %v5484 = vsel %vm720, %v5480, 0
    %v5485 = vld [vmem:[#allocation10] sm:$0xf]
    %v5486 = vld [vmem:[#allocation10 + $0x4] sm:$0xf]
    %v5487 = vld [vmem:[#allocation10 + $0x8] sm:$0xf]
    %v5488 = vld [vmem:[#allocation10 + $0xc] sm:$0xf]
    %v5489 = vld [vmem:[#allocation10 + $0x10] sm:$0xf]
    %v5490 = vld [vmem:[#allocation10 + $0x14] sm:$0xf]
    %v5491 = vld [vmem:[#allocation10 + $0x18] sm:$0xf]
    %v5492 = vld [vmem:[#allocation10 + $0x1c] sm:$0xf]
    %v5493 = vld [vmem:[#allocation10 + $0x20] sm:$0xf]
    %v5494 = vld [vmem:[#allocation10 + $0x24] sm:$0xf]
    %v5495 = vld [vmem:[#allocation10 + $0x28] sm:$0xf]
    %v5496 = vld [vmem:[#allocation10 + $0x2c] sm:$0xf]
    %v5497 = vld [vmem:[#allocation10 + $0x30] sm:$0xf]
    %v5498 = vld [vmem:[#allocation10 + $0x34] sm:$0xf]
    %v5499 = vld [vmem:[#allocation10 + $0x38] sm:$0xf]
    %v5500 = vld [vmem:[#allocation10 + $0x3c] sm:$0xf]
    %v5501 = vld [vmem:[#allocation10 + $0x40] sm:$0xf]
    %v5502 = vld [vmem:[#allocation10 + $0x44] sm:$0xf]
    %v5503 = vld [vmem:[#allocation10 + $0x48] sm:$0xf]
    %v5504 = vld [vmem:[#allocation10 + $0x4c] sm:$0xf]
    %v5505 = vld [vmem:[#allocation10 + $0x50] sm:$0xf]
    %v5506 = vld [vmem:[#allocation10 + $0x54] sm:$0xf]
    %v5507 = vld [vmem:[#allocation10 + $0x58] sm:$0xf]
    %v5508 = vld [vmem:[#allocation10 + $0x5c] sm:$0xf]
    %v5509 = vld [vmem:[#allocation10 + $0x60] sm:$0xf]
    %v5510 = vld [vmem:[#allocation10 + $0x64] sm:$0xf]
    %v5511 = vld [vmem:[#allocation10 + $0x68] sm:$0xf]
    %v5512 = vld [vmem:[#allocation10 + $0x6c] sm:$0xf]
    %v5513 = vld [vmem:[#allocation10 + $0x70] sm:$0xf]
    %v5514 = vld [vmem:[#allocation10 + $0x74] sm:$0xf]
    %v5515 = vld [vmem:[#allocation10 + $0x78] sm:$0xf]
    %v5516 = vld [vmem:[#allocation10 + $0x7c] sm:$0xf]
    %v5517 = vld [vmem:[#allocation4 + $0x20] sm:$0xff]
    %v5518 = vsel %vm799, %v5478, 0
    %v5519 = vsel %vm800, %v5479, 0
    %v5520 = vsel %vm801, %v5480, 0
    %v5521 = vsel %vm802, %v5517, 0
    %s5522 = scalar_lea.vmem [#allocation10], 128
    %v5523 = vld [vmem:[%s5522] sm:$0xf]
    %v5524 = vld [vmem:[%s5522 + $0x4] sm:$0xf]
    %v5525 = vld [vmem:[%s5522 + $0x8] sm:$0xf]
    %v5526 = vld [vmem:[%s5522 + $0xc] sm:$0xf]
    %v5527 = vld [vmem:[%s5522 + $0x10] sm:$0xf]
    %v5528 = vld [vmem:[%s5522 + $0x14] sm:$0xf]
    %v5529 = vld [vmem:[%s5522 + $0x18] sm:$0xf]
    %v5530 = vld [vmem:[%s5522 + $0x1c] sm:$0xf]
    %v5531 = vld [vmem:[%s5522 + $0x20] sm:$0xf]
    %v5532 = vld [vmem:[%s5522 + $0x24] sm:$0xf]
    %v5533 = vld [vmem:[%s5522 + $0x28] sm:$0xf]
    %v5534 = vld [vmem:[%s5522 + $0x2c] sm:$0xf]
    %v5535 = vld [vmem:[%s5522 + $0x30] sm:$0xf]
    %v5536 = vld [vmem:[%s5522 + $0x34] sm:$0xf]
    %v5537 = vld [vmem:[%s5522 + $0x38] sm:$0xf]
    %v5538 = vld [vmem:[%s5522 + $0x3c] sm:$0xf]
    %v5539 = vld [vmem:[%s5522 + $0x40] sm:$0xf]
    %v5540 = vld [vmem:[%s5522 + $0x44] sm:$0xf]
    %v5541 = vld [vmem:[%s5522 + $0x48] sm:$0xf]
    %v5542 = vld [vmem:[%s5522 + $0x4c] sm:$0xf]
    %v5543 = vld [vmem:[%s5522 + $0x50] sm:$0xf]
    %v5544 = vld [vmem:[%s5522 + $0x54] sm:$0xf]
    %v5545 = vld [vmem:[%s5522 + $0x58] sm:$0xf]
    %v5546 = vld [vmem:[%s5522 + $0x5c] sm:$0xf]
    %v5547 = vld [vmem:[%s5522 + $0x60] sm:$0xf]
    %v5548 = vld [vmem:[%s5522 + $0x64] sm:$0xf]
    %v5549 = vld [vmem:[%s5522 + $0x68] sm:$0xf]
    %v5550 = vld [vmem:[%s5522 + $0x6c] sm:$0xf]
    %v5551 = vld [vmem:[%s5522 + $0x70] sm:$0xf]
    %v5552 = vld [vmem:[%s5522 + $0x74] sm:$0xf]
    %v5553 = vld [vmem:[%s5522 + $0x78] sm:$0xf]
    %v5554 = vld [vmem:[%s5522 + $0x7c] sm:$0xf]
    %v5559 = vunpack.c.l.b16 %v5518
    %v5560 = vunpack.c.h.b16 %v5518
    %v5561 = vunpack.c.l.b16 %v5519
    %v5562 = vunpack.c.h.b16 %v5519
    %v5563 = vunpack.c.l.b16 %v5520
    %v5564 = vunpack.c.h.b16 %v5520
    %v5565 = vunpack.c.l.b16 %v5521
    %v5566 = vunpack.c.h.b16 %v5521
    %v5567 = vpack.c.b16 %v5561, %v5559
    %v5568 = vpack.c.b16 %v5562, %v5560
    %v5569 = vpack.c.b16 %v5565, %v5563
    %v5570 = vpack.c.b16 %v5566, %v5564
    %v5607 = vunpack.c.l.b16 %v5523
    %v5608 = vunpack.c.l.b16 %v5524
    %v5609 = vunpack.c.l.b16 %v5525
    %v5610 = vunpack.c.l.b16 %v5526
    %v5611 = vunpack.c.l.b16 %v5527
    %v5612 = vunpack.c.l.b16 %v5528
    %v5613 = vunpack.c.l.b16 %v5529
    %v5614 = vunpack.c.l.b16 %v5530
    %v5615 = vunpack.c.l.b16 %v5531
    %v5616 = vunpack.c.l.b16 %v5532
    %v5617 = vunpack.c.l.b16 %v5533
    %v5618 = vunpack.c.l.b16 %v5534
    %v5619 = vunpack.c.l.b16 %v5535
    %v5620 = vunpack.c.l.b16 %v5536
    %v5621 = vunpack.c.l.b16 %v5537
    %v5622 = vunpack.c.l.b16 %v5538
    %v5623 = vunpack.c.l.b16 %v5539
    %v5624 = vunpack.c.l.b16 %v5540
    %v5625 = vunpack.c.l.b16 %v5541
    %v5626 = vunpack.c.l.b16 %v5542
    %v5627 = vunpack.c.l.b16 %v5543
    %v5628 = vunpack.c.l.b16 %v5544
    %v5629 = vunpack.c.l.b16 %v5545
    %v5630 = vunpack.c.l.b16 %v5546
    %v5631 = vunpack.c.l.b16 %v5547
    %v5632 = vunpack.c.l.b16 %v5548
    %v5633 = vunpack.c.l.b16 %v5549
    %v5634 = vunpack.c.l.b16 %v5550
    %v5635 = vunpack.c.l.b16 %v5551
    %v5636 = vunpack.c.l.b16 %v5552
    %v5637 = vunpack.c.l.b16 %v5553
    %v5638 = vunpack.c.l.b16 %v5554
    %v5639 = vpack.c.b16 %v5608, %v5607
    %v5640 = vpack.c.b16 %v5610, %v5609
    %v5641 = vpack.c.b16 %v5612, %v5611
    %v5642 = vpack.c.b16 %v5614, %v5613
    %v5643 = vpack.c.b16 %v5616, %v5615
    %v5644 = vpack.c.b16 %v5618, %v5617
    %v5645 = vpack.c.b16 %v5620, %v5619
    %v5646 = vpack.c.b16 %v5622, %v5621
    %v5647 = vpack.c.b16 %v5624, %v5623
    %v5648 = vpack.c.b16 %v5626, %v5625
    %v5649 = vpack.c.b16 %v5628, %v5627
    %v5650 = vpack.c.b16 %v5630, %v5629
    %v5651 = vpack.c.b16 %v5632, %v5631
    %v5652 = vpack.c.b16 %v5634, %v5633
    %v5653 = vpack.c.b16 %v5636, %v5635
    %v5654 = vpack.c.b16 %v5638, %v5637
    %5671 = vmatprep.subr.bf16.mxu0 0
    %5672 = vmatpush1.bf16.msra.mxu0 %v5646
    %5673 = vmatprep.subr.bf16.mxu0 0
    %5674 = vmatpush1.bf16.msra.mxu0 %v5645
    %5675 = vmatprep.subr.bf16.mxu0 0
    %5676 = vmatpush1.bf16.msra.mxu0 %v5644
    %5677 = vmatprep.subr.bf16.mxu0 0
    %5678 = vmatpush1.bf16.msra.mxu0 %v5643
    %5679 = vmatprep.subr.bf16.mxu0 0
    %5680 = vmatpush1.bf16.msra.mxu0 %v5642
    %5681 = vmatprep.subr.bf16.mxu0 0
    %5682 = vmatpush1.bf16.msra.mxu0 %v5641
    %5683 = vmatprep.subr.bf16.mxu0 0
    %5684 = vmatpush1.bf16.msra.mxu0 %v5640
    %5685 = vmatprep.subr.bf16.mxu0 0
    %5686 = vmatpush1.bf16.msra.mxu0 %v5639
    %5687 = vmatprep.subr.bf16.mxu0 0
    %5688 = vmatpush2.bf16.msra.mxu0 %v5654
    %5689 = vmatprep.subr.bf16.mxu0 0
    %5690 = vmatpush2.bf16.msra.mxu0 %v5653
    %5691 = vmatprep.subr.bf16.mxu0 0
    %5692 = vmatpush2.bf16.msra.mxu0 %v5652
    %5693 = vmatprep.subr.bf16.mxu0 0
    %5694 = vmatpush2.bf16.msra.mxu0 %v5651
    %5695 = vmatprep.subr.bf16.mxu0 0
    %5696 = vmatpush2.bf16.msra.mxu0 %v5650
    %5697 = vmatprep.subr.bf16.mxu0 0
    %5698 = vmatpush2.bf16.msra.mxu0 %v5649
    %5699 = vmatprep.subr.bf16.mxu0 0
    %5700 = vmatpush2.bf16.msra.mxu0 %v5648
    %5701 = vmatprep.subr.bf16.mxu0 0
    %5702 = vmatpush2.bf16.msra.mxu0 %v5647
    %5703 = vmatprep.mubr.bf16.mxu0 %v5568
    %5704 = vmatmul.mubr.bf16.gmra.mxu0 %v5567
    %v5705 = vpop.f32.mrf.mxu0
    %v5706 = vadd.f32 0.0, %v5705
    %v5707 = vpop.f32.mrf.mxu0
    %v5708 = vpop.f32.mrf.mxu0
    %v5709 = vadd.f32 0.0, %v5708
    %v5710 = vpop.f32.mrf.mxu0
    %5711 = vmatprep.mubr.bf16.mxu0 %v5570
    %5712 = vmatmul.mubr.bf16.gmra.mxu0 %v5569
    %v5713 = vpop.f32.mrf.mxu0
    %v5714 = vadd.f32 0.0, %v5713
    %v5715 = vpop.f32.mrf.mxu0
    %v5716 = vpop.f32.mrf.mxu0
    %v5717 = vadd.f32 0.0, %v5716
    %v5718 = vpop.f32.mrf.mxu0
    %5719 = vdwg.mxu0
    %v5724 = vunpack.c.l.b16 %v5481
    %v5725 = vunpack.c.h.b16 %v5481
    %v5726 = vunpack.c.l.b16 %v5482
    %v5727 = vunpack.c.h.b16 %v5482
    %v5728 = vunpack.c.l.b16 %v5483
    %v5729 = vunpack.c.h.b16 %v5483
    %v5730 = vunpack.c.l.b16 %v5484
    %v5731 = vunpack.c.h.b16 %v5484
    %v5732 = vpack.c.b16 %v5726, %v5724
    %v5733 = vpack.c.b16 %v5727, %v5725
    %v5734 = vpack.c.b16 %v5730, %v5728
    %v5735 = vpack.c.b16 %v5731, %v5729
    %v5772 = vunpack.c.l.b16 %v5485
    %v5773 = vunpack.c.l.b16 %v5486
    %v5774 = vunpack.c.l.b16 %v5487
    %v5775 = vunpack.c.l.b16 %v5488
    %v5776 = vunpack.c.l.b16 %v5489
    %v5777 = vunpack.c.l.b16 %v5490
    %v5778 = vunpack.c.l.b16 %v5491
    %v5779 = vunpack.c.l.b16 %v5492
    %v5780 = vunpack.c.l.b16 %v5493
    %v5781 = vunpack.c.l.b16 %v5494
    %v5782 = vunpack.c.l.b16 %v5495
    %v5783 = vunpack.c.l.b16 %v5496
    %v5784 = vunpack.c.l.b16 %v5497
    %v5785 = vunpack.c.l.b16 %v5498
    %v5786 = vunpack.c.l.b16 %v5499
    %v5787 = vunpack.c.l.b16 %v5500
    %v5788 = vunpack.c.l.b16 %v5501
    %v5789 = vunpack.c.l.b16 %v5502
    %v5790 = vunpack.c.l.b16 %v5503
    %v5791 = vunpack.c.l.b16 %v5504
    %v5792 = vunpack.c.l.b16 %v5505
    %v5793 = vunpack.c.l.b16 %v5506
    %v5794 = vunpack.c.l.b16 %v5507
    %v5795 = vunpack.c.l.b16 %v5508
    %v5796 = vunpack.c.l.b16 %v5509
    %v5797 = vunpack.c.l.b16 %v5510
    %v5798 = vunpack.c.l.b16 %v5511
    %v5799 = vunpack.c.l.b16 %v5512
    %v5800 = vunpack.c.l.b16 %v5513
    %v5801 = vunpack.c.l.b16 %v5514
    %v5802 = vunpack.c.l.b16 %v5515
    %v5803 = vunpack.c.l.b16 %v5516
    %v5804 = vpack.c.b16 %v5773, %v5772
    %v5805 = vpack.c.b16 %v5775, %v5774
    %v5806 = vpack.c.b16 %v5777, %v5776
    %v5807 = vpack.c.b16 %v5779, %v5778
    %v5808 = vpack.c.b16 %v5781, %v5780
    %v5809 = vpack.c.b16 %v5783, %v5782
    %v5810 = vpack.c.b16 %v5785, %v5784
    %v5811 = vpack.c.b16 %v5787, %v5786
    %v5812 = vpack.c.b16 %v5789, %v5788
    %v5813 = vpack.c.b16 %v5791, %v5790
    %v5814 = vpack.c.b16 %v5793, %v5792
    %v5815 = vpack.c.b16 %v5795, %v5794
    %v5816 = vpack.c.b16 %v5797, %v5796
    %v5817 = vpack.c.b16 %v5799, %v5798
    %v5818 = vpack.c.b16 %v5801, %v5800
    %v5819 = vpack.c.b16 %v5803, %v5802
    %5836 = vmatprep.subr.bf16.mxu0 0
    %5837 = vmatpush1.bf16.msra.mxu0 %v5811
    %5838 = vmatprep.subr.bf16.mxu0 0
    %5839 = vmatpush1.bf16.msra.mxu0 %v5810
    %5840 = vmatprep.subr.bf16.mxu0 0
    %5841 = vmatpush1.bf16.msra.mxu0 %v5809
    %5842 = vmatprep.subr.bf16.mxu0 0
    %5843 = vmatpush1.bf16.msra.mxu0 %v5808
    %5844 = vmatprep.subr.bf16.mxu0 0
    %5845 = vmatpush1.bf16.msra.mxu0 %v5807
    %5846 = vmatprep.subr.bf16.mxu0 0
    %5847 = vmatpush1.bf16.msra.mxu0 %v5806
    %5848 = vmatprep.subr.bf16.mxu0 0
    %5849 = vmatpush1.bf16.msra.mxu0 %v5805
    %5850 = vmatprep.subr.bf16.mxu0 0
    %5851 = vmatpush1.bf16.msra.mxu0 %v5804
    %5852 = vmatprep.subr.bf16.mxu0 0
    %5853 = vmatpush2.bf16.msra.mxu0 %v5819
    %5854 = vmatprep.subr.bf16.mxu0 0
    %5855 = vmatpush2.bf16.msra.mxu0 %v5818
    %5856 = vmatprep.subr.bf16.mxu0 0
    %5857 = vmatpush2.bf16.msra.mxu0 %v5817
    %5858 = vmatprep.subr.bf16.mxu0 0
    %5859 = vmatpush2.bf16.msra.mxu0 %v5816
    %5860 = vmatprep.subr.bf16.mxu0 0
    %5861 = vmatpush2.bf16.msra.mxu0 %v5815
    %5862 = vmatprep.subr.bf16.mxu0 0
    %5863 = vmatpush2.bf16.msra.mxu0 %v5814
    %5864 = vmatprep.subr.bf16.mxu0 0
    %5865 = vmatpush2.bf16.msra.mxu0 %v5813
    %5866 = vmatprep.subr.bf16.mxu0 0
    %5867 = vmatpush2.bf16.msra.mxu0 %v5812
    %5868 = vmatprep.mubr.bf16.mxu0 %v5733
    %5869 = vmatmul.mubr.bf16.gmra.mxu0 %v5732
    %v5870 = vpop.f32.mrf.mxu0
    %v5871 = vadd.f32 %v5706, %v5870
    %v5872 = vpop.f32.mrf.mxu0
    %v5873 = vpop.f32.mrf.mxu0
    %v5874 = vadd.f32 %v5709, %v5873
    %v5875 = vpop.f32.mrf.mxu0
    %5876 = vmatprep.mubr.bf16.mxu0 %v5735
    %5877 = vmatmul.mubr.bf16.gmra.mxu0 %v5734
    %v5878 = vpop.f32.mrf.mxu0
    %v5879 = vadd.f32 %v5714, %v5878
    %v5880 = vpop.f32.mrf.mxu0
    %v5881 = vpop.f32.mrf.mxu0
    %v5882 = vadd.f32 %v5717, %v5881
    %v5883 = vpop.f32.mrf.mxu0
    %5884 = vdwg.mxu0
    %v5885 = vld [vmem:[#allocation4 + $0x10] sm:$0xff]
    %v5886 = vld [vmem:[#allocation4 + $0x18] sm:$0xff]
    %v5887 = vld [vmem:[#allocation4 + $0x20] sm:$0xff]
    %v5888 = vld [vmem:[#allocation4 + $0x28] sm:$0xff]
    %v5889 = vsel %vm1215, %v5885, 0
    %v5890 = vsel %vm1216, %v5886, 0
    %v5891 = vsel %vm1217, %v5887, 0
    %v5892 = vsel %vm1218, %v5888, 0
    %s5893 = scalar_lea.vmem [#allocation10], 256
    %v5894 = vld [vmem:[%s5893] sm:$0xf]
    %v5895 = vld [vmem:[%s5893 + $0x4] sm:$0xf]
    %v5896 = vld [vmem:[%s5893 + $0x8] sm:$0xf]
    %v5897 = vld [vmem:[%s5893 + $0xc] sm:$0xf]
    %v5898 = vld [vmem:[%s5893 + $0x10] sm:$0xf]
    %v5899 = vld [vmem:[%s5893 + $0x14] sm:$0xf]
    %v5900 = vld [vmem:[%s5893 + $0x18] sm:$0xf]
    %v5901 = vld [vmem:[%s5893 + $0x1c] sm:$0xf]
    %v5902 = vld [vmem:[%s5893 + $0x20] sm:$0xf]
    %v5903 = vld [vmem:[%s5893 + $0x24] sm:$0xf]
    %v5904 = vld [vmem:[%s5893 + $0x28] sm:$0xf]
    %v5905 = vld [vmem:[%s5893 + $0x2c] sm:$0xf]
    %v5906 = vld [vmem:[%s5893 + $0x30] sm:$0xf]
    %v5907 = vld [vmem:[%s5893 + $0x34] sm:$0xf]
    %v5908 = vld [vmem:[%s5893 + $0x38] sm:$0xf]
    %v5909 = vld [vmem:[%s5893 + $0x3c] sm:$0xf]
    %v5910 = vld [vmem:[%s5893 + $0x40] sm:$0xf]
    %v5911 = vld [vmem:[%s5893 + $0x44] sm:$0xf]
    %v5912 = vld [vmem:[%s5893 + $0x48] sm:$0xf]
    %v5913 = vld [vmem:[%s5893 + $0x4c] sm:$0xf]
    %v5914 = vld [vmem:[%s5893 + $0x50] sm:$0xf]
    %v5915 = vld [vmem:[%s5893 + $0x54] sm:$0xf]
    %v5916 = vld [vmem:[%s5893 + $0x58] sm:$0xf]
    %v5917 = vld [vmem:[%s5893 + $0x5c] sm:$0xf]
    %v5918 = vld [vmem:[%s5893 + $0x60] sm:$0xf]
    %v5919 = vld [vmem:[%s5893 + $0x64] sm:$0xf]
    %v5920 = vld [vmem:[%s5893 + $0x68] sm:$0xf]
    %v5921 = vld [vmem:[%s5893 + $0x6c] sm:$0xf]
    %v5922 = vld [vmem:[%s5893 + $0x70] sm:$0xf]
    %v5923 = vld [vmem:[%s5893 + $0x74] sm:$0xf]
    %v5924 = vld [vmem:[%s5893 + $0x78] sm:$0xf]
    %v5925 = vld [vmem:[%s5893 + $0x7c] sm:$0xf]
    %v5930 = vunpack.c.l.b16 %v5889
    %v5931 = vunpack.c.h.b16 %v5889
    %v5932 = vunpack.c.l.b16 %v5890
    %v5933 = vunpack.c.h.b16 %v5890
    %v5934 = vunpack.c.l.b16 %v5891
    %v5935 = vunpack.c.h.b16 %v5891
    %v5936 = vunpack.c.l.b16 %v5892
    %v5937 = vunpack.c.h.b16 %v5892
    %v5938 = vpack.c.b16 %v5932, %v5930
    %v5939 = vpack.c.b16 %v5933, %v5931
    %v5940 = vpack.c.b16 %v5936, %v5934
    %v5941 = vpack.c.b16 %v5937, %v5935
    %v5978 = vunpack.c.l.b16 %v5894
    %v5979 = vunpack.c.l.b16 %v5895
    %v5980 = vunpack.c.l.b16 %v5896
    %v5981 = vunpack.c.l.b16 %v5897
    %v5982 = vunpack.c.l.b16 %v5898
    %v5983 = vunpack.c.l.b16 %v5899
    %v5984 = vunpack.c.l.b16 %v5900
    %v5985 = vunpack.c.l.b16 %v5901
    %v5986 = vunpack.c.l.b16 %v5902
    %v5987 = vunpack.c.l.b16 %v5903
    %v5988 = vunpack.c.l.b16 %v5904
    %v5989 = vunpack.c.l.b16 %v5905
    %v5990 = vunpack.c.l.b16 %v5906
    %v5991 = vunpack.c.l.b16 %v5907
    %v5992 = vunpack.c.l.b16 %v5908
    %v5993 = vunpack.c.l.b16 %v5909
    %v5994 = vunpack.c.l.b16 %v5910
    %v5995 = vunpack.c.l.b16 %v5911
    %v5996 = vunpack.c.l.b16 %v5912
    %v5997 = vunpack.c.l.b16 %v5913
    %v5998 = vunpack.c.l.b16 %v5914
    %v5999 = vunpack.c.l.b16 %v5915
    %v6000 = vunpack.c.l.b16 %v5916
    %v6001 = vunpack.c.l.b16 %v5917
    %v6002 = vunpack.c.l.b16 %v5918
    %v6003 = vunpack.c.l.b16 %v5919
    %v6004 = vunpack.c.l.b16 %v5920
    %v6005 = vunpack.c.l.b16 %v5921
    %v6006 = vunpack.c.l.b16 %v5922
    %v6007 = vunpack.c.l.b16 %v5923
    %v6008 = vunpack.c.l.b16 %v5924
    %v6009 = vunpack.c.l.b16 %v5925
    %v6010 = vpack.c.b16 %v5979, %v5978
    %v6011 = vpack.c.b16 %v5981, %v5980
    %v6012 = vpack.c.b16 %v5983, %v5982
    %v6013 = vpack.c.b16 %v5985, %v5984
    %v6014 = vpack.c.b16 %v5987, %v5986
    %v6015 = vpack.c.b16 %v5989, %v5988
    %v6016 = vpack.c.b16 %v5991, %v5990
    %v6017 = vpack.c.b16 %v5993, %v5992
    %v6018 = vpack.c.b16 %v5995, %v5994
    %v6019 = vpack.c.b16 %v5997, %v5996
    %v6020 = vpack.c.b16 %v5999, %v5998
    %v6021 = vpack.c.b16 %v6001, %v6000
    %v6022 = vpack.c.b16 %v6003, %v6002
    %v6023 = vpack.c.b16 %v6005, %v6004
    %v6024 = vpack.c.b16 %v6007, %v6006
    %v6025 = vpack.c.b16 %v6009, %v6008
    %6042 = vmatprep.subr.bf16.mxu0 0
    %6043 = vmatpush1.bf16.msra.mxu0 %v6017
    %6044 = vmatprep.subr.bf16.mxu0 0
    %6045 = vmatpush1.bf16.msra.mxu0 %v6016
    %6046 = vmatprep.subr.bf16.mxu0 0
    %6047 = vmatpush1.bf16.msra.mxu0 %v6015
    %6048 = vmatprep.subr.bf16.mxu0 0
    %6049 = vmatpush1.bf16.msra.mxu0 %v6014
    %6050 = vmatprep.subr.bf16.mxu0 0
    %6051 = vmatpush1.bf16.msra.mxu0 %v6013
    %6052 = vmatprep.subr.bf16.mxu0 0
    %6053 = vmatpush1.bf16.msra.mxu0 %v6012
    %6054 = vmatprep.subr.bf16.mxu0 0
    %6055 = vmatpush1.bf16.msra.mxu0 %v6011
    %6056 = vmatprep.subr.bf16.mxu0 0
    %6057 = vmatpush1.bf16.msra.mxu0 %v6010
    %6058 = vmatprep.subr.bf16.mxu0 0
    %6059 = vmatpush2.bf16.msra.mxu0 %v6025
    %6060 = vmatprep.subr.bf16.mxu0 0
    %6061 = vmatpush2.bf16.msra.mxu0 %v6024
    %6062 = vmatprep.subr.bf16.mxu0 0
    %6063 = vmatpush2.bf16.msra.mxu0 %v6023
    %6064 = vmatprep.subr.bf16.mxu0 0
    %6065 = vmatpush2.bf16.msra.mxu0 %v6022
    %6066 = vmatprep.subr.bf16.mxu0 0
    %6067 = vmatpush2.bf16.msra.mxu0 %v6021
    %6068 = vmatprep.subr.bf16.mxu0 0
    %6069 = vmatpush2.bf16.msra.mxu0 %v6020
    %6070 = vmatprep.subr.bf16.mxu0 0
    %6071 = vmatpush2.bf16.msra.mxu0 %v6019
    %6072 = vmatprep.subr.bf16.mxu0 0
    %6073 = vmatpush2.bf16.msra.mxu0 %v6018
    %6074 = vmatprep.mubr.bf16.mxu0 %v5939
    %6075 = vmatmul.mubr.bf16.gmra.mxu0 %v5938
    %v6076 = vpop.f32.mrf.mxu0
    %v6077 = vadd.f32 0.0, %v6076
    %v6078 = vpop.f32.mrf.mxu0
    %v6079 = vpop.f32.mrf.mxu0
    %v6080 = vadd.f32 0.0, %v6079
    %v6081 = vpop.f32.mrf.mxu0
    %6082 = vmatprep.mubr.bf16.mxu0 %v5941
    %6083 = vmatmul.mubr.bf16.gmra.mxu0 %v5940
    %v6084 = vpop.f32.mrf.mxu0
    %v6085 = vadd.f32 0.0, %v6084
    %v6086 = vpop.f32.mrf.mxu0
    %v6087 = vpop.f32.mrf.mxu0
    %v6088 = vadd.f32 0.0, %v6087
    %v6089 = vpop.f32.mrf.mxu0
    %6090 = vdwg.mxu0
    %v6091 = vadd.f32 %v5871, %v6077
    %v6092 = vadd.f32 %v5874, %v6080
    %v6093 = vadd.f32 %v5879, %v6085
    %v6094 = vadd.f32 %v5882, %v6088
    %v6095 = vld [vmem:[#allocation4 + $0x18] sm:$0xff]
    %v6096 = vld [vmem:[#allocation4 + $0x20] sm:$0xff]
    %v6097 = vld [vmem:[#allocation4 + $0x28] sm:$0xff]
    %v6098 = vld [vmem:[#allocation4 + $0x30] sm:$0xff]
    %v6099 = vsel %vm1470, %v6095, 0
    %v6100 = vsel %vm1471, %v6096, 0
    %v6101 = vsel %vm1472, %v6097, 0
    %v6102 = vsel %vm1473, %v6098, 0
    %s6103 = scalar_lea.vmem [#allocation10], 384
    %v6104 = vld [vmem:[%s6103] sm:$0xf]
    %v6105 = vld [vmem:[%s6103 + $0x4] sm:$0xf]
    %v6106 = vld [vmem:[%s6103 + $0x8] sm:$0xf]
    %v6107 = vld [vmem:[%s6103 + $0xc] sm:$0xf]
    %v6108 = vld [vmem:[%s6103 + $0x10] sm:$0xf]
    %v6109 = vld [vmem:[%s6103 + $0x14] sm:$0xf]
    %v6110 = vld [vmem:[%s6103 + $0x18] sm:$0xf]
    %v6111 = vld [vmem:[%s6103 + $0x1c] sm:$0xf]
    %v6112 = vld [vmem:[%s6103 + $0x20] sm:$0xf]
    %v6113 = vld [vmem:[%s6103 + $0x24] sm:$0xf]
    %v6114 = vld [vmem:[%s6103 + $0x28] sm:$0xf]
    %v6115 = vld [vmem:[%s6103 + $0x2c] sm:$0xf]
    %v6116 = vld [vmem:[%s6103 + $0x30] sm:$0xf]
    %v6117 = vld [vmem:[%s6103 + $0x34] sm:$0xf]
    %v6118 = vld [vmem:[%s6103 + $0x38] sm:$0xf]
    %v6119 = vld [vmem:[%s6103 + $0x3c] sm:$0xf]
    %v6120 = vld [vmem:[%s6103 + $0x40] sm:$0xf]
    %v6121 = vld [vmem:[%s6103 + $0x44] sm:$0xf]
    %v6122 = vld [vmem:[%s6103 + $0x48] sm:$0xf]
    %v6123 = vld [vmem:[%s6103 + $0x4c] sm:$0xf]
    %v6124 = vld [vmem:[%s6103 + $0x50] sm:$0xf]
    %v6125 = vld [vmem:[%s6103 + $0x54] sm:$0xf]
    %v6126 = vld [vmem:[%s6103 + $0x58] sm:$0xf]
    %v6127 = vld [vmem:[%s6103 + $0x5c] sm:$0xf]
    %v6128 = vld [vmem:[%s6103 + $0x60] sm:$0xf]
    %v6129 = vld [vmem:[%s6103 + $0x64] sm:$0xf]
    %v6130 = vld [vmem:[%s6103 + $0x68] sm:$0xf]
    %v6131 = vld [vmem:[%s6103 + $0x6c] sm:$0xf]
    %v6132 = vld [vmem:[%s6103 + $0x70] sm:$0xf]
    %v6133 = vld [vmem:[%s6103 + $0x74] sm:$0xf]
    %v6134 = vld [vmem:[%s6103 + $0x78] sm:$0xf]
    %v6135 = vld [vmem:[%s6103 + $0x7c] sm:$0xf]
    %v6140 = vunpack.c.l.b16 %v6099
    %v6141 = vunpack.c.h.b16 %v6099
    %v6142 = vunpack.c.l.b16 %v6100
    %v6143 = vunpack.c.h.b16 %v6100
    %v6144 = vunpack.c.l.b16 %v6101
    %v6145 = vunpack.c.h.b16 %v6101
    %v6146 = vunpack.c.l.b16 %v6102
    %v6147 = vunpack.c.h.b16 %v6102
    %v6148 = vpack.c.b16 %v6142, %v6140
    %v6149 = vpack.c.b16 %v6143, %v6141
    %v6150 = vpack.c.b16 %v6146, %v6144
    %v6151 = vpack.c.b16 %v6147, %v6145
    %v6188 = vunpack.c.l.b16 %v6104
    %v6189 = vunpack.c.l.b16 %v6105
    %v6190 = vunpack.c.l.b16 %v6106
    %v6191 = vunpack.c.l.b16 %v6107
    %v6192 = vunpack.c.l.b16 %v6108
    %v6193 = vunpack.c.l.b16 %v6109
    %v6194 = vunpack.c.l.b16 %v6110
    %v6195 = vunpack.c.l.b16 %v6111
    %v6196 = vunpack.c.l.b16 %v6112
    %v6197 = vunpack.c.l.b16 %v6113
    %v6198 = vunpack.c.l.b16 %v6114
    %v6199 = vunpack.c.l.b16 %v6115
    %v6200 = vunpack.c.l.b16 %v6116
    %v6201 = vunpack.c.l.b16 %v6117
    %v6202 = vunpack.c.l.b16 %v6118
    %v6203 = vunpack.c.l.b16 %v6119
    %v6204 = vunpack.c.l.b16 %v6120
    %v6205 = vunpack.c.l.b16 %v6121
    %v6206 = vunpack.c.l.b16 %v6122
    %v6207 = vunpack.c.l.b16 %v6123
    %v6208 = vunpack.c.l.b16 %v6124
    %v6209 = vunpack.c.l.b16 %v6125
    %v6210 = vunpack.c.l.b16 %v6126
    %v6211 = vunpack.c.l.b16 %v6127
    %v6212 = vunpack.c.l.b16 %v6128
    %v6213 = vunpack.c.l.b16 %v6129
    %v6214 = vunpack.c.l.b16 %v6130
    %v6215 = vunpack.c.l.b16 %v6131
    %v6216 = vunpack.c.l.b16 %v6132
    %v6217 = vunpack.c.l.b16 %v6133
    %v6218 = vunpack.c.l.b16 %v6134
    %v6219 = vunpack.c.l.b16 %v6135
    %v6220 = vpack.c.b16 %v6189, %v6188
    %v6221 = vpack.c.b16 %v6191, %v6190
    %v6222 = vpack.c.b16 %v6193, %v6192
    %v6223 = vpack.c.b16 %v6195, %v6194
    %v6224 = vpack.c.b16 %v6197, %v6196
    %v6225 = vpack.c.b16 %v6199, %v6198
    %v6226 = vpack.c.b16 %v6201, %v6200
    %v6227 = vpack.c.b16 %v6203, %v6202
    %v6228 = vpack.c.b16 %v6205, %v6204
    %v6229 = vpack.c.b16 %v6207, %v6206
    %v6230 = vpack.c.b16 %v6209, %v6208
    %v6231 = vpack.c.b16 %v6211, %v6210
    %v6232 = vpack.c.b16 %v6213, %v6212
    %v6233 = vpack.c.b16 %v6215, %v6214
    %v6234 = vpack.c.b16 %v6217, %v6216
    %v6235 = vpack.c.b16 %v6219, %v6218
    %6252 = vmatprep.subr.bf16.mxu0 0
    %6253 = vmatpush1.bf16.msra.mxu0 %v6227
    %6254 = vmatprep.subr.bf16.mxu0 0
    %6255 = vmatpush1.bf16.msra.mxu0 %v6226
    %6256 = vmatprep.subr.bf16.mxu0 0
    %6257 = vmatpush1.bf16.msra.mxu0 %v6225
    %6258 = vmatprep.subr.bf16.mxu0 0
    %6259 = vmatpush1.bf16.msra.mxu0 %v6224
    %6260 = vmatprep.subr.bf16.mxu0 0
    %6261 = vmatpush1.bf16.msra.mxu0 %v6223
    %6262 = vmatprep.subr.bf16.mxu0 0
    %6263 = vmatpush1.bf16.msra.mxu0 %v6222
    %6264 = vmatprep.subr.bf16.mxu0 0
    %6265 = vmatpush1.bf16.msra.mxu0 %v6221
    %6266 = vmatprep.subr.bf16.mxu0 0
    %6267 = vmatpush1.bf16.msra.mxu0 %v6220
    %6268 = vmatprep.subr.bf16.mxu0 0
    %6269 = vmatpush2.bf16.msra.mxu0 %v6235
    %6270 = vmatprep.subr.bf16.mxu0 0
    %6271 = vmatpush2.bf16.msra.mxu0 %v6234
    %6272 = vmatprep.subr.bf16.mxu0 0
    %6273 = vmatpush2.bf16.msra.mxu0 %v6233
    %6274 = vmatprep.subr.bf16.mxu0 0
    %6275 = vmatpush2.bf16.msra.mxu0 %v6232
    %6276 = vmatprep.subr.bf16.mxu0 0
    %6277 = vmatpush2.bf16.msra.mxu0 %v6231
    %6278 = vmatprep.subr.bf16.mxu0 0
    %6279 = vmatpush2.bf16.msra.mxu0 %v6230
    %6280 = vmatprep.subr.bf16.mxu0 0
    %6281 = vmatpush2.bf16.msra.mxu0 %v6229
    %6282 = vmatprep.subr.bf16.mxu0 0
    %6283 = vmatpush2.bf16.msra.mxu0 %v6228
    %6284 = vmatprep.mubr.bf16.mxu0 %v6149
    %6285 = vmatmul.mubr.bf16.gmra.mxu0 %v6148
    %v6286 = vpop.f32.mrf.mxu0
    %v6287 = vadd.f32 0.0, %v6286
    %v6288 = vpop.f32.mrf.mxu0
    %v6289 = vpop.f32.mrf.mxu0
    %v6290 = vadd.f32 0.0, %v6289
    %v6291 = vpop.f32.mrf.mxu0
    %6292 = vmatprep.mubr.bf16.mxu0 %v6151
    %6293 = vmatmul.mubr.bf16.gmra.mxu0 %v6150
    %v6294 = vpop.f32.mrf.mxu0
    %v6295 = vadd.f32 0.0, %v6294
    %v6296 = vpop.f32.mrf.mxu0
    %v6297 = vpop.f32.mrf.mxu0
    %v6298 = vadd.f32 0.0, %v6297
    %v6299 = vpop.f32.mrf.mxu0
    %6300 = vdwg.mxu0
    %v6301 = vadd.f32 %v6091, %v6287
    %v6302 = vadd.f32 %v6092, %v6290
    %v6303 = vadd.f32 %v6093, %v6295
    %v6304 = vadd.f32 %v6094, %v6298
    %v6306 = vshrl.u32 %v5087, 16
    %v6308 = vrot.slane %v6306, 7
    %v6309 = vshll.u32 %v5087, 16
    %v6311 = vor.u32 %v6308, %v6309
    %v6313 = vshrl.u32 %v5088, 16
    %v6315 = vrot.slane %v6313, 7
    %v6316 = vshll.u32 %v5088, 16
    %v6318 = vor.u32 %v6315, %v6316
    %v6319 = vsel %vm597, %v6308, %v6318
    %v6321 = vsel %vm1694, %v5059, %v6311
    %v6322 = vrot.slane %v6309, 1
    %v6323 = vor.u32 %v6306, %v6322
    %v6324 = vrot.slane %v6316, 1
    %v6325 = vsel %vm1696, %v6323, %v6324
    %v6326 = vor.u32 %v6313, %v6324
    %v6328 = vpack.c.b16 %v5086, %v5086
    %v6330 = vsel %vm1706, %v6326, %v6328
    %v6332 = vunpack.c.l.b16 %v6321
    %v6333 = vunpack.c.h.b16 %v6321
    %v6334 = vunpack.c.l.b16 %v6319
    %v6335 = vunpack.c.h.b16 %v6319
    %v6336 = vpack.c.b16 %v6332, %v6332
    %v6337 = vpack.c.b16 %v6333, %v6333
    %v6338 = vpack.c.b16 %v6334, %v6334
    %v6339 = vpack.c.b16 %v6335, %v6335
    %v6344 = vsel %vm1728, %v5059, %v6336
    %v6345 = vsel %vm1729, %v5060, %v6337
    %v6346 = vsel %vm1730, %v5061, %v6338
    %v6347 = vsel %vm1731, %v5062, %v6339
    %v6349 = vunpack.c.l.b16 %v6325
    %v6350 = vunpack.c.h.b16 %v6325
    %v6351 = vunpack.c.l.b16 %v6330
    %v6352 = vunpack.c.h.b16 %v6330
    %v6353 = vpack.c.b16 %v6349, %v6349
    %v6354 = vpack.c.b16 %v6350, %v6350
    %v6355 = vpack.c.b16 %v6351, %v6351
    %v6356 = vpack.c.b16 %v6352, %v6352
    %v6361 = vsel %vm1769, %v5059, %v6353
    %v6362 = vsel %vm1770, %v5060, %v6354
    %v6363 = vsel %vm1771, %v5061, %v6355
    %v6364 = vsel %vm1772, %v5062, %v6356
    %v6365 = vmax.bf16 %v6344, %v5059
    %v6366 = vmax.bf16 %v6345, %v5060
    %v6367 = vmax.bf16 %v6346, %v5061
    %v6368 = vmax.bf16 %v6347, %v5062
    %v6369 = vmax.bf16 %v6365, %v6361
    %v6370 = vmax.bf16 %v6366, %v6362
    %v6371 = vmax.bf16 %v6367, %v6363
    %v6372 = vmax.bf16 %v6368, %v6364
    %v6373 = vld [vmem:[%s41] sm:$0xf]
    %v6374 = vld [vmem:[%s41 + $0x4] sm:$0xf]
    %v6375 = vld [vmem:[%s41 + $0x8] sm:$0xf]
    %v6376 = vld [vmem:[%s41 + $0xc] sm:$0xf]
    %v6377 = vld [vmem:[%s41 + $0x10] sm:$0xf]
    %v6378 = vld [vmem:[%s41 + $0x14] sm:$0xf]
    %v6379 = vld [vmem:[%s41 + $0x18] sm:$0xf]
    %v6380 = vld [vmem:[%s41 + $0x1c] sm:$0xf]
    %v6381 = vld [vmem:[%s41 + $0x20] sm:$0xf]
    %v6382 = vld [vmem:[%s41 + $0x24] sm:$0xf]
    %v6383 = vld [vmem:[%s41 + $0x28] sm:$0xf]
    %v6384 = vld [vmem:[%s41 + $0x2c] sm:$0xf]
    %v6385 = vld [vmem:[%s41 + $0x30] sm:$0xf]
    %v6386 = vld [vmem:[%s41 + $0x34] sm:$0xf]
    %v6387 = vld [vmem:[%s41 + $0x38] sm:$0xf]
    %v6388 = vld [vmem:[%s41 + $0x3c] sm:$0xf]
    %v6393 = vunpack.c.l.b16 %v6369
    %v6394 = vunpack.c.l.b16 %v6370
    %v6395 = vunpack.c.l.b16 %v6371
    %v6396 = vunpack.c.l.b16 %v6372
    %v6397 = vpack.c.b16 %v6394, %v6393
    %v6398 = vpack.c.b16 %v6396, %v6395
    %v6417 = vunpack.c.l.b16 %v6373
    %v6418 = vunpack.c.l.b16 %v6374
    %v6419 = vunpack.c.l.b16 %v6375
    %v6420 = vunpack.c.l.b16 %v6376
    %v6421 = vunpack.c.l.b16 %v6377
    %v6422 = vunpack.c.l.b16 %v6378
    %v6423 = vunpack.c.l.b16 %v6379
    %v6424 = vunpack.c.l.b16 %v6380
    %v6425 = vunpack.c.l.b16 %v6381
    %v6426 = vunpack.c.l.b16 %v6382
    %v6427 = vunpack.c.l.b16 %v6383
    %v6428 = vunpack.c.l.b16 %v6384
    %v6429 = vunpack.c.l.b16 %v6385
    %v6430 = vunpack.c.l.b16 %v6386
    %v6431 = vunpack.c.l.b16 %v6387
    %v6432 = vunpack.c.l.b16 %v6388
    %v6433 = vpack.c.b16 %v6418, %v6417
    %v6434 = vpack.c.b16 %v6420, %v6419
    %v6435 = vpack.c.b16 %v6422, %v6421
    %v6436 = vpack.c.b16 %v6424, %v6423
    %v6437 = vpack.c.b16 %v6426, %v6425
    %v6438 = vpack.c.b16 %v6428, %v6427
    %v6439 = vpack.c.b16 %v6430, %v6429
    %v6440 = vpack.c.b16 %v6432, %v6431
    %6449 = vmatprep.subr.bf16.mxu0 0
    %6450 = vmatpush1.bf16.msra.mxu0 %v6440
    %6451 = vmatprep.subr.bf16.mxu0 0
    %6452 = vmatpush1.bf16.msra.mxu0 %v6439
    %6453 = vmatprep.subr.bf16.mxu0 0
    %6454 = vmatpush1.bf16.msra.mxu0 %v6438
    %6455 = vmatprep.subr.bf16.mxu0 0
    %6456 = vmatpush1.bf16.msra.mxu0 %v6437
    %6457 = vmatprep.subr.bf16.mxu0 0
    %6458 = vmatpush1.bf16.msra.mxu0 %v6436
    %6459 = vmatprep.subr.bf16.mxu0 0
    %6460 = vmatpush1.bf16.msra.mxu0 %v6435
    %6461 = vmatprep.subr.bf16.mxu0 0
    %6462 = vmatpush1.bf16.msra.mxu0 %v6434
    %6463 = vmatprep.subr.bf16.mxu0 0
    %6464 = vmatpush1.bf16.msra.mxu0 %v6433
    %6465 = vmatprep.subr.bf16.mxu0 0
    %6466 = vmatpush2.bf16.msra.mxu0 0
    %6467 = vmatprep.subr.bf16.mxu0 0
    %6468 = vmatpush2.bf16.msra.mxu0 0
    %6469 = vmatprep.subr.bf16.mxu0 0
    %6470 = vmatpush2.bf16.msra.mxu0 0
    %6471 = vmatprep.subr.bf16.mxu0 0
    %6472 = vmatpush2.bf16.msra.mxu0 0
    %6473 = vmatprep.subr.bf16.mxu0 0
    %6474 = vmatpush2.bf16.msra.mxu0 0
    %6475 = vmatprep.subr.bf16.mxu0 0
    %6476 = vmatpush2.bf16.msra.mxu0 0
    %6477 = vmatprep.subr.bf16.mxu0 0
    %6478 = vmatpush2.bf16.msra.mxu0 0
    %6479 = vmatprep.subr.bf16.mxu0 0
    %6480 = vmatpush2.bf16.msra.mxu0 0
    %6481 = vmatprep.mubr.bf16.mxu0 0
    %6482 = vmatmul.mubr.bf16.gmra.mxu0 %v6397
    %v6483 = vpop.f32.mrf.mxu0
    %v6484 = vadd.f32 0.0, %v6483
    %v6485 = vpop.f32.mrf.mxu0
    %v6486 = vpop.f32.mrf.mxu0
    %v6487 = vadd.f32 0.0, %v6486
    %v6488 = vpop.f32.mrf.mxu0
    %6489 = vmatprep.mubr.bf16.mxu0 0
    %6490 = vmatmul.mubr.bf16.gmra.mxu0 %v6398
    %v6491 = vpop.f32.mrf.mxu0
    %v6492 = vadd.f32 0.0, %v6491
    %v6493 = vpop.f32.mrf.mxu0
    %v6494 = vpop.f32.mrf.mxu0
    %v6495 = vadd.f32 0.0, %v6494
    %v6496 = vpop.f32.mrf.mxu0
    %6497 = vdwg.mxu0
    %6502 = vrot.lane.b32.xlu0 %v6484, 96
    %v6503 = vpop.permute.xlu0 %6502
    %6504 = vrot.lane.b32.xlu0 %v6487, 96
    %v6505 = vpop.permute.xlu0 %6504
    %6506 = vrot.lane.b32.xlu0 %v6492, 96
    %v6507 = vpop.permute.xlu0 %6506
    %6508 = vrot.lane.b32.xlu0 %v6495, 96
    %v6509 = vpop.permute.xlu0 %6508
    %v6514 = vadd.f32 %v6301, %v6503
    %v6515 = vadd.f32 %v6302, %v6505
    %v6516 = vadd.f32 %v6303, %v6507
    %v6517 = vadd.f32 %v6304, %v6509
    %v6518 = vsel %vm1887, %v6301, %v6514
    %v6519 = vsel %vm1887, %v6302, %v6515
    %v6520 = vsel %vm1887, %v6303, %v6516
    %v6521 = vsel %vm1887, %v6304, %v6517
    %v6522 = vld [vmem:[%s43] sm:$0x1]
    %v6524 = vlaneseq
    %v6525 = vshrl.u32 %v6524, 7
    %v6526 = vsub.s32 0, %v6525
    %v6527 = vrot.slane %v6522, %v6526
    %v6529 = vmul.f32 %v6518, %v6527
    %v6530 = vmul.f32 %v6519, %v6527
    %v6531 = vmul.f32 %v6520, %v6527
    %v6532 = vmul.f32 %v6521, %v6527
    %v6533 = vld [vmem:[%s45] sm:$0x1]
    %v6535 = vlaneseq
    %v6536 = vshrl.u32 %v6535, 7
    %v6537 = vsub.s32 0, %v6536
    %v6538 = vrot.slane %v6533, %v6537
    %v6540 = vadd.f32 %v6529, %v6538
    %v6541 = vadd.f32 %v6530, %v6538
    %v6542 = vadd.f32 %v6531, %v6538
    %v6543 = vadd.f32 %v6532, %v6538
    %v6544 = vmax.f32 %v6540, 0.0
    %v6545 = vmax.f32 %v6541, 0.0
    %v6546 = vmax.f32 %v6542, 0.0
    %v6547 = vmax.f32 %v6543, 0.0
    %v6548 = vpack.c.bf16 %v6545, %v6544
    %v6549 = vpack.c.bf16 %v6547, %v6546
    %v6552 = vunpack.c.l.b16 %v6548
    %v6553 = vunpack.c.h.b16 %v6548
    %v6554 = vunpack.c.l.b16 %v6549
    %v6555 = vunpack.c.h.b16 %v6549
    %v6556 = vpack.c.b16 %v6552, %v6552
    %v6557 = vpack.c.b16 %v6553, %v6553
    %v6558 = vpack.c.b16 %v6554, %v6554
    %v6559 = vpack.c.b16 %v6555, %v6555
    %6564 = vst [vmem:[#allocation3] sm:$0xf] %v6556
    %6565 = vst [vmem:[#allocation3 + $0x4] sm:$0xf] %v6557
    %6566 = vst [vmem:[#allocation3 + $0x8] sm:$0xf] %v6558
    %6567 = vst [vmem:[#allocation3 + $0xc] sm:$0xf] %v6559
    %v6568 = vld [vmem:[#allocation3] sm:$0xf]
    %v6569 = vld [vmem:[#allocation3 + $0x4] sm:$0xf]
    %v6570 = vld [vmem:[#allocation3 + $0x8] sm:$0xf]
    %v6571 = vld [vmem:[#allocation3 + $0xc] sm:$0xf]
    %v6572 = vld [vmem:[%s47] sm:$0xf]
    %v6573 = vld [vmem:[%s47 + $0x4] sm:$0xf]
    %v6574 = vld [vmem:[%s47 + $0x8] sm:$0xf]
    %v6575 = vld [vmem:[%s47 + $0xc] sm:$0xf]
    %v6576 = vld [vmem:[%s47 + $0x10] sm:$0xf]
    %v6577 = vld [vmem:[%s47 + $0x14] sm:$0xf]
    %v6578 = vld [vmem:[%s47 + $0x18] sm:$0xf]
    %v6579 = vld [vmem:[%s47 + $0x1c] sm:$0xf]
    %v6580 = vld [vmem:[%s47 + $0x20] sm:$0xf]
    %v6581 = vld [vmem:[%s47 + $0x24] sm:$0xf]
    %v6582 = vld [vmem:[%s47 + $0x28] sm:$0xf]
    %v6583 = vld [vmem:[%s47 + $0x2c] sm:$0xf]
    %v6584 = vld [vmem:[%s47 + $0x30] sm:$0xf]
    %v6585 = vld [vmem:[%s47 + $0x34] sm:$0xf]
    %v6586 = vld [vmem:[%s47 + $0x38] sm:$0xf]
    %v6587 = vld [vmem:[%s47 + $0x3c] sm:$0xf]
    %v6592 = vunpack.c.l.b16 %v6568
    %v6593 = vunpack.c.l.b16 %v6569
    %v6594 = vunpack.c.l.b16 %v6570
    %v6595 = vunpack.c.l.b16 %v6571
    %v6596 = vpack.c.b16 %v6593, %v6592
    %v6597 = vpack.c.b16 %v6595, %v6594
    %v6616 = vunpack.c.l.b16 %v6572
    %v6617 = vunpack.c.l.b16 %v6573
    %v6618 = vunpack.c.l.b16 %v6574
    %v6619 = vunpack.c.l.b16 %v6575
    %v6620 = vunpack.c.l.b16 %v6576
    %v6621 = vunpack.c.l.b16 %v6577
    %v6622 = vunpack.c.l.b16 %v6578
    %v6623 = vunpack.c.l.b16 %v6579
    %v6624 = vunpack.c.l.b16 %v6580
    %v6625 = vunpack.c.l.b16 %v6581
    %v6626 = vunpack.c.l.b16 %v6582
    %v6627 = vunpack.c.l.b16 %v6583
    %v6628 = vunpack.c.l.b16 %v6584
    %v6629 = vunpack.c.l.b16 %v6585
    %v6630 = vunpack.c.l.b16 %v6586
    %v6631 = vunpack.c.l.b16 %v6587
    %v6632 = vpack.c.b16 %v6617, %v6616
    %v6633 = vpack.c.b16 %v6619, %v6618
    %v6634 = vpack.c.b16 %v6621, %v6620
    %v6635 = vpack.c.b16 %v6623, %v6622
    %v6636 = vpack.c.b16 %v6625, %v6624
    %v6637 = vpack.c.b16 %v6627, %v6626
    %v6638 = vpack.c.b16 %v6629, %v6628
    %v6639 = vpack.c.b16 %v6631, %v6630
    %6648 = vmatprep.subr.bf16.mxu0 0
    %6649 = vmatpush1.bf16.msra.mxu0 %v6639
    %6650 = vmatprep.subr.bf16.mxu0 0
    %6651 = vmatpush1.bf16.msra.mxu0 %v6638
    %6652 = vmatprep.subr.bf16.mxu0 0
    %6653 = vmatpush1.bf16.msra.mxu0 %v6637
    %6654 = vmatprep.subr.bf16.mxu0 0
    %6655 = vmatpush1.bf16.msra.mxu0 %v6636
    %6656 = vmatprep.subr.bf16.mxu0 0
    %6657 = vmatpush1.bf16.msra.mxu0 %v6635
    %6658 = vmatprep.subr.bf16.mxu0 0
    %6659 = vmatpush1.bf16.msra.mxu0 %v6634
    %6660 = vmatprep.subr.bf16.mxu0 0
    %6661 = vmatpush1.bf16.msra.mxu0 %v6633
    %6662 = vmatprep.subr.bf16.mxu0 0
    %6663 = vmatpush1.bf16.msra.mxu0 %v6632
    %6664 = vmatprep.subr.bf16.mxu0 0
    %6665 = vmatpush2.bf16.msra.mxu0 0
    %6666 = vmatprep.subr.bf16.mxu0 0
    %6667 = vmatpush2.bf16.msra.mxu0 0
    %6668 = vmatprep.subr.bf16.mxu0 0
    %6669 = vmatpush2.bf16.msra.mxu0 0
    %6670 = vmatprep.subr.bf16.mxu0 0
    %6671 = vmatpush2.bf16.msra.mxu0 0
    %6672 = vmatprep.subr.bf16.mxu0 0
    %6673 = vmatpush2.bf16.msra.mxu0 0
    %6674 = vmatprep.subr.bf16.mxu0 0
    %6675 = vmatpush2.bf16.msra.mxu0 0
    %6676 = vmatprep.subr.bf16.mxu0 0
    %6677 = vmatpush2.bf16.msra.mxu0 0
    %6678 = vmatprep.subr.bf16.mxu0 0
    %6679 = vmatpush2.bf16.msra.mxu0 0
    %6680 = vmatprep.mubr.bf16.mxu0 0
    %6681 = vmatmul.mubr.bf16.gmra.mxu0 %v6596
    %v6682 = vpop.f32.mrf.mxu0
    %v6683 = vadd.f32 0.0, %v6682
    %v6684 = vpop.f32.mrf.mxu0
    %v6685 = vpop.f32.mrf.mxu0
    %v6686 = vadd.f32 0.0, %v6685
    %v6687 = vpop.f32.mrf.mxu0
    %6688 = vmatprep.mubr.bf16.mxu0 0
    %6689 = vmatmul.mubr.bf16.gmra.mxu0 %v6597
    %v6690 = vpop.f32.mrf.mxu0
    %v6691 = vadd.f32 0.0, %v6690
    %v6692 = vpop.f32.mrf.mxu0
    %v6693 = vpop.f32.mrf.mxu0
    %v6694 = vadd.f32 0.0, %v6693
    %v6695 = vpop.f32.mrf.mxu0
    %6696 = vdwg.mxu0
    %v6697 = vpack.c.bf16 %v6686, %v6683
    %v6698 = vpack.c.bf16 %v6694, %v6691
    %v6701 = vunpack.c.l.b16 %v6697
    %v6702 = vunpack.c.h.b16 %v6697
    %v6703 = vunpack.c.l.b16 %v6698
    %v6704 = vunpack.c.h.b16 %v6698
    %v6705 = vpack.c.b16 %v6701, %v6701
    %v6706 = vpack.c.b16 %v6702, %v6702
    %v6707 = vpack.c.b16 %v6703, %v6703
    %v6708 = vpack.c.b16 %v6704, %v6704
    %v6710 = vshll.u32 %v6705, 16
    %v6712 = vrot.slane %v6710, 5
    %v6713 = vshrl.u32 %v6705, 16
    %v6715 = vrot.slane %v6713, 4
    %v6716 = vor.u32 %v6715, %v6712
    %v6717 = vrot.slane %v6716, 4
    %v6719 = vshll.u32 %v6706, 16
    %v6721 = vrot.slane %v6719, 5
    %v6722 = vsel %vm334, %v6717, %v6721
    %v6723 = vshrl.u32 %v6706, 16
    %v6725 = vrot.slane %v6723, 4
    %v6726 = vor.u32 %v6725, %v6721
    %v6727 = vrot.slane %v6726, 4
    %v6729 = vshll.u32 %v6707, 16
    %v6731 = vrot.slane %v6729, 5
    %v6732 = vsel %vm334, %v6727, %v6731
    %v6733 = vshrl.u32 %v6707, 16
    %v6735 = vrot.slane %v6733, 4
    %v6736 = vor.u32 %v6735, %v6731
    %v6737 = vrot.slane %v6736, 4
    %v6739 = vshll.u32 %v6708, 16
    %v6741 = vrot.slane %v6739, 5
    %v6742 = vsel %vm334, %v6737, %v6741
    %v6743 = vshrl.u32 %v6708, 16
    %v6745 = vrot.slane %v6743, 4
    %v6746 = vor.u32 %v6745, %v6741
    %v6747 = vrot.slane %v6746, 4
    %v6753 = vld [vmem:[#allocation4 + $0x8] sm:$0x8]
    %v6754 = vsel %vm381, %v6712, %v6753
    %6755 = vst [vmem:[#allocation4 + $0x8] sm:$0x8] %v6754
    %6756 = vst.msk [vmem:[#allocation4 + $0x10] sm:$0xf] %vm385, %v6722
    %6757 = vst.msk [vmem:[#allocation4 + $0x18] sm:$0xf] %vm385, %v6732
    %6758 = vst.msk [vmem:[#allocation4 + $0x20] sm:$0xf] %vm385, %v6742
    %v6759 = vld [vmem:[#allocation4 + $0x28] sm:$0xf]
    %v6760 = vsel %vm390, %v6747, %v6759
    %6761 = vst [vmem:[#allocation4 + $0x28] sm:$0xf] %v6760
    %v6762 = vrot.slane %v6705, 5
    %v6763 = vrot.slane %v6762, 4
    %v6764 = vrot.slane %v6706, 5
    %v6765 = vsel %vm396, %v6763, %v6764
    %v6766 = vrot.slane %v6764, 4
    %v6767 = vrot.slane %v6707, 5
    %v6768 = vsel %vm396, %v6766, %v6767
    %v6769 = vrot.slane %v6767, 4
    %v6770 = vrot.slane %v6708, 5
    %v6771 = vsel %vm396, %v6769, %v6770
    %v6772 = vrot.slane %v6770, 4
    %6773 = vrot.lane.b32.xlu0 %v6762, 32
    %v6774 = vpop.permute.xlu0 %6773
    %6775 = vrot.lane.b32.xlu0 %v6765, 32
    %v6776 = vpop.permute.xlu0 %6775
    %6777 = vrot.lane.b32.xlu0 %v6768, 32
    %v6778 = vpop.permute.xlu0 %6777
    %6779 = vrot.lane.b32.xlu0 %v6771, 32
    %v6780 = vpop.permute.xlu0 %6779
    %6781 = vrot.lane.b32.xlu0 %v6772, 32
    %v6782 = vpop.permute.xlu0 %6781
    %6788 = vst.msk [vmem:[#allocation4 + $0x8] sm:$0x8] %vm423, %v6774
    %6789 = vst.msk [vmem:[#allocation4 + $0x10] sm:$0xf] %vm425, %v6776
    %6790 = vst.msk [vmem:[#allocation4 + $0x18] sm:$0xf] %vm425, %v6778
    %6791 = vst.msk [vmem:[#allocation4 + $0x20] sm:$0xf] %vm425, %v6780
    %6792 = vst.msk [vmem:[#allocation4 + $0x28] sm:$0x7] %vm429, %v6782
    %v6793 = vrot.slane %v6713, 5
    %v6794 = vrot.slane %v6710, 6
    %v6795 = vor.u32 %v6793, %v6794
    %v6796 = vrot.slane %v6795, 4
    %v6797 = vrot.slane %v6723, 5
    %v6798 = vrot.slane %v6719, 6
    %v6799 = vor.u32 %v6797, %v6798
    %v6800 = vsel %vm433, %v6796, %v6799
    %v6801 = vrot.slane %v6799, 4
    %v6802 = vrot.slane %v6733, 5
    %v6803 = vrot.slane %v6729, 6
    %v6804 = vor.u32 %v6802, %v6803
    %v6805 = vsel %vm433, %v6801, %v6804
    %v6806 = vrot.slane %v6804, 4
    %v6807 = vrot.slane %v6743, 5
    %v6808 = vrot.slane %v6739, 6
    %v6809 = vor.u32 %v6807, %v6808
    %v6810 = vsel %vm433, %v6806, %v6809
    %v6811 = vrot.slane %v6809, 4
    %6812 = vrot.lane.b32.xlu0 %v6795, 64
    %v6813 = vpop.permute.xlu0 %6812
    %6814 = vrot.lane.b32.xlu0 %v6800, 64
    %v6815 = vpop.permute.xlu0 %6814
    %6816 = vrot.lane.b32.xlu0 %v6805, 64
    %v6817 = vpop.permute.xlu0 %6816
    %6818 = vrot.lane.b32.xlu0 %v6810, 64
    %v6819 = vpop.permute.xlu0 %6818
    %6820 = vrot.lane.b32.xlu0 %v6811, 64
    %v6821 = vpop.permute.xlu0 %6820
    %v6827 = vld [vmem:[#allocation4 + $0x8] sm:$0xc]
    %v6828 = vsel %vm470, %v6813, %v6827
    %6829 = vst [vmem:[#allocation4 + $0x8] sm:$0xc] %v6828
    %6830 = vst.msk [vmem:[#allocation4 + $0x10] sm:$0xf] %vm474, %v6815
    %6831 = vst.msk [vmem:[#allocation4 + $0x18] sm:$0xf] %vm474, %v6817
    %6832 = vst.msk [vmem:[#allocation4 + $0x20] sm:$0xf] %vm474, %v6819
    %v6833 = vld [vmem:[#allocation4 + $0x28] sm:$0x7]
    %v6834 = vsel %vm479, %v6821, %v6833
    %6835 = vst [vmem:[#allocation4 + $0x28] sm:$0x7] %v6834
    %v6836 = vrot.slane %v6705, 6
    %v6837 = vrot.slane %v6836, 4
    %v6838 = vrot.slane %v6706, 6
    %v6839 = vsel %vm485, %v6837, %v6838
    %v6840 = vrot.slane %v6838, 4
    %v6841 = vrot.slane %v6707, 6
    %v6842 = vsel %vm485, %v6840, %v6841
    %v6843 = vrot.slane %v6841, 4
    %v6844 = vrot.slane %v6708, 6
    %v6845 = vsel %vm485, %v6843, %v6844
    %v6846 = vrot.slane %v6844, 4
    %6847 = vrot.lane.b32.xlu0 %v6836, 96
    %v6848 = vpop.permute.xlu0 %6847
    %6849 = vrot.lane.b32.xlu0 %v6839, 96
    %v6850 = vpop.permute.xlu0 %6849
    %6851 = vrot.lane.b32.xlu0 %v6842, 96
    %v6852 = vpop.permute.xlu0 %6851
    %6853 = vrot.lane.b32.xlu0 %v6845, 96
    %v6854 = vpop.permute.xlu0 %6853
    %6855 = vrot.lane.b32.xlu0 %v6846, 96
    %v6856 = vpop.permute.xlu0 %6855
    %6862 = vst.msk [vmem:[#allocation4 + $0x8] sm:$0xc] %vm512, %v6848
    %6863 = vst.msk [vmem:[#allocation4 + $0x10] sm:$0xf] %vm514, %v6850
    %6864 = vst.msk [vmem:[#allocation4 + $0x18] sm:$0xf] %vm514, %v6852
    %6865 = vst.msk [vmem:[#allocation4 + $0x20] sm:$0xf] %vm514, %v6854
    %6866 = vst.msk [vmem:[#allocation4 + $0x28] sm:$0x3] %vm518, %v6856
    %v6867 = vrot.slane %v6713, 6
    %v6868 = vrot.slane %v6710, 7
    %v6869 = vor.u32 %v6867, %v6868
    %v6870 = vrot.slane %v6869, 4
    %v6871 = vrot.slane %v6723, 6
    %v6872 = vrot.slane %v6719, 7
    %v6873 = vor.u32 %v6871, %v6872
    %v6874 = vsel %vm522, %v6870, %v6873
    %v6875 = vrot.slane %v6873, 4
    %v6876 = vrot.slane %v6733, 6
    %v6877 = vrot.slane %v6729, 7
    %v6878 = vor.u32 %v6876, %v6877
    %v6879 = vsel %vm522, %v6875, %v6878
    %v6880 = vrot.slane %v6878, 4
    %v6881 = vrot.slane %v6743, 6
    %v6882 = vrot.slane %v6739, 7
    %v6883 = vor.u32 %v6881, %v6882
    %v6884 = vsel %vm522, %v6880, %v6883
    %v6885 = vrot.slane %v6883, 4
    %v6891 = vld [vmem:[#allocation4 + $0xc] sm:$0xe]
    %v6892 = vsel %vm549, %v6869, %v6891
    %6893 = vst [vmem:[#allocation4 + $0xc] sm:$0xe] %v6892
    %6894 = vst.msk [vmem:[#allocation4 + $0x14] sm:$0xf] %vm385, %v6874
    %6895 = vst.msk [vmem:[#allocation4 + $0x1c] sm:$0xf] %vm385, %v6879
    %6896 = vst.msk [vmem:[#allocation4 + $0x24] sm:$0xf] %vm385, %v6884
    %v6897 = vld [vmem:[#allocation4 + $0x2c] sm:$0x3]
    %v6898 = vsel %vm557, %v6885, %v6897
    %6899 = vst [vmem:[#allocation4 + $0x2c] sm:$0x3] %v6898
    %v6900 = vrot.slane %v6705, 7
    %v6901 = vrot.slane %v6900, 4
    %v6902 = vrot.slane %v6706, 7
    %v6903 = vsel %vm563, %v6901, %v6902
    %v6904 = vrot.slane %v6902, 4
    %v6905 = vrot.slane %v6707, 7
    %v6906 = vsel %vm563, %v6904, %v6905
    %v6907 = vrot.slane %v6905, 4
    %v6908 = vrot.slane %v6708, 7
    %v6909 = vsel %vm563, %v6907, %v6908
    %v6910 = vrot.slane %v6908, 4
    %6911 = vrot.lane.b32.xlu0 %v6900, 32
    %v6912 = vpop.permute.xlu0 %6911
    %6913 = vrot.lane.b32.xlu0 %v6903, 32
    %v6914 = vpop.permute.xlu0 %6913
    %6915 = vrot.lane.b32.xlu0 %v6906, 32
    %v6916 = vpop.permute.xlu0 %6915
    %6917 = vrot.lane.b32.xlu0 %v6909, 32
    %v6918 = vpop.permute.xlu0 %6917
    %6919 = vrot.lane.b32.xlu0 %v6910, 32
    %v6920 = vpop.permute.xlu0 %6919
    %6926 = vst.msk [vmem:[#allocation4 + $0xc] sm:$0xe] %vm590, %v6912
    %6927 = vst.msk [vmem:[#allocation4 + $0x14] sm:$0xf] %vm425, %v6914
    %6928 = vst.msk [vmem:[#allocation4 + $0x1c] sm:$0xf] %vm425, %v6916
    %6929 = vst.msk [vmem:[#allocation4 + $0x24] sm:$0xf] %vm425, %v6918
    %6930 = vst.msk [vmem:[#allocation4 + $0x2c] sm:$0x1] %vm595, %v6920
    %v6931 = vrot.slane %v6713, 7
    %v6932 = vor.u32 %v6931, %v6710
    %v6933 = vrot.slane %v6931, 4
    %v6934 = vrot.slane %v6723, 7
    %v6935 = vor.u32 %v6934, %v6719
    %v6936 = vsel %vm599, %v6933, %v6935
    %v6937 = vrot.slane %v6934, 4
    %v6938 = vrot.slane %v6733, 7
    %v6939 = vor.u32 %v6938, %v6729
    %v6940 = vsel %vm599, %v6937, %v6939
    %v6941 = vrot.slane %v6938, 4
    %v6942 = vrot.slane %v6743, 7
    %v6943 = vor.u32 %v6942, %v6739
    %v6944 = vsel %vm599, %v6941, %v6943
    %v6945 = vrot.slane %v6942, 4
    %6946 = vrot.lane.b32.xlu0 %v6932, 64
    %v6947 = vpop.permute.xlu0 %6946
    %6948 = vrot.lane.b32.xlu0 %v6936, 64
    %v6949 = vpop.permute.xlu0 %6948
    %6950 = vrot.lane.b32.xlu0 %v6940, 64
    %v6951 = vpop.permute.xlu0 %6950
    %6952 = vrot.lane.b32.xlu0 %v6944, 64
    %v6953 = vpop.permute.xlu0 %6952
    %6954 = vrot.lane.b32.xlu0 %v6945, 64
    %v6955 = vpop.permute.xlu0 %6954
    %v6961 = vld [vmem:[#allocation4 + $0xc] sm:$0xf]
    %v6962 = vsel %vm632, %v6947, %v6961
    %6963 = vst [vmem:[#allocation4 + $0xc] sm:$0xf] %v6962
    %6964 = vst.msk [vmem:[#allocation4 + $0x14] sm:$0xf] %vm474, %v6949
    %6965 = vst.msk [vmem:[#allocation4 + $0x1c] sm:$0xf] %vm474, %v6951
    %6966 = vst.msk [vmem:[#allocation4 + $0x24] sm:$0xf] %vm474, %v6953
    %v6967 = vld [vmem:[#allocation4 + $0x2c] sm:$0x1]
    %v6968 = vsel %vm640, %v6955, %v6967
    %6969 = vst [vmem:[#allocation4 + $0x2c] sm:$0x1] %v6968
    %6970 = vrot.lane.b32.xlu0 %v6705, 96
    %v6971 = vpop.permute.xlu0 %6970
    %6972 = vrot.lane.b32.xlu0 %v6706, 96
    %v6973 = vpop.permute.xlu0 %6972
    %6974 = vrot.lane.b32.xlu0 %v6707, 96
    %v6975 = vpop.permute.xlu0 %6974
    %6976 = vrot.lane.b32.xlu0 %v6708, 96
    %v6977 = vpop.permute.xlu0 %6976
    %6982 = vst.msk [vmem:[#allocation4 + $0xc] sm:$0xf] %vm514, %v6971
    %6983 = vst.msk [vmem:[#allocation4 + $0x14] sm:$0xf] %vm514, %v6973
    %6984 = vst.msk [vmem:[#allocation4 + $0x1c] sm:$0xf] %vm514, %v6975
    %6985 = vst.msk [vmem:[#allocation4 + $0x24] sm:$0xf] %vm514, %v6977
    %v6986 = vld [vmem:[#allocation4] sm:$0xff]
    %v6987 = vld [vmem:[#allocation4 + $0x8] sm:$0xff]
    %v6988 = vld [vmem:[#allocation4 + $0x10] sm:$0xff]
    %v6989 = vld [vmem:[#allocation4 + $0x18] sm:$0xff]
    %v6990 = vsel %vm717, %v6986, 0
    %v6991 = vsel %vm718, %v6987, 0
    %v6992 = vsel %vm719, %v6988, 0
    %v6993 = vsel %vm720, %v6989, 0
    %v6994 = vld [vmem:[#allocation11] sm:$0xf]
    %v6995 = vld [vmem:[#allocation11 + $0x4] sm:$0xf]
    %v6996 = vld [vmem:[#allocation11 + $0x8] sm:$0xf]
    %v6997 = vld [vmem:[#allocation11 + $0xc] sm:$0xf]
    %v6998 = vld [vmem:[#allocation11 + $0x10] sm:$0xf]
    %v6999 = vld [vmem:[#allocation11 + $0x14] sm:$0xf]
    %v7000 = vld [vmem:[#allocation11 + $0x18] sm:$0xf]
    %v7001 = vld [vmem:[#allocation11 + $0x1c] sm:$0xf]
    %v7002 = vld [vmem:[#allocation11 + $0x20] sm:$0xf]
    %v7003 = vld [vmem:[#allocation11 + $0x24] sm:$0xf]
    %v7004 = vld [vmem:[#allocation11 + $0x28] sm:$0xf]
    %v7005 = vld [vmem:[#allocation11 + $0x2c] sm:$0xf]
    %v7006 = vld [vmem:[#allocation11 + $0x30] sm:$0xf]
    %v7007 = vld [vmem:[#allocation11 + $0x34] sm:$0xf]
    %v7008 = vld [vmem:[#allocation11 + $0x38] sm:$0xf]
    %v7009 = vld [vmem:[#allocation11 + $0x3c] sm:$0xf]
    %v7010 = vld [vmem:[#allocation11 + $0x40] sm:$0xf]
    %v7011 = vld [vmem:[#allocation11 + $0x44] sm:$0xf]
    %v7012 = vld [vmem:[#allocation11 + $0x48] sm:$0xf]
    %v7013 = vld [vmem:[#allocation11 + $0x4c] sm:$0xf]
    %v7014 = vld [vmem:[#allocation11 + $0x50] sm:$0xf]
    %v7015 = vld [vmem:[#allocation11 + $0x54] sm:$0xf]
    %v7016 = vld [vmem:[#allocation11 + $0x58] sm:$0xf]
    %v7017 = vld [vmem:[#allocation11 + $0x5c] sm:$0xf]
    %v7018 = vld [vmem:[#allocation11 + $0x60] sm:$0xf]
    %v7019 = vld [vmem:[#allocation11 + $0x64] sm:$0xf]
    %v7020 = vld [vmem:[#allocation11 + $0x68] sm:$0xf]
    %v7021 = vld [vmem:[#allocation11 + $0x6c] sm:$0xf]
    %v7022 = vld [vmem:[#allocation11 + $0x70] sm:$0xf]
    %v7023 = vld [vmem:[#allocation11 + $0x74] sm:$0xf]
    %v7024 = vld [vmem:[#allocation11 + $0x78] sm:$0xf]
    %v7025 = vld [vmem:[#allocation11 + $0x7c] sm:$0xf]
    %v7026 = vld [vmem:[#allocation4 + $0x20] sm:$0xff]
    %v7027 = vsel %vm799, %v6987, 0
    %v7028 = vsel %vm800, %v6988, 0
    %v7029 = vsel %vm801, %v6989, 0
    %v7030 = vsel %vm802, %v7026, 0
    %s7031 = scalar_lea.vmem [#allocation11], 128
    %v7032 = vld [vmem:[%s7031] sm:$0xf]
    %v7033 = vld [vmem:[%s7031 + $0x4] sm:$0xf]
    %v7034 = vld [vmem:[%s7031 + $0x8] sm:$0xf]
    %v7035 = vld [vmem:[%s7031 + $0xc] sm:$0xf]
    %v7036 = vld [vmem:[%s7031 + $0x10] sm:$0xf]
    %v7037 = vld [vmem:[%s7031 + $0x14] sm:$0xf]
    %v7038 = vld [vmem:[%s7031 + $0x18] sm:$0xf]
    %v7039 = vld [vmem:[%s7031 + $0x1c] sm:$0xf]
    %v7040 = vld [vmem:[%s7031 + $0x20] sm:$0xf]
    %v7041 = vld [vmem:[%s7031 + $0x24] sm:$0xf]
    %v7042 = vld [vmem:[%s7031 + $0x28] sm:$0xf]
    %v7043 = vld [vmem:[%s7031 + $0x2c] sm:$0xf]
    %v7044 = vld [vmem:[%s7031 + $0x30] sm:$0xf]
    %v7045 = vld [vmem:[%s7031 + $0x34] sm:$0xf]
    %v7046 = vld [vmem:[%s7031 + $0x38] sm:$0xf]
    %v7047 = vld [vmem:[%s7031 + $0x3c] sm:$0xf]
    %v7048 = vld [vmem:[%s7031 + $0x40] sm:$0xf]
    %v7049 = vld [vmem:[%s7031 + $0x44] sm:$0xf]
    %v7050 = vld [vmem:[%s7031 + $0x48] sm:$0xf]
    %v7051 = vld [vmem:[%s7031 + $0x4c] sm:$0xf]
    %v7052 = vld [vmem:[%s7031 + $0x50] sm:$0xf]
    %v7053 = vld [vmem:[%s7031 + $0x54] sm:$0xf]
    %v7054 = vld [vmem:[%s7031 + $0x58] sm:$0xf]
    %v7055 = vld [vmem:[%s7031 + $0x5c] sm:$0xf]
    %v7056 = vld [vmem:[%s7031 + $0x60] sm:$0xf]
    %v7057 = vld [vmem:[%s7031 + $0x64] sm:$0xf]
    %v7058 = vld [vmem:[%s7031 + $0x68] sm:$0xf]
    %v7059 = vld [vmem:[%s7031 + $0x6c] sm:$0xf]
    %v7060 = vld [vmem:[%s7031 + $0x70] sm:$0xf]
    %v7061 = vld [vmem:[%s7031 + $0x74] sm:$0xf]
    %v7062 = vld [vmem:[%s7031 + $0x78] sm:$0xf]
    %v7063 = vld [vmem:[%s7031 + $0x7c] sm:$0xf]
    %v7068 = vunpack.c.l.b16 %v7027
    %v7069 = vunpack.c.h.b16 %v7027
    %v7070 = vunpack.c.l.b16 %v7028
    %v7071 = vunpack.c.h.b16 %v7028
    %v7072 = vunpack.c.l.b16 %v7029
    %v7073 = vunpack.c.h.b16 %v7029
    %v7074 = vunpack.c.l.b16 %v7030
    %v7075 = vunpack.c.h.b16 %v7030
    %v7076 = vpack.c.b16 %v7070, %v7068
    %v7077 = vpack.c.b16 %v7071, %v7069
    %v7078 = vpack.c.b16 %v7074, %v7072
    %v7079 = vpack.c.b16 %v7075, %v7073
    %v7116 = vunpack.c.l.b16 %v7032
    %v7117 = vunpack.c.l.b16 %v7033
    %v7118 = vunpack.c.l.b16 %v7034
    %v7119 = vunpack.c.l.b16 %v7035
    %v7120 = vunpack.c.l.b16 %v7036
    %v7121 = vunpack.c.l.b16 %v7037
    %v7122 = vunpack.c.l.b16 %v7038
    %v7123 = vunpack.c.l.b16 %v7039
    %v7124 = vunpack.c.l.b16 %v7040
    %v7125 = vunpack.c.l.b16 %v7041
    %v7126 = vunpack.c.l.b16 %v7042
    %v7127 = vunpack.c.l.b16 %v7043
    %v7128 = vunpack.c.l.b16 %v7044
    %v7129 = vunpack.c.l.b16 %v7045
    %v7130 = vunpack.c.l.b16 %v7046
    %v7131 = vunpack.c.l.b16 %v7047
    %v7132 = vunpack.c.l.b16 %v7048
    %v7133 = vunpack.c.l.b16 %v7049
    %v7134 = vunpack.c.l.b16 %v7050
    %v7135 = vunpack.c.l.b16 %v7051
    %v7136 = vunpack.c.l.b16 %v7052
    %v7137 = vunpack.c.l.b16 %v7053
    %v7138 = vunpack.c.l.b16 %v7054
    %v7139 = vunpack.c.l.b16 %v7055
    %v7140 = vunpack.c.l.b16 %v7056
    %v7141 = vunpack.c.l.b16 %v7057
    %v7142 = vunpack.c.l.b16 %v7058
    %v7143 = vunpack.c.l.b16 %v7059
    %v7144 = vunpack.c.l.b16 %v7060
    %v7145 = vunpack.c.l.b16 %v7061
    %v7146 = vunpack.c.l.b16 %v7062
    %v7147 = vunpack.c.l.b16 %v7063
    %v7148 = vpack.c.b16 %v7117, %v7116
    %v7149 = vpack.c.b16 %v7119, %v7118
    %v7150 = vpack.c.b16 %v7121, %v7120
    %v7151 = vpack.c.b16 %v7123, %v7122
    %v7152 = vpack.c.b16 %v7125, %v7124
    %v7153 = vpack.c.b16 %v7127, %v7126
    %v7154 = vpack.c.b16 %v7129, %v7128
    %v7155 = vpack.c.b16 %v7131, %v7130
    %v7156 = vpack.c.b16 %v7133, %v7132
    %v7157 = vpack.c.b16 %v7135, %v7134
    %v7158 = vpack.c.b16 %v7137, %v7136
    %v7159 = vpack.c.b16 %v7139, %v7138
    %v7160 = vpack.c.b16 %v7141, %v7140
    %v7161 = vpack.c.b16 %v7143, %v7142
    %v7162 = vpack.c.b16 %v7145, %v7144
    %v7163 = vpack.c.b16 %v7147, %v7146
    %7180 = vmatprep.subr.bf16.mxu0 0
    %7181 = vmatpush1.bf16.msra.mxu0 %v7155
    %7182 = vmatprep.subr.bf16.mxu0 0
    %7183 = vmatpush1.bf16.msra.mxu0 %v7154
    %7184 = vmatprep.subr.bf16.mxu0 0
    %7185 = vmatpush1.bf16.msra.mxu0 %v7153
    %7186 = vmatprep.subr.bf16.mxu0 0
    %7187 = vmatpush1.bf16.msra.mxu0 %v7152
    %7188 = vmatprep.subr.bf16.mxu0 0
    %7189 = vmatpush1.bf16.msra.mxu0 %v7151
    %7190 = vmatprep.subr.bf16.mxu0 0
    %7191 = vmatpush1.bf16.msra.mxu0 %v7150
    %7192 = vmatprep.subr.bf16.mxu0 0
    %7193 = vmatpush1.bf16.msra.mxu0 %v7149
    %7194 = vmatprep.subr.bf16.mxu0 0
    %7195 = vmatpush1.bf16.msra.mxu0 %v7148
    %7196 = vmatprep.subr.bf16.mxu0 0
    %7197 = vmatpush2.bf16.msra.mxu0 %v7163
    %7198 = vmatprep.subr.bf16.mxu0 0
    %7199 = vmatpush2.bf16.msra.mxu0 %v7162
    %7200 = vmatprep.subr.bf16.mxu0 0
    %7201 = vmatpush2.bf16.msra.mxu0 %v7161
    %7202 = vmatprep.subr.bf16.mxu0 0
    %7203 = vmatpush2.bf16.msra.mxu0 %v7160
    %7204 = vmatprep.subr.bf16.mxu0 0
    %7205 = vmatpush2.bf16.msra.mxu0 %v7159
    %7206 = vmatprep.subr.bf16.mxu0 0
    %7207 = vmatpush2.bf16.msra.mxu0 %v7158
    %7208 = vmatprep.subr.bf16.mxu0 0
    %7209 = vmatpush2.bf16.msra.mxu0 %v7157
    %7210 = vmatprep.subr.bf16.mxu0 0
    %7211 = vmatpush2.bf16.msra.mxu0 %v7156
    %7212 = vmatprep.mubr.bf16.mxu0 %v7077
    %7213 = vmatmul.mubr.bf16.gmra.mxu0 %v7076
    %v7214 = vpop.f32.mrf.mxu0
    %v7215 = vadd.f32 0.0, %v7214
    %v7216 = vpop.f32.mrf.mxu0
    %v7217 = vpop.f32.mrf.mxu0
    %v7218 = vadd.f32 0.0, %v7217
    %v7219 = vpop.f32.mrf.mxu0
    %7220 = vmatprep.mubr.bf16.mxu0 %v7079
    %7221 = vmatmul.mubr.bf16.gmra.mxu0 %v7078
    %v7222 = vpop.f32.mrf.mxu0
    %v7223 = vadd.f32 0.0, %v7222
    %v7224 = vpop.f32.mrf.mxu0
    %v7225 = vpop.f32.mrf.mxu0
    %v7226 = vadd.f32 0.0, %v7225
    %v7227 = vpop.f32.mrf.mxu0
    %7228 = vdwg.mxu0
    %v7233 = vunpack.c.l.b16 %v6990
    %v7234 = vunpack.c.h.b16 %v6990
    %v7235 = vunpack.c.l.b16 %v6991
    %v7236 = vunpack.c.h.b16 %v6991
    %v7237 = vunpack.c.l.b16 %v6992
    %v7238 = vunpack.c.h.b16 %v6992
    %v7239 = vunpack.c.l.b16 %v6993
    %v7240 = vunpack.c.h.b16 %v6993
    %v7241 = vpack.c.b16 %v7235, %v7233
    %v7242 = vpack.c.b16 %v7236, %v7234
    %v7243 = vpack.c.b16 %v7239, %v7237
    %v7244 = vpack.c.b16 %v7240, %v7238
    %v7281 = vunpack.c.l.b16 %v6994
    %v7282 = vunpack.c.l.b16 %v6995
    %v7283 = vunpack.c.l.b16 %v6996
    %v7284 = vunpack.c.l.b16 %v6997
    %v7285 = vunpack.c.l.b16 %v6998
    %v7286 = vunpack.c.l.b16 %v6999
    %v7287 = vunpack.c.l.b16 %v7000
    %v7288 = vunpack.c.l.b16 %v7001
    %v7289 = vunpack.c.l.b16 %v7002
    %v7290 = vunpack.c.l.b16 %v7003
    %v7291 = vunpack.c.l.b16 %v7004
    %v7292 = vunpack.c.l.b16 %v7005
    %v7293 = vunpack.c.l.b16 %v7006
    %v7294 = vunpack.c.l.b16 %v7007
    %v7295 = vunpack.c.l.b16 %v7008
    %v7296 = vunpack.c.l.b16 %v7009
    %v7297 = vunpack.c.l.b16 %v7010
    %v7298 = vunpack.c.l.b16 %v7011
    %v7299 = vunpack.c.l.b16 %v7012
    %v7300 = vunpack.c.l.b16 %v7013
    %v7301 = vunpack.c.l.b16 %v7014
    %v7302 = vunpack.c.l.b16 %v7015
    %v7303 = vunpack.c.l.b16 %v7016
    %v7304 = vunpack.c.l.b16 %v7017
    %v7305 = vunpack.c.l.b16 %v7018
    %v7306 = vunpack.c.l.b16 %v7019
    %v7307 = vunpack.c.l.b16 %v7020
    %v7308 = vunpack.c.l.b16 %v7021
    %v7309 = vunpack.c.l.b16 %v7022
    %v7310 = vunpack.c.l.b16 %v7023
    %v7311 = vunpack.c.l.b16 %v7024
    %v7312 = vunpack.c.l.b16 %v7025
    %v7313 = vpack.c.b16 %v7282, %v7281
    %v7314 = vpack.c.b16 %v7284, %v7283
    %v7315 = vpack.c.b16 %v7286, %v7285
    %v7316 = vpack.c.b16 %v7288, %v7287
    %v7317 = vpack.c.b16 %v7290, %v7289
    %v7318 = vpack.c.b16 %v7292, %v7291
    %v7319 = vpack.c.b16 %v7294, %v7293
    %v7320 = vpack.c.b16 %v7296, %v7295
    %v7321 = vpack.c.b16 %v7298, %v7297
    %v7322 = vpack.c.b16 %v7300, %v7299
    %v7323 = vpack.c.b16 %v7302, %v7301
    %v7324 = vpack.c.b16 %v7304, %v7303
    %v7325 = vpack.c.b16 %v7306, %v7305
    %v7326 = vpack.c.b16 %v7308, %v7307
    %v7327 = vpack.c.b16 %v7310, %v7309
    %v7328 = vpack.c.b16 %v7312, %v7311
    %7345 = vmatprep.subr.bf16.mxu0 0
    %7346 = vmatpush1.bf16.msra.mxu0 %v7320
    %7347 = vmatprep.subr.bf16.mxu0 0
    %7348 = vmatpush1.bf16.msra.mxu0 %v7319
    %7349 = vmatprep.subr.bf16.mxu0 0
    %7350 = vmatpush1.bf16.msra.mxu0 %v7318
    %7351 = vmatprep.subr.bf16.mxu0 0
    %7352 = vmatpush1.bf16.msra.mxu0 %v7317
    %7353 = vmatprep.subr.bf16.mxu0 0
    %7354 = vmatpush1.bf16.msra.mxu0 %v7316
    %7355 = vmatprep.subr.bf16.mxu0 0
    %7356 = vmatpush1.bf16.msra.mxu0 %v7315
    %7357 = vmatprep.subr.bf16.mxu0 0
    %7358 = vmatpush1.bf16.msra.mxu0 %v7314
    %7359 = vmatprep.subr.bf16.mxu0 0
    %7360 = vmatpush1.bf16.msra.mxu0 %v7313
    %7361 = vmatprep.subr.bf16.mxu0 0
    %7362 = vmatpush2.bf16.msra.mxu0 %v7328
    %7363 = vmatprep.subr.bf16.mxu0 0
    %7364 = vmatpush2.bf16.msra.mxu0 %v7327
    %7365 = vmatprep.subr.bf16.mxu0 0
    %7366 = vmatpush2.bf16.msra.mxu0 %v7326
    %7367 = vmatprep.subr.bf16.mxu0 0
    %7368 = vmatpush2.bf16.msra.mxu0 %v7325
    %7369 = vmatprep.subr.bf16.mxu0 0
    %7370 = vmatpush2.bf16.msra.mxu0 %v7324
    %7371 = vmatprep.subr.bf16.mxu0 0
    %7372 = vmatpush2.bf16.msra.mxu0 %v7323
    %7373 = vmatprep.subr.bf16.mxu0 0
    %7374 = vmatpush2.bf16.msra.mxu0 %v7322
    %7375 = vmatprep.subr.bf16.mxu0 0
    %7376 = vmatpush2.bf16.msra.mxu0 %v7321
    %7377 = vmatprep.mubr.bf16.mxu0 %v7242
    %7378 = vmatmul.mubr.bf16.gmra.mxu0 %v7241
    %v7379 = vpop.f32.mrf.mxu0
    %v7380 = vadd.f32 %v7215, %v7379
    %v7381 = vpop.f32.mrf.mxu0
    %v7382 = vpop.f32.mrf.mxu0
    %v7383 = vadd.f32 %v7218, %v7382
    %v7384 = vpop.f32.mrf.mxu0
    %7385 = vmatprep.mubr.bf16.mxu0 %v7244
    %7386 = vmatmul.mubr.bf16.gmra.mxu0 %v7243
    %v7387 = vpop.f32.mrf.mxu0
    %v7388 = vadd.f32 %v7223, %v7387
    %v7389 = vpop.f32.mrf.mxu0
    %v7390 = vpop.f32.mrf.mxu0
    %v7391 = vadd.f32 %v7226, %v7390
    %v7392 = vpop.f32.mrf.mxu0
    %7393 = vdwg.mxu0
    %v7394 = vld [vmem:[#allocation4 + $0x10] sm:$0xff]
    %v7395 = vld [vmem:[#allocation4 + $0x18] sm:$0xff]
    %v7396 = vld [vmem:[#allocation4 + $0x20] sm:$0xff]
    %v7397 = vld [vmem:[#allocation4 + $0x28] sm:$0xff]
    %v7398 = vsel %vm1215, %v7394, 0
    %v7399 = vsel %vm1216, %v7395, 0
    %v7400 = vsel %vm1217, %v7396, 0
    %v7401 = vsel %vm1218, %v7397, 0
    %s7402 = scalar_lea.vmem [#allocation11], 256
    %v7403 = vld [vmem:[%s7402] sm:$0xf]
    %v7404 = vld [vmem:[%s7402 + $0x4] sm:$0xf]
    %v7405 = vld [vmem:[%s7402 + $0x8] sm:$0xf]
    %v7406 = vld [vmem:[%s7402 + $0xc] sm:$0xf]
    %v7407 = vld [vmem:[%s7402 + $0x10] sm:$0xf]
    %v7408 = vld [vmem:[%s7402 + $0x14] sm:$0xf]
    %v7409 = vld [vmem:[%s7402 + $0x18] sm:$0xf]
    %v7410 = vld [vmem:[%s7402 + $0x1c] sm:$0xf]
    %v7411 = vld [vmem:[%s7402 + $0x20] sm:$0xf]
    %v7412 = vld [vmem:[%s7402 + $0x24] sm:$0xf]
    %v7413 = vld [vmem:[%s7402 + $0x28] sm:$0xf]
    %v7414 = vld [vmem:[%s7402 + $0x2c] sm:$0xf]
    %v7415 = vld [vmem:[%s7402 + $0x30] sm:$0xf]
    %v7416 = vld [vmem:[%s7402 + $0x34] sm:$0xf]
    %v7417 = vld [vmem:[%s7402 + $0x38] sm:$0xf]
    %v7418 = vld [vmem:[%s7402 + $0x3c] sm:$0xf]
    %v7419 = vld [vmem:[%s7402 + $0x40] sm:$0xf]
    %v7420 = vld [vmem:[%s7402 + $0x44] sm:$0xf]
    %v7421 = vld [vmem:[%s7402 + $0x48] sm:$0xf]
    %v7422 = vld [vmem:[%s7402 + $0x4c] sm:$0xf]
    %v7423 = vld [vmem:[%s7402 + $0x50] sm:$0xf]
    %v7424 = vld [vmem:[%s7402 + $0x54] sm:$0xf]
    %v7425 = vld [vmem:[%s7402 + $0x58] sm:$0xf]
    %v7426 = vld [vmem:[%s7402 + $0x5c] sm:$0xf]
    %v7427 = vld [vmem:[%s7402 + $0x60] sm:$0xf]
    %v7428 = vld [vmem:[%s7402 + $0x64] sm:$0xf]
    %v7429 = vld [vmem:[%s7402 + $0x68] sm:$0xf]
    %v7430 = vld [vmem:[%s7402 + $0x6c] sm:$0xf]
    %v7431 = vld [vmem:[%s7402 + $0x70] sm:$0xf]
    %v7432 = vld [vmem:[%s7402 + $0x74] sm:$0xf]
    %v7433 = vld [vmem:[%s7402 + $0x78] sm:$0xf]
    %v7434 = vld [vmem:[%s7402 + $0x7c] sm:$0xf]
    %v7439 = vunpack.c.l.b16 %v7398
    %v7440 = vunpack.c.h.b16 %v7398
    %v7441 = vunpack.c.l.b16 %v7399
    %v7442 = vunpack.c.h.b16 %v7399
    %v7443 = vunpack.c.l.b16 %v7400
    %v7444 = vunpack.c.h.b16 %v7400
    %v7445 = vunpack.c.l.b16 %v7401
    %v7446 = vunpack.c.h.b16 %v7401
    %v7447 = vpack.c.b16 %v7441, %v7439
    %v7448 = vpack.c.b16 %v7442, %v7440
    %v7449 = vpack.c.b16 %v7445, %v7443
    %v7450 = vpack.c.b16 %v7446, %v7444
    %v7487 = vunpack.c.l.b16 %v7403
    %v7488 = vunpack.c.l.b16 %v7404
    %v7489 = vunpack.c.l.b16 %v7405
    %v7490 = vunpack.c.l.b16 %v7406
    %v7491 = vunpack.c.l.b16 %v7407
    %v7492 = vunpack.c.l.b16 %v7408
    %v7493 = vunpack.c.l.b16 %v7409
    %v7494 = vunpack.c.l.b16 %v7410
    %v7495 = vunpack.c.l.b16 %v7411
    %v7496 = vunpack.c.l.b16 %v7412
    %v7497 = vunpack.c.l.b16 %v7413
    %v7498 = vunpack.c.l.b16 %v7414
    %v7499 = vunpack.c.l.b16 %v7415
    %v7500 = vunpack.c.l.b16 %v7416
    %v7501 = vunpack.c.l.b16 %v7417
    %v7502 = vunpack.c.l.b16 %v7418
    %v7503 = vunpack.c.l.b16 %v7419
    %v7504 = vunpack.c.l.b16 %v7420
    %v7505 = vunpack.c.l.b16 %v7421
    %v7506 = vunpack.c.l.b16 %v7422
    %v7507 = vunpack.c.l.b16 %v7423
    %v7508 = vunpack.c.l.b16 %v7424
    %v7509 = vunpack.c.l.b16 %v7425
    %v7510 = vunpack.c.l.b16 %v7426
    %v7511 = vunpack.c.l.b16 %v7427
    %v7512 = vunpack.c.l.b16 %v7428
    %v7513 = vunpack.c.l.b16 %v7429
    %v7514 = vunpack.c.l.b16 %v7430
    %v7515 = vunpack.c.l.b16 %v7431
    %v7516 = vunpack.c.l.b16 %v7432
    %v7517 = vunpack.c.l.b16 %v7433
    %v7518 = vunpack.c.l.b16 %v7434
    %v7519 = vpack.c.b16 %v7488, %v7487
    %v7520 = vpack.c.b16 %v7490, %v7489
    %v7521 = vpack.c.b16 %v7492, %v7491
    %v7522 = vpack.c.b16 %v7494, %v7493
    %v7523 = vpack.c.b16 %v7496, %v7495
    %v7524 = vpack.c.b16 %v7498, %v7497
    %v7525 = vpack.c.b16 %v7500, %v7499
    %v7526 = vpack.c.b16 %v7502, %v7501
    %v7527 = vpack.c.b16 %v7504, %v7503
    %v7528 = vpack.c.b16 %v7506, %v7505
    %v7529 = vpack.c.b16 %v7508, %v7507
    %v7530 = vpack.c.b16 %v7510, %v7509
    %v7531 = vpack.c.b16 %v7512, %v7511
    %v7532 = vpack.c.b16 %v7514, %v7513
    %v7533 = vpack.c.b16 %v7516, %v7515
    %v7534 = vpack.c.b16 %v7518, %v7517
    %7551 = vmatprep.subr.bf16.mxu0 0
    %7552 = vmatpush1.bf16.msra.mxu0 %v7526
    %7553 = vmatprep.subr.bf16.mxu0 0
    %7554 = vmatpush1.bf16.msra.mxu0 %v7525
    %7555 = vmatprep.subr.bf16.mxu0 0
    %7556 = vmatpush1.bf16.msra.mxu0 %v7524
    %7557 = vmatprep.subr.bf16.mxu0 0
    %7558 = vmatpush1.bf16.msra.mxu0 %v7523
    %7559 = vmatprep.subr.bf16.mxu0 0
    %7560 = vmatpush1.bf16.msra.mxu0 %v7522
    %7561 = vmatprep.subr.bf16.mxu0 0
    %7562 = vmatpush1.bf16.msra.mxu0 %v7521
    %7563 = vmatprep.subr.bf16.mxu0 0
    %7564 = vmatpush1.bf16.msra.mxu0 %v7520
    %7565 = vmatprep.subr.bf16.mxu0 0
    %7566 = vmatpush1.bf16.msra.mxu0 %v7519
    %7567 = vmatprep.subr.bf16.mxu0 0
    %7568 = vmatpush2.bf16.msra.mxu0 %v7534
    %7569 = vmatprep.subr.bf16.mxu0 0
    %7570 = vmatpush2.bf16.msra.mxu0 %v7533
    %7571 = vmatprep.subr.bf16.mxu0 0
    %7572 = vmatpush2.bf16.msra.mxu0 %v7532
    %7573 = vmatprep.subr.bf16.mxu0 0
    %7574 = vmatpush2.bf16.msra.mxu0 %v7531
    %7575 = vmatprep.subr.bf16.mxu0 0
    %7576 = vmatpush2.bf16.msra.mxu0 %v7530
    %7577 = vmatprep.subr.bf16.mxu0 0
    %7578 = vmatpush2.bf16.msra.mxu0 %v7529
    %7579 = vmatprep.subr.bf16.mxu0 0
    %7580 = vmatpush2.bf16.msra.mxu0 %v7528
    %7581 = vmatprep.subr.bf16.mxu0 0
    %7582 = vmatpush2.bf16.msra.mxu0 %v7527
    %7583 = vmatprep.mubr.bf16.mxu0 %v7448
    %7584 = vmatmul.mubr.bf16.gmra.mxu0 %v7447
    %v7585 = vpop.f32.mrf.mxu0
    %v7586 = vadd.f32 0.0, %v7585
    %v7587 = vpop.f32.mrf.mxu0
    %v7588 = vpop.f32.mrf.mxu0
    %v7589 = vadd.f32 0.0, %v7588
    %v7590 = vpop.f32.mrf.mxu0
    %7591 = vmatprep.mubr.bf16.mxu0 %v7450
    %7592 = vmatmul.mubr.bf16.gmra.mxu0 %v7449
    %v7593 = vpop.f32.mrf.mxu0
    %v7594 = vadd.f32 0.0, %v7593
    %v7595 = vpop.f32.mrf.mxu0
    %v7596 = vpop.f32.mrf.mxu0
    %v7597 = vadd.f32 0.0, %v7596
    %v7598 = vpop.f32.mrf.mxu0
    %7599 = vdwg.mxu0
    %v7600 = vadd.f32 %v7380, %v7586
    %v7601 = vadd.f32 %v7383, %v7589
    %v7602 = vadd.f32 %v7388, %v7594
    %v7603 = vadd.f32 %v7391, %v7597
    %v7604 = vld [vmem:[#allocation4 + $0x18] sm:$0xff]
    %v7605 = vld [vmem:[#allocation4 + $0x20] sm:$0xff]
    %v7606 = vld [vmem:[#allocation4 + $0x28] sm:$0xff]
    %v7607 = vld [vmem:[#allocation4 + $0x30] sm:$0xff]
    %v7608 = vsel %vm1470, %v7604, 0
    %v7609 = vsel %vm1471, %v7605, 0
    %v7610 = vsel %vm1472, %v7606, 0
    %v7611 = vsel %vm1473, %v7607, 0
    %s7612 = scalar_lea.vmem [#allocation11], 384
    %v7613 = vld [vmem:[%s7612] sm:$0xf]
    %v7614 = vld [vmem:[%s7612 + $0x4] sm:$0xf]
    %v7615 = vld [vmem:[%s7612 + $0x8] sm:$0xf]
    %v7616 = vld [vmem:[%s7612 + $0xc] sm:$0xf]
    %v7617 = vld [vmem:[%s7612 + $0x10] sm:$0xf]
    %v7618 = vld [vmem:[%s7612 + $0x14] sm:$0xf]
    %v7619 = vld [vmem:[%s7612 + $0x18] sm:$0xf]
    %v7620 = vld [vmem:[%s7612 + $0x1c] sm:$0xf]
    %v7621 = vld [vmem:[%s7612 + $0x20] sm:$0xf]
    %v7622 = vld [vmem:[%s7612 + $0x24] sm:$0xf]
    %v7623 = vld [vmem:[%s7612 + $0x28] sm:$0xf]
    %v7624 = vld [vmem:[%s7612 + $0x2c] sm:$0xf]
    %v7625 = vld [vmem:[%s7612 + $0x30] sm:$0xf]
    %v7626 = vld [vmem:[%s7612 + $0x34] sm:$0xf]
    %v7627 = vld [vmem:[%s7612 + $0x38] sm:$0xf]
    %v7628 = vld [vmem:[%s7612 + $0x3c] sm:$0xf]
    %v7629 = vld [vmem:[%s7612 + $0x40] sm:$0xf]
    %v7630 = vld [vmem:[%s7612 + $0x44] sm:$0xf]
    %v7631 = vld [vmem:[%s7612 + $0x48] sm:$0xf]
    %v7632 = vld [vmem:[%s7612 + $0x4c] sm:$0xf]
    %v7633 = vld [vmem:[%s7612 + $0x50] sm:$0xf]
    %v7634 = vld [vmem:[%s7612 + $0x54] sm:$0xf]
    %v7635 = vld [vmem:[%s7612 + $0x58] sm:$0xf]
    %v7636 = vld [vmem:[%s7612 + $0x5c] sm:$0xf]
    %v7637 = vld [vmem:[%s7612 + $0x60] sm:$0xf]
    %v7638 = vld [vmem:[%s7612 + $0x64] sm:$0xf]
    %v7639 = vld [vmem:[%s7612 + $0x68] sm:$0xf]
    %v7640 = vld [vmem:[%s7612 + $0x6c] sm:$0xf]
    %v7641 = vld [vmem:[%s7612 + $0x70] sm:$0xf]
    %v7642 = vld [vmem:[%s7612 + $0x74] sm:$0xf]
    %v7643 = vld [vmem:[%s7612 + $0x78] sm:$0xf]
    %v7644 = vld [vmem:[%s7612 + $0x7c] sm:$0xf]
    %v7649 = vunpack.c.l.b16 %v7608
    %v7650 = vunpack.c.h.b16 %v7608
    %v7651 = vunpack.c.l.b16 %v7609
    %v7652 = vunpack.c.h.b16 %v7609
    %v7653 = vunpack.c.l.b16 %v7610
    %v7654 = vunpack.c.h.b16 %v7610
    %v7655 = vunpack.c.l.b16 %v7611
    %v7656 = vunpack.c.h.b16 %v7611
    %v7657 = vpack.c.b16 %v7651, %v7649
    %v7658 = vpack.c.b16 %v7652, %v7650
    %v7659 = vpack.c.b16 %v7655, %v7653
    %v7660 = vpack.c.b16 %v7656, %v7654
    %v7697 = vunpack.c.l.b16 %v7613
    %v7698 = vunpack.c.l.b16 %v7614
    %v7699 = vunpack.c.l.b16 %v7615
    %v7700 = vunpack.c.l.b16 %v7616
    %v7701 = vunpack.c.l.b16 %v7617
    %v7702 = vunpack.c.l.b16 %v7618
    %v7703 = vunpack.c.l.b16 %v7619
    %v7704 = vunpack.c.l.b16 %v7620
    %v7705 = vunpack.c.l.b16 %v7621
    %v7706 = vunpack.c.l.b16 %v7622
    %v7707 = vunpack.c.l.b16 %v7623
    %v7708 = vunpack.c.l.b16 %v7624
    %v7709 = vunpack.c.l.b16 %v7625
    %v7710 = vunpack.c.l.b16 %v7626
    %v7711 = vunpack.c.l.b16 %v7627
    %v7712 = vunpack.c.l.b16 %v7628
    %v7713 = vunpack.c.l.b16 %v7629
    %v7714 = vunpack.c.l.b16 %v7630
    %v7715 = vunpack.c.l.b16 %v7631
    %v7716 = vunpack.c.l.b16 %v7632
    %v7717 = vunpack.c.l.b16 %v7633
    %v7718 = vunpack.c.l.b16 %v7634
    %v7719 = vunpack.c.l.b16 %v7635
    %v7720 = vunpack.c.l.b16 %v7636
    %v7721 = vunpack.c.l.b16 %v7637
    %v7722 = vunpack.c.l.b16 %v7638
    %v7723 = vunpack.c.l.b16 %v7639
    %v7724 = vunpack.c.l.b16 %v7640
    %v7725 = vunpack.c.l.b16 %v7641
    %v7726 = vunpack.c.l.b16 %v7642
    %v7727 = vunpack.c.l.b16 %v7643
    %v7728 = vunpack.c.l.b16 %v7644
    %v7729 = vpack.c.b16 %v7698, %v7697
    %v7730 = vpack.c.b16 %v7700, %v7699
    %v7731 = vpack.c.b16 %v7702, %v7701
    %v7732 = vpack.c.b16 %v7704, %v7703
    %v7733 = vpack.c.b16 %v7706, %v7705
    %v7734 = vpack.c.b16 %v7708, %v7707
    %v7735 = vpack.c.b16 %v7710, %v7709
    %v7736 = vpack.c.b16 %v7712, %v7711
    %v7737 = vpack.c.b16 %v7714, %v7713
    %v7738 = vpack.c.b16 %v7716, %v7715
    %v7739 = vpack.c.b16 %v7718, %v7717
    %v7740 = vpack.c.b16 %v7720, %v7719
    %v7741 = vpack.c.b16 %v7722, %v7721
    %v7742 = vpack.c.b16 %v7724, %v7723
    %v7743 = vpack.c.b16 %v7726, %v7725
    %v7744 = vpack.c.b16 %v7728, %v7727
    %7761 = vmatprep.subr.bf16.mxu0 0
    %7762 = vmatpush1.bf16.msra.mxu0 %v7736
    %7763 = vmatprep.subr.bf16.mxu0 0
    %7764 = vmatpush1.bf16.msra.mxu0 %v7735
    %7765 = vmatprep.subr.bf16.mxu0 0
    %7766 = vmatpush1.bf16.msra.mxu0 %v7734
    %7767 = vmatprep.subr.bf16.mxu0 0
    %7768 = vmatpush1.bf16.msra.mxu0 %v7733
    %7769 = vmatprep.subr.bf16.mxu0 0
    %7770 = vmatpush1.bf16.msra.mxu0 %v7732
    %7771 = vmatprep.subr.bf16.mxu0 0
    %7772 = vmatpush1.bf16.msra.mxu0 %v7731
    %7773 = vmatprep.subr.bf16.mxu0 0
    %7774 = vmatpush1.bf16.msra.mxu0 %v7730
    %7775 = vmatprep.subr.bf16.mxu0 0
    %7776 = vmatpush1.bf16.msra.mxu0 %v7729
    %7777 = vmatprep.subr.bf16.mxu0 0
    %7778 = vmatpush2.bf16.msra.mxu0 %v7744
    %7779 = vmatprep.subr.bf16.mxu0 0
    %7780 = vmatpush2.bf16.msra.mxu0 %v7743
    %7781 = vmatprep.subr.bf16.mxu0 0
    %7782 = vmatpush2.bf16.msra.mxu0 %v7742
    %7783 = vmatprep.subr.bf16.mxu0 0
    %7784 = vmatpush2.bf16.msra.mxu0 %v7741
    %7785 = vmatprep.subr.bf16.mxu0 0
    %7786 = vmatpush2.bf16.msra.mxu0 %v7740
    %7787 = vmatprep.subr.bf16.mxu0 0
    %7788 = vmatpush2.bf16.msra.mxu0 %v7739
    %7789 = vmatprep.subr.bf16.mxu0 0
    %7790 = vmatpush2.bf16.msra.mxu0 %v7738
    %7791 = vmatprep.subr.bf16.mxu0 0
    %7792 = vmatpush2.bf16.msra.mxu0 %v7737
    %7793 = vmatprep.mubr.bf16.mxu0 %v7658
    %7794 = vmatmul.mubr.bf16.gmra.mxu0 %v7657
    %v7795 = vpop.f32.mrf.mxu0
    %v7796 = vadd.f32 0.0, %v7795
    %v7797 = vpop.f32.mrf.mxu0
    %v7798 = vpop.f32.mrf.mxu0
    %v7799 = vadd.f32 0.0, %v7798
    %v7800 = vpop.f32.mrf.mxu0
    %7801 = vmatprep.mubr.bf16.mxu0 %v7660
    %7802 = vmatmul.mubr.bf16.gmra.mxu0 %v7659
    %v7803 = vpop.f32.mrf.mxu0
    %v7804 = vadd.f32 0.0, %v7803
    %v7805 = vpop.f32.mrf.mxu0
    %v7806 = vpop.f32.mrf.mxu0
    %v7807 = vadd.f32 0.0, %v7806
    %v7808 = vpop.f32.mrf.mxu0
    %7809 = vdwg.mxu0
    %v7810 = vadd.f32 %v7600, %v7796
    %v7811 = vadd.f32 %v7601, %v7799
    %v7812 = vadd.f32 %v7602, %v7804
    %v7813 = vadd.f32 %v7603, %v7807
    %v7815 = vshrl.u32 %v6596, 16
    %v7817 = vrot.slane %v7815, 7
    %v7818 = vshll.u32 %v6596, 16
    %v7820 = vor.u32 %v7817, %v7818
    %v7822 = vshrl.u32 %v6597, 16
    %v7824 = vrot.slane %v7822, 7
    %v7825 = vshll.u32 %v6597, 16
    %v7827 = vor.u32 %v7824, %v7825
    %v7828 = vsel %vm597, %v7817, %v7827
    %v7830 = vsel %vm1694, %v6568, %v7820
    %v7831 = vrot.slane %v7818, 1
    %v7832 = vor.u32 %v7815, %v7831
    %v7833 = vrot.slane %v7825, 1
    %v7834 = vsel %vm1696, %v7832, %v7833
    %v7835 = vor.u32 %v7822, %v7833
    %v7837 = vpack.c.b16 %v6595, %v6595
    %v7839 = vsel %vm1706, %v7835, %v7837
    %v7841 = vunpack.c.l.b16 %v7830
    %v7842 = vunpack.c.h.b16 %v7830
    %v7843 = vunpack.c.l.b16 %v7828
    %v7844 = vunpack.c.h.b16 %v7828
    %v7845 = vpack.c.b16 %v7841, %v7841
    %v7846 = vpack.c.b16 %v7842, %v7842
    %v7847 = vpack.c.b16 %v7843, %v7843
    %v7848 = vpack.c.b16 %v7844, %v7844
    %v7853 = vsel %vm1728, %v6568, %v7845
    %v7854 = vsel %vm1729, %v6569, %v7846
    %v7855 = vsel %vm1730, %v6570, %v7847
    %v7856 = vsel %vm1731, %v6571, %v7848
    %v7858 = vunpack.c.l.b16 %v7834
    %v7859 = vunpack.c.h.b16 %v7834
    %v7860 = vunpack.c.l.b16 %v7839
    %v7861 = vunpack.c.h.b16 %v7839
    %v7862 = vpack.c.b16 %v7858, %v7858
    %v7863 = vpack.c.b16 %v7859, %v7859
    %v7864 = vpack.c.b16 %v7860, %v7860
    %v7865 = vpack.c.b16 %v7861, %v7861
    %v7870 = vsel %vm1769, %v6568, %v7862
    %v7871 = vsel %vm1770, %v6569, %v7863
    %v7872 = vsel %vm1771, %v6570, %v7864
    %v7873 = vsel %vm1772, %v6571, %v7865
    %v7874 = vmax.bf16 %v7853, %v6568
    %v7875 = vmax.bf16 %v7854, %v6569
    %v7876 = vmax.bf16 %v7855, %v6570
    %v7877 = vmax.bf16 %v7856, %v6571
    %v7878 = vmax.bf16 %v7874, %v7870
    %v7879 = vmax.bf16 %v7875, %v7871
    %v7880 = vmax.bf16 %v7876, %v7872
    %v7881 = vmax.bf16 %v7877, %v7873
    %v7882 = vld [vmem:[%s51] sm:$0xf]
    %v7883 = vld [vmem:[%s51 + $0x4] sm:$0xf]
    %v7884 = vld [vmem:[%s51 + $0x8] sm:$0xf]
    %v7885 = vld [vmem:[%s51 + $0xc] sm:$0xf]
    %v7886 = vld [vmem:[%s51 + $0x10] sm:$0xf]
    %v7887 = vld [vmem:[%s51 + $0x14] sm:$0xf]
    %v7888 = vld [vmem:[%s51 + $0x18] sm:$0xf]
    %v7889 = vld [vmem:[%s51 + $0x1c] sm:$0xf]
    %v7890 = vld [vmem:[%s51 + $0x20] sm:$0xf]
    %v7891 = vld [vmem:[%s51 + $0x24] sm:$0xf]
    %v7892 = vld [vmem:[%s51 + $0x28] sm:$0xf]
    %v7893 = vld [vmem:[%s51 + $0x2c] sm:$0xf]
    %v7894 = vld [vmem:[%s51 + $0x30] sm:$0xf]
    %v7895 = vld [vmem:[%s51 + $0x34] sm:$0xf]
    %v7896 = vld [vmem:[%s51 + $0x38] sm:$0xf]
    %v7897 = vld [vmem:[%s51 + $0x3c] sm:$0xf]
    %v7902 = vunpack.c.l.b16 %v7878
    %v7903 = vunpack.c.l.b16 %v7879
    %v7904 = vunpack.c.l.b16 %v7880
    %v7905 = vunpack.c.l.b16 %v7881
    %v7906 = vpack.c.b16 %v7903, %v7902
    %v7907 = vpack.c.b16 %v7905, %v7904
    %v7926 = vunpack.c.l.b16 %v7882
    %v7927 = vunpack.c.l.b16 %v7883
    %v7928 = vunpack.c.l.b16 %v7884
    %v7929 = vunpack.c.l.b16 %v7885
    %v7930 = vunpack.c.l.b16 %v7886
    %v7931 = vunpack.c.l.b16 %v7887
    %v7932 = vunpack.c.l.b16 %v7888
    %v7933 = vunpack.c.l.b16 %v7889
    %v7934 = vunpack.c.l.b16 %v7890
    %v7935 = vunpack.c.l.b16 %v7891
    %v7936 = vunpack.c.l.b16 %v7892
    %v7937 = vunpack.c.l.b16 %v7893
    %v7938 = vunpack.c.l.b16 %v7894
    %v7939 = vunpack.c.l.b16 %v7895
    %v7940 = vunpack.c.l.b16 %v7896
    %v7941 = vunpack.c.l.b16 %v7897
    %v7942 = vpack.c.b16 %v7927, %v7926
    %v7943 = vpack.c.b16 %v7929, %v7928
    %v7944 = vpack.c.b16 %v7931, %v7930
    %v7945 = vpack.c.b16 %v7933, %v7932
    %v7946 = vpack.c.b16 %v7935, %v7934
    %v7947 = vpack.c.b16 %v7937, %v7936
    %v7948 = vpack.c.b16 %v7939, %v7938
    %v7949 = vpack.c.b16 %v7941, %v7940
    %7958 = vmatprep.subr.bf16.mxu0 0
    %7959 = vmatpush1.bf16.msra.mxu0 %v7949
    %7960 = vmatprep.subr.bf16.mxu0 0
    %7961 = vmatpush1.bf16.msra.mxu0 %v7948
    %7962 = vmatprep.subr.bf16.mxu0 0
    %7963 = vmatpush1.bf16.msra.mxu0 %v7947
    %7964 = vmatprep.subr.bf16.mxu0 0
    %7965 = vmatpush1.bf16.msra.mxu0 %v7946
    %7966 = vmatprep.subr.bf16.mxu0 0
    %7967 = vmatpush1.bf16.msra.mxu0 %v7945
    %7968 = vmatprep.subr.bf16.mxu0 0
    %7969 = vmatpush1.bf16.msra.mxu0 %v7944
    %7970 = vmatprep.subr.bf16.mxu0 0
    %7971 = vmatpush1.bf16.msra.mxu0 %v7943
    %7972 = vmatprep.subr.bf16.mxu0 0
    %7973 = vmatpush1.bf16.msra.mxu0 %v7942
    %7974 = vmatprep.subr.bf16.mxu0 0
    %7975 = vmatpush2.bf16.msra.mxu0 0
    %7976 = vmatprep.subr.bf16.mxu0 0
    %7977 = vmatpush2.bf16.msra.mxu0 0
    %7978 = vmatprep.subr.bf16.mxu0 0
    %7979 = vmatpush2.bf16.msra.mxu0 0
    %7980 = vmatprep.subr.bf16.mxu0 0
    %7981 = vmatpush2.bf16.msra.mxu0 0
    %7982 = vmatprep.subr.bf16.mxu0 0
    %7983 = vmatpush2.bf16.msra.mxu0 0
    %7984 = vmatprep.subr.bf16.mxu0 0
    %7985 = vmatpush2.bf16.msra.mxu0 0
    %7986 = vmatprep.subr.bf16.mxu0 0
    %7987 = vmatpush2.bf16.msra.mxu0 0
    %7988 = vmatprep.subr.bf16.mxu0 0
    %7989 = vmatpush2.bf16.msra.mxu0 0
    %7990 = vmatprep.mubr.bf16.mxu0 0
    %7991 = vmatmul.mubr.bf16.gmra.mxu0 %v7906
    %v7992 = vpop.f32.mrf.mxu0
    %v7993 = vadd.f32 0.0, %v7992
    %v7994 = vpop.f32.mrf.mxu0
    %v7995 = vpop.f32.mrf.mxu0
    %v7996 = vadd.f32 0.0, %v7995
    %v7997 = vpop.f32.mrf.mxu0
    %7998 = vmatprep.mubr.bf16.mxu0 0
    %7999 = vmatmul.mubr.bf16.gmra.mxu0 %v7907
    %v8000 = vpop.f32.mrf.mxu0
    %v8001 = vadd.f32 0.0, %v8000
    %v8002 = vpop.f32.mrf.mxu0
    %v8003 = vpop.f32.mrf.mxu0
    %v8004 = vadd.f32 0.0, %v8003
    %v8005 = vpop.f32.mrf.mxu0
    %8006 = vdwg.mxu0
    %8011 = vrot.lane.b32.xlu0 %v7993, 96
    %v8012 = vpop.permute.xlu0 %8011
    %8013 = vrot.lane.b32.xlu0 %v7996, 96
    %v8014 = vpop.permute.xlu0 %8013
    %8015 = vrot.lane.b32.xlu0 %v8001, 96
    %v8016 = vpop.permute.xlu0 %8015
    %8017 = vrot.lane.b32.xlu0 %v8004, 96
    %v8018 = vpop.permute.xlu0 %8017
    %v8023 = vadd.f32 %v7810, %v8012
    %v8024 = vadd.f32 %v7811, %v8014
    %v8025 = vadd.f32 %v7812, %v8016
    %v8026 = vadd.f32 %v7813, %v8018
    %v8027 = vsel %vm1887, %v7810, %v8023
    %v8028 = vsel %vm1887, %v7811, %v8024
    %v8029 = vsel %vm1887, %v7812, %v8025
    %v8030 = vsel %vm1887, %v7813, %v8026
    %v8031 = vld [vmem:[%s53] sm:$0x1]
    %v8033 = vlaneseq
    %v8034 = vshrl.u32 %v8033, 7
    %v8035 = vsub.s32 0, %v8034
    %v8036 = vrot.slane %v8031, %v8035
    %v8038 = vmul.f32 %v8027, %v8036
    %v8039 = vmul.f32 %v8028, %v8036
    %v8040 = vmul.f32 %v8029, %v8036
    %v8041 = vmul.f32 %v8030, %v8036
    %v8042 = vld [vmem:[%s55] sm:$0x1]
    %v8044 = vlaneseq
    %v8045 = vshrl.u32 %v8044, 7
    %v8046 = vsub.s32 0, %v8045
    %v8047 = vrot.slane %v8042, %v8046
    %v8049 = vadd.f32 %v8038, %v8047
    %v8050 = vadd.f32 %v8039, %v8047
    %v8051 = vadd.f32 %v8040, %v8047
    %v8052 = vadd.f32 %v8041, %v8047
    %v8053 = vmax.f32 %v8049, 0.0
    %v8054 = vmax.f32 %v8050, 0.0
    %v8055 = vmax.f32 %v8051, 0.0
    %v8056 = vmax.f32 %v8052, 0.0
    %v8057 = vpack.c.bf16 %v8054, %v8053
    %v8058 = vpack.c.bf16 %v8056, %v8055
    %v8061 = vunpack.c.l.b16 %v8057
    %v8062 = vunpack.c.h.b16 %v8057
    %v8063 = vunpack.c.l.b16 %v8058
    %v8064 = vunpack.c.h.b16 %v8058
    %v8065 = vpack.c.b16 %v8061, %v8061
    %v8066 = vpack.c.b16 %v8062, %v8062
    %v8067 = vpack.c.b16 %v8063, %v8063
    %v8068 = vpack.c.b16 %v8064, %v8064
    %8073 = vst [vmem:[#allocation2] sm:$0xf] %v8065
    %8074 = vst [vmem:[#allocation2 + $0x4] sm:$0xf] %v8066
    %8075 = vst [vmem:[#allocation2 + $0x8] sm:$0xf] %v8067
    %8076 = vst [vmem:[#allocation2 + $0xc] sm:$0xf] %v8068
    %v8077 = vld [vmem:[#allocation2] sm:$0xf]
    %v8078 = vld [vmem:[#allocation2 + $0x4] sm:$0xf]
    %v8079 = vld [vmem:[#allocation2 + $0x8] sm:$0xf]
    %v8080 = vld [vmem:[#allocation2 + $0xc] sm:$0xf]
    %v8081 = vld [vmem:[%s57] sm:$0xf]
    %v8082 = vld [vmem:[%s57 + $0x4] sm:$0xf]
    %v8083 = vld [vmem:[%s57 + $0x8] sm:$0xf]
    %v8084 = vld [vmem:[%s57 + $0xc] sm:$0xf]
    %v8085 = vld [vmem:[%s57 + $0x10] sm:$0xf]
    %v8086 = vld [vmem:[%s57 + $0x14] sm:$0xf]
    %v8087 = vld [vmem:[%s57 + $0x18] sm:$0xf]
    %v8088 = vld [vmem:[%s57 + $0x1c] sm:$0xf]
    %v8089 = vld [vmem:[%s57 + $0x20] sm:$0xf]
    %v8090 = vld [vmem:[%s57 + $0x24] sm:$0xf]
    %v8091 = vld [vmem:[%s57 + $0x28] sm:$0xf]
    %v8092 = vld [vmem:[%s57 + $0x2c] sm:$0xf]
    %v8093 = vld [vmem:[%s57 + $0x30] sm:$0xf]
    %v8094 = vld [vmem:[%s57 + $0x34] sm:$0xf]
    %v8095 = vld [vmem:[%s57 + $0x38] sm:$0xf]
    %v8096 = vld [vmem:[%s57 + $0x3c] sm:$0xf]
    %v8101 = vunpack.c.l.b16 %v8077
    %v8102 = vunpack.c.l.b16 %v8078
    %v8103 = vunpack.c.l.b16 %v8079
    %v8104 = vunpack.c.l.b16 %v8080
    %v8105 = vpack.c.b16 %v8102, %v8101
    %v8106 = vpack.c.b16 %v8104, %v8103
    %v8125 = vunpack.c.l.b16 %v8081
    %v8126 = vunpack.c.l.b16 %v8082
    %v8127 = vunpack.c.l.b16 %v8083
    %v8128 = vunpack.c.l.b16 %v8084
    %v8129 = vunpack.c.l.b16 %v8085
    %v8130 = vunpack.c.l.b16 %v8086
    %v8131 = vunpack.c.l.b16 %v8087
    %v8132 = vunpack.c.l.b16 %v8088
    %v8133 = vunpack.c.l.b16 %v8089
    %v8134 = vunpack.c.l.b16 %v8090
    %v8135 = vunpack.c.l.b16 %v8091
    %v8136 = vunpack.c.l.b16 %v8092
    %v8137 = vunpack.c.l.b16 %v8093
    %v8138 = vunpack.c.l.b16 %v8094
    %v8139 = vunpack.c.l.b16 %v8095
    %v8140 = vunpack.c.l.b16 %v8096
    %v8141 = vpack.c.b16 %v8126, %v8125
    %v8142 = vpack.c.b16 %v8128, %v8127
    %v8143 = vpack.c.b16 %v8130, %v8129
    %v8144 = vpack.c.b16 %v8132, %v8131
    %v8145 = vpack.c.b16 %v8134, %v8133
    %v8146 = vpack.c.b16 %v8136, %v8135
    %v8147 = vpack.c.b16 %v8138, %v8137
    %v8148 = vpack.c.b16 %v8140, %v8139
    %8157 = vmatprep.subr.bf16.mxu0 0
    %8158 = vmatpush1.bf16.msra.mxu0 %v8148
    %8159 = vmatprep.subr.bf16.mxu0 0
    %8160 = vmatpush1.bf16.msra.mxu0 %v8147
    %8161 = vmatprep.subr.bf16.mxu0 0
    %8162 = vmatpush1.bf16.msra.mxu0 %v8146
    %8163 = vmatprep.subr.bf16.mxu0 0
    %8164 = vmatpush1.bf16.msra.mxu0 %v8145
    %8165 = vmatprep.subr.bf16.mxu0 0
    %8166 = vmatpush1.bf16.msra.mxu0 %v8144
    %8167 = vmatprep.subr.bf16.mxu0 0
    %8168 = vmatpush1.bf16.msra.mxu0 %v8143
    %8169 = vmatprep.subr.bf16.mxu0 0
    %8170 = vmatpush1.bf16.msra.mxu0 %v8142
    %8171 = vmatprep.subr.bf16.mxu0 0
    %8172 = vmatpush1.bf16.msra.mxu0 %v8141
    %8173 = vmatprep.subr.bf16.mxu0 0
    %8174 = vmatpush2.bf16.msra.mxu0 0
    %8175 = vmatprep.subr.bf16.mxu0 0
    %8176 = vmatpush2.bf16.msra.mxu0 0
    %8177 = vmatprep.subr.bf16.mxu0 0
    %8178 = vmatpush2.bf16.msra.mxu0 0
    %8179 = vmatprep.subr.bf16.mxu0 0
    %8180 = vmatpush2.bf16.msra.mxu0 0
    %8181 = vmatprep.subr.bf16.mxu0 0
    %8182 = vmatpush2.bf16.msra.mxu0 0
    %8183 = vmatprep.subr.bf16.mxu0 0
    %8184 = vmatpush2.bf16.msra.mxu0 0
    %8185 = vmatprep.subr.bf16.mxu0 0
    %8186 = vmatpush2.bf16.msra.mxu0 0
    %8187 = vmatprep.subr.bf16.mxu0 0
    %8188 = vmatpush2.bf16.msra.mxu0 0
    %8189 = vmatprep.mubr.bf16.mxu0 0
    %8190 = vmatmul.mubr.bf16.gmra.mxu0 %v8105
    %v8191 = vpop.f32.mrf.mxu0
    %v8192 = vadd.f32 0.0, %v8191
    %v8193 = vpop.f32.mrf.mxu0
    %v8194 = vpop.f32.mrf.mxu0
    %v8195 = vadd.f32 0.0, %v8194
    %v8196 = vpop.f32.mrf.mxu0
    %8197 = vmatprep.mubr.bf16.mxu0 0
    %8198 = vmatmul.mubr.bf16.gmra.mxu0 %v8106
    %v8199 = vpop.f32.mrf.mxu0
    %v8200 = vadd.f32 0.0, %v8199
    %v8201 = vpop.f32.mrf.mxu0
    %v8202 = vpop.f32.mrf.mxu0
    %v8203 = vadd.f32 0.0, %v8202
    %v8204 = vpop.f32.mrf.mxu0
    %8205 = vdwg.mxu0
    %v8206 = vpack.c.bf16 %v8195, %v8192
    %v8207 = vpack.c.bf16 %v8203, %v8200
    %v8210 = vunpack.c.l.b16 %v8206
    %v8211 = vunpack.c.h.b16 %v8206
    %v8212 = vunpack.c.l.b16 %v8207
    %v8213 = vunpack.c.h.b16 %v8207
    %v8214 = vpack.c.b16 %v8210, %v8210
    %v8215 = vpack.c.b16 %v8211, %v8211
    %v8216 = vpack.c.b16 %v8212, %v8212
    %v8217 = vpack.c.b16 %v8213, %v8213
    %v8219 = vshll.u32 %v8214, 16
    %v8221 = vrot.slane %v8219, 5
    %v8222 = vshrl.u32 %v8214, 16
    %v8224 = vrot.slane %v8222, 4
    %v8225 = vor.u32 %v8224, %v8221
    %v8226 = vrot.slane %v8225, 4
    %v8228 = vshll.u32 %v8215, 16
    %v8230 = vrot.slane %v8228, 5
    %v8231 = vsel %vm334, %v8226, %v8230
    %v8232 = vshrl.u32 %v8215, 16
    %v8234 = vrot.slane %v8232, 4
    %v8235 = vor.u32 %v8234, %v8230
    %v8236 = vrot.slane %v8235, 4
    %v8238 = vshll.u32 %v8216, 16
    %v8240 = vrot.slane %v8238, 5
    %v8241 = vsel %vm334, %v8236, %v8240
    %v8242 = vshrl.u32 %v8216, 16
    %v8244 = vrot.slane %v8242, 4
    %v8245 = vor.u32 %v8244, %v8240
    %v8246 = vrot.slane %v8245, 4
    %v8248 = vshll.u32 %v8217, 16
    %v8250 = vrot.slane %v8248, 5
    %v8251 = vsel %vm334, %v8246, %v8250
    %v8252 = vshrl.u32 %v8217, 16
    %v8254 = vrot.slane %v8252, 4
    %v8255 = vor.u32 %v8254, %v8250
    %v8256 = vrot.slane %v8255, 4
    %v8262 = vld [vmem:[#allocation4 + $0x8] sm:$0x8]
    %v8263 = vsel %vm381, %v8221, %v8262
    %8264 = vst [vmem:[#allocation4 + $0x8] sm:$0x8] %v8263
    %8265 = vst.msk [vmem:[#allocation4 + $0x10] sm:$0xf] %vm385, %v8231
    %8266 = vst.msk [vmem:[#allocation4 + $0x18] sm:$0xf] %vm385, %v8241
    %8267 = vst.msk [vmem:[#allocation4 + $0x20] sm:$0xf] %vm385, %v8251
    %v8268 = vld [vmem:[#allocation4 + $0x28] sm:$0xf]
    %v8269 = vsel %vm390, %v8256, %v8268
    %8270 = vst [vmem:[#allocation4 + $0x28] sm:$0xf] %v8269
    %v8271 = vrot.slane %v8214, 5
    %v8272 = vrot.slane %v8271, 4
    %v8273 = vrot.slane %v8215, 5
    %v8274 = vsel %vm396, %v8272, %v8273
    %v8275 = vrot.slane %v8273, 4
    %v8276 = vrot.slane %v8216, 5
    %v8277 = vsel %vm396, %v8275, %v8276
    %v8278 = vrot.slane %v8276, 4
    %v8279 = vrot.slane %v8217, 5
    %v8280 = vsel %vm396, %v8278, %v8279
    %v8281 = vrot.slane %v8279, 4
    %8282 = vrot.lane.b32.xlu0 %v8271, 32
    %v8283 = vpop.permute.xlu0 %8282
    %8284 = vrot.lane.b32.xlu0 %v8274, 32
    %v8285 = vpop.permute.xlu0 %8284
    %8286 = vrot.lane.b32.xlu0 %v8277, 32
    %v8287 = vpop.permute.xlu0 %8286
    %8288 = vrot.lane.b32.xlu0 %v8280, 32
    %v8289 = vpop.permute.xlu0 %8288
    %8290 = vrot.lane.b32.xlu0 %v8281, 32
    %v8291 = vpop.permute.xlu0 %8290
    %8297 = vst.msk [vmem:[#allocation4 + $0x8] sm:$0x8] %vm423, %v8283
    %8298 = vst.msk [vmem:[#allocation4 + $0x10] sm:$0xf] %vm425, %v8285
    %8299 = vst.msk [vmem:[#allocation4 + $0x18] sm:$0xf] %vm425, %v8287
    %8300 = vst.msk [vmem:[#allocation4 + $0x20] sm:$0xf] %vm425, %v8289
    %8301 = vst.msk [vmem:[#allocation4 + $0x28] sm:$0x7] %vm429, %v8291
    %v8302 = vrot.slane %v8222, 5
    %v8303 = vrot.slane %v8219, 6
    %v8304 = vor.u32 %v8302, %v8303
    %v8305 = vrot.slane %v8304, 4
    %v8306 = vrot.slane %v8232, 5
    %v8307 = vrot.slane %v8228, 6
    %v8308 = vor.u32 %v8306, %v8307
    %v8309 = vsel %vm433, %v8305, %v8308
    %v8310 = vrot.slane %v8308, 4
    %v8311 = vrot.slane %v8242, 5
    %v8312 = vrot.slane %v8238, 6
    %v8313 = vor.u32 %v8311, %v8312
    %v8314 = vsel %vm433, %v8310, %v8313
    %v8315 = vrot.slane %v8313, 4
    %v8316 = vrot.slane %v8252, 5
    %v8317 = vrot.slane %v8248, 6
    %v8318 = vor.u32 %v8316, %v8317
    %v8319 = vsel %vm433, %v8315, %v8318
    %v8320 = vrot.slane %v8318, 4
    %8321 = vrot.lane.b32.xlu0 %v8304, 64
    %v8322 = vpop.permute.xlu0 %8321
    %8323 = vrot.lane.b32.xlu0 %v8309, 64
    %v8324 = vpop.permute.xlu0 %8323
    %8325 = vrot.lane.b32.xlu0 %v8314, 64
    %v8326 = vpop.permute.xlu0 %8325
    %8327 = vrot.lane.b32.xlu0 %v8319, 64
    %v8328 = vpop.permute.xlu0 %8327
    %8329 = vrot.lane.b32.xlu0 %v8320, 64
    %v8330 = vpop.permute.xlu0 %8329
    %v8336 = vld [vmem:[#allocation4 + $0x8] sm:$0xc]
    %v8337 = vsel %vm470, %v8322, %v8336
    %8338 = vst [vmem:[#allocation4 + $0x8] sm:$0xc] %v8337
    %8339 = vst.msk [vmem:[#allocation4 + $0x10] sm:$0xf] %vm474, %v8324
    %8340 = vst.msk [vmem:[#allocation4 + $0x18] sm:$0xf] %vm474, %v8326
    %8341 = vst.msk [vmem:[#allocation4 + $0x20] sm:$0xf] %vm474, %v8328
    %v8342 = vld [vmem:[#allocation4 + $0x28] sm:$0x7]
    %v8343 = vsel %vm479, %v8330, %v8342
    %8344 = vst [vmem:[#allocation4 + $0x28] sm:$0x7] %v8343
    %v8345 = vrot.slane %v8214, 6
    %v8346 = vrot.slane %v8345, 4
    %v8347 = vrot.slane %v8215, 6
    %v8348 = vsel %vm485, %v8346, %v8347
    %v8349 = vrot.slane %v8347, 4
    %v8350 = vrot.slane %v8216, 6
    %v8351 = vsel %vm485, %v8349, %v8350
    %v8352 = vrot.slane %v8350, 4
    %v8353 = vrot.slane %v8217, 6
    %v8354 = vsel %vm485, %v8352, %v8353
    %v8355 = vrot.slane %v8353, 4
    %8356 = vrot.lane.b32.xlu0 %v8345, 96
    %v8357 = vpop.permute.xlu0 %8356
    %8358 = vrot.lane.b32.xlu0 %v8348, 96
    %v8359 = vpop.permute.xlu0 %8358
    %8360 = vrot.lane.b32.xlu0 %v8351, 96
    %v8361 = vpop.permute.xlu0 %8360
    %8362 = vrot.lane.b32.xlu0 %v8354, 96
    %v8363 = vpop.permute.xlu0 %8362
    %8364 = vrot.lane.b32.xlu0 %v8355, 96
    %v8365 = vpop.permute.xlu0 %8364
    %8371 = vst.msk [vmem:[#allocation4 + $0x8] sm:$0xc] %vm512, %v8357
    %8372 = vst.msk [vmem:[#allocation4 + $0x10] sm:$0xf] %vm514, %v8359
    %8373 = vst.msk [vmem:[#allocation4 + $0x18] sm:$0xf] %vm514, %v8361
    %8374 = vst.msk [vmem:[#allocation4 + $0x20] sm:$0xf] %vm514, %v8363
    %8375 = vst.msk [vmem:[#allocation4 + $0x28] sm:$0x3] %vm518, %v8365
    %v8376 = vrot.slane %v8222, 6
    %v8377 = vrot.slane %v8219, 7
    %v8378 = vor.u32 %v8376, %v8377
    %v8379 = vrot.slane %v8378, 4
    %v8380 = vrot.slane %v8232, 6
    %v8381 = vrot.slane %v8228, 7
    %v8382 = vor.u32 %v8380, %v8381
    %v8383 = vsel %vm522, %v8379, %v8382
    %v8384 = vrot.slane %v8382, 4
    %v8385 = vrot.slane %v8242, 6
    %v8386 = vrot.slane %v8238, 7
    %v8387 = vor.u32 %v8385, %v8386
    %v8388 = vsel %vm522, %v8384, %v8387
    %v8389 = vrot.slane %v8387, 4
    %v8390 = vrot.slane %v8252, 6
    %v8391 = vrot.slane %v8248, 7
    %v8392 = vor.u32 %v8390, %v8391
    %v8393 = vsel %vm522, %v8389, %v8392
    %v8394 = vrot.slane %v8392, 4
    %v8400 = vld [vmem:[#allocation4 + $0xc] sm:$0xe]
    %v8401 = vsel %vm549, %v8378, %v8400
    %8402 = vst [vmem:[#allocation4 + $0xc] sm:$0xe] %v8401
    %8403 = vst.msk [vmem:[#allocation4 + $0x14] sm:$0xf] %vm385, %v8383
    %8404 = vst.msk [vmem:[#allocation4 + $0x1c] sm:$0xf] %vm385, %v8388
    %8405 = vst.msk [vmem:[#allocation4 + $0x24] sm:$0xf] %vm385, %v8393
    %v8406 = vld [vmem:[#allocation4 + $0x2c] sm:$0x3]
    %v8407 = vsel %vm557, %v8394, %v8406
    %8408 = vst [vmem:[#allocation4 + $0x2c] sm:$0x3] %v8407
    %v8409 = vrot.slane %v8214, 7
    %v8410 = vrot.slane %v8409, 4
    %v8411 = vrot.slane %v8215, 7
    %v8412 = vsel %vm563, %v8410, %v8411
    %v8413 = vrot.slane %v8411, 4
    %v8414 = vrot.slane %v8216, 7
    %v8415 = vsel %vm563, %v8413, %v8414
    %v8416 = vrot.slane %v8414, 4
    %v8417 = vrot.slane %v8217, 7
    %v8418 = vsel %vm563, %v8416, %v8417
    %v8419 = vrot.slane %v8417, 4
    %8420 = vrot.lane.b32.xlu0 %v8409, 32
    %v8421 = vpop.permute.xlu0 %8420
    %8422 = vrot.lane.b32.xlu0 %v8412, 32
    %v8423 = vpop.permute.xlu0 %8422
    %8424 = vrot.lane.b32.xlu0 %v8415, 32
    %v8425 = vpop.permute.xlu0 %8424
    %8426 = vrot.lane.b32.xlu0 %v8418, 32
    %v8427 = vpop.permute.xlu0 %8426
    %8428 = vrot.lane.b32.xlu0 %v8419, 32
    %v8429 = vpop.permute.xlu0 %8428
    %8435 = vst.msk [vmem:[#allocation4 + $0xc] sm:$0xe] %vm590, %v8421
    %8436 = vst.msk [vmem:[#allocation4 + $0x14] sm:$0xf] %vm425, %v8423
    %8437 = vst.msk [vmem:[#allocation4 + $0x1c] sm:$0xf] %vm425, %v8425
    %8438 = vst.msk [vmem:[#allocation4 + $0x24] sm:$0xf] %vm425, %v8427
    %8439 = vst.msk [vmem:[#allocation4 + $0x2c] sm:$0x1] %vm595, %v8429
    %v8440 = vrot.slane %v8222, 7
    %v8441 = vor.u32 %v8440, %v8219
    %v8442 = vrot.slane %v8440, 4
    %v8443 = vrot.slane %v8232, 7
    %v8444 = vor.u32 %v8443, %v8228
    %v8445 = vsel %vm599, %v8442, %v8444
    %v8446 = vrot.slane %v8443, 4
    %v8447 = vrot.slane %v8242, 7
    %v8448 = vor.u32 %v8447, %v8238
    %v8449 = vsel %vm599, %v8446, %v8448
    %v8450 = vrot.slane %v8447, 4
    %v8451 = vrot.slane %v8252, 7
    %v8452 = vor.u32 %v8451, %v8248
    %v8453 = vsel %vm599, %v8450, %v8452
    %v8454 = vrot.slane %v8451, 4
    %8455 = vrot.lane.b32.xlu0 %v8441, 64
    %v8456 = vpop.permute.xlu0 %8455
    %8457 = vrot.lane.b32.xlu0 %v8445, 64
    %v8458 = vpop.permute.xlu0 %8457
    %8459 = vrot.lane.b32.xlu0 %v8449, 64
    %v8460 = vpop.permute.xlu0 %8459
    %8461 = vrot.lane.b32.xlu0 %v8453, 64
    %v8462 = vpop.permute.xlu0 %8461
    %8463 = vrot.lane.b32.xlu0 %v8454, 64
    %v8464 = vpop.permute.xlu0 %8463
    %v8470 = vld [vmem:[#allocation4 + $0xc] sm:$0xf]
    %v8471 = vsel %vm632, %v8456, %v8470
    %8472 = vst [vmem:[#allocation4 + $0xc] sm:$0xf] %v8471
    %8473 = vst.msk [vmem:[#allocation4 + $0x14] sm:$0xf] %vm474, %v8458
    %8474 = vst.msk [vmem:[#allocation4 + $0x1c] sm:$0xf] %vm474, %v8460
    %8475 = vst.msk [vmem:[#allocation4 + $0x24] sm:$0xf] %vm474, %v8462
    %v8476 = vld [vmem:[#allocation4 + $0x2c] sm:$0x1]
    %v8477 = vsel %vm640, %v8464, %v8476
    %8478 = vst [vmem:[#allocation4 + $0x2c] sm:$0x1] %v8477
    %8479 = vrot.lane.b32.xlu0 %v8214, 96
    %v8480 = vpop.permute.xlu0 %8479
    %8481 = vrot.lane.b32.xlu0 %v8215, 96
    %v8482 = vpop.permute.xlu0 %8481
    %8483 = vrot.lane.b32.xlu0 %v8216, 96
    %v8484 = vpop.permute.xlu0 %8483
    %8485 = vrot.lane.b32.xlu0 %v8217, 96
    %v8486 = vpop.permute.xlu0 %8485
    %8491 = vst.msk [vmem:[#allocation4 + $0xc] sm:$0xf] %vm514, %v8480
    %8492 = vst.msk [vmem:[#allocation4 + $0x14] sm:$0xf] %vm514, %v8482
    %8493 = vst.msk [vmem:[#allocation4 + $0x1c] sm:$0xf] %vm514, %v8484
    %8494 = vst.msk [vmem:[#allocation4 + $0x24] sm:$0xf] %vm514, %v8486
    %v8495 = vld [vmem:[#allocation4] sm:$0xff]
    %v8496 = vld [vmem:[#allocation4 + $0x8] sm:$0xff]
    %v8497 = vld [vmem:[#allocation4 + $0x10] sm:$0xff]
    %v8498 = vld [vmem:[#allocation4 + $0x18] sm:$0xff]
    %v8499 = vsel %vm717, %v8495, 0
    %v8500 = vsel %vm718, %v8496, 0
    %v8501 = vsel %vm719, %v8497, 0
    %v8502 = vsel %vm720, %v8498, 0
    %v8503 = vld [vmem:[#allocation13] sm:$0xf]
    %v8504 = vld [vmem:[#allocation13 + $0x4] sm:$0xf]
    %v8505 = vld [vmem:[#allocation13 + $0x8] sm:$0xf]
    %v8506 = vld [vmem:[#allocation13 + $0xc] sm:$0xf]
    %v8507 = vld [vmem:[#allocation13 + $0x10] sm:$0xf]
    %v8508 = vld [vmem:[#allocation13 + $0x14] sm:$0xf]
    %v8509 = vld [vmem:[#allocation13 + $0x18] sm:$0xf]
    %v8510 = vld [vmem:[#allocation13 + $0x1c] sm:$0xf]
    %v8511 = vld [vmem:[#allocation13 + $0x20] sm:$0xf]
    %v8512 = vld [vmem:[#allocation13 + $0x24] sm:$0xf]
    %v8513 = vld [vmem:[#allocation13 + $0x28] sm:$0xf]
    %v8514 = vld [vmem:[#allocation13 + $0x2c] sm:$0xf]
    %v8515 = vld [vmem:[#allocation13 + $0x30] sm:$0xf]
    %v8516 = vld [vmem:[#allocation13 + $0x34] sm:$0xf]
    %v8517 = vld [vmem:[#allocation13 + $0x38] sm:$0xf]
    %v8518 = vld [vmem:[#allocation13 + $0x3c] sm:$0xf]
    %v8519 = vld [vmem:[#allocation13 + $0x40] sm:$0xf]
    %v8520 = vld [vmem:[#allocation13 + $0x44] sm:$0xf]
    %v8521 = vld [vmem:[#allocation13 + $0x48] sm:$0xf]
    %v8522 = vld [vmem:[#allocation13 + $0x4c] sm:$0xf]
    %v8523 = vld [vmem:[#allocation13 + $0x50] sm:$0xf]
    %v8524 = vld [vmem:[#allocation13 + $0x54] sm:$0xf]
    %v8525 = vld [vmem:[#allocation13 + $0x58] sm:$0xf]
    %v8526 = vld [vmem:[#allocation13 + $0x5c] sm:$0xf]
    %v8527 = vld [vmem:[#allocation13 + $0x60] sm:$0xf]
    %v8528 = vld [vmem:[#allocation13 + $0x64] sm:$0xf]
    %v8529 = vld [vmem:[#allocation13 + $0x68] sm:$0xf]
    %v8530 = vld [vmem:[#allocation13 + $0x6c] sm:$0xf]
    %v8531 = vld [vmem:[#allocation13 + $0x70] sm:$0xf]
    %v8532 = vld [vmem:[#allocation13 + $0x74] sm:$0xf]
    %v8533 = vld [vmem:[#allocation13 + $0x78] sm:$0xf]
    %v8534 = vld [vmem:[#allocation13 + $0x7c] sm:$0xf]
    %v8535 = vld [vmem:[#allocation4 + $0x20] sm:$0xff]
    %v8536 = vsel %vm799, %v8496, 0
    %v8537 = vsel %vm800, %v8497, 0
    %v8538 = vsel %vm801, %v8498, 0
    %v8539 = vsel %vm802, %v8535, 0
    %s8540 = scalar_lea.vmem [#allocation13], 128
    %v8541 = vld [vmem:[%s8540] sm:$0xf]
    %v8542 = vld [vmem:[%s8540 + $0x4] sm:$0xf]
    %v8543 = vld [vmem:[%s8540 + $0x8] sm:$0xf]
    %v8544 = vld [vmem:[%s8540 + $0xc] sm:$0xf]
    %v8545 = vld [vmem:[%s8540 + $0x10] sm:$0xf]
    %v8546 = vld [vmem:[%s8540 + $0x14] sm:$0xf]
    %v8547 = vld [vmem:[%s8540 + $0x18] sm:$0xf]
    %v8548 = vld [vmem:[%s8540 + $0x1c] sm:$0xf]
    %v8549 = vld [vmem:[%s8540 + $0x20] sm:$0xf]
    %v8550 = vld [vmem:[%s8540 + $0x24] sm:$0xf]
    %v8551 = vld [vmem:[%s8540 + $0x28] sm:$0xf]
    %v8552 = vld [vmem:[%s8540 + $0x2c] sm:$0xf]
    %v8553 = vld [vmem:[%s8540 + $0x30] sm:$0xf]
    %v8554 = vld [vmem:[%s8540 + $0x34] sm:$0xf]
    %v8555 = vld [vmem:[%s8540 + $0x38] sm:$0xf]
    %v8556 = vld [vmem:[%s8540 + $0x3c] sm:$0xf]
    %v8557 = vld [vmem:[%s8540 + $0x40] sm:$0xf]
    %v8558 = vld [vmem:[%s8540 + $0x44] sm:$0xf]
    %v8559 = vld [vmem:[%s8540 + $0x48] sm:$0xf]
    %v8560 = vld [vmem:[%s8540 + $0x4c] sm:$0xf]
    %v8561 = vld [vmem:[%s8540 + $0x50] sm:$0xf]
    %v8562 = vld [vmem:[%s8540 + $0x54] sm:$0xf]
    %v8563 = vld [vmem:[%s8540 + $0x58] sm:$0xf]
    %v8564 = vld [vmem:[%s8540 + $0x5c] sm:$0xf]
    %v8565 = vld [vmem:[%s8540 + $0x60] sm:$0xf]
    %v8566 = vld [vmem:[%s8540 + $0x64] sm:$0xf]
    %v8567 = vld [vmem:[%s8540 + $0x68] sm:$0xf]
    %v8568 = vld [vmem:[%s8540 + $0x6c] sm:$0xf]
    %v8569 = vld [vmem:[%s8540 + $0x70] sm:$0xf]
    %v8570 = vld [vmem:[%s8540 + $0x74] sm:$0xf]
    %v8571 = vld [vmem:[%s8540 + $0x78] sm:$0xf]
    %v8572 = vld [vmem:[%s8540 + $0x7c] sm:$0xf]
    %v8577 = vunpack.c.l.b16 %v8536
    %v8578 = vunpack.c.h.b16 %v8536
    %v8579 = vunpack.c.l.b16 %v8537
    %v8580 = vunpack.c.h.b16 %v8537
    %v8581 = vunpack.c.l.b16 %v8538
    %v8582 = vunpack.c.h.b16 %v8538
    %v8583 = vunpack.c.l.b16 %v8539
    %v8584 = vunpack.c.h.b16 %v8539
    %v8585 = vpack.c.b16 %v8579, %v8577
    %v8586 = vpack.c.b16 %v8580, %v8578
    %v8587 = vpack.c.b16 %v8583, %v8581
    %v8588 = vpack.c.b16 %v8584, %v8582
    %v8625 = vunpack.c.l.b16 %v8541
    %v8626 = vunpack.c.l.b16 %v8542
    %v8627 = vunpack.c.l.b16 %v8543
    %v8628 = vunpack.c.l.b16 %v8544
    %v8629 = vunpack.c.l.b16 %v8545
    %v8630 = vunpack.c.l.b16 %v8546
    %v8631 = vunpack.c.l.b16 %v8547
    %v8632 = vunpack.c.l.b16 %v8548
    %v8633 = vunpack.c.l.b16 %v8549
    %v8634 = vunpack.c.l.b16 %v8550
    %v8635 = vunpack.c.l.b16 %v8551
    %v8636 = vunpack.c.l.b16 %v8552
    %v8637 = vunpack.c.l.b16 %v8553
    %v8638 = vunpack.c.l.b16 %v8554
    %v8639 = vunpack.c.l.b16 %v8555
    %v8640 = vunpack.c.l.b16 %v8556
    %v8641 = vunpack.c.l.b16 %v8557
    %v8642 = vunpack.c.l.b16 %v8558
    %v8643 = vunpack.c.l.b16 %v8559
    %v8644 = vunpack.c.l.b16 %v8560
    %v8645 = vunpack.c.l.b16 %v8561
    %v8646 = vunpack.c.l.b16 %v8562
    %v8647 = vunpack.c.l.b16 %v8563
    %v8648 = vunpack.c.l.b16 %v8564
    %v8649 = vunpack.c.l.b16 %v8565
    %v8650 = vunpack.c.l.b16 %v8566
    %v8651 = vunpack.c.l.b16 %v8567
    %v8652 = vunpack.c.l.b16 %v8568
    %v8653 = vunpack.c.l.b16 %v8569
    %v8654 = vunpack.c.l.b16 %v8570
    %v8655 = vunpack.c.l.b16 %v8571
    %v8656 = vunpack.c.l.b16 %v8572
    %v8657 = vpack.c.b16 %v8626, %v8625
    %v8658 = vpack.c.b16 %v8628, %v8627
    %v8659 = vpack.c.b16 %v8630, %v8629
    %v8660 = vpack.c.b16 %v8632, %v8631
    %v8661 = vpack.c.b16 %v8634, %v8633
    %v8662 = vpack.c.b16 %v8636, %v8635
    %v8663 = vpack.c.b16 %v8638, %v8637
    %v8664 = vpack.c.b16 %v8640, %v8639
    %v8665 = vpack.c.b16 %v8642, %v8641
    %v8666 = vpack.c.b16 %v8644, %v8643
    %v8667 = vpack.c.b16 %v8646, %v8645
    %v8668 = vpack.c.b16 %v8648, %v8647
    %v8669 = vpack.c.b16 %v8650, %v8649
    %v8670 = vpack.c.b16 %v8652, %v8651
    %v8671 = vpack.c.b16 %v8654, %v8653
    %v8672 = vpack.c.b16 %v8656, %v8655
    %8689 = vmatprep.subr.bf16.mxu0 0
    %8690 = vmatpush1.bf16.msra.mxu0 %v8664
    %8691 = vmatprep.subr.bf16.mxu0 0
    %8692 = vmatpush1.bf16.msra.mxu0 %v8663
    %8693 = vmatprep.subr.bf16.mxu0 0
    %8694 = vmatpush1.bf16.msra.mxu0 %v8662
    %8695 = vmatprep.subr.bf16.mxu0 0
    %8696 = vmatpush1.bf16.msra.mxu0 %v8661
    %8697 = vmatprep.subr.bf16.mxu0 0
    %8698 = vmatpush1.bf16.msra.mxu0 %v8660
    %8699 = vmatprep.subr.bf16.mxu0 0
    %8700 = vmatpush1.bf16.msra.mxu0 %v8659
    %8701 = vmatprep.subr.bf16.mxu0 0
    %8702 = vmatpush1.bf16.msra.mxu0 %v8658
    %8703 = vmatprep.subr.bf16.mxu0 0
    %8704 = vmatpush1.bf16.msra.mxu0 %v8657
    %8705 = vmatprep.subr.bf16.mxu0 0
    %8706 = vmatpush2.bf16.msra.mxu0 %v8672
    %8707 = vmatprep.subr.bf16.mxu0 0
    %8708 = vmatpush2.bf16.msra.mxu0 %v8671
    %8709 = vmatprep.subr.bf16.mxu0 0
    %8710 = vmatpush2.bf16.msra.mxu0 %v8670
    %8711 = vmatprep.subr.bf16.mxu0 0
    %8712 = vmatpush2.bf16.msra.mxu0 %v8669
    %8713 = vmatprep.subr.bf16.mxu0 0
    %8714 = vmatpush2.bf16.msra.mxu0 %v8668
    %8715 = vmatprep.subr.bf16.mxu0 0
    %8716 = vmatpush2.bf16.msra.mxu0 %v8667
    %8717 = vmatprep.subr.bf16.mxu0 0
    %8718 = vmatpush2.bf16.msra.mxu0 %v8666
    %8719 = vmatprep.subr.bf16.mxu0 0
    %8720 = vmatpush2.bf16.msra.mxu0 %v8665
    %8721 = vmatprep.mubr.bf16.mxu0 %v8586
    %8722 = vmatmul.mubr.bf16.gmra.mxu0 %v8585
    %v8723 = vpop.f32.mrf.mxu0
    %v8724 = vadd.f32 0.0, %v8723
    %v8725 = vpop.f32.mrf.mxu0
    %v8726 = vpop.f32.mrf.mxu0
    %v8727 = vadd.f32 0.0, %v8726
    %v8728 = vpop.f32.mrf.mxu0
    %8729 = vmatprep.mubr.bf16.mxu0 %v8588
    %8730 = vmatmul.mubr.bf16.gmra.mxu0 %v8587
    %v8731 = vpop.f32.mrf.mxu0
    %v8732 = vadd.f32 0.0, %v8731
    %v8733 = vpop.f32.mrf.mxu0
    %v8734 = vpop.f32.mrf.mxu0
    %v8735 = vadd.f32 0.0, %v8734
    %v8736 = vpop.f32.mrf.mxu0
    %8737 = vdwg.mxu0
    %v8742 = vunpack.c.l.b16 %v8499
    %v8743 = vunpack.c.h.b16 %v8499
    %v8744 = vunpack.c.l.b16 %v8500
    %v8745 = vunpack.c.h.b16 %v8500
    %v8746 = vunpack.c.l.b16 %v8501
    %v8747 = vunpack.c.h.b16 %v8501
    %v8748 = vunpack.c.l.b16 %v8502
    %v8749 = vunpack.c.h.b16 %v8502
    %v8750 = vpack.c.b16 %v8744, %v8742
    %v8751 = vpack.c.b16 %v8745, %v8743
    %v8752 = vpack.c.b16 %v8748, %v8746
    %v8753 = vpack.c.b16 %v8749, %v8747
    %v8790 = vunpack.c.l.b16 %v8503
    %v8791 = vunpack.c.l.b16 %v8504
    %v8792 = vunpack.c.l.b16 %v8505
    %v8793 = vunpack.c.l.b16 %v8506
    %v8794 = vunpack.c.l.b16 %v8507
    %v8795 = vunpack.c.l.b16 %v8508
    %v8796 = vunpack.c.l.b16 %v8509
    %v8797 = vunpack.c.l.b16 %v8510
    %v8798 = vunpack.c.l.b16 %v8511
    %v8799 = vunpack.c.l.b16 %v8512
    %v8800 = vunpack.c.l.b16 %v8513
    %v8801 = vunpack.c.l.b16 %v8514
    %v8802 = vunpack.c.l.b16 %v8515
    %v8803 = vunpack.c.l.b16 %v8516
    %v8804 = vunpack.c.l.b16 %v8517
    %v8805 = vunpack.c.l.b16 %v8518
    %v8806 = vunpack.c.l.b16 %v8519
    %v8807 = vunpack.c.l.b16 %v8520
    %v8808 = vunpack.c.l.b16 %v8521
    %v8809 = vunpack.c.l.b16 %v8522
    %v8810 = vunpack.c.l.b16 %v8523
    %v8811 = vunpack.c.l.b16 %v8524
    %v8812 = vunpack.c.l.b16 %v8525
    %v8813 = vunpack.c.l.b16 %v8526
    %v8814 = vunpack.c.l.b16 %v8527
    %v8815 = vunpack.c.l.b16 %v8528
    %v8816 = vunpack.c.l.b16 %v8529
    %v8817 = vunpack.c.l.b16 %v8530
    %v8818 = vunpack.c.l.b16 %v8531
    %v8819 = vunpack.c.l.b16 %v8532
    %v8820 = vunpack.c.l.b16 %v8533
    %v8821 = vunpack.c.l.b16 %v8534
    %v8822 = vpack.c.b16 %v8791, %v8790
    %v8823 = vpack.c.b16 %v8793, %v8792
    %v8824 = vpack.c.b16 %v8795, %v8794
    %v8825 = vpack.c.b16 %v8797, %v8796
    %v8826 = vpack.c.b16 %v8799, %v8798
    %v8827 = vpack.c.b16 %v8801, %v8800
    %v8828 = vpack.c.b16 %v8803, %v8802
    %v8829 = vpack.c.b16 %v8805, %v8804
    %v8830 = vpack.c.b16 %v8807, %v8806
    %v8831 = vpack.c.b16 %v8809, %v8808
    %v8832 = vpack.c.b16 %v8811, %v8810
    %v8833 = vpack.c.b16 %v8813, %v8812
    %v8834 = vpack.c.b16 %v8815, %v8814
    %v8835 = vpack.c.b16 %v8817, %v8816
    %v8836 = vpack.c.b16 %v8819, %v8818
    %v8837 = vpack.c.b16 %v8821, %v8820
    %8854 = vmatprep.subr.bf16.mxu0 0
    %8855 = vmatpush1.bf16.msra.mxu0 %v8829
    %8856 = vmatprep.subr.bf16.mxu0 0
    %8857 = vmatpush1.bf16.msra.mxu0 %v8828
    %8858 = vmatprep.subr.bf16.mxu0 0
    %8859 = vmatpush1.bf16.msra.mxu0 %v8827
    %8860 = vmatprep.subr.bf16.mxu0 0
    %8861 = vmatpush1.bf16.msra.mxu0 %v8826
    %8862 = vmatprep.subr.bf16.mxu0 0
    %8863 = vmatpush1.bf16.msra.mxu0 %v8825
    %8864 = vmatprep.subr.bf16.mxu0 0
    %8865 = vmatpush1.bf16.msra.mxu0 %v8824
    %8866 = vmatprep.subr.bf16.mxu0 0
    %8867 = vmatpush1.bf16.msra.mxu0 %v8823
    %8868 = vmatprep.subr.bf16.mxu0 0
    %8869 = vmatpush1.bf16.msra.mxu0 %v8822
    %8870 = vmatprep.subr.bf16.mxu0 0
    %8871 = vmatpush2.bf16.msra.mxu0 %v8837
    %8872 = vmatprep.subr.bf16.mxu0 0
    %8873 = vmatpush2.bf16.msra.mxu0 %v8836
    %8874 = vmatprep.subr.bf16.mxu0 0
    %8875 = vmatpush2.bf16.msra.mxu0 %v8835
    %8876 = vmatprep.subr.bf16.mxu0 0
    %8877 = vmatpush2.bf16.msra.mxu0 %v8834
    %8878 = vmatprep.subr.bf16.mxu0 0
    %8879 = vmatpush2.bf16.msra.mxu0 %v8833
    %8880 = vmatprep.subr.bf16.mxu0 0
    %8881 = vmatpush2.bf16.msra.mxu0 %v8832
    %8882 = vmatprep.subr.bf16.mxu0 0
    %8883 = vmatpush2.bf16.msra.mxu0 %v8831
    %8884 = vmatprep.subr.bf16.mxu0 0
    %8885 = vmatpush2.bf16.msra.mxu0 %v8830
    %8886 = vmatprep.mubr.bf16.mxu0 %v8751
    %8887 = vmatmul.mubr.bf16.gmra.mxu0 %v8750
    %v8888 = vpop.f32.mrf.mxu0
    %v8889 = vadd.f32 %v8724, %v8888
    %v8890 = vpop.f32.mrf.mxu0
    %v8891 = vpop.f32.mrf.mxu0
    %v8892 = vadd.f32 %v8727, %v8891
    %v8893 = vpop.f32.mrf.mxu0
    %8894 = vmatprep.mubr.bf16.mxu0 %v8753
    %8895 = vmatmul.mubr.bf16.gmra.mxu0 %v8752
    %v8896 = vpop.f32.mrf.mxu0
    %v8897 = vadd.f32 %v8732, %v8896
    %v8898 = vpop.f32.mrf.mxu0
    %v8899 = vpop.f32.mrf.mxu0
    %v8900 = vadd.f32 %v8735, %v8899
    %v8901 = vpop.f32.mrf.mxu0
    %8902 = vdwg.mxu0
    %v8903 = vld [vmem:[#allocation4 + $0x10] sm:$0xff]
    %v8904 = vld [vmem:[#allocation4 + $0x18] sm:$0xff]
    %v8905 = vld [vmem:[#allocation4 + $0x20] sm:$0xff]
    %v8906 = vld [vmem:[#allocation4 + $0x28] sm:$0xff]
    %v8907 = vsel %vm1215, %v8903, 0
    %v8908 = vsel %vm1216, %v8904, 0
    %v8909 = vsel %vm1217, %v8905, 0
    %v8910 = vsel %vm1218, %v8906, 0
    %s8911 = scalar_lea.vmem [#allocation13], 256
    %v8912 = vld [vmem:[%s8911] sm:$0xf]
    %v8913 = vld [vmem:[%s8911 + $0x4] sm:$0xf]
    %v8914 = vld [vmem:[%s8911 + $0x8] sm:$0xf]
    %v8915 = vld [vmem:[%s8911 + $0xc] sm:$0xf]
    %v8916 = vld [vmem:[%s8911 + $0x10] sm:$0xf]
    %v8917 = vld [vmem:[%s8911 + $0x14] sm:$0xf]
    %v8918 = vld [vmem:[%s8911 + $0x18] sm:$0xf]
    %v8919 = vld [vmem:[%s8911 + $0x1c] sm:$0xf]
    %v8920 = vld [vmem:[%s8911 + $0x20] sm:$0xf]
    %v8921 = vld [vmem:[%s8911 + $0x24] sm:$0xf]
    %v8922 = vld [vmem:[%s8911 + $0x28] sm:$0xf]
    %v8923 = vld [vmem:[%s8911 + $0x2c] sm:$0xf]
    %v8924 = vld [vmem:[%s8911 + $0x30] sm:$0xf]
    %v8925 = vld [vmem:[%s8911 + $0x34] sm:$0xf]
    %v8926 = vld [vmem:[%s8911 + $0x38] sm:$0xf]
    %v8927 = vld [vmem:[%s8911 + $0x3c] sm:$0xf]
    %v8928 = vld [vmem:[%s8911 + $0x40] sm:$0xf]
    %v8929 = vld [vmem:[%s8911 + $0x44] sm:$0xf]
    %v8930 = vld [vmem:[%s8911 + $0x48] sm:$0xf]
    %v8931 = vld [vmem:[%s8911 + $0x4c] sm:$0xf]
    %v8932 = vld [vmem:[%s8911 + $0x50] sm:$0xf]
    %v8933 = vld [vmem:[%s8911 + $0x54] sm:$0xf]
    %v8934 = vld [vmem:[%s8911 + $0x58] sm:$0xf]
    %v8935 = vld [vmem:[%s8911 + $0x5c] sm:$0xf]
    %v8936 = vld [vmem:[%s8911 + $0x60] sm:$0xf]
    %v8937 = vld [vmem:[%s8911 + $0x64] sm:$0xf]
    %v8938 = vld [vmem:[%s8911 + $0x68] sm:$0xf]
    %v8939 = vld [vmem:[%s8911 + $0x6c] sm:$0xf]
    %v8940 = vld [vmem:[%s8911 + $0x70] sm:$0xf]
    %v8941 = vld [vmem:[%s8911 + $0x74] sm:$0xf]
    %v8942 = vld [vmem:[%s8911 + $0x78] sm:$0xf]
    %v8943 = vld [vmem:[%s8911 + $0x7c] sm:$0xf]
    %v8948 = vunpack.c.l.b16 %v8907
    %v8949 = vunpack.c.h.b16 %v8907
    %v8950 = vunpack.c.l.b16 %v8908
    %v8951 = vunpack.c.h.b16 %v8908
    %v8952 = vunpack.c.l.b16 %v8909
    %v8953 = vunpack.c.h.b16 %v8909
    %v8954 = vunpack.c.l.b16 %v8910
    %v8955 = vunpack.c.h.b16 %v8910
    %v8956 = vpack.c.b16 %v8950, %v8948
    %v8957 = vpack.c.b16 %v8951, %v8949
    %v8958 = vpack.c.b16 %v8954, %v8952
    %v8959 = vpack.c.b16 %v8955, %v8953
    %v8996 = vunpack.c.l.b16 %v8912
    %v8997 = vunpack.c.l.b16 %v8913
    %v8998 = vunpack.c.l.b16 %v8914
    %v8999 = vunpack.c.l.b16 %v8915
    %v9000 = vunpack.c.l.b16 %v8916
    %v9001 = vunpack.c.l.b16 %v8917
    %v9002 = vunpack.c.l.b16 %v8918
    %v9003 = vunpack.c.l.b16 %v8919
    %v9004 = vunpack.c.l.b16 %v8920
    %v9005 = vunpack.c.l.b16 %v8921
    %v9006 = vunpack.c.l.b16 %v8922
    %v9007 = vunpack.c.l.b16 %v8923
    %v9008 = vunpack.c.l.b16 %v8924
    %v9009 = vunpack.c.l.b16 %v8925
    %v9010 = vunpack.c.l.b16 %v8926
    %v9011 = vunpack.c.l.b16 %v8927
    %v9012 = vunpack.c.l.b16 %v8928
    %v9013 = vunpack.c.l.b16 %v8929
    %v9014 = vunpack.c.l.b16 %v8930
    %v9015 = vunpack.c.l.b16 %v8931
    %v9016 = vunpack.c.l.b16 %v8932
    %v9017 = vunpack.c.l.b16 %v8933
    %v9018 = vunpack.c.l.b16 %v8934
    %v9019 = vunpack.c.l.b16 %v8935
    %v9020 = vunpack.c.l.b16 %v8936
    %v9021 = vunpack.c.l.b16 %v8937
    %v9022 = vunpack.c.l.b16 %v8938
    %v9023 = vunpack.c.l.b16 %v8939
    %v9024 = vunpack.c.l.b16 %v8940
    %v9025 = vunpack.c.l.b16 %v8941
    %v9026 = vunpack.c.l.b16 %v8942
    %v9027 = vunpack.c.l.b16 %v8943
    %v9028 = vpack.c.b16 %v8997, %v8996
    %v9029 = vpack.c.b16 %v8999, %v8998
    %v9030 = vpack.c.b16 %v9001, %v9000
    %v9031 = vpack.c.b16 %v9003, %v9002
    %v9032 = vpack.c.b16 %v9005, %v9004
    %v9033 = vpack.c.b16 %v9007, %v9006
    %v9034 = vpack.c.b16 %v9009, %v9008
    %v9035 = vpack.c.b16 %v9011, %v9010
    %v9036 = vpack.c.b16 %v9013, %v9012
    %v9037 = vpack.c.b16 %v9015, %v9014
    %v9038 = vpack.c.b16 %v9017, %v9016
    %v9039 = vpack.c.b16 %v9019, %v9018
    %v9040 = vpack.c.b16 %v9021, %v9020
    %v9041 = vpack.c.b16 %v9023, %v9022
    %v9042 = vpack.c.b16 %v9025, %v9024
    %v9043 = vpack.c.b16 %v9027, %v9026
    %9060 = vmatprep.subr.bf16.mxu0 0
    %9061 = vmatpush1.bf16.msra.mxu0 %v9035
    %9062 = vmatprep.subr.bf16.mxu0 0
    %9063 = vmatpush1.bf16.msra.mxu0 %v9034
    %9064 = vmatprep.subr.bf16.mxu0 0
    %9065 = vmatpush1.bf16.msra.mxu0 %v9033
    %9066 = vmatprep.subr.bf16.mxu0 0
    %9067 = vmatpush1.bf16.msra.mxu0 %v9032
    %9068 = vmatprep.subr.bf16.mxu0 0
    %9069 = vmatpush1.bf16.msra.mxu0 %v9031
    %9070 = vmatprep.subr.bf16.mxu0 0
    %9071 = vmatpush1.bf16.msra.mxu0 %v9030
    %9072 = vmatprep.subr.bf16.mxu0 0
    %9073 = vmatpush1.bf16.msra.mxu0 %v9029
    %9074 = vmatprep.subr.bf16.mxu0 0
    %9075 = vmatpush1.bf16.msra.mxu0 %v9028
    %9076 = vmatprep.subr.bf16.mxu0 0
    %9077 = vmatpush2.bf16.msra.mxu0 %v9043
    %9078 = vmatprep.subr.bf16.mxu0 0
    %9079 = vmatpush2.bf16.msra.mxu0 %v9042
    %9080 = vmatprep.subr.bf16.mxu0 0
    %9081 = vmatpush2.bf16.msra.mxu0 %v9041
    %9082 = vmatprep.subr.bf16.mxu0 0
    %9083 = vmatpush2.bf16.msra.mxu0 %v9040
    %9084 = vmatprep.subr.bf16.mxu0 0
    %9085 = vmatpush2.bf16.msra.mxu0 %v9039
    %9086 = vmatprep.subr.bf16.mxu0 0
    %9087 = vmatpush2.bf16.msra.mxu0 %v9038
    %9088 = vmatprep.subr.bf16.mxu0 0
    %9089 = vmatpush2.bf16.msra.mxu0 %v9037
    %9090 = vmatprep.subr.bf16.mxu0 0
    %9091 = vmatpush2.bf16.msra.mxu0 %v9036
    %9092 = vmatprep.mubr.bf16.mxu0 %v8957
    %9093 = vmatmul.mubr.bf16.gmra.mxu0 %v8956
    %v9094 = vpop.f32.mrf.mxu0
    %v9095 = vadd.f32 0.0, %v9094
    %v9096 = vpop.f32.mrf.mxu0
    %v9097 = vpop.f32.mrf.mxu0
    %v9098 = vadd.f32 0.0, %v9097
    %v9099 = vpop.f32.mrf.mxu0
    %9100 = vmatprep.mubr.bf16.mxu0 %v8959
    %9101 = vmatmul.mubr.bf16.gmra.mxu0 %v8958
    %v9102 = vpop.f32.mrf.mxu0
    %v9103 = vadd.f32 0.0, %v9102
    %v9104 = vpop.f32.mrf.mxu0
    %v9105 = vpop.f32.mrf.mxu0
    %v9106 = vadd.f32 0.0, %v9105
    %v9107 = vpop.f32.mrf.mxu0
    %9108 = vdwg.mxu0
    %v9109 = vadd.f32 %v8889, %v9095
    %v9110 = vadd.f32 %v8892, %v9098
    %v9111 = vadd.f32 %v8897, %v9103
    %v9112 = vadd.f32 %v8900, %v9106
    %v9113 = vld [vmem:[#allocation4 + $0x18] sm:$0xff]
    %v9114 = vld [vmem:[#allocation4 + $0x20] sm:$0xff]
    %v9115 = vld [vmem:[#allocation4 + $0x28] sm:$0xff]
    %v9116 = vld [vmem:[#allocation4 + $0x30] sm:$0xff]
    %v9117 = vsel %vm1470, %v9113, 0
    %v9118 = vsel %vm1471, %v9114, 0
    %v9119 = vsel %vm1472, %v9115, 0
    %v9120 = vsel %vm1473, %v9116, 0
    %s9121 = scalar_lea.vmem [#allocation13], 384
    %v9122 = vld [vmem:[%s9121] sm:$0xf]
    %v9123 = vld [vmem:[%s9121 + $0x4] sm:$0xf]
    %v9124 = vld [vmem:[%s9121 + $0x8] sm:$0xf]
    %v9125 = vld [vmem:[%s9121 + $0xc] sm:$0xf]
    %v9126 = vld [vmem:[%s9121 + $0x10] sm:$0xf]
    %v9127 = vld [vmem:[%s9121 + $0x14] sm:$0xf]
    %v9128 = vld [vmem:[%s9121 + $0x18] sm:$0xf]
    %v9129 = vld [vmem:[%s9121 + $0x1c] sm:$0xf]
    %v9130 = vld [vmem:[%s9121 + $0x20] sm:$0xf]
    %v9131 = vld [vmem:[%s9121 + $0x24] sm:$0xf]
    %v9132 = vld [vmem:[%s9121 + $0x28] sm:$0xf]
    %v9133 = vld [vmem:[%s9121 + $0x2c] sm:$0xf]
    %v9134 = vld [vmem:[%s9121 + $0x30] sm:$0xf]
    %v9135 = vld [vmem:[%s9121 + $0x34] sm:$0xf]
    %v9136 = vld [vmem:[%s9121 + $0x38] sm:$0xf]
    %v9137 = vld [vmem:[%s9121 + $0x3c] sm:$0xf]
    %v9138 = vld [vmem:[%s9121 + $0x40] sm:$0xf]
    %v9139 = vld [vmem:[%s9121 + $0x44] sm:$0xf]
    %v9140 = vld [vmem:[%s9121 + $0x48] sm:$0xf]
    %v9141 = vld [vmem:[%s9121 + $0x4c] sm:$0xf]
    %v9142 = vld [vmem:[%s9121 + $0x50] sm:$0xf]
    %v9143 = vld [vmem:[%s9121 + $0x54] sm:$0xf]
    %v9144 = vld [vmem:[%s9121 + $0x58] sm:$0xf]
    %v9145 = vld [vmem:[%s9121 + $0x5c] sm:$0xf]
    %v9146 = vld [vmem:[%s9121 + $0x60] sm:$0xf]
    %v9147 = vld [vmem:[%s9121 + $0x64] sm:$0xf]
    %v9148 = vld [vmem:[%s9121 + $0x68] sm:$0xf]
    %v9149 = vld [vmem:[%s9121 + $0x6c] sm:$0xf]
    %v9150 = vld [vmem:[%s9121 + $0x70] sm:$0xf]
    %v9151 = vld [vmem:[%s9121 + $0x74] sm:$0xf]
    %v9152 = vld [vmem:[%s9121 + $0x78] sm:$0xf]
    %v9153 = vld [vmem:[%s9121 + $0x7c] sm:$0xf]
    %v9158 = vunpack.c.l.b16 %v9117
    %v9159 = vunpack.c.h.b16 %v9117
    %v9160 = vunpack.c.l.b16 %v9118
    %v9161 = vunpack.c.h.b16 %v9118
    %v9162 = vunpack.c.l.b16 %v9119
    %v9163 = vunpack.c.h.b16 %v9119
    %v9164 = vunpack.c.l.b16 %v9120
    %v9165 = vunpack.c.h.b16 %v9120
    %v9166 = vpack.c.b16 %v9160, %v9158
    %v9167 = vpack.c.b16 %v9161, %v9159
    %v9168 = vpack.c.b16 %v9164, %v9162
    %v9169 = vpack.c.b16 %v9165, %v9163
    %v9206 = vunpack.c.l.b16 %v9122
    %v9207 = vunpack.c.l.b16 %v9123
    %v9208 = vunpack.c.l.b16 %v9124
    %v9209 = vunpack.c.l.b16 %v9125
    %v9210 = vunpack.c.l.b16 %v9126
    %v9211 = vunpack.c.l.b16 %v9127
    %v9212 = vunpack.c.l.b16 %v9128
    %v9213 = vunpack.c.l.b16 %v9129
    %v9214 = vunpack.c.l.b16 %v9130
    %v9215 = vunpack.c.l.b16 %v9131
    %v9216 = vunpack.c.l.b16 %v9132
    %v9217 = vunpack.c.l.b16 %v9133
    %v9218 = vunpack.c.l.b16 %v9134
    %v9219 = vunpack.c.l.b16 %v9135
    %v9220 = vunpack.c.l.b16 %v9136
    %v9221 = vunpack.c.l.b16 %v9137
    %v9222 = vunpack.c.l.b16 %v9138
    %v9223 = vunpack.c.l.b16 %v9139
    %v9224 = vunpack.c.l.b16 %v9140
    %v9225 = vunpack.c.l.b16 %v9141
    %v9226 = vunpack.c.l.b16 %v9142
    %v9227 = vunpack.c.l.b16 %v9143
    %v9228 = vunpack.c.l.b16 %v9144
    %v9229 = vunpack.c.l.b16 %v9145
    %v9230 = vunpack.c.l.b16 %v9146
    %v9231 = vunpack.c.l.b16 %v9147
    %v9232 = vunpack.c.l.b16 %v9148
    %v9233 = vunpack.c.l.b16 %v9149
    %v9234 = vunpack.c.l.b16 %v9150
    %v9235 = vunpack.c.l.b16 %v9151
    %v9236 = vunpack.c.l.b16 %v9152
    %v9237 = vunpack.c.l.b16 %v9153
    %v9238 = vpack.c.b16 %v9207, %v9206
    %v9239 = vpack.c.b16 %v9209, %v9208
    %v9240 = vpack.c.b16 %v9211, %v9210
    %v9241 = vpack.c.b16 %v9213, %v9212
    %v9242 = vpack.c.b16 %v9215, %v9214
    %v9243 = vpack.c.b16 %v9217, %v9216
    %v9244 = vpack.c.b16 %v9219, %v9218
    %v9245 = vpack.c.b16 %v9221, %v9220
    %v9246 = vpack.c.b16 %v9223, %v9222
    %v9247 = vpack.c.b16 %v9225, %v9224
    %v9248 = vpack.c.b16 %v9227, %v9226
    %v9249 = vpack.c.b16 %v9229, %v9228
    %v9250 = vpack.c.b16 %v9231, %v9230
    %v9251 = vpack.c.b16 %v9233, %v9232
    %v9252 = vpack.c.b16 %v9235, %v9234
    %v9253 = vpack.c.b16 %v9237, %v9236
    %9270 = vmatprep.subr.bf16.mxu0 0
    %9271 = vmatpush1.bf16.msra.mxu0 %v9245
    %9272 = vmatprep.subr.bf16.mxu0 0
    %9273 = vmatpush1.bf16.msra.mxu0 %v9244
    %9274 = vmatprep.subr.bf16.mxu0 0
    %9275 = vmatpush1.bf16.msra.mxu0 %v9243
    %9276 = vmatprep.subr.bf16.mxu0 0
    %9277 = vmatpush1.bf16.msra.mxu0 %v9242
    %9278 = vmatprep.subr.bf16.mxu0 0
    %9279 = vmatpush1.bf16.msra.mxu0 %v9241
    %9280 = vmatprep.subr.bf16.mxu0 0
    %9281 = vmatpush1.bf16.msra.mxu0 %v9240
    %9282 = vmatprep.subr.bf16.mxu0 0
    %9283 = vmatpush1.bf16.msra.mxu0 %v9239
    %9284 = vmatprep.subr.bf16.mxu0 0
    %9285 = vmatpush1.bf16.msra.mxu0 %v9238
    %9286 = vmatprep.subr.bf16.mxu0 0
    %9287 = vmatpush2.bf16.msra.mxu0 %v9253
    %9288 = vmatprep.subr.bf16.mxu0 0
    %9289 = vmatpush2.bf16.msra.mxu0 %v9252
    %9290 = vmatprep.subr.bf16.mxu0 0
    %9291 = vmatpush2.bf16.msra.mxu0 %v9251
    %9292 = vmatprep.subr.bf16.mxu0 0
    %9293 = vmatpush2.bf16.msra.mxu0 %v9250
    %9294 = vmatprep.subr.bf16.mxu0 0
    %9295 = vmatpush2.bf16.msra.mxu0 %v9249
    %9296 = vmatprep.subr.bf16.mxu0 0
    %9297 = vmatpush2.bf16.msra.mxu0 %v9248
    %9298 = vmatprep.subr.bf16.mxu0 0
    %9299 = vmatpush2.bf16.msra.mxu0 %v9247
    %9300 = vmatprep.subr.bf16.mxu0 0
    %9301 = vmatpush2.bf16.msra.mxu0 %v9246
    %9302 = vmatprep.mubr.bf16.mxu0 %v9167
    %9303 = vmatmul.mubr.bf16.gmra.mxu0 %v9166
    %v9304 = vpop.f32.mrf.mxu0
    %v9305 = vadd.f32 0.0, %v9304
    %v9306 = vpop.f32.mrf.mxu0
    %v9307 = vpop.f32.mrf.mxu0
    %v9308 = vadd.f32 0.0, %v9307
    %v9309 = vpop.f32.mrf.mxu0
    %9310 = vmatprep.mubr.bf16.mxu0 %v9169
    %9311 = vmatmul.mubr.bf16.gmra.mxu0 %v9168
    %v9312 = vpop.f32.mrf.mxu0
    %v9313 = vadd.f32 0.0, %v9312
    %v9314 = vpop.f32.mrf.mxu0
    %v9315 = vpop.f32.mrf.mxu0
    %v9316 = vadd.f32 0.0, %v9315
    %v9317 = vpop.f32.mrf.mxu0
    %9318 = vdwg.mxu0
    %v9319 = vadd.f32 %v9109, %v9305
    %v9320 = vadd.f32 %v9110, %v9308
    %v9321 = vadd.f32 %v9111, %v9313
    %v9322 = vadd.f32 %v9112, %v9316
    %v9324 = vshrl.u32 %v8105, 16
    %v9326 = vrot.slane %v9324, 7
    %v9327 = vshll.u32 %v8105, 16
    %v9329 = vor.u32 %v9326, %v9327
    %v9331 = vshrl.u32 %v8106, 16
    %v9333 = vrot.slane %v9331, 7
    %v9334 = vshll.u32 %v8106, 16
    %v9336 = vor.u32 %v9333, %v9334
    %v9337 = vsel %vm597, %v9326, %v9336
    %v9339 = vsel %vm1694, %v8077, %v9329
    %v9340 = vrot.slane %v9327, 1
    %v9341 = vor.u32 %v9324, %v9340
    %v9342 = vrot.slane %v9334, 1
    %v9343 = vsel %vm1696, %v9341, %v9342
    %v9344 = vor.u32 %v9331, %v9342
    %v9346 = vpack.c.b16 %v8104, %v8104
    %v9348 = vsel %vm1706, %v9344, %v9346
    %v9350 = vunpack.c.l.b16 %v9339
    %v9351 = vunpack.c.h.b16 %v9339
    %v9352 = vunpack.c.l.b16 %v9337
    %v9353 = vunpack.c.h.b16 %v9337
    %v9354 = vpack.c.b16 %v9350, %v9350
    %v9355 = vpack.c.b16 %v9351, %v9351
    %v9356 = vpack.c.b16 %v9352, %v9352
    %v9357 = vpack.c.b16 %v9353, %v9353
    %v9362 = vsel %vm1728, %v8077, %v9354
    %v9363 = vsel %vm1729, %v8078, %v9355
    %v9364 = vsel %vm1730, %v8079, %v9356
    %v9365 = vsel %vm1731, %v8080, %v9357
    %v9367 = vunpack.c.l.b16 %v9343
    %v9368 = vunpack.c.h.b16 %v9343
    %v9369 = vunpack.c.l.b16 %v9348
    %v9370 = vunpack.c.h.b16 %v9348
    %v9371 = vpack.c.b16 %v9367, %v9367
    %v9372 = vpack.c.b16 %v9368, %v9368
    %v9373 = vpack.c.b16 %v9369, %v9369
    %v9374 = vpack.c.b16 %v9370, %v9370
    %v9379 = vsel %vm1769, %v8077, %v9371
    %v9380 = vsel %vm1770, %v8078, %v9372
    %v9381 = vsel %vm1771, %v8079, %v9373
    %v9382 = vsel %vm1772, %v8080, %v9374
    %v9383 = vmax.bf16 %v9362, %v8077
    %v9384 = vmax.bf16 %v9363, %v8078
    %v9385 = vmax.bf16 %v9364, %v8079
    %v9386 = vmax.bf16 %v9365, %v8080
    %v9387 = vmax.bf16 %v9383, %v9379
    %v9388 = vmax.bf16 %v9384, %v9380
    %v9389 = vmax.bf16 %v9385, %v9381
    %v9390 = vmax.bf16 %v9386, %v9382
    %v9391 = vld [vmem:[%s61] sm:$0xf]
    %v9392 = vld [vmem:[%s61 + $0x4] sm:$0xf]
    %v9393 = vld [vmem:[%s61 + $0x8] sm:$0xf]
    %v9394 = vld [vmem:[%s61 + $0xc] sm:$0xf]
    %v9395 = vld [vmem:[%s61 + $0x10] sm:$0xf]
    %v9396 = vld [vmem:[%s61 + $0x14] sm:$0xf]
    %v9397 = vld [vmem:[%s61 + $0x18] sm:$0xf]
    %v9398 = vld [vmem:[%s61 + $0x1c] sm:$0xf]
    %v9399 = vld [vmem:[%s61 + $0x20] sm:$0xf]
    %v9400 = vld [vmem:[%s61 + $0x24] sm:$0xf]
    %v9401 = vld [vmem:[%s61 + $0x28] sm:$0xf]
    %v9402 = vld [vmem:[%s61 + $0x2c] sm:$0xf]
    %v9403 = vld [vmem:[%s61 + $0x30] sm:$0xf]
    %v9404 = vld [vmem:[%s61 + $0x34] sm:$0xf]
    %v9405 = vld [vmem:[%s61 + $0x38] sm:$0xf]
    %v9406 = vld [vmem:[%s61 + $0x3c] sm:$0xf]
    %v9411 = vunpack.c.l.b16 %v9387
    %v9412 = vunpack.c.l.b16 %v9388
    %v9413 = vunpack.c.l.b16 %v9389
    %v9414 = vunpack.c.l.b16 %v9390
    %v9415 = vpack.c.b16 %v9412, %v9411
    %v9416 = vpack.c.b16 %v9414, %v9413
    %v9435 = vunpack.c.l.b16 %v9391
    %v9436 = vunpack.c.l.b16 %v9392
    %v9437 = vunpack.c.l.b16 %v9393
    %v9438 = vunpack.c.l.b16 %v9394
    %v9439 = vunpack.c.l.b16 %v9395
    %v9440 = vunpack.c.l.b16 %v9396
    %v9441 = vunpack.c.l.b16 %v9397
    %v9442 = vunpack.c.l.b16 %v9398
    %v9443 = vunpack.c.l.b16 %v9399
    %v9444 = vunpack.c.l.b16 %v9400
    %v9445 = vunpack.c.l.b16 %v9401
    %v9446 = vunpack.c.l.b16 %v9402
    %v9447 = vunpack.c.l.b16 %v9403
    %v9448 = vunpack.c.l.b16 %v9404
    %v9449 = vunpack.c.l.b16 %v9405
    %v9450 = vunpack.c.l.b16 %v9406
    %v9451 = vpack.c.b16 %v9436, %v9435
    %v9452 = vpack.c.b16 %v9438, %v9437
    %v9453 = vpack.c.b16 %v9440, %v9439
    %v9454 = vpack.c.b16 %v9442, %v9441
    %v9455 = vpack.c.b16 %v9444, %v9443
    %v9456 = vpack.c.b16 %v9446, %v9445
    %v9457 = vpack.c.b16 %v9448, %v9447
    %v9458 = vpack.c.b16 %v9450, %v9449
    %9467 = vmatprep.subr.bf16.mxu0 0
    %9468 = vmatpush1.bf16.msra.mxu0 %v9458
    %9469 = vmatprep.subr.bf16.mxu0 0
    %9470 = vmatpush1.bf16.msra.mxu0 %v9457
    %9471 = vmatprep.subr.bf16.mxu0 0
    %9472 = vmatpush1.bf16.msra.mxu0 %v9456
    %9473 = vmatprep.subr.bf16.mxu0 0
    %9474 = vmatpush1.bf16.msra.mxu0 %v9455
    %9475 = vmatprep.subr.bf16.mxu0 0
    %9476 = vmatpush1.bf16.msra.mxu0 %v9454
    %9477 = vmatprep.subr.bf16.mxu0 0
    %9478 = vmatpush1.bf16.msra.mxu0 %v9453
    %9479 = vmatprep.subr.bf16.mxu0 0
    %9480 = vmatpush1.bf16.msra.mxu0 %v9452
    %9481 = vmatprep.subr.bf16.mxu0 0
    %9482 = vmatpush1.bf16.msra.mxu0 %v9451
    %9483 = vmatprep.subr.bf16.mxu0 0
    %9484 = vmatpush2.bf16.msra.mxu0 0
    %9485 = vmatprep.subr.bf16.mxu0 0
    %9486 = vmatpush2.bf16.msra.mxu0 0
    %9487 = vmatprep.subr.bf16.mxu0 0
    %9488 = vmatpush2.bf16.msra.mxu0 0
    %9489 = vmatprep.subr.bf16.mxu0 0
    %9490 = vmatpush2.bf16.msra.mxu0 0
    %9491 = vmatprep.subr.bf16.mxu0 0
    %9492 = vmatpush2.bf16.msra.mxu0 0
    %9493 = vmatprep.subr.bf16.mxu0 0
    %9494 = vmatpush2.bf16.msra.mxu0 0
    %9495 = vmatprep.subr.bf16.mxu0 0
    %9496 = vmatpush2.bf16.msra.mxu0 0
    %9497 = vmatprep.subr.bf16.mxu0 0
    %9498 = vmatpush2.bf16.msra.mxu0 0
    %9499 = vmatprep.mubr.bf16.mxu0 0
    %9500 = vmatmul.mubr.bf16.gmra.mxu0 %v9415
    %v9501 = vpop.f32.mrf.mxu0
    %v9502 = vadd.f32 0.0, %v9501
    %v9503 = vpop.f32.mrf.mxu0
    %v9504 = vpop.f32.mrf.mxu0
    %v9505 = vadd.f32 0.0, %v9504
    %v9506 = vpop.f32.mrf.mxu0
    %9507 = vmatprep.mubr.bf16.mxu0 0
    %9508 = vmatmul.mubr.bf16.gmra.mxu0 %v9416
    %v9509 = vpop.f32.mrf.mxu0
    %v9510 = vadd.f32 0.0, %v9509
    %v9511 = vpop.f32.mrf.mxu0
    %v9512 = vpop.f32.mrf.mxu0
    %v9513 = vadd.f32 0.0, %v9512
    %v9514 = vpop.f32.mrf.mxu0
    %9515 = vdwg.mxu0
    %9520 = vrot.lane.b32.xlu0 %v9502, 96
    %v9521 = vpop.permute.xlu0 %9520
    %9522 = vrot.lane.b32.xlu0 %v9505, 96
    %v9523 = vpop.permute.xlu0 %9522
    %9524 = vrot.lane.b32.xlu0 %v9510, 96
    %v9525 = vpop.permute.xlu0 %9524
    %9526 = vrot.lane.b32.xlu0 %v9513, 96
    %v9527 = vpop.permute.xlu0 %9526
    %v9532 = vadd.f32 %v9319, %v9521
    %v9533 = vadd.f32 %v9320, %v9523
    %v9534 = vadd.f32 %v9321, %v9525
    %v9535 = vadd.f32 %v9322, %v9527
    %v9536 = vsel %vm1887, %v9319, %v9532
    %v9537 = vsel %vm1887, %v9320, %v9533
    %v9538 = vsel %vm1887, %v9321, %v9534
    %v9539 = vsel %vm1887, %v9322, %v9535
    %v9540 = vld [vmem:[%s63] sm:$0x1]
    %v9542 = vlaneseq
    %v9543 = vshrl.u32 %v9542, 7
    %v9544 = vsub.s32 0, %v9543
    %v9545 = vrot.slane %v9540, %v9544
    %v9547 = vmul.f32 %v9536, %v9545
    %v9548 = vmul.f32 %v9537, %v9545
    %v9549 = vmul.f32 %v9538, %v9545
    %v9550 = vmul.f32 %v9539, %v9545
    %v9551 = vld [vmem:[%s65] sm:$0x1]
    %v9553 = vlaneseq
    %v9554 = vshrl.u32 %v9553, 7
    %v9555 = vsub.s32 0, %v9554
    %v9556 = vrot.slane %v9551, %v9555
    %v9558 = vadd.f32 %v9547, %v9556
    %v9559 = vadd.f32 %v9548, %v9556
    %v9560 = vadd.f32 %v9549, %v9556
    %v9561 = vadd.f32 %v9550, %v9556
    %v9562 = vmax.f32 %v9558, 0.0
    %v9563 = vmax.f32 %v9559, 0.0
    %v9564 = vmax.f32 %v9560, 0.0
    %v9565 = vmax.f32 %v9561, 0.0
    %v9566 = vld [vmem:[%s73] sm:$0x1]
    %v9567 = vpack.c.bf16 %v9563, %v9562
    %v9568 = vpack.c.bf16 %v9565, %v9564
    %vm9569 = vcmask 261120
    %v9571 = vsel %vm9569, %v9566, 0
    %9573 = vmatprep.subr.bf16.mxu0 0
    %9574 = vmatpush1.bf16.msra.mxu0 0
    %9575 = vmatprep.subr.bf16.mxu0 0
    %9576 = vmatpush1.bf16.msra.mxu0 0
    %9577 = vmatprep.subr.bf16.mxu0 0
    %9578 = vmatpush1.bf16.msra.mxu0 0
    %9579 = vmatprep.subr.bf16.mxu0 0
    %9580 = vmatpush1.bf16.msra.mxu0 0
    %9581 = vmatprep.subr.bf16.mxu0 0
    %9582 = vmatpush1.bf16.msra.mxu0 0
    %9583 = vmatprep.subr.bf16.mxu0 0
    %9584 = vmatpush1.bf16.msra.mxu0 0
    %9585 = vmatprep.subr.bf16.mxu0 0
    %9586 = vmatpush1.bf16.msra.mxu0 %v9568
    %9587 = vmatprep.subr.bf16.mxu0 0
    %9588 = vmatpush1.bf16.msra.mxu0 %v9567
    %9589 = vmatprep.subr.bf16.mxu0 0
    %9590 = vmatpush2.bf16.msra.mxu0 0
    %9591 = vmatprep.subr.bf16.mxu0 0
    %9592 = vmatpush2.bf16.msra.mxu0 0
    %9593 = vmatprep.subr.bf16.mxu0 0
    %9594 = vmatpush2.bf16.msra.mxu0 0
    %9595 = vmatprep.subr.bf16.mxu0 0
    %9596 = vmatpush2.bf16.msra.mxu0 0
    %9597 = vmatprep.subr.bf16.mxu0 0
    %9598 = vmatpush2.bf16.msra.mxu0 0
    %9599 = vmatprep.subr.bf16.mxu0 0
    %9600 = vmatpush2.bf16.msra.mxu0 0
    %9601 = vmatprep.subr.bf16.mxu0 0
    %9602 = vmatpush2.bf16.msra.mxu0 0
    %9603 = vmatprep.subr.bf16.mxu0 0
    %9604 = vmatpush2.bf16.msra.mxu0 0
    %9605 = vmatprep.mubr.bf16.mxu0 0
    %9606 = vmatmul.mubr.bf16.gmra.mxu0 %v9571
    %v9607 = vpop.f32.mrf.mxu0
    %v9608 = vadd.f32 0.0, %v9607
    %v9609 = vpop.f32.mrf.mxu0
    %v9610 = vpop.f32.mrf.mxu0
    %v9611 = vpop.f32.mrf.mxu0
    %9612 = vdwg.mxu0
    %v9613 = vmul.f32 %v9608, 0.0625
    %v9614 = vpack.c.bf16 %v9613, %v9613
    %v9615 = vld [vmem:[%s75] sm:$0xf]
    %v9616 = vld [vmem:[%s75 + $0x4] sm:$0xf]
    %v9617 = vld [vmem:[%s75 + $0x8] sm:$0xf]
    %v9618 = vld [vmem:[%s75 + $0xc] sm:$0xf]
    %v9619 = vld [vmem:[%s75 + $0x10] sm:$0xf]
    %v9620 = vld [vmem:[%s75 + $0x14] sm:$0xf]
    %v9621 = vld [vmem:[%s75 + $0x18] sm:$0xf]
    %v9622 = vld [vmem:[%s75 + $0x1c] sm:$0xf]
    %v9623 = vld [vmem:[%s75 + $0x20] sm:$0xf]
    %v9624 = vld [vmem:[%s75 + $0x24] sm:$0xf]
    %v9625 = vld [vmem:[%s75 + $0x28] sm:$0xf]
    %v9626 = vld [vmem:[%s75 + $0x2c] sm:$0xf]
    %v9627 = vld [vmem:[%s75 + $0x30] sm:$0xf]
    %v9628 = vld [vmem:[%s75 + $0x34] sm:$0xf]
    %v9629 = vld [vmem:[%s75 + $0x38] sm:$0xf]
    %v9630 = vld [vmem:[%s75 + $0x3c] sm:$0xf]
    %v9631 = vld [vmem:[%s77] sm:$0x1]
    %v9633 = vlaneseq
    %v9634 = vshrl.u32 %v9633, 7
    %v9635 = vsub.s32 0, %v9634
    %v9636 = vrot.slane %v9631, %v9635
    %v9654 = vunpack.c.l.b16 %v9615
    %v9655 = vunpack.c.l.b16 %v9616
    %v9656 = vunpack.c.l.b16 %v9617
    %v9657 = vunpack.c.l.b16 %v9618
    %v9658 = vunpack.c.l.b16 %v9619
    %v9659 = vunpack.c.l.b16 %v9620
    %v9660 = vunpack.c.l.b16 %v9621
    %v9661 = vunpack.c.l.b16 %v9622
    %v9662 = vunpack.c.l.b16 %v9623
    %v9663 = vunpack.c.l.b16 %v9624
    %v9664 = vunpack.c.l.b16 %v9625
    %v9665 = vunpack.c.l.b16 %v9626
    %v9666 = vunpack.c.l.b16 %v9627
    %v9667 = vunpack.c.l.b16 %v9628
    %v9668 = vunpack.c.l.b16 %v9629
    %v9669 = vunpack.c.l.b16 %v9630
    %v9670 = vpack.c.b16 %v9655, %v9654
    %v9671 = vpack.c.b16 %v9657, %v9656
    %v9672 = vpack.c.b16 %v9659, %v9658
    %v9673 = vpack.c.b16 %v9661, %v9660
    %v9674 = vpack.c.b16 %v9663, %v9662
    %v9675 = vpack.c.b16 %v9665, %v9664
    %v9676 = vpack.c.b16 %v9667, %v9666
    %v9677 = vpack.c.b16 %v9669, %v9668
    %9686 = vmatprep.subr.bf16.mxu0 0
    %9687 = vmatpush1.bf16.msra.mxu0 %v9677
    %9688 = vmatprep.subr.bf16.mxu0 0
    %9689 = vmatpush1.bf16.msra.mxu0 %v9676
    %9690 = vmatprep.subr.bf16.mxu0 0
    %9691 = vmatpush1.bf16.msra.mxu0 %v9675
    %9692 = vmatprep.subr.bf16.mxu0 0
    %9693 = vmatpush1.bf16.msra.mxu0 %v9674
    %9694 = vmatprep.subr.bf16.mxu0 0
    %9695 = vmatpush1.bf16.msra.mxu0 %v9673
    %9696 = vmatprep.subr.bf16.mxu0 0
    %9697 = vmatpush1.bf16.msra.mxu0 %v9672
    %9698 = vmatprep.subr.bf16.mxu0 0
    %9699 = vmatpush1.bf16.msra.mxu0 %v9671
    %9700 = vmatprep.subr.bf16.mxu0 0
    %9701 = vmatpush1.bf16.msra.mxu0 %v9670
    %9702 = vmatprep.subr.bf16.mxu0 0
    %9703 = vmatpush2.bf16.msra.mxu0 0
    %9704 = vmatprep.subr.bf16.mxu0 0
    %9705 = vmatpush2.bf16.msra.mxu0 0
    %9706 = vmatprep.subr.bf16.mxu0 0
    %9707 = vmatpush2.bf16.msra.mxu0 0
    %9708 = vmatprep.subr.bf16.mxu0 0
    %9709 = vmatpush2.bf16.msra.mxu0 0
    %9710 = vmatprep.subr.bf16.mxu0 0
    %9711 = vmatpush2.bf16.msra.mxu0 0
    %9712 = vmatprep.subr.bf16.mxu0 0
    %9713 = vmatpush2.bf16.msra.mxu0 0
    %9714 = vmatprep.subr.bf16.mxu0 0
    %9715 = vmatpush2.bf16.msra.mxu0 0
    %9716 = vmatprep.subr.bf16.mxu0 0
    %9717 = vmatpush2.bf16.msra.mxu0 0
    %9718 = vmatprep.mubr.bf16.mxu0 0
    %9719 = vmatmul.mubr.bf16.gmra.mxu0 %v9614
    %v9720 = vpop.f32.mrf.mxu0
    %v9721 = vadd.f32 %v9636, %v9720
    %v9722 = vpop.f32.mrf.mxu0
    %v9723 = vpop.f32.mrf.mxu0
    %v9724 = vpop.f32.mrf.mxu0
    %9725 = vdwg.mxu0
    %vm9726 = vcmask 17408
    %9727 = vst.msk [vmem:[#allocation14] sm:$0x3] %vm9726, %v9721
    // Predicated region
    $region178: #{inception_time_forward.1} parent=1 // pred_check
      _
    $region179: #{inception_time_forward.1} parent=1 // pred_check_branch
      %9729 = sbr.rel (0) target = $region181
    $region180: #{inception_time_forward.1} parent=1 // pred_region
      %s9731 = ssub.s32 32, 32
      %9732 = vsyncadd [#allocation7], %s9731
      %s9734 = sshll.u32 [#allocation14], 4
      %s9735 = int_to_ptr.vmem [resolvable:$true] %s9734
      %9737 = dma.vmem_to_hbm [thread:$0]  %s9735, 32, %s79, [#allocation7]
    $region181: #{inception_time_forward.1} parent=1 // pred_fallthru
      _
    // Predicated region
    $region182: #{inception_time_forward.1} parent=1 // pred_check
      _
    $region183: #{inception_time_forward.1} parent=1 // pred_check_branch
      %9739 = sbr.rel (0) target = $region185
    $region184: #{inception_time_forward.1} parent=1 // pred_region
      %9740 = dma.done [#allocation7], 32
    $region185: #{inception_time_forward.1} parent=1 // pred_fallthru
      _
    %9741 = vsyncpa [#allocation6], 1
    %9742 = vsyncpa [#allocation9], 1
    %9743 = vsyncpa [#allocation12], 1
    %9744 = vsyncpa [#allocation7], 1

</llo_original>
